<compile_context>
chip_gen: v5e
topology: v5e:2x2
jax: 0.10.0
libtpu: 0.0.40
codegen_flags: <defaults>
</compile_context>

<pallas_src>
import functools

import jax
import jax.numpy as jnp
from jax import lax
from jax.experimental import pallas as pl
from jax.experimental.pallas import tpu as pltpu


# ----------------------------------------------------------------------------
# Kernel: GEMM + bias (+ optional ReLU):  out = [relu](W @ X + b)
#   W: [M, K]   X: [K, N]   b: [M, 1]   out: [M, N]
# Used for the conv (M=64, K=Cin*16) and the merged-parity deconv (M=4*Cout,
# K=64*9).  N = spatial * batch (lane-dense).
# ----------------------------------------------------------------------------
def _gemm_bias_kernel(x_ref, w_ref, b_ref, o_ref, *, relu):
    acc = jnp.dot(w_ref[...], x_ref[...], preferred_element_type=jnp.float32)
    acc = acc + b_ref[...]
    if relu:
        acc = jnp.maximum(acc, 0.0)
    o_ref[...] = acc.astype(o_ref.dtype)


def _pick_tile_n(n, max_tile):
    """Largest multiple-of-128 divisor of n that is <= max_tile (else full n)."""
    if n % 128 != 0:
        return n
    t = min(n, max_tile)
    while n % t != 0:
        t -= 128
    return t


def gemm_bias(w, x, b, *, relu, out_dtype, max_tile_n=2048):
    """w: [M, K] bf16, x: [K, N] bf16, b: [M, 1] f32 -> [M, N] out_dtype."""
    M, K = w.shape
    Kx, N = x.shape
    assert K == Kx, (w.shape, x.shape)
    tn = _pick_tile_n(N, max_tile_n)
    return pl.pallas_call(
        functools.partial(_gemm_bias_kernel, relu=relu),
        out_shape=jax.ShapeDtypeStruct((M, N), out_dtype),
        grid=(N // tn,),
        in_specs=[
            pl.BlockSpec((K, tn), lambda i: (0, i)),   # activations (tiled on N)
            pl.BlockSpec((M, K), lambda i: (0, 0)),    # weight (resident)
            pl.BlockSpec((M, 1), lambda i: (0, 0)),    # bias   (resident)
        ],
        out_specs=pl.BlockSpec((M, tn), lambda i: (0, i)),
        compiler_params=pltpu.CompilerParams(
            dimension_semantics=("parallel",),
            vmem_limit_bytes=32 * 1024 * 1024),
    )(x, w, b)


# ----------------------------------------------------------------------------
# Kernel: fused fc1 + fc2 in a single grid step, all weights resident in VMEM.
#   y:  [feat, B]   (conv output, columns = batch)
#   h1 = W1 @ y + b1          W1: [32, feat]   -> [32, B]
#   h2 = W2 @ h1 + b2         W2: [feat, 32]   -> [feat, B]
# Transposed (batch-last) layout means the PyTorch Linear weights are used with
# NO transpose at all.
# ----------------------------------------------------------------------------
def _fc_fused_kernel(y_ref, w1_ref, b1_ref, w2_ref, b2_ref, o_ref):
    h1 = jnp.dot(w1_ref[...], y_ref[...], preferred_element_type=jnp.float32)
    h1 = h1 + b1_ref[...]
    h2 = jnp.dot(w2_ref[...], h1.astype(w2_ref.dtype),
                 preferred_element_type=jnp.float32)
    o_ref[...] = (h2 + b2_ref[...]).astype(o_ref.dtype)


def fc_fused(y_cols, w1, b1, w2, b2):
    """y_cols: [feat, B] bf16 -> [feat, B] bf16.

    Single grid step: at feat=64*S2*S2 the whole weight set is well under any
    VMEM limit (would need tiling only for very large input_size).
    """
    feat, B = y_cols.shape
    H = w1.shape[0]
    return pl.pallas_call(
        _fc_fused_kernel,
        out_shape=jax.ShapeDtypeStruct((feat, B), jnp.bfloat16),
        grid=(1,),
        in_specs=[
            pl.BlockSpec((feat, B), lambda i: (0, 0)),
            pl.BlockSpec((H, feat), lambda i: (0, 0)),
            pl.BlockSpec((H, 1), lambda i: (0, 0)),
            pl.BlockSpec((feat, H), lambda i: (0, 0)),
            pl.BlockSpec((feat, 1), lambda i: (0, 0)),
        ],
        out_specs=pl.BlockSpec((feat, B), lambda i: (0, 0)),
        compiler_params=pltpu.CompilerParams(
            dimension_semantics=("arbitrary",),
            vmem_limit_bytes=32 * 1024 * 1024),
    )(y_cols, w1, b1, w2, b2)


# ----------------------------------------------------------------------------
# Plain-JAX layout glue (cheap at these sizes; fused by XLA under jit).
# ----------------------------------------------------------------------------
def _conv_cols_lanedense(x, k, stride, pad):
    """x: [B, C, H, W] -> cols [C*k*k, Ho*Wo*B]; row = (c, i, j), col = (hw, b)."""
    B, C, H, W = x.shape
    xp = jnp.pad(x, ((0, 0), (0, 0), (pad, pad), (pad, pad)))
    Ho = (H + 2 * pad - k) // stride + 1
    Wo = (W + 2 * pad - k) // stride + 1
    taps = []
    for i in range(k):
        for j in range(k):
            taps.append(xp[:, :, i:i + stride * Ho:stride, j:j + stride * Wo:stride])
    cols = jnp.stack(taps, axis=2)              # [B, C, k*k, Ho, Wo]
    cols = cols.transpose(1, 2, 3, 4, 0)        # [C, k*k, Ho, Wo, B]
    return cols.reshape(C * k * k, Ho * Wo * B), Ho, Wo


def _deconv_cols9(h_ld, S2, B):
    """h_ld: [64, S2, S2, B] -> cols [64*9, S2*S2*B]; row = (c, dr, ds)."""
    hp = jnp.pad(h_ld, ((0, 0), (1, 1), (1, 1), (0, 0)))
    shifts = [hp[:, r:r + S2, s:s + S2, :] for r in range(3) for s in range(3)]
    cols = jnp.stack(shifts, axis=1)            # [64, 9, S2, S2, B]
    return cols.reshape(64 * 9, S2 * S2 * B)


# ----------------------------------------------------------------------------
# One-time parameter preparation (hoisted out of the forward).
# ----------------------------------------------------------------------------
def prepare_params(params):
    C, Cout = params["deconv_w"].shape[0], params["deconv_w"].shape[1]
    # ConvTranspose2d(64, Cout, 4, 2, 1) merged-parity weight:
    #   out[b,o,2m+py,2n+px] = bias[o]
    #     + sum_{c,dr,ds} Wbig[(py*2+px)*Cout+o, c*9+dr*3+ds] * h_pad[c,m+dr,n+ds,b]
    # kernel-tap index as a function of (parity, shift); 4 == zero tap.
    kh_map = jnp.array([[3, 1, 4], [4, 2, 0]], dtype=jnp.int32)
    wt_ext = jnp.pad(params["deconv_w"], ((0, 0), (0, 0), (0, 1), (0, 1)))
    wfull = wt_ext[:, :, kh_map][:, :, :, :, kh_map]      # [C, Cout, 2, 3, 2, 3]
    wbig = wfull.transpose(2, 4, 1, 0, 3, 5).reshape(4 * Cout, C * 9)
    return {
        "conv_w": params["conv_w"].reshape(64, -1).astype(jnp.bfloat16),
        "conv_b": params["conv_b"].reshape(-1, 1).astype(jnp.float32),
        "fc1_w": params["fc1_w"].astype(jnp.bfloat16),                 # [32, feat]
        "fc1_b": params["fc1_b"].reshape(-1, 1).astype(jnp.float32),
        "fc2_w": params["fc2_w"].astype(jnp.bfloat16),                 # [feat, 32]
        "fc2_b": params["fc2_b"].reshape(-1, 1).astype(jnp.float32),
        "deconv_w": wbig.astype(jnp.bfloat16),                         # [4*Cout, C*9]
        "deconv_b": jnp.tile(params["deconv_b"], 4).reshape(4 * Cout, 1)
                    .astype(jnp.float32),
    }


# ----------------------------------------------------------------------------
# pre_D forward
# ----------------------------------------------------------------------------
@functools.partial(jax.jit, static_argnames=("input_size",))
def pre_d_forward(x, prepped, *, input_size):
    B = x.shape[0]
    S2 = input_size // 2
    Cout = prepped["deconv_b"].shape[0] // 4

    # conv: Conv2d(input_dim, 64, 4, 2, 1) + ReLU  -> lane-dense [64, S2*S2*B]
    cols1, Ho, Wo = _conv_cols_lanedense(x.astype(jnp.bfloat16), k=4, stride=2, pad=1)
    y_ld = gemm_bias(prepped["conv_w"], cols1, prepped["conv_b"],
                     relu=True, out_dtype=jnp.bfloat16)        # [64, Ho*Wo*B]

    # fc: Linear(feat, 32) -> Linear(32, feat), fused, single grid step.
    feat = 64 * Ho * Wo
    y_cols = y_ld.reshape(feat, B)                             # free reshape
    h2 = fc_fused(y_cols, prepped["fc1_w"], prepped["fc1_b"],
                  prepped["fc2_w"], prepped["fc2_b"])          # [feat, B]

    # deconv: ConvTranspose2d(64, Cout, 4, 2, 1) as one merged-parity GEMM.
    h_ld = h2.reshape(64, S2, S2, B)                           # free reshape
    cols9 = _deconv_cols9(h_ld, S2, B)                         # [576, S2*S2*B]
    out_ld = gemm_bias(prepped["deconv_w"], cols9, prepped["deconv_b"],
                       relu=False, out_dtype=jnp.float32)      # [4*Cout, S2*S2*B]

    out = out_ld.reshape(2, 2, Cout, S2, S2, B)                # (py, px, o, m, n, b)
    out = out.transpose(5, 2, 3, 0, 4, 1).reshape(B, Cout, 2 * S2, 2 * S2)
    return out


# ----------------------------------------------------------------------------
# Pure-JAX f32 reference (correctness check only)
# ----------------------------------------------------------------------------
def pre_d_reference(x, params, *, input_size):
    B = x.shape[0]
    S2 = input_size // 2
    dn = ("NCHW", "OIHW", "NCHW")
    y = lax.conv_general_dilated(x, params["conv_w"], (2, 2), ((1, 1), (1, 1)),
                                 dimension_numbers=dn)
    y = jnp.maximum(y + params["conv_b"][None, :, None, None], 0.0)
    flat = y.reshape(B, -1)
    h = flat @ params["fc1_w"].T + params["fc1_b"]
    h = h @ params["fc2_w"].T + params["fc2_b"]
    h = h.reshape(B, 64, S2, S2)
    w_conv = jnp.flip(params["deconv_w"], axis=(2, 3)).transpose(1, 0, 2, 3)
    out = lax.conv_general_dilated(h, w_conv, (1, 1), ((2, 2), (2, 2)),
                                   lhs_dilation=(2, 2), dimension_numbers=dn)
    return out + params["deconv_b"][None, :, None, None]


# ----------------------------------------------------------------------------
# Parameter init (normal(0, 0.02), zero biases) — matches the PyTorch __init__.
# ----------------------------------------------------------------------------
def init_params(key, input_dim, output_dim, input_size):
    S2 = input_size // 2
    feat = 64 * S2 * S2
    ks = jax.random.split(key, 4)
    return {
        "conv_w": 0.02 * jax.random.normal(ks[0], (64, input_dim, 4, 4), jnp.float32),
        "conv_b": jnp.zeros((64,), jnp.float32),
        "fc1_w": 0.02 * jax.random.normal(ks[1], (32, feat), jnp.float32),
        "fc1_b": jnp.zeros((32,), jnp.float32),
        "fc2_w": 0.02 * jax.random.normal(ks[2], (feat, 32), jnp.float32),
        "fc2_b": jnp.zeros((feat,), jnp.float32),
        "deconv_w": 0.02 * jax.random.normal(ks[3], (64, output_dim, 4, 4), jnp.float32),
        "deconv_b": jnp.zeros((output_dim,), jnp.float32),
    }


if __name__ == "__main__":
    INPUT_DIM, OUTPUT_DIM, INPUT_SIZE, BATCH = 1, 1, 16, 2

    key = jax.random.PRNGKey(0)
    pkey, xkey, bkey = jax.random.split(key, 3)
    params = init_params(pkey, INPUT_DIM, OUTPUT_DIM, INPUT_SIZE)
    # Exercise the bias path in the correctness check (biases are trainable and
    # would not stay zero after training; forward semantics are unchanged).
    bks = jax.random.split(bkey, 4)
    params["conv_b"] = 0.02 * jax.random.normal(bks[0], params["conv_b"].shape)
    params["fc1_b"] = 0.02 * jax.random.normal(bks[1], params["fc1_b"].shape)
    params["fc2_b"] = 0.02 * jax.random.normal(bks[2], params["fc2_b"].shape)
    params["deconv_b"] = 0.02 * jax.random.normal(bks[3], params["deconv_b"].shape)

    prepped = prepare_params(params)   # one-time weight layout prep (hoisted)

    x = jax.random.normal(xkey, (BATCH, INPUT_DIM, INPUT_SIZE, INPUT_SIZE), jnp.float32)

    out = jax.block_until_ready(pre_d_forward(x, prepped, input_size=INPUT_SIZE))
    ref = jax.block_until_ready(pre_d_reference(x, params, input_size=INPUT_SIZE))

    assert out.shape == (BATCH, OUTPUT_DIM, INPUT_SIZE, INPUT_SIZE), out.shape
    max_err = float(jnp.max(jnp.abs(out - ref)))
    # bf16 MXU operands with f32 accumulation -> loose-ish but meaningful tolerance.
    assert jnp.allclose(out, ref, rtol=2e-2, atol=2e-3), max_err

    print("KERNEL_OK")
</pallas_src>

<mosaic_0001>
module attributes {stable_mosaic.version = 11 : i64} {
  func.func @_gemm_bias_kernel(%arg0: i32, %arg1: memref<16x128xbf16, #tpu.memory_space<vmem>>, %arg2: memref<64x16xbf16, #tpu.memory_space<vmem>>, %arg3: memref<64x1xf32, #tpu.memory_space<vmem>>, %arg4: memref<64x128xbf16, #tpu.memory_space<vmem>>) attributes {dimension_semantics = [#tpu.dimension_semantics<parallel>], iteration_bounds = array<i64: 1>, scalar_prefetch = 0 : i64, scratch_operands = 0 : i64, tpu.core_type = #tpu.core_type<tc>, window_params = [{transform_indices = @transform_0, window_bounds = array<i64: 16, 128>}, {pipeline_mode = #tpu.pipeline_mode<synchronous>, transform_indices = @transform_1, window_bounds = array<i64: 64, 16>}, {pipeline_mode = #tpu.pipeline_mode<synchronous>, transform_indices = @transform_2, window_bounds = array<i64: 64, 1>}, {transform_indices = @transform_3, window_bounds = array<i64: 64, 128>}]} {
    %c0 = arith.constant 0 : index
    %c0_0 = arith.constant 0 : index
    %0 = vector.load %arg2[%c0, %c0_0] : memref<64x16xbf16, #tpu.memory_space<vmem>>, vector<64x16xbf16>
    %c0_1 = arith.constant 0 : index
    %c0_2 = arith.constant 0 : index
    %1 = vector.load %arg1[%c0_1, %c0_2] : memref<16x128xbf16, #tpu.memory_space<vmem>>, vector<16x128xbf16>
    %cst = arith.constant dense<0.000000e+00> : vector<64x128xf32>
    %2 = tpu.matmul %0, %1, %cst {dimension_numbers = #tpu.dot_dimension_numbers<[1], [0], [0], [1], [0, 0, 1, 1], [], []>} : vector<64x16xbf16>, vector<16x128xbf16>, vector<64x128xf32> -> vector<64x128xf32>
    %c0_3 = arith.constant 0 : index
    %c0_4 = arith.constant 0 : index
    %3 = vector.load %arg3[%c0_3, %c0_4] : memref<64x1xf32, #tpu.memory_space<vmem>>, vector<64x1xf32>
    %4 = vector.broadcast %3 : vector<64x1xf32> to vector<64x128xf32>
    %5 = arith.addf %2, %4 : vector<64x128xf32>
    %cst_5 = arith.constant 0.000000e+00 : f32
    %6 = vector.broadcast %cst_5 : f32 to vector<64x128xf32>
    %7 = arith.maximumf %5, %6 : vector<64x128xf32>
    %8 = arith.truncf %7 : vector<64x128xf32> to vector<64x128xbf16>
    %c0_6 = arith.constant 0 : index
    %c0_7 = arith.constant 0 : index
    %9 = vector.load %arg4[%c0_6, %c0_7] : memref<64x128xbf16, #tpu.memory_space<vmem>>, vector<64x128xbf16>
    tpu.vector_store %arg4[%c0_6, %c0_7], %8 {strides = array<i32>} : memref<64x128xbf16, #tpu.memory_space<vmem>>, vector<64x128xbf16>,
    return
  }
  func.func @transform_0(%arg0: i32) -> (i32, i32) {
    %c0_i32 = arith.constant 0 : i32
    %c0_i32_0 = arith.constant 0 : i32
    return %c0_i32, %arg0 : i32, i32
  }
  func.func @transform_1(%arg0: i32) -> (i32, i32) {
    %c0_i32 = arith.constant 0 : i32
    %c0_i32_0 = arith.constant 0 : i32
    %c0_i32_1 = arith.constant 0 : i32
    return %c0_i32, %c0_i32_0 : i32, i32
  }
  func.func @transform_2(%arg0: i32) -> (i32, i32) {
    %c0_i32 = arith.constant 0 : i32
    %c0_i32_0 = arith.constant 0 : i32
    %c0_i32_1 = arith.constant 0 : i32
    return %c0_i32, %c0_i32_0 : i32, i32
  }
  func.func @transform_3(%arg0: i32) -> (i32, i32) {
    %c0_i32 = arith.constant 0 : i32
    %c0_i32_0 = arith.constant 0 : i32
    return %c0_i32, %arg0 : i32, i32
  }
}

module attributes {stable_mosaic.version = 11 : i64} {
  func.func @_fc_fused_kernel(%arg0: i32, %arg1: memref<4096x2xbf16, #tpu.memory_space<vmem>>, %arg2: memref<32x4096xbf16, #tpu.memory_space<vmem>>, %arg3: memref<32x1xf32, #tpu.memory_space<vmem>>, %arg4: memref<4096x32xbf16, #tpu.memory_space<vmem>>, %arg5: memref<4096x1xf32, #tpu.memory_space<vmem>>, %arg6: memref<4096x2xbf16, #tpu.memory_space<vmem>>) attributes {dimension_semantics = [#tpu.dimension_semantics<arbitrary>], iteration_bounds = array<i64: 1>, scalar_prefetch = 0 : i64, scratch_operands = 0 : i64, tpu.core_type = #tpu.core_type<tc>, window_params = [{pipeline_mode = #tpu.pipeline_mode<synchronous>, transform_indices = @transform_0, window_bounds = array<i64: 4096, 2>}, {pipeline_mode = #tpu.pipeline_mode<synchronous>, transform_indices = @transform_1, window_bounds = array<i64: 32, 4096>}, {pipeline_mode = #tpu.pipeline_mode<synchronous>, transform_indices = @transform_2, window_bounds = array<i64: 32, 1>}, {pipeline_mode = #tpu.pipeline_mode<synchronous>, transform_indices = @transform_3, window_bounds = array<i64: 4096, 32>}, {pipeline_mode = #tpu.pipeline_mode<synchronous>, transform_indices = @transform_4, window_bounds = array<i64: 4096, 1>}, {pipeline_mode = #tpu.pipeline_mode<synchronous>, transform_indices = @transform_5, window_bounds = array<i64: 4096, 2>}]} {
    %c0 = arith.constant 0 : index
    %c0_0 = arith.constant 0 : index
    %0 = vector.load %arg2[%c0, %c0_0] : memref<32x4096xbf16, #tpu.memory_space<vmem>>, vector<32x4096xbf16>
    %c0_1 = arith.constant 0 : index
    %c0_2 = arith.constant 0 : index
    %1 = vector.load %arg1[%c0_1, %c0_2] : memref<4096x2xbf16, #tpu.memory_space<vmem>>, vector<4096x2xbf16>
    %cst = arith.constant dense<0.000000e+00> : vector<32x2xf32>
    %2 = tpu.matmul %0, %1, %cst {dimension_numbers = #tpu.dot_dimension_numbers<[1], [0], [0], [1], [0, 0, 1, 1], [], []>} : vector<32x4096xbf16>, vector<4096x2xbf16>, vector<32x2xf32> -> vector<32x2xf32>
    %c0_3 = arith.constant 0 : index
    %c0_4 = arith.constant 0 : index
    %3 = vector.load %arg3[%c0_3, %c0_4] : memref<32x1xf32, #tpu.memory_space<vmem>>, vector<32x1xf32>
    %4 = vector.broadcast %3 : vector<32x1xf32> to vector<32x2xf32>
    %5 = arith.addf %2, %4 : vector<32x2xf32>
    %c0_5 = arith.constant 0 : index
    %c0_6 = arith.constant 0 : index
    %6 = vector.load %arg4[%c0_5, %c0_6] : memref<4096x32xbf16, #tpu.memory_space<vmem>>, vector<4096x32xbf16>
    %7 = arith.truncf %5 : vector<32x2xf32> to vector<32x2xbf16>
    %cst_7 = arith.constant dense<0.000000e+00> : vector<4096x2xf32>
    %8 = tpu.matmul %6, %7, %cst_7 {dimension_numbers = #tpu.dot_dimension_numbers<[1], [0], [0], [1], [0, 0, 1, 1], [], []>} : vector<4096x32xbf16>, vector<32x2xbf16>, vector<4096x2xf32> -> vector<4096x2xf32>
    %c0_8 = arith.constant 0 : index
    %c0_9 = arith.constant 0 : index
    %9 = vector.load %arg5[%c0_8, %c0_9] : memref<4096x1xf32, #tpu.memory_space<vmem>>, vector<4096x1xf32>
    %10 = vector.broadcast %9 : vector<4096x1xf32> to vector<4096x2xf32>
    %11 = arith.addf %8, %10 : vector<4096x2xf32>
    %12 = arith.truncf %11 : vector<4096x2xf32> to vector<4096x2xbf16>
    %c0_10 = arith.constant 0 : index
    %c0_11 = arith.constant 0 : index
    %13 = vector.load %arg6[%c0_10, %c0_11] : memref<4096x2xbf16, #tpu.memory_space<vmem>>, vector<4096x2xbf16>
    tpu.vector_store %arg6[%c0_10, %c0_11], %12 {strides = array<i32>} : memref<4096x2xbf16, #tpu.memory_space<vmem>>, vector<4096x2xbf16>,
    return
  }
  func.func @transform_0(%arg0: i32) -> (i32, i32) {
    %c0_i32 = arith.constant 0 : i32
    %c0_i32_0 = arith.constant 0 : i32
    %c0_i32_1 = arith.constant 0 : i32
    return %c0_i32, %c0_i32_0 : i32, i32
  }
  func.func @transform_1(%arg0: i32) -> (i32, i32) {
    %c0_i32 = arith.constant 0 : i32
    %c0_i32_0 = arith.constant 0 : i32
    %c0_i32_1 = arith.constant 0 : i32
    return %c0_i32, %c0_i32_0 : i32, i32
  }
  func.func @transform_2(%arg0: i32) -> (i32, i32) {
    %c0_i32 = arith.constant 0 : i32
    %c0_i32_0 = arith.constant 0 : i32
    %c0_i32_1 = arith.constant 0 : i32
    return %c0_i32, %c0_i32_0 : i32, i32
  }
  func.func @transform_3(%arg0: i32) -> (i32, i32) {
    %c0_i32 = arith.constant 0 : i32
    %c0_i32_0 = arith.constant 0 : i32
    %c0_i32_1 = arith.constant 0 : i32
    return %c0_i32, %c0_i32_0 : i32, i32
  }
  func.func @transform_4(%arg0: i32) -> (i32, i32) {
    %c0_i32 = arith.constant 0 : i32
    %c0_i32_0 = arith.constant 0 : i32
    %c0_i32_1 = arith.constant 0 : i32
    return %c0_i32, %c0_i32_0 : i32, i32
  }
  func.func @transform_5(%arg0: i32) -> (i32, i32) {
    %c0_i32 = arith.constant 0 : i32
    %c0_i32_0 = arith.constant 0 : i32
    %c0_i32_1 = arith.constant 0 : i32
    return %c0_i32, %c0_i32_0 : i32, i32
  }
}

module attributes {stable_mosaic.version = 11 : i64} {
  func.func @_gemm_bias_kernel(%arg0: i32, %arg1: memref<576x128xbf16, #tpu.memory_space<vmem>>, %arg2: memref<4x576xbf16, #tpu.memory_space<vmem>>, %arg3: memref<4x1xf32, #tpu.memory_space<vmem>>, %arg4: memref<4x128xf32, #tpu.memory_space<vmem>>) attributes {dimension_semantics = [#tpu.dimension_semantics<parallel>], iteration_bounds = array<i64: 1>, scalar_prefetch = 0 : i64, scratch_operands = 0 : i64, tpu.core_type = #tpu.core_type<tc>, window_params = [{transform_indices = @transform_0, window_bounds = array<i64: 576, 128>}, {pipeline_mode = #tpu.pipeline_mode<synchronous>, transform_indices = @transform_1, window_bounds = array<i64: 4, 576>}, {pipeline_mode = #tpu.pipeline_mode<synchronous>, transform_indices = @transform_2, window_bounds = array<i64: 4, 1>}, {transform_indices = @transform_3, window_bounds = array<i64: 4, 128>}]} {
    %c0 = arith.constant 0 : index
    %c0_0 = arith.constant 0 : index
    %0 = vector.load %arg2[%c0, %c0_0] : memref<4x576xbf16, #tpu.memory_space<vmem>>, vector<4x576xbf16>
    %c0_1 = arith.constant 0 : index
    %c0_2 = arith.constant 0 : index
    %1 = vector.load %arg1[%c0_1, %c0_2] : memref<576x128xbf16, #tpu.memory_space<vmem>>, vector<576x128xbf16>
    %cst = arith.constant dense<0.000000e+00> : vector<4x128xf32>
    %2 = tpu.matmul %0, %1, %cst {dimension_numbers = #tpu.dot_dimension_numbers<[1], [0], [0], [1], [0, 0, 1, 1], [], []>} : vector<4x576xbf16>, vector<576x128xbf16>, vector<4x128xf32> -> vector<4x128xf32>
    %c0_3 = arith.constant 0 : index
    %c0_4 = arith.constant 0 : index
    %3 = vector.load %arg3[%c0_3, %c0_4] : memref<4x1xf32, #tpu.memory_space<vmem>>, vector<4x1xf32>
    %4 = vector.broadcast %3 : vector<4x1xf32> to vector<4x128xf32>
    %5 = arith.addf %2, %4 : vector<4x128xf32>
    %c0_5 = arith.constant 0 : index
    %c0_6 = arith.constant 0 : index
    %6 = vector.load %arg4[%c0_5, %c0_6] : memref<4x128xf32, #tpu.memory_space<vmem>>, vector<4x128xf32>
    tpu.vector_store %arg4[%c0_5, %c0_6], %5 {strides = array<i32>} : memref<4x128xf32, #tpu.memory_space<vmem>>, vector<4x128xf32>,
    return
  }
  func.func @transform_0(%arg0: i32) -> (i32, i32) {
    %c0_i32 = arith.constant 0 : i32
    %c0_i32_0 = arith.constant 0 : i32
    return %c0_i32, %arg0 : i32, i32
  }
  func.func @transform_1(%arg0: i32) -> (i32, i32) {
    %c0_i32 = arith.constant 0 : i32
    %c0_i32_0 = arith.constant 0 : i32
    %c0_i32_1 = arith.constant 0 : i32
    return %c0_i32, %c0_i32_0 : i32, i32
  }
  func.func @transform_2(%arg0: i32) -> (i32, i32) {
    %c0_i32 = arith.constant 0 : i32
    %c0_i32_0 = arith.constant 0 : i32
    %c0_i32_1 = arith.constant 0 : i32
    return %c0_i32, %c0_i32_0 : i32, i32
  }
  func.func @transform_3(%arg0: i32) -> (i32, i32) {
    %c0_i32 = arith.constant 0 : i32
    %c0_i32_0 = arith.constant 0 : i32
    return %c0_i32, %arg0 : i32, i32
  }
}

</mosaic_0001>

<llo_original>
// kernel: pre_d_forward.3
$region0: #{pre_d_forward.3}
  #allocation0 [shape = 'u32[]', space=smem, size = 0x4, offset = 0x4, fixed_abs, tag = 'smem constant byte address 0x4 - core index']
  #allocation1 [shape = 'u32[72,128]{1,0:T(1,128)}', space=vmem, size = 0x9000, scoped, tag = 'internal scratch']
  %s0 = inlined_call_operand.vmem [shape: bf16[16,128], index: 0, kind: input, shape index: {}]
  %s1 = inlined_call_operand.vmem [shape: bf16[64,16], index: 1, kind: input, shape index: {}]
  %s2 = inlined_call_operand.vmem [shape: f32[64,1], index: 2, kind: input, shape index: {}]
  %s3 = inlined_call_operand.vmem [shape: bf16[64,128], index: 3, kind: output, shape index: {}]
  %s4 = sld [smem:[#allocation0]]
  $region22: #{pre_d_forward.3} parent=0
    _
  %s6 = ssub.s32 1, %s4
  %s7 = scalar_select 0, %s6, %s4
  // Predicated region
  $region2: #{pre_d_forward.3} parent=0 // pred_check
    _
  $region3: #{pre_d_forward.3} parent=0 // pred_check_branch
    %9 = sbr.rel (0) target = $region5
  $region4: #{pre_d_forward.3} parent=0 // pred_region
    _
  $region5: #{pre_d_forward.3} parent=0 // pred_fallthru
    _
  // Predicated region
  $region6: #{pre_d_forward.3} parent=0 // pred_check
    _
  $region7: #{pre_d_forward.3} parent=0 // pred_check_branch
    %11 = sbr.rel (0) target = $region9
  $region8: #{pre_d_forward.3} parent=0 // pred_region
    _
  $region9: #{pre_d_forward.3} parent=0 // pred_fallthru
    _
  // Predicated region
  $region10: #{pre_d_forward.3} parent=0 // pred_check
    _
  $region11: #{pre_d_forward.3} parent=0 // pred_check_branch
    %13 = sbr.rel (0) target = $region13
  $region12: #{pre_d_forward.3} parent=0 // pred_region
    _
  $region13: #{pre_d_forward.3} parent=0 // pred_fallthru
    _
  %v15 = vld [vmem:[%s1] sm:$0xf]
  %v16 = vld [vmem:[%s1 + $0x4] sm:$0xf]
  %v17 = vld [vmem:[%s1 + $0x8] sm:$0xf]
  %v18 = vld [vmem:[%s1 + $0xc] sm:$0xf]
  %v19 = vld [vmem:[%s1 + $0x10] sm:$0xf]
  %v20 = vld [vmem:[%s1 + $0x14] sm:$0xf]
  %v21 = vld [vmem:[%s1 + $0x18] sm:$0xf]
  %v22 = vld [vmem:[%s1 + $0x1c] sm:$0xf]
  %v23 = vld [vmem:[%s0] sm:$0xf]
  %v24 = vld [vmem:[%s0 + $0x4] sm:$0xf]
  %v25 = vld [vmem:[%s2] sm:$0xff]
  %v26 = vld [vmem:[%s2 + $0x8] sm:$0xff]
  %v27 = vld [vmem:[%s2 + $0x10] sm:$0xff]
  %v28 = vld [vmem:[%s2 + $0x18] sm:$0xff]
  %v29 = vld [vmem:[%s2 + $0x20] sm:$0xff]
  %v30 = vld [vmem:[%s2 + $0x28] sm:$0xff]
  %v31 = vld [vmem:[%s2 + $0x30] sm:$0xff]
  %v32 = vld [vmem:[%s2 + $0x38] sm:$0xff]
  %34 = vset.pattern.permute.xlu0 0
  %35 = vperm.xlu0 %34, %v25
  %v36 = vpop.permute.xlu0 %35
  %39 = vset.pattern.permute.xlu0 0
  %40 = vperm.xlu0 %39, %v26
  %v41 = vpop.permute.xlu0 %40
  %44 = vset.pattern.permute.xlu0 0
  %45 = vperm.xlu0 %44, %v27
  %v46 = vpop.permute.xlu0 %45
  %49 = vset.pattern.permute.xlu0 0
  %50 = vperm.xlu0 %49, %v28
  %v51 = vpop.permute.xlu0 %50
  %54 = vset.pattern.permute.xlu0 0
  %55 = vperm.xlu0 %54, %v29
  %v56 = vpop.permute.xlu0 %55
  %59 = vset.pattern.permute.xlu0 0
  %60 = vperm.xlu0 %59, %v30
  %v61 = vpop.permute.xlu0 %60
  %64 = vset.pattern.permute.xlu0 0
  %65 = vperm.xlu0 %64, %v31
  %v66 = vpop.permute.xlu0 %65
  %69 = vset.pattern.permute.xlu0 0
  %70 = vperm.xlu0 %69, %v32
  %v71 = vpop.permute.xlu0 %70
  %v81 = vunpack.c.l.b16 %v15
  %v82 = vunpack.c.l.b16 %v16
  %v83 = vunpack.c.l.b16 %v17
  %v84 = vunpack.c.l.b16 %v18
  %v85 = vunpack.c.l.b16 %v19
  %v86 = vunpack.c.l.b16 %v20
  %v87 = vunpack.c.l.b16 %v21
  %v88 = vunpack.c.l.b16 %v22
  %v89 = vpack.c.b16 %v82, %v81
  %v90 = vpack.c.b16 %v84, %v83
  %v91 = vpack.c.b16 %v86, %v85
  %v92 = vpack.c.b16 %v88, %v87
  %v95 = vunpack.c.l.b16 %v23
  %v96 = vunpack.c.l.b16 %v24
  %v97 = vpack.c.b16 %v96, %v95
  %vm99 = vcmask 130048
  %v101 = vsel %vm99, %v89, 0
  %v104 = vsel %vm99, %v90, 0
  %v107 = vsel %vm99, %v91, 0
  %v110 = vsel %vm99, %v92, 0
  %112 = vmatpush.bf16.msra.mxu0 0
  %113 = vmatpush.bf16.msra.mxu0 0
  %114 = vmatpush.bf16.msra.mxu0 0
  %115 = vmatpush.bf16.msra.mxu0 0
  %116 = vmatpush.bf16.msra.mxu0 0
  %117 = vmatpush.bf16.msra.mxu0 0
  %118 = vmatpush.bf16.msra.mxu0 0
  %119 = vmatpush.bf16.msra.mxu0 %v97
  %120 = vmatmul.bf16.gmra.mxu0 %v101
  %v121 = vpop.f32.mrf.mxu0
  %v122 = vadd.f32 %v36, %v121
  %v123 = vpop.f32.mrf.mxu0
  %v124 = vadd.f32 %v41, %v123
  %125 = vmatmul.bf16.gmra.mxu0 %v104
  %v126 = vpop.f32.mrf.mxu0
  %v127 = vadd.f32 %v46, %v126
  %v128 = vpop.f32.mrf.mxu0
  %v129 = vadd.f32 %v51, %v128
  %130 = vmatmul.bf16.gmra.mxu0 %v107
  %v131 = vpop.f32.mrf.mxu0
  %v132 = vadd.f32 %v56, %v131
  %v133 = vpop.f32.mrf.mxu0
  %v134 = vadd.f32 %v61, %v133
  %135 = vmatmul.bf16.gmra.mxu0 %v110
  %v136 = vpop.f32.mrf.mxu0
  %v137 = vadd.f32 %v66, %v136
  %v138 = vpop.f32.mrf.mxu0
  %v139 = vadd.f32 %v71, %v138
  %140 = vdwg.mxu0
  %v141 = vmax.f32 %v122, 0.0
  %v142 = vmax.f32 %v124, 0.0
  %v143 = vmax.f32 %v127, 0.0
  %v144 = vmax.f32 %v129, 0.0
  %v145 = vmax.f32 %v132, 0.0
  %v146 = vmax.f32 %v134, 0.0
  %v147 = vmax.f32 %v137, 0.0
  %v148 = vmax.f32 %v139, 0.0
  %v149 = vpack.c.bf16 %v141, %v141
  %v150 = vpack.c.bf16 %v142, %v142
  %v151 = vpack.c.bf16 %v143, %v143
  %v152 = vpack.c.bf16 %v144, %v144
  %v153 = vpack.c.bf16 %v145, %v145
  %v154 = vpack.c.bf16 %v146, %v146
  %v155 = vpack.c.bf16 %v147, %v147
  %v156 = vpack.c.bf16 %v148, %v148
  %157 = vst [vmem:[%s3] sm:$0xf] %v149
  %158 = vst [vmem:[%s3 + $0x4] sm:$0xf] %v150
  %159 = vst [vmem:[%s3 + $0x8] sm:$0xf] %v151
  %160 = vst [vmem:[%s3 + $0xc] sm:$0xf] %v152
  %161 = vst [vmem:[%s3 + $0x10] sm:$0xf] %v153
  %162 = vst [vmem:[%s3 + $0x14] sm:$0xf] %v154
  %163 = vst [vmem:[%s3 + $0x18] sm:$0xf] %v155
  %164 = vst [vmem:[%s3 + $0x1c] sm:$0xf] %v156
  // Predicated region
  $region14: #{pre_d_forward.3} parent=0 // pred_check
    _
  $region15: #{pre_d_forward.3} parent=0 // pred_check_branch
    %166 = sbr.rel (0) target = $region17
  $region16: #{pre_d_forward.3} parent=0 // pred_region
    _
  $region17: #{pre_d_forward.3} parent=0 // pred_fallthru
    _
  // Predicated region
  $region18: #{pre_d_forward.3} parent=0 // pred_check
    _
  $region19: #{pre_d_forward.3} parent=0 // pred_check_branch
    %168 = sbr.rel (0) target = $region21
  $region20: #{pre_d_forward.3} parent=0 // pred_region
    _
  $region21: #{pre_d_forward.3} parent=0 // pred_fallthru
    _

// kernel: pre_d_forward.4
$region0: #{pre_d_forward.4}
  #allocation0 [shape = 'u32[]', space=smem, size = 0x4, offset = 0x4, fixed_abs, tag = 'smem constant byte address 0x4 - core index']
  #allocation1 [shape = 'u32[72,128]{1,0:T(1,128)}', space=vmem, size = 0x9000, scoped, tag = 'internal scratch']
  %s0 = inlined_call_operand.vmem [shape: bf16[4096,2], index: 0, kind: input, shape index: {}]
  %s1 = inlined_call_operand.vmem [shape: bf16[32,4096], index: 1, kind: input, shape index: {}]
  %s2 = inlined_call_operand.vmem [shape: f32[32,1], index: 2, kind: input, shape index: {}]
  %s3 = inlined_call_operand.vmem [shape: bf16[4096,32], index: 3, kind: input, shape index: {}]
  %s4 = inlined_call_operand.vmem [shape: f32[4096,1], index: 4, kind: input, shape index: {}]
  %s5 = inlined_call_operand.vmem [shape: bf16[4096,2], index: 5, kind: output, shape index: {}]
  %s6 = sld [smem:[#allocation0]]
  $region30: #{pre_d_forward.4} parent=0
    _
  %s8 = ssub.s32 1, %s6
  %s9 = scalar_select 0, %s8, %s6
  // Predicated region
  $region2: #{pre_d_forward.4} parent=0 // pred_check
    _
  $region3: #{pre_d_forward.4} parent=0 // pred_check_branch
    %11 = sbr.rel (0) target = $region5
  $region4: #{pre_d_forward.4} parent=0 // pred_region
    _
  $region5: #{pre_d_forward.4} parent=0 // pred_fallthru
    _
  // Predicated region
  $region6: #{pre_d_forward.4} parent=0 // pred_check
    _
  $region7: #{pre_d_forward.4} parent=0 // pred_check_branch
    %13 = sbr.rel (0) target = $region9
  $region8: #{pre_d_forward.4} parent=0 // pred_region
    _
  $region9: #{pre_d_forward.4} parent=0 // pred_fallthru
    _
  // Predicated region
  $region10: #{pre_d_forward.4} parent=0 // pred_check
    _
  $region11: #{pre_d_forward.4} parent=0 // pred_check_branch
    %15 = sbr.rel (0) target = $region13
  $region12: #{pre_d_forward.4} parent=0 // pred_region
    _
  $region13: #{pre_d_forward.4} parent=0 // pred_fallthru
    _
  // Predicated region
  $region14: #{pre_d_forward.4} parent=0 // pred_check
    _
  $region15: #{pre_d_forward.4} parent=0 // pred_check_branch
    %17 = sbr.rel (0) target = $region17
  $region16: #{pre_d_forward.4} parent=0 // pred_region
    _
  $region17: #{pre_d_forward.4} parent=0 // pred_fallthru
    _
  // Predicated region
  $region18: #{pre_d_forward.4} parent=0 // pred_check
    _
  $region19: #{pre_d_forward.4} parent=0 // pred_check_branch
    %19 = sbr.rel (0) target = $region21
  $region20: #{pre_d_forward.4} parent=0 // pred_region
    _
  $region21: #{pre_d_forward.4} parent=0 // pred_fallthru
    _
  %v21 = vld [vmem:[%s1] sm:$0xff]
  %v22 = vld [vmem:[%s1 + $0x8] sm:$0xff]
  %v23 = vld [vmem:[%s1 + $0x10] sm:$0xff]
  %v24 = vld [vmem:[%s1 + $0x18] sm:$0xff]
  %v25 = vld [vmem:[%s1 + $0x20] sm:$0xff]
  %v26 = vld [vmem:[%s1 + $0x28] sm:$0xff]
  %v27 = vld [vmem:[%s1 + $0x30] sm:$0xff]
  %v28 = vld [vmem:[%s1 + $0x38] sm:$0xff]
  %v29 = vld [vmem:[%s1 + $0x40] sm:$0xff]
  %v30 = vld [vmem:[%s1 + $0x48] sm:$0xff]
  %v31 = vld [vmem:[%s1 + $0x50] sm:$0xff]
  %v32 = vld [vmem:[%s1 + $0x58] sm:$0xff]
  %v33 = vld [vmem:[%s1 + $0x60] sm:$0xff]
  %v34 = vld [vmem:[%s1 + $0x68] sm:$0xff]
  %v35 = vld [vmem:[%s1 + $0x70] sm:$0xff]
  %v36 = vld [vmem:[%s1 + $0x78] sm:$0xff]
  %v37 = vld [vmem:[%s1 + $0x80] sm:$0xff]
  %v38 = vld [vmem:[%s1 + $0x88] sm:$0xff]
  %v39 = vld [vmem:[%s1 + $0x90] sm:$0xff]
  %v40 = vld [vmem:[%s1 + $0x98] sm:$0xff]
  %v41 = vld [vmem:[%s1 + $0xa0] sm:$0xff]
  %v42 = vld [vmem:[%s1 + $0xa8] sm:$0xff]
  %v43 = vld [vmem:[%s1 + $0xb0] sm:$0xff]
  %v44 = vld [vmem:[%s1 + $0xb8] sm:$0xff]
  %v45 = vld [vmem:[%s1 + $0xc0] sm:$0xff]
  %v46 = vld [vmem:[%s1 + $0xc8] sm:$0xff]
  %v47 = vld [vmem:[%s1 + $0xd0] sm:$0xff]
  %v48 = vld [vmem:[%s1 + $0xd8] sm:$0xff]
  %v49 = vld [vmem:[%s1 + $0xe0] sm:$0xff]
  %v50 = vld [vmem:[%s1 + $0xe8] sm:$0xff]
  %v51 = vld [vmem:[%s1 + $0xf0] sm:$0xff]
  %v52 = vld [vmem:[%s1 + $0xf8] sm:$0xff]
  %v53 = vld [vmem:[%s1 + $0x100] sm:$0xff]
  %v54 = vld [vmem:[%s1 + $0x108] sm:$0xff]
  %v55 = vld [vmem:[%s1 + $0x110] sm:$0xff]
  %v56 = vld [vmem:[%s1 + $0x118] sm:$0xff]
  %v57 = vld [vmem:[%s1 + $0x120] sm:$0xff]
  %v58 = vld [vmem:[%s1 + $0x128] sm:$0xff]
  %v59 = vld [vmem:[%s1 + $0x130] sm:$0xff]
  %v60 = vld [vmem:[%s1 + $0x138] sm:$0xff]
  %v61 = vld [vmem:[%s1 + $0x140] sm:$0xff]
  %v62 = vld [vmem:[%s1 + $0x148] sm:$0xff]
  %v63 = vld [vmem:[%s1 + $0x150] sm:$0xff]
  %v64 = vld [vmem:[%s1 + $0x158] sm:$0xff]
  %v65 = vld [vmem:[%s1 + $0x160] sm:$0xff]
  %v66 = vld [vmem:[%s1 + $0x168] sm:$0xff]
  %v67 = vld [vmem:[%s1 + $0x170] sm:$0xff]
  %v68 = vld [vmem:[%s1 + $0x178] sm:$0xff]
  %v69 = vld [vmem:[%s1 + $0x180] sm:$0xff]
  %v70 = vld [vmem:[%s1 + $0x188] sm:$0xff]
  %v71 = vld [vmem:[%s1 + $0x190] sm:$0xff]
  %v72 = vld [vmem:[%s1 + $0x198] sm:$0xff]
  %v73 = vld [vmem:[%s1 + $0x1a0] sm:$0xff]
  %v74 = vld [vmem:[%s1 + $0x1a8] sm:$0xff]
  %v75 = vld [vmem:[%s1 + $0x1b0] sm:$0xff]
  %v76 = vld [vmem:[%s1 + $0x1b8] sm:$0xff]
  %v77 = vld [vmem:[%s1 + $0x1c0] sm:$0xff]
  %v78 = vld [vmem:[%s1 + $0x1c8] sm:$0xff]
  %v79 = vld [vmem:[%s1 + $0x1d0] sm:$0xff]
  %v80 = vld [vmem:[%s1 + $0x1d8] sm:$0xff]
  %v81 = vld [vmem:[%s1 + $0x1e0] sm:$0xff]
  %v82 = vld [vmem:[%s1 + $0x1e8] sm:$0xff]
  %v83 = vld [vmem:[%s1 + $0x1f0] sm:$0xff]
  %v84 = vld [vmem:[%s1 + $0x1f8] sm:$0xff]
  %v85 = vld [vmem:[%s0] sm:$0xf]
  %v86 = vld [vmem:[%s0 + $0x4] sm:$0xf]
  %v87 = vld [vmem:[%s0 + $0x8] sm:$0xf]
  %v88 = vld [vmem:[%s0 + $0xc] sm:$0xf]
  %v89 = vld [vmem:[%s0 + $0x10] sm:$0xf]
  %v90 = vld [vmem:[%s0 + $0x14] sm:$0xf]
  %v91 = vld [vmem:[%s0 + $0x18] sm:$0xf]
  %v92 = vld [vmem:[%s0 + $0x1c] sm:$0xf]
  %v93 = vld [vmem:[%s0 + $0x20] sm:$0xf]
  %v94 = vld [vmem:[%s0 + $0x24] sm:$0xf]
  %v95 = vld [vmem:[%s0 + $0x28] sm:$0xf]
  %v96 = vld [vmem:[%s0 + $0x2c] sm:$0xf]
  %v97 = vld [vmem:[%s0 + $0x30] sm:$0xf]
  %v98 = vld [vmem:[%s0 + $0x34] sm:$0xf]
  %v99 = vld [vmem:[%s0 + $0x38] sm:$0xf]
  %v100 = vld [vmem:[%s0 + $0x3c] sm:$0xf]
  %v101 = vld [vmem:[%s0 + $0x40] sm:$0xf]
  %v102 = vld [vmem:[%s0 + $0x44] sm:$0xf]
  %v103 = vld [vmem:[%s0 + $0x48] sm:$0xf]
  %v104 = vld [vmem:[%s0 + $0x4c] sm:$0xf]
  %v105 = vld [vmem:[%s0 + $0x50] sm:$0xf]
  %v106 = vld [vmem:[%s0 + $0x54] sm:$0xf]
  %v107 = vld [vmem:[%s0 + $0x58] sm:$0xf]
  %v108 = vld [vmem:[%s0 + $0x5c] sm:$0xf]
  %v109 = vld [vmem:[%s0 + $0x60] sm:$0xf]
  %v110 = vld [vmem:[%s0 + $0x64] sm:$0xf]
  %v111 = vld [vmem:[%s0 + $0x68] sm:$0xf]
  %v112 = vld [vmem:[%s0 + $0x6c] sm:$0xf]
  %v113 = vld [vmem:[%s0 + $0x70] sm:$0xf]
  %v114 = vld [vmem:[%s0 + $0x74] sm:$0xf]
  %v115 = vld [vmem:[%s0 + $0x78] sm:$0xf]
  %v116 = vld [vmem:[%s0 + $0x7c] sm:$0xf]
  %v117 = vld [vmem:[%s0 + $0x80] sm:$0xf]
  %v118 = vld [vmem:[%s0 + $0x84] sm:$0xf]
  %v119 = vld [vmem:[%s0 + $0x88] sm:$0xf]
  %v120 = vld [vmem:[%s0 + $0x8c] sm:$0xf]
  %v121 = vld [vmem:[%s0 + $0x90] sm:$0xf]
  %v122 = vld [vmem:[%s0 + $0x94] sm:$0xf]
  %v123 = vld [vmem:[%s0 + $0x98] sm:$0xf]
  %v124 = vld [vmem:[%s0 + $0x9c] sm:$0xf]
  %v125 = vld [vmem:[%s0 + $0xa0] sm:$0xf]
  %v126 = vld [vmem:[%s0 + $0xa4] sm:$0xf]
  %v127 = vld [vmem:[%s0 + $0xa8] sm:$0xf]
  %v128 = vld [vmem:[%s0 + $0xac] sm:$0xf]
  %v129 = vld [vmem:[%s0 + $0xb0] sm:$0xf]
  %v130 = vld [vmem:[%s0 + $0xb4] sm:$0xf]
  %v131 = vld [vmem:[%s0 + $0xb8] sm:$0xf]
  %v132 = vld [vmem:[%s0 + $0xbc] sm:$0xf]
  %v133 = vld [vmem:[%s0 + $0xc0] sm:$0xf]
  %v134 = vld [vmem:[%s0 + $0xc4] sm:$0xf]
  %v135 = vld [vmem:[%s0 + $0xc8] sm:$0xf]
  %v136 = vld [vmem:[%s0 + $0xcc] sm:$0xf]
  %v137 = vld [vmem:[%s0 + $0xd0] sm:$0xf]
  %v138 = vld [vmem:[%s0 + $0xd4] sm:$0xf]
  %v139 = vld [vmem:[%s0 + $0xd8] sm:$0xf]
  %v140 = vld [vmem:[%s0 + $0xdc] sm:$0xf]
  %v141 = vld [vmem:[%s0 + $0xe0] sm:$0xf]
  %v142 = vld [vmem:[%s0 + $0xe4] sm:$0xf]
  %v143 = vld [vmem:[%s0 + $0xe8] sm:$0xf]
  %v144 = vld [vmem:[%s0 + $0xec] sm:$0xf]
  %v145 = vld [vmem:[%s0 + $0xf0] sm:$0xf]
  %v146 = vld [vmem:[%s0 + $0xf4] sm:$0xf]
  %v147 = vld [vmem:[%s0 + $0xf8] sm:$0xf]
  %v148 = vld [vmem:[%s0 + $0xfc] sm:$0xf]
  %v149 = vld [vmem:[%s0 + $0x100] sm:$0xf]
  %v150 = vld [vmem:[%s0 + $0x104] sm:$0xf]
  %v151 = vld [vmem:[%s0 + $0x108] sm:$0xf]
  %v152 = vld [vmem:[%s0 + $0x10c] sm:$0xf]
  %v153 = vld [vmem:[%s0 + $0x110] sm:$0xf]
  %v154 = vld [vmem:[%s0 + $0x114] sm:$0xf]
  %v155 = vld [vmem:[%s0 + $0x118] sm:$0xf]
  %v156 = vld [vmem:[%s0 + $0x11c] sm:$0xf]
  %v157 = vld [vmem:[%s0 + $0x120] sm:$0xf]
  %v158 = vld [vmem:[%s0 + $0x124] sm:$0xf]
  %v159 = vld [vmem:[%s0 + $0x128] sm:$0xf]
  %v160 = vld [vmem:[%s0 + $0x12c] sm:$0xf]
  %v161 = vld [vmem:[%s0 + $0x130] sm:$0xf]
  %v162 = vld [vmem:[%s0 + $0x134] sm:$0xf]
  %v163 = vld [vmem:[%s0 + $0x138] sm:$0xf]
  %v164 = vld [vmem:[%s0 + $0x13c] sm:$0xf]
  %v165 = vld [vmem:[%s0 + $0x140] sm:$0xf]
  %v166 = vld [vmem:[%s0 + $0x144] sm:$0xf]
  %v167 = vld [vmem:[%s0 + $0x148] sm:$0xf]
  %v168 = vld [vmem:[%s0 + $0x14c] sm:$0xf]
  %v169 = vld [vmem:[%s0 + $0x150] sm:$0xf]
  %v170 = vld [vmem:[%s0 + $0x154] sm:$0xf]
  %v171 = vld [vmem:[%s0 + $0x158] sm:$0xf]
  %v172 = vld [vmem:[%s0 + $0x15c] sm:$0xf]
  %v173 = vld [vmem:[%s0 + $0x160] sm:$0xf]
  %v174 = vld [vmem:[%s0 + $0x164] sm:$0xf]
  %v175 = vld [vmem:[%s0 + $0x168] sm:$0xf]
  %v176 = vld [vmem:[%s0 + $0x16c] sm:$0xf]
  %v177 = vld [vmem:[%s0 + $0x170] sm:$0xf]
  %v178 = vld [vmem:[%s0 + $0x174] sm:$0xf]
  %v179 = vld [vmem:[%s0 + $0x178] sm:$0xf]
  %v180 = vld [vmem:[%s0 + $0x17c] sm:$0xf]
  %v181 = vld [vmem:[%s0 + $0x180] sm:$0xf]
  %v182 = vld [vmem:[%s0 + $0x184] sm:$0xf]
  %v183 = vld [vmem:[%s0 + $0x188] sm:$0xf]
  %v184 = vld [vmem:[%s0 + $0x18c] sm:$0xf]
  %v185 = vld [vmem:[%s0 + $0x190] sm:$0xf]
  %v186 = vld [vmem:[%s0 + $0x194] sm:$0xf]
  %v187 = vld [vmem:[%s0 + $0x198] sm:$0xf]
  %v188 = vld [vmem:[%s0 + $0x19c] sm:$0xf]
  %v189 = vld [vmem:[%s0 + $0x1a0] sm:$0xf]
  %v190 = vld [vmem:[%s0 + $0x1a4] sm:$0xf]
  %v191 = vld [vmem:[%s0 + $0x1a8] sm:$0xf]
  %v192 = vld [vmem:[%s0 + $0x1ac] sm:$0xf]
  %v193 = vld [vmem:[%s0 + $0x1b0] sm:$0xf]
  %v194 = vld [vmem:[%s0 + $0x1b4] sm:$0xf]
  %v195 = vld [vmem:[%s0 + $0x1b8] sm:$0xf]
  %v196 = vld [vmem:[%s0 + $0x1bc] sm:$0xf]
  %v197 = vld [vmem:[%s0 + $0x1c0] sm:$0xf]
  %v198 = vld [vmem:[%s0 + $0x1c4] sm:$0xf]
  %v199 = vld [vmem:[%s0 + $0x1c8] sm:$0xf]
  %v200 = vld [vmem:[%s0 + $0x1cc] sm:$0xf]
  %v201 = vld [vmem:[%s0 + $0x1d0] sm:$0xf]
  %v202 = vld [vmem:[%s0 + $0x1d4] sm:$0xf]
  %v203 = vld [vmem:[%s0 + $0x1d8] sm:$0xf]
  %v204 = vld [vmem:[%s0 + $0x1dc] sm:$0xf]
  %v205 = vld [vmem:[%s0 + $0x1e0] sm:$0xf]
  %v206 = vld [vmem:[%s0 + $0x1e4] sm:$0xf]
  %v207 = vld [vmem:[%s0 + $0x1e8] sm:$0xf]
  %v208 = vld [vmem:[%s0 + $0x1ec] sm:$0xf]
  %v209 = vld [vmem:[%s0 + $0x1f0] sm:$0xf]
  %v210 = vld [vmem:[%s0 + $0x1f4] sm:$0xf]
  %v211 = vld [vmem:[%s0 + $0x1f8] sm:$0xf]
  %v212 = vld [vmem:[%s0 + $0x1fc] sm:$0xf]
  %v213 = vld [vmem:[%s0 + $0x200] sm:$0xf]
  %v214 = vld [vmem:[%s0 + $0x204] sm:$0xf]
  %v215 = vld [vmem:[%s0 + $0x208] sm:$0xf]
  %v216 = vld [vmem:[%s0 + $0x20c] sm:$0xf]
  %v217 = vld [vmem:[%s0 + $0x210] sm:$0xf]
  %v218 = vld [vmem:[%s0 + $0x214] sm:$0xf]
  %v219 = vld [vmem:[%s0 + $0x218] sm:$0xf]
  %v220 = vld [vmem:[%s0 + $0x21c] sm:$0xf]
  %v221 = vld [vmem:[%s0 + $0x220] sm:$0xf]
  %v222 = vld [vmem:[%s0 + $0x224] sm:$0xf]
  %v223 = vld [vmem:[%s0 + $0x228] sm:$0xf]
  %v224 = vld [vmem:[%s0 + $0x22c] sm:$0xf]
  %v225 = vld [vmem:[%s0 + $0x230] sm:$0xf]
  %v226 = vld [vmem:[%s0 + $0x234] sm:$0xf]
  %v227 = vld [vmem:[%s0 + $0x238] sm:$0xf]
  %v228 = vld [vmem:[%s0 + $0x23c] sm:$0xf]
  %v229 = vld [vmem:[%s0 + $0x240] sm:$0xf]
  %v230 = vld [vmem:[%s0 + $0x244] sm:$0xf]
  %v231 = vld [vmem:[%s0 + $0x248] sm:$0xf]
  %v232 = vld [vmem:[%s0 + $0x24c] sm:$0xf]
  %v233 = vld [vmem:[%s0 + $0x250] sm:$0xf]
  %v234 = vld [vmem:[%s0 + $0x254] sm:$0xf]
  %v235 = vld [vmem:[%s0 + $0x258] sm:$0xf]
  %v236 = vld [vmem:[%s0 + $0x25c] sm:$0xf]
  %v237 = vld [vmem:[%s0 + $0x260] sm:$0xf]
  %v238 = vld [vmem:[%s0 + $0x264] sm:$0xf]
  %v239 = vld [vmem:[%s0 + $0x268] sm:$0xf]
  %v240 = vld [vmem:[%s0 + $0x26c] sm:$0xf]
  %v241 = vld [vmem:[%s0 + $0x270] sm:$0xf]
  %v242 = vld [vmem:[%s0 + $0x274] sm:$0xf]
  %v243 = vld [vmem:[%s0 + $0x278] sm:$0xf]
  %v244 = vld [vmem:[%s0 + $0x27c] sm:$0xf]
  %v245 = vld [vmem:[%s0 + $0x280] sm:$0xf]
  %v246 = vld [vmem:[%s0 + $0x284] sm:$0xf]
  %v247 = vld [vmem:[%s0 + $0x288] sm:$0xf]
  %v248 = vld [vmem:[%s0 + $0x28c] sm:$0xf]
  %v249 = vld [vmem:[%s0 + $0x290] sm:$0xf]
  %v250 = vld [vmem:[%s0 + $0x294] sm:$0xf]
  %v251 = vld [vmem:[%s0 + $0x298] sm:$0xf]
  %v252 = vld [vmem:[%s0 + $0x29c] sm:$0xf]
  %v253 = vld [vmem:[%s0 + $0x2a0] sm:$0xf]
  %v254 = vld [vmem:[%s0 + $0x2a4] sm:$0xf]
  %v255 = vld [vmem:[%s0 + $0x2a8] sm:$0xf]
  %v256 = vld [vmem:[%s0 + $0x2ac] sm:$0xf]
  %v257 = vld [vmem:[%s0 + $0x2b0] sm:$0xf]
  %v258 = vld [vmem:[%s0 + $0x2b4] sm:$0xf]
  %v259 = vld [vmem:[%s0 + $0x2b8] sm:$0xf]
  %v260 = vld [vmem:[%s0 + $0x2bc] sm:$0xf]
  %v261 = vld [vmem:[%s0 + $0x2c0] sm:$0xf]
  %v262 = vld [vmem:[%s0 + $0x2c4] sm:$0xf]
  %v263 = vld [vmem:[%s0 + $0x2c8] sm:$0xf]
  %v264 = vld [vmem:[%s0 + $0x2cc] sm:$0xf]
  %v265 = vld [vmem:[%s0 + $0x2d0] sm:$0xf]
  %v266 = vld [vmem:[%s0 + $0x2d4] sm:$0xf]
  %v267 = vld [vmem:[%s0 + $0x2d8] sm:$0xf]
  %v268 = vld [vmem:[%s0 + $0x2dc] sm:$0xf]
  %v269 = vld [vmem:[%s0 + $0x2e0] sm:$0xf]
  %v270 = vld [vmem:[%s0 + $0x2e4] sm:$0xf]
  %v271 = vld [vmem:[%s0 + $0x2e8] sm:$0xf]
  %v272 = vld [vmem:[%s0 + $0x2ec] sm:$0xf]
  %v273 = vld [vmem:[%s0 + $0x2f0] sm:$0xf]
  %v274 = vld [vmem:[%s0 + $0x2f4] sm:$0xf]
  %v275 = vld [vmem:[%s0 + $0x2f8] sm:$0xf]
  %v276 = vld [vmem:[%s0 + $0x2fc] sm:$0xf]
  %v277 = vld [vmem:[%s0 + $0x300] sm:$0xf]
  %v278 = vld [vmem:[%s0 + $0x304] sm:$0xf]
  %v279 = vld [vmem:[%s0 + $0x308] sm:$0xf]
  %v280 = vld [vmem:[%s0 + $0x30c] sm:$0xf]
  %v281 = vld [vmem:[%s0 + $0x310] sm:$0xf]
  %v282 = vld [vmem:[%s0 + $0x314] sm:$0xf]
  %v283 = vld [vmem:[%s0 + $0x318] sm:$0xf]
  %v284 = vld [vmem:[%s0 + $0x31c] sm:$0xf]
  %v285 = vld [vmem:[%s0 + $0x320] sm:$0xf]
  %v286 = vld [vmem:[%s0 + $0x324] sm:$0xf]
  %v287 = vld [vmem:[%s0 + $0x328] sm:$0xf]
  %v288 = vld [vmem:[%s0 + $0x32c] sm:$0xf]
  %v289 = vld [vmem:[%s0 + $0x330] sm:$0xf]
  %v290 = vld [vmem:[%s0 + $0x334] sm:$0xf]
  %v291 = vld [vmem:[%s0 + $0x338] sm:$0xf]
  %v292 = vld [vmem:[%s0 + $0x33c] sm:$0xf]
  %v293 = vld [vmem:[%s0 + $0x340] sm:$0xf]
  %v294 = vld [vmem:[%s0 + $0x344] sm:$0xf]
  %v295 = vld [vmem:[%s0 + $0x348] sm:$0xf]
  %v296 = vld [vmem:[%s0 + $0x34c] sm:$0xf]
  %v297 = vld [vmem:[%s0 + $0x350] sm:$0xf]
  %v298 = vld [vmem:[%s0 + $0x354] sm:$0xf]
  %v299 = vld [vmem:[%s0 + $0x358] sm:$0xf]
  %v300 = vld [vmem:[%s0 + $0x35c] sm:$0xf]
  %v301 = vld [vmem:[%s0 + $0x360] sm:$0xf]
  %v302 = vld [vmem:[%s0 + $0x364] sm:$0xf]
  %v303 = vld [vmem:[%s0 + $0x368] sm:$0xf]
  %v304 = vld [vmem:[%s0 + $0x36c] sm:$0xf]
  %v305 = vld [vmem:[%s0 + $0x370] sm:$0xf]
  %v306 = vld [vmem:[%s0 + $0x374] sm:$0xf]
  %v307 = vld [vmem:[%s0 + $0x378] sm:$0xf]
  %v308 = vld [vmem:[%s0 + $0x37c] sm:$0xf]
  %v309 = vld [vmem:[%s0 + $0x380] sm:$0xf]
  %v310 = vld [vmem:[%s0 + $0x384] sm:$0xf]
  %v311 = vld [vmem:[%s0 + $0x388] sm:$0xf]
  %v312 = vld [vmem:[%s0 + $0x38c] sm:$0xf]
  %v313 = vld [vmem:[%s0 + $0x390] sm:$0xf]
  %v314 = vld [vmem:[%s0 + $0x394] sm:$0xf]
  %v315 = vld [vmem:[%s0 + $0x398] sm:$0xf]
  %v316 = vld [vmem:[%s0 + $0x39c] sm:$0xf]
  %v317 = vld [vmem:[%s0 + $0x3a0] sm:$0xf]
  %v318 = vld [vmem:[%s0 + $0x3a4] sm:$0xf]
  %v319 = vld [vmem:[%s0 + $0x3a8] sm:$0xf]
  %v320 = vld [vmem:[%s0 + $0x3ac] sm:$0xf]
  %v321 = vld [vmem:[%s0 + $0x3b0] sm:$0xf]
  %v322 = vld [vmem:[%s0 + $0x3b4] sm:$0xf]
  %v323 = vld [vmem:[%s0 + $0x3b8] sm:$0xf]
  %v324 = vld [vmem:[%s0 + $0x3bc] sm:$0xf]
  %v325 = vld [vmem:[%s0 + $0x3c0] sm:$0xf]
  %v326 = vld [vmem:[%s0 + $0x3c4] sm:$0xf]
  %v327 = vld [vmem:[%s0 + $0x3c8] sm:$0xf]
  %v328 = vld [vmem:[%s0 + $0x3cc] sm:$0xf]
  %v329 = vld [vmem:[%s0 + $0x3d0] sm:$0xf]
  %v330 = vld [vmem:[%s0 + $0x3d4] sm:$0xf]
  %v331 = vld [vmem:[%s0 + $0x3d8] sm:$0xf]
  %v332 = vld [vmem:[%s0 + $0x3dc] sm:$0xf]
  %v333 = vld [vmem:[%s0 + $0x3e0] sm:$0xf]
  %v334 = vld [vmem:[%s0 + $0x3e4] sm:$0xf]
  %v335 = vld [vmem:[%s0 + $0x3e8] sm:$0xf]
  %v336 = vld [vmem:[%s0 + $0x3ec] sm:$0xf]
  %v337 = vld [vmem:[%s0 + $0x3f0] sm:$0xf]
  %v338 = vld [vmem:[%s0 + $0x3f4] sm:$0xf]
  %v339 = vld [vmem:[%s0 + $0x3f8] sm:$0xf]
  %v340 = vld [vmem:[%s0 + $0x3fc] sm:$0xf]
  %v341 = vld [vmem:[%s0 + $0x400] sm:$0xf]
  %v342 = vld [vmem:[%s0 + $0x404] sm:$0xf]
  %v343 = vld [vmem:[%s0 + $0x408] sm:$0xf]
  %v344 = vld [vmem:[%s0 + $0x40c] sm:$0xf]
  %v345 = vld [vmem:[%s0 + $0x410] sm:$0xf]
  %v346 = vld [vmem:[%s0 + $0x414] sm:$0xf]
  %v347 = vld [vmem:[%s0 + $0x418] sm:$0xf]
  %v348 = vld [vmem:[%s0 + $0x41c] sm:$0xf]
  %v349 = vld [vmem:[%s0 + $0x420] sm:$0xf]
  %v350 = vld [vmem:[%s0 + $0x424] sm:$0xf]
  %v351 = vld [vmem:[%s0 + $0x428] sm:$0xf]
  %v352 = vld [vmem:[%s0 + $0x42c] sm:$0xf]
  %v353 = vld [vmem:[%s0 + $0x430] sm:$0xf]
  %v354 = vld [vmem:[%s0 + $0x434] sm:$0xf]
  %v355 = vld [vmem:[%s0 + $0x438] sm:$0xf]
  %v356 = vld [vmem:[%s0 + $0x43c] sm:$0xf]
  %v357 = vld [vmem:[%s0 + $0x440] sm:$0xf]
  %v358 = vld [vmem:[%s0 + $0x444] sm:$0xf]
  %v359 = vld [vmem:[%s0 + $0x448] sm:$0xf]
  %v360 = vld [vmem:[%s0 + $0x44c] sm:$0xf]
  %v361 = vld [vmem:[%s0 + $0x450] sm:$0xf]
  %v362 = vld [vmem:[%s0 + $0x454] sm:$0xf]
  %v363 = vld [vmem:[%s0 + $0x458] sm:$0xf]
  %v364 = vld [vmem:[%s0 + $0x45c] sm:$0xf]
  %v365 = vld [vmem:[%s0 + $0x460] sm:$0xf]
  %v366 = vld [vmem:[%s0 + $0x464] sm:$0xf]
  %v367 = vld [vmem:[%s0 + $0x468] sm:$0xf]
  %v368 = vld [vmem:[%s0 + $0x46c] sm:$0xf]
  %v369 = vld [vmem:[%s0 + $0x470] sm:$0xf]
  %v370 = vld [vmem:[%s0 + $0x474] sm:$0xf]
  %v371 = vld [vmem:[%s0 + $0x478] sm:$0xf]
  %v372 = vld [vmem:[%s0 + $0x47c] sm:$0xf]
  %v373 = vld [vmem:[%s0 + $0x480] sm:$0xf]
  %v374 = vld [vmem:[%s0 + $0x484] sm:$0xf]
  %v375 = vld [vmem:[%s0 + $0x488] sm:$0xf]
  %v376 = vld [vmem:[%s0 + $0x48c] sm:$0xf]
  %v377 = vld [vmem:[%s0 + $0x490] sm:$0xf]
  %v378 = vld [vmem:[%s0 + $0x494] sm:$0xf]
  %v379 = vld [vmem:[%s0 + $0x498] sm:$0xf]
  %v380 = vld [vmem:[%s0 + $0x49c] sm:$0xf]
  %v381 = vld [vmem:[%s0 + $0x4a0] sm:$0xf]
  %v382 = vld [vmem:[%s0 + $0x4a4] sm:$0xf]
  %v383 = vld [vmem:[%s0 + $0x4a8] sm:$0xf]
  %v384 = vld [vmem:[%s0 + $0x4ac] sm:$0xf]
  %v385 = vld [vmem:[%s0 + $0x4b0] sm:$0xf]
  %v386 = vld [vmem:[%s0 + $0x4b4] sm:$0xf]
  %v387 = vld [vmem:[%s0 + $0x4b8] sm:$0xf]
  %v388 = vld [vmem:[%s0 + $0x4bc] sm:$0xf]
  %v389 = vld [vmem:[%s0 + $0x4c0] sm:$0xf]
  %v390 = vld [vmem:[%s0 + $0x4c4] sm:$0xf]
  %v391 = vld [vmem:[%s0 + $0x4c8] sm:$0xf]
  %v392 = vld [vmem:[%s0 + $0x4cc] sm:$0xf]
  %v393 = vld [vmem:[%s0 + $0x4d0] sm:$0xf]
  %v394 = vld [vmem:[%s0 + $0x4d4] sm:$0xf]
  %v395 = vld [vmem:[%s0 + $0x4d8] sm:$0xf]
  %v396 = vld [vmem:[%s0 + $0x4dc] sm:$0xf]
  %v397 = vld [vmem:[%s0 + $0x4e0] sm:$0xf]
  %v398 = vld [vmem:[%s0 + $0x4e4] sm:$0xf]
  %v399 = vld [vmem:[%s0 + $0x4e8] sm:$0xf]
  %v400 = vld [vmem:[%s0 + $0x4ec] sm:$0xf]
  %v401 = vld [vmem:[%s0 + $0x4f0] sm:$0xf]
  %v402 = vld [vmem:[%s0 + $0x4f4] sm:$0xf]
  %v403 = vld [vmem:[%s0 + $0x4f8] sm:$0xf]
  %v404 = vld [vmem:[%s0 + $0x4fc] sm:$0xf]
  %v405 = vld [vmem:[%s0 + $0x500] sm:$0xf]
  %v406 = vld [vmem:[%s0 + $0x504] sm:$0xf]
  %v407 = vld [vmem:[%s0 + $0x508] sm:$0xf]
  %v408 = vld [vmem:[%s0 + $0x50c] sm:$0xf]
  %v409 = vld [vmem:[%s0 + $0x510] sm:$0xf]
  %v410 = vld [vmem:[%s0 + $0x514] sm:$0xf]
  %v411 = vld [vmem:[%s0 + $0x518] sm:$0xf]
  %v412 = vld [vmem:[%s0 + $0x51c] sm:$0xf]
  %v413 = vld [vmem:[%s0 + $0x520] sm:$0xf]
  %v414 = vld [vmem:[%s0 + $0x524] sm:$0xf]
  %v415 = vld [vmem:[%s0 + $0x528] sm:$0xf]
  %v416 = vld [vmem:[%s0 + $0x52c] sm:$0xf]
  %v417 = vld [vmem:[%s0 + $0x530] sm:$0xf]
  %v418 = vld [vmem:[%s0 + $0x534] sm:$0xf]
  %v419 = vld [vmem:[%s0 + $0x538] sm:$0xf]
  %v420 = vld [vmem:[%s0 + $0x53c] sm:$0xf]
  %v421 = vld [vmem:[%s0 + $0x540] sm:$0xf]
  %v422 = vld [vmem:[%s0 + $0x544] sm:$0xf]
  %v423 = vld [vmem:[%s0 + $0x548] sm:$0xf]
  %v424 = vld [vmem:[%s0 + $0x54c] sm:$0xf]
  %v425 = vld [vmem:[%s0 + $0x550] sm:$0xf]
  %v426 = vld [vmem:[%s0 + $0x554] sm:$0xf]
  %v427 = vld [vmem:[%s0 + $0x558] sm:$0xf]
  %v428 = vld [vmem:[%s0 + $0x55c] sm:$0xf]
  %v429 = vld [vmem:[%s0 + $0x560] sm:$0xf]
  %v430 = vld [vmem:[%s0 + $0x564] sm:$0xf]
  %v431 = vld [vmem:[%s0 + $0x568] sm:$0xf]
  %v432 = vld [vmem:[%s0 + $0x56c] sm:$0xf]
  %v433 = vld [vmem:[%s0 + $0x570] sm:$0xf]
  %v434 = vld [vmem:[%s0 + $0x574] sm:$0xf]
  %v435 = vld [vmem:[%s0 + $0x578] sm:$0xf]
  %v436 = vld [vmem:[%s0 + $0x57c] sm:$0xf]
  %v437 = vld [vmem:[%s0 + $0x580] sm:$0xf]
  %v438 = vld [vmem:[%s0 + $0x584] sm:$0xf]
  %v439 = vld [vmem:[%s0 + $0x588] sm:$0xf]
  %v440 = vld [vmem:[%s0 + $0x58c] sm:$0xf]
  %v441 = vld [vmem:[%s0 + $0x590] sm:$0xf]
  %v442 = vld [vmem:[%s0 + $0x594] sm:$0xf]
  %v443 = vld [vmem:[%s0 + $0x598] sm:$0xf]
  %v444 = vld [vmem:[%s0 + $0x59c] sm:$0xf]
  %v445 = vld [vmem:[%s0 + $0x5a0] sm:$0xf]
  %v446 = vld [vmem:[%s0 + $0x5a4] sm:$0xf]
  %v447 = vld [vmem:[%s0 + $0x5a8] sm:$0xf]
  %v448 = vld [vmem:[%s0 + $0x5ac] sm:$0xf]
  %v449 = vld [vmem:[%s0 + $0x5b0] sm:$0xf]
  %v450 = vld [vmem:[%s0 + $0x5b4] sm:$0xf]
  %v451 = vld [vmem:[%s0 + $0x5b8] sm:$0xf]
  %v452 = vld [vmem:[%s0 + $0x5bc] sm:$0xf]
  %v453 = vld [vmem:[%s0 + $0x5c0] sm:$0xf]
  %v454 = vld [vmem:[%s0 + $0x5c4] sm:$0xf]
  %v455 = vld [vmem:[%s0 + $0x5c8] sm:$0xf]
  %v456 = vld [vmem:[%s0 + $0x5cc] sm:$0xf]
  %v457 = vld [vmem:[%s0 + $0x5d0] sm:$0xf]
  %v458 = vld [vmem:[%s0 + $0x5d4] sm:$0xf]
  %v459 = vld [vmem:[%s0 + $0x5d8] sm:$0xf]
  %v460 = vld [vmem:[%s0 + $0x5dc] sm:$0xf]
  %v461 = vld [vmem:[%s0 + $0x5e0] sm:$0xf]
  %v462 = vld [vmem:[%s0 + $0x5e4] sm:$0xf]
  %v463 = vld [vmem:[%s0 + $0x5e8] sm:$0xf]
  %v464 = vld [vmem:[%s0 + $0x5ec] sm:$0xf]
  %v465 = vld [vmem:[%s0 + $0x5f0] sm:$0xf]
  %v466 = vld [vmem:[%s0 + $0x5f4] sm:$0xf]
  %v467 = vld [vmem:[%s0 + $0x5f8] sm:$0xf]
  %v468 = vld [vmem:[%s0 + $0x5fc] sm:$0xf]
  %v469 = vld [vmem:[%s0 + $0x600] sm:$0xf]
  %v470 = vld [vmem:[%s0 + $0x604] sm:$0xf]
  %v471 = vld [vmem:[%s0 + $0x608] sm:$0xf]
  %v472 = vld [vmem:[%s0 + $0x60c] sm:$0xf]
  %v473 = vld [vmem:[%s0 + $0x610] sm:$0xf]
  %v474 = vld [vmem:[%s0 + $0x614] sm:$0xf]
  %v475 = vld [vmem:[%s0 + $0x618] sm:$0xf]
  %v476 = vld [vmem:[%s0 + $0x61c] sm:$0xf]
  %v477 = vld [vmem:[%s0 + $0x620] sm:$0xf]
  %v478 = vld [vmem:[%s0 + $0x624] sm:$0xf]
  %v479 = vld [vmem:[%s0 + $0x628] sm:$0xf]
  %v480 = vld [vmem:[%s0 + $0x62c] sm:$0xf]
  %v481 = vld [vmem:[%s0 + $0x630] sm:$0xf]
  %v482 = vld [vmem:[%s0 + $0x634] sm:$0xf]
  %v483 = vld [vmem:[%s0 + $0x638] sm:$0xf]
  %v484 = vld [vmem:[%s0 + $0x63c] sm:$0xf]
  %v485 = vld [vmem:[%s0 + $0x640] sm:$0xf]
  %v486 = vld [vmem:[%s0 + $0x644] sm:$0xf]
  %v487 = vld [vmem:[%s0 + $0x648] sm:$0xf]
  %v488 = vld [vmem:[%s0 + $0x64c] sm:$0xf]
  %v489 = vld [vmem:[%s0 + $0x650] sm:$0xf]
  %v490 = vld [vmem:[%s0 + $0x654] sm:$0xf]
  %v491 = vld [vmem:[%s0 + $0x658] sm:$0xf]
  %v492 = vld [vmem:[%s0 + $0x65c] sm:$0xf]
  %v493 = vld [vmem:[%s0 + $0x660] sm:$0xf]
  %v494 = vld [vmem:[%s0 + $0x664] sm:$0xf]
  %v495 = vld [vmem:[%s0 + $0x668] sm:$0xf]
  %v496 = vld [vmem:[%s0 + $0x66c] sm:$0xf]
  %v497 = vld [vmem:[%s0 + $0x670] sm:$0xf]
  %v498 = vld [vmem:[%s0 + $0x674] sm:$0xf]
  %v499 = vld [vmem:[%s0 + $0x678] sm:$0xf]
  %v500 = vld [vmem:[%s0 + $0x67c] sm:$0xf]
  %v501 = vld [vmem:[%s0 + $0x680] sm:$0xf]
  %v502 = vld [vmem:[%s0 + $0x684] sm:$0xf]
  %v503 = vld [vmem:[%s0 + $0x688] sm:$0xf]
  %v504 = vld [vmem:[%s0 + $0x68c] sm:$0xf]
  %v505 = vld [vmem:[%s0 + $0x690] sm:$0xf]
  %v506 = vld [vmem:[%s0 + $0x694] sm:$0xf]
  %v507 = vld [vmem:[%s0 + $0x698] sm:$0xf]
  %v508 = vld [vmem:[%s0 + $0x69c] sm:$0xf]
  %v509 = vld [vmem:[%s0 + $0x6a0] sm:$0xf]
  %v510 = vld [vmem:[%s0 + $0x6a4] sm:$0xf]
  %v511 = vld [vmem:[%s0 + $0x6a8] sm:$0xf]
  %v512 = vld [vmem:[%s0 + $0x6ac] sm:$0xf]
  %v513 = vld [vmem:[%s0 + $0x6b0] sm:$0xf]
  %v514 = vld [vmem:[%s0 + $0x6b4] sm:$0xf]
  %v515 = vld [vmem:[%s0 + $0x6b8] sm:$0xf]
  %v516 = vld [vmem:[%s0 + $0x6bc] sm:$0xf]
  %v517 = vld [vmem:[%s0 + $0x6c0] sm:$0xf]
  %v518 = vld [vmem:[%s0 + $0x6c4] sm:$0xf]
  %v519 = vld [vmem:[%s0 + $0x6c8] sm:$0xf]
  %v520 = vld [vmem:[%s0 + $0x6cc] sm:$0xf]
  %v521 = vld [vmem:[%s0 + $0x6d0] sm:$0xf]
  %v522 = vld [vmem:[%s0 + $0x6d4] sm:$0xf]
  %v523 = vld [vmem:[%s0 + $0x6d8] sm:$0xf]
  %v524 = vld [vmem:[%s0 + $0x6dc] sm:$0xf]
  %v525 = vld [vmem:[%s0 + $0x6e0] sm:$0xf]
  %v526 = vld [vmem:[%s0 + $0x6e4] sm:$0xf]
  %v527 = vld [vmem:[%s0 + $0x6e8] sm:$0xf]
  %v528 = vld [vmem:[%s0 + $0x6ec] sm:$0xf]
  %v529 = vld [vmem:[%s0 + $0x6f0] sm:$0xf]
  %v530 = vld [vmem:[%s0 + $0x6f4] sm:$0xf]
  %v531 = vld [vmem:[%s0 + $0x6f8] sm:$0xf]
  %v532 = vld [vmem:[%s0 + $0x6fc] sm:$0xf]
  %v533 = vld [vmem:[%s0 + $0x700] sm:$0xf]
  %v534 = vld [vmem:[%s0 + $0x704] sm:$0xf]
  %v535 = vld [vmem:[%s0 + $0x708] sm:$0xf]
  %v536 = vld [vmem:[%s0 + $0x70c] sm:$0xf]
  %v537 = vld [vmem:[%s0 + $0x710] sm:$0xf]
  %v538 = vld [vmem:[%s0 + $0x714] sm:$0xf]
  %v539 = vld [vmem:[%s0 + $0x718] sm:$0xf]
  %v540 = vld [vmem:[%s0 + $0x71c] sm:$0xf]
  %v541 = vld [vmem:[%s0 + $0x720] sm:$0xf]
  %v542 = vld [vmem:[%s0 + $0x724] sm:$0xf]
  %v543 = vld [vmem:[%s0 + $0x728] sm:$0xf]
  %v544 = vld [vmem:[%s0 + $0x72c] sm:$0xf]
  %v545 = vld [vmem:[%s0 + $0x730] sm:$0xf]
  %v546 = vld [vmem:[%s0 + $0x734] sm:$0xf]
  %v547 = vld [vmem:[%s0 + $0x738] sm:$0xf]
  %v548 = vld [vmem:[%s0 + $0x73c] sm:$0xf]
  %v549 = vld [vmem:[%s0 + $0x740] sm:$0xf]
  %v550 = vld [vmem:[%s0 + $0x744] sm:$0xf]
  %v551 = vld [vmem:[%s0 + $0x748] sm:$0xf]
  %v552 = vld [vmem:[%s0 + $0x74c] sm:$0xf]
  %v553 = vld [vmem:[%s0 + $0x750] sm:$0xf]
  %v554 = vld [vmem:[%s0 + $0x754] sm:$0xf]
  %v555 = vld [vmem:[%s0 + $0x758] sm:$0xf]
  %v556 = vld [vmem:[%s0 + $0x75c] sm:$0xf]
  %v557 = vld [vmem:[%s0 + $0x760] sm:$0xf]
  %v558 = vld [vmem:[%s0 + $0x764] sm:$0xf]
  %v559 = vld [vmem:[%s0 + $0x768] sm:$0xf]
  %v560 = vld [vmem:[%s0 + $0x76c] sm:$0xf]
  %v561 = vld [vmem:[%s0 + $0x770] sm:$0xf]
  %v562 = vld [vmem:[%s0 + $0x774] sm:$0xf]
  %v563 = vld [vmem:[%s0 + $0x778] sm:$0xf]
  %v564 = vld [vmem:[%s0 + $0x77c] sm:$0xf]
  %v565 = vld [vmem:[%s0 + $0x780] sm:$0xf]
  %v566 = vld [vmem:[%s0 + $0x784] sm:$0xf]
  %v567 = vld [vmem:[%s0 + $0x788] sm:$0xf]
  %v568 = vld [vmem:[%s0 + $0x78c] sm:$0xf]
  %v569 = vld [vmem:[%s0 + $0x790] sm:$0xf]
  %v570 = vld [vmem:[%s0 + $0x794] sm:$0xf]
  %v571 = vld [vmem:[%s0 + $0x798] sm:$0xf]
  %v572 = vld [vmem:[%s0 + $0x79c] sm:$0xf]
  %v573 = vld [vmem:[%s0 + $0x7a0] sm:$0xf]
  %v574 = vld [vmem:[%s0 + $0x7a4] sm:$0xf]
  %v575 = vld [vmem:[%s0 + $0x7a8] sm:$0xf]
  %v576 = vld [vmem:[%s0 + $0x7ac] sm:$0xf]
  %v577 = vld [vmem:[%s0 + $0x7b0] sm:$0xf]
  %v578 = vld [vmem:[%s0 + $0x7b4] sm:$0xf]
  %v579 = vld [vmem:[%s0 + $0x7b8] sm:$0xf]
  %v580 = vld [vmem:[%s0 + $0x7bc] sm:$0xf]
  %v581 = vld [vmem:[%s0 + $0x7c0] sm:$0xf]
  %v582 = vld [vmem:[%s0 + $0x7c4] sm:$0xf]
  %v583 = vld [vmem:[%s0 + $0x7c8] sm:$0xf]
  %v584 = vld [vmem:[%s0 + $0x7cc] sm:$0xf]
  %v585 = vld [vmem:[%s0 + $0x7d0] sm:$0xf]
  %v586 = vld [vmem:[%s0 + $0x7d4] sm:$0xf]
  %v587 = vld [vmem:[%s0 + $0x7d8] sm:$0xf]
  %v588 = vld [vmem:[%s0 + $0x7dc] sm:$0xf]
  %v589 = vld [vmem:[%s0 + $0x7e0] sm:$0xf]
  %v590 = vld [vmem:[%s0 + $0x7e4] sm:$0xf]
  %v591 = vld [vmem:[%s0 + $0x7e8] sm:$0xf]
  %v592 = vld [vmem:[%s0 + $0x7ec] sm:$0xf]
  %v593 = vld [vmem:[%s0 + $0x7f0] sm:$0xf]
  %v594 = vld [vmem:[%s0 + $0x7f4] sm:$0xf]
  %v595 = vld [vmem:[%s0 + $0x7f8] sm:$0xf]
  %v596 = vld [vmem:[%s0 + $0x7fc] sm:$0xf]
  %v597 = vld [vmem:[%s2] sm:$0xff]
  %v598 = vld [vmem:[%s2 + $0x8] sm:$0xff]
  %v599 = vld [vmem:[%s2 + $0x10] sm:$0xff]
  %v600 = vld [vmem:[%s2 + $0x18] sm:$0xff]
  %602 = vset.pattern.permute.xlu0 0
  %603 = vperm.xlu0 %602, %v597
  %v604 = vpop.permute.xlu0 %603
  %607 = vset.pattern.permute.xlu0 0
  %608 = vperm.xlu0 %607, %v598
  %v609 = vpop.permute.xlu0 %608
  %612 = vset.pattern.permute.xlu0 0
  %613 = vperm.xlu0 %612, %v599
  %v614 = vpop.permute.xlu0 %613
  %617 = vset.pattern.permute.xlu0 0
  %618 = vperm.xlu0 %617, %v600
  %v619 = vpop.permute.xlu0 %618
  %v685 = vunpack.c.l.b16 %v21
  %v686 = vunpack.c.h.b16 %v21
  %v687 = vunpack.c.l.b16 %v22
  %v688 = vunpack.c.h.b16 %v22
  %v689 = vunpack.c.l.b16 %v23
  %v690 = vunpack.c.h.b16 %v23
  %v691 = vunpack.c.l.b16 %v24
  %v692 = vunpack.c.h.b16 %v24
  %v693 = vunpack.c.l.b16 %v25
  %v694 = vunpack.c.h.b16 %v25
  %v695 = vunpack.c.l.b16 %v26
  %v696 = vunpack.c.h.b16 %v26
  %v697 = vunpack.c.l.b16 %v27
  %v698 = vunpack.c.h.b16 %v27
  %v699 = vunpack.c.l.b16 %v28
  %v700 = vunpack.c.h.b16 %v28
  %v701 = vunpack.c.l.b16 %v29
  %v702 = vunpack.c.h.b16 %v29
  %v703 = vunpack.c.l.b16 %v30
  %v704 = vunpack.c.h.b16 %v30
  %v705 = vunpack.c.l.b16 %v31
  %v706 = vunpack.c.h.b16 %v31
  %v707 = vunpack.c.l.b16 %v32
  %v708 = vunpack.c.h.b16 %v32
  %v709 = vunpack.c.l.b16 %v33
  %v710 = vunpack.c.h.b16 %v33
  %v711 = vunpack.c.l.b16 %v34
  %v712 = vunpack.c.h.b16 %v34
  %v713 = vunpack.c.l.b16 %v35
  %v714 = vunpack.c.h.b16 %v35
  %v715 = vunpack.c.l.b16 %v36
  %v716 = vunpack.c.h.b16 %v36
  %v717 = vunpack.c.l.b16 %v37
  %v718 = vunpack.c.h.b16 %v37
  %v719 = vunpack.c.l.b16 %v38
  %v720 = vunpack.c.h.b16 %v38
  %v721 = vunpack.c.l.b16 %v39
  %v722 = vunpack.c.h.b16 %v39
  %v723 = vunpack.c.l.b16 %v40
  %v724 = vunpack.c.h.b16 %v40
  %v725 = vunpack.c.l.b16 %v41
  %v726 = vunpack.c.h.b16 %v41
  %v727 = vunpack.c.l.b16 %v42
  %v728 = vunpack.c.h.b16 %v42
  %v729 = vunpack.c.l.b16 %v43
  %v730 = vunpack.c.h.b16 %v43
  %v731 = vunpack.c.l.b16 %v44
  %v732 = vunpack.c.h.b16 %v44
  %v733 = vunpack.c.l.b16 %v45
  %v734 = vunpack.c.h.b16 %v45
  %v735 = vunpack.c.l.b16 %v46
  %v736 = vunpack.c.h.b16 %v46
  %v737 = vunpack.c.l.b16 %v47
  %v738 = vunpack.c.h.b16 %v47
  %v739 = vunpack.c.l.b16 %v48
  %v740 = vunpack.c.h.b16 %v48
  %v741 = vunpack.c.l.b16 %v49
  %v742 = vunpack.c.h.b16 %v49
  %v743 = vunpack.c.l.b16 %v50
  %v744 = vunpack.c.h.b16 %v50
  %v745 = vunpack.c.l.b16 %v51
  %v746 = vunpack.c.h.b16 %v51
  %v747 = vunpack.c.l.b16 %v52
  %v748 = vunpack.c.h.b16 %v52
  %v749 = vunpack.c.l.b16 %v53
  %v750 = vunpack.c.h.b16 %v53
  %v751 = vunpack.c.l.b16 %v54
  %v752 = vunpack.c.h.b16 %v54
  %v753 = vunpack.c.l.b16 %v55
  %v754 = vunpack.c.h.b16 %v55
  %v755 = vunpack.c.l.b16 %v56
  %v756 = vunpack.c.h.b16 %v56
  %v757 = vunpack.c.l.b16 %v57
  %v758 = vunpack.c.h.b16 %v57
  %v759 = vunpack.c.l.b16 %v58
  %v760 = vunpack.c.h.b16 %v58
  %v761 = vunpack.c.l.b16 %v59
  %v762 = vunpack.c.h.b16 %v59
  %v763 = vunpack.c.l.b16 %v60
  %v764 = vunpack.c.h.b16 %v60
  %v765 = vunpack.c.l.b16 %v61
  %v766 = vunpack.c.h.b16 %v61
  %v767 = vunpack.c.l.b16 %v62
  %v768 = vunpack.c.h.b16 %v62
  %v769 = vunpack.c.l.b16 %v63
  %v770 = vunpack.c.h.b16 %v63
  %v771 = vunpack.c.l.b16 %v64
  %v772 = vunpack.c.h.b16 %v64
  %v773 = vunpack.c.l.b16 %v65
  %v774 = vunpack.c.h.b16 %v65
  %v775 = vunpack.c.l.b16 %v66
  %v776 = vunpack.c.h.b16 %v66
  %v777 = vunpack.c.l.b16 %v67
  %v778 = vunpack.c.h.b16 %v67
  %v779 = vunpack.c.l.b16 %v68
  %v780 = vunpack.c.h.b16 %v68
  %v781 = vunpack.c.l.b16 %v69
  %v782 = vunpack.c.h.b16 %v69
  %v783 = vunpack.c.l.b16 %v70
  %v784 = vunpack.c.h.b16 %v70
  %v785 = vunpack.c.l.b16 %v71
  %v786 = vunpack.c.h.b16 %v71
  %v787 = vunpack.c.l.b16 %v72
  %v788 = vunpack.c.h.b16 %v72
  %v789 = vunpack.c.l.b16 %v73
  %v790 = vunpack.c.h.b16 %v73
  %v791 = vunpack.c.l.b16 %v74
  %v792 = vunpack.c.h.b16 %v74
  %v793 = vunpack.c.l.b16 %v75
  %v794 = vunpack.c.h.b16 %v75
  %v795 = vunpack.c.l.b16 %v76
  %v796 = vunpack.c.h.b16 %v76
  %v797 = vunpack.c.l.b16 %v77
  %v798 = vunpack.c.h.b16 %v77
  %v799 = vunpack.c.l.b16 %v78
  %v800 = vunpack.c.h.b16 %v78
  %v801 = vunpack.c.l.b16 %v79
  %v802 = vunpack.c.h.b16 %v79
  %v803 = vunpack.c.l.b16 %v80
  %v804 = vunpack.c.h.b16 %v80
  %v805 = vunpack.c.l.b16 %v81
  %v806 = vunpack.c.h.b16 %v81
  %v807 = vunpack.c.l.b16 %v82
  %v808 = vunpack.c.h.b16 %v82
  %v809 = vunpack.c.l.b16 %v83
  %v810 = vunpack.c.h.b16 %v83
  %v811 = vunpack.c.l.b16 %v84
  %v812 = vunpack.c.h.b16 %v84
  %v813 = vpack.c.b16 %v717, %v685
  %v814 = vpack.c.b16 %v718, %v686
  %v815 = vpack.c.b16 %v719, %v687
  %v816 = vpack.c.b16 %v720, %v688
  %v817 = vpack.c.b16 %v721, %v689
  %v818 = vpack.c.b16 %v722, %v690
  %v819 = vpack.c.b16 %v723, %v691
  %v820 = vpack.c.b16 %v724, %v692
  %v821 = vpack.c.b16 %v725, %v693
  %v822 = vpack.c.b16 %v726, %v694
  %v823 = vpack.c.b16 %v727, %v695
  %v824 = vpack.c.b16 %v728, %v696
  %v825 = vpack.c.b16 %v729, %v697
  %v826 = vpack.c.b16 %v730, %v698
  %v827 = vpack.c.b16 %v731, %v699
  %v828 = vpack.c.b16 %v732, %v700
  %v829 = vpack.c.b16 %v733, %v701
  %v830 = vpack.c.b16 %v734, %v702
  %v831 = vpack.c.b16 %v735, %v703
  %v832 = vpack.c.b16 %v736, %v704
  %v833 = vpack.c.b16 %v737, %v705
  %v834 = vpack.c.b16 %v738, %v706
  %v835 = vpack.c.b16 %v739, %v707
  %v836 = vpack.c.b16 %v740, %v708
  %v837 = vpack.c.b16 %v741, %v709
  %v838 = vpack.c.b16 %v742, %v710
  %v839 = vpack.c.b16 %v743, %v711
  %v840 = vpack.c.b16 %v744, %v712
  %v841 = vpack.c.b16 %v745, %v713
  %v842 = vpack.c.b16 %v746, %v714
  %v843 = vpack.c.b16 %v747, %v715
  %v844 = vpack.c.b16 %v748, %v716
  %v845 = vpack.c.b16 %v781, %v749
  %v846 = vpack.c.b16 %v782, %v750
  %v847 = vpack.c.b16 %v783, %v751
  %v848 = vpack.c.b16 %v784, %v752
  %v849 = vpack.c.b16 %v785, %v753
  %v850 = vpack.c.b16 %v786, %v754
  %v851 = vpack.c.b16 %v787, %v755
  %v852 = vpack.c.b16 %v788, %v756
  %v853 = vpack.c.b16 %v789, %v757
  %v854 = vpack.c.b16 %v790, %v758
  %v855 = vpack.c.b16 %v791, %v759
  %v856 = vpack.c.b16 %v792, %v760
  %v857 = vpack.c.b16 %v793, %v761
  %v858 = vpack.c.b16 %v794, %v762
  %v859 = vpack.c.b16 %v795, %v763
  %v860 = vpack.c.b16 %v796, %v764
  %v861 = vpack.c.b16 %v797, %v765
  %v862 = vpack.c.b16 %v798, %v766
  %v863 = vpack.c.b16 %v799, %v767
  %v864 = vpack.c.b16 %v800, %v768
  %v865 = vpack.c.b16 %v801, %v769
  %v866 = vpack.c.b16 %v802, %v770
  %v867 = vpack.c.b16 %v803, %v771
  %v868 = vpack.c.b16 %v804, %v772
  %v869 = vpack.c.b16 %v805, %v773
  %v870 = vpack.c.b16 %v806, %v774
  %v871 = vpack.c.b16 %v807, %v775
  %v872 = vpack.c.b16 %v808, %v776
  %v873 = vpack.c.b16 %v809, %v777
  %v874 = vpack.c.b16 %v810, %v778
  %v875 = vpack.c.b16 %v811, %v779
  %v876 = vpack.c.b16 %v812, %v780
  %v1453 = vunpack.c.l.b16 %v85
  %v1454 = vunpack.c.l.b16 %v86
  %v1455 = vunpack.c.l.b16 %v87
  %v1456 = vunpack.c.l.b16 %v88
  %v1457 = vunpack.c.l.b16 %v89
  %v1458 = vunpack.c.l.b16 %v90
  %v1459 = vunpack.c.l.b16 %v91
  %v1460 = vunpack.c.l.b16 %v92
  %v1461 = vunpack.c.l.b16 %v93
  %v1462 = vunpack.c.l.b16 %v94
  %v1463 = vunpack.c.l.b16 %v95
  %v1464 = vunpack.c.l.b16 %v96
  %v1465 = vunpack.c.l.b16 %v97
  %v1466 = vunpack.c.l.b16 %v98
  %v1467 = vunpack.c.l.b16 %v99
  %v1468 = vunpack.c.l.b16 %v100
  %v1469 = vunpack.c.l.b16 %v101
  %v1470 = vunpack.c.l.b16 %v102
  %v1471 = vunpack.c.l.b16 %v103
  %v1472 = vunpack.c.l.b16 %v104
  %v1473 = vunpack.c.l.b16 %v105
  %v1474 = vunpack.c.l.b16 %v106
  %v1475 = vunpack.c.l.b16 %v107
  %v1476 = vunpack.c.l.b16 %v108
  %v1477 = vunpack.c.l.b16 %v109
  %v1478 = vunpack.c.l.b16 %v110
  %v1479 = vunpack.c.l.b16 %v111
  %v1480 = vunpack.c.l.b16 %v112
  %v1481 = vunpack.c.l.b16 %v113
  %v1482 = vunpack.c.l.b16 %v114
  %v1483 = vunpack.c.l.b16 %v115
  %v1484 = vunpack.c.l.b16 %v116
  %v1485 = vunpack.c.l.b16 %v117
  %v1486 = vunpack.c.l.b16 %v118
  %v1487 = vunpack.c.l.b16 %v119
  %v1488 = vunpack.c.l.b16 %v120
  %v1489 = vunpack.c.l.b16 %v121
  %v1490 = vunpack.c.l.b16 %v122
  %v1491 = vunpack.c.l.b16 %v123
  %v1492 = vunpack.c.l.b16 %v124
  %v1493 = vunpack.c.l.b16 %v125
  %v1494 = vunpack.c.l.b16 %v126
  %v1495 = vunpack.c.l.b16 %v127
  %v1496 = vunpack.c.l.b16 %v128
  %v1497 = vunpack.c.l.b16 %v129
  %v1498 = vunpack.c.l.b16 %v130
  %v1499 = vunpack.c.l.b16 %v131
  %v1500 = vunpack.c.l.b16 %v132
  %v1501 = vunpack.c.l.b16 %v133
  %v1502 = vunpack.c.l.b16 %v134
  %v1503 = vunpack.c.l.b16 %v135
  %v1504 = vunpack.c.l.b16 %v136
  %v1505 = vunpack.c.l.b16 %v137
  %v1506 = vunpack.c.l.b16 %v138
  %v1507 = vunpack.c.l.b16 %v139
  %v1508 = vunpack.c.l.b16 %v140
  %v1509 = vunpack.c.l.b16 %v141
  %v1510 = vunpack.c.l.b16 %v142
  %v1511 = vunpack.c.l.b16 %v143
  %v1512 = vunpack.c.l.b16 %v144
  %v1513 = vunpack.c.l.b16 %v145
  %v1514 = vunpack.c.l.b16 %v146
  %v1515 = vunpack.c.l.b16 %v147
  %v1516 = vunpack.c.l.b16 %v148
  %v1517 = vunpack.c.l.b16 %v149
  %v1518 = vunpack.c.l.b16 %v150
  %v1519 = vunpack.c.l.b16 %v151
  %v1520 = vunpack.c.l.b16 %v152
  %v1521 = vunpack.c.l.b16 %v153
  %v1522 = vunpack.c.l.b16 %v154
  %v1523 = vunpack.c.l.b16 %v155
  %v1524 = vunpack.c.l.b16 %v156
  %v1525 = vunpack.c.l.b16 %v157
  %v1526 = vunpack.c.l.b16 %v158
  %v1527 = vunpack.c.l.b16 %v159
  %v1528 = vunpack.c.l.b16 %v160
  %v1529 = vunpack.c.l.b16 %v161
  %v1530 = vunpack.c.l.b16 %v162
  %v1531 = vunpack.c.l.b16 %v163
  %v1532 = vunpack.c.l.b16 %v164
  %v1533 = vunpack.c.l.b16 %v165
  %v1534 = vunpack.c.l.b16 %v166
  %v1535 = vunpack.c.l.b16 %v167
  %v1536 = vunpack.c.l.b16 %v168
  %v1537 = vunpack.c.l.b16 %v169
  %v1538 = vunpack.c.l.b16 %v170
  %v1539 = vunpack.c.l.b16 %v171
  %v1540 = vunpack.c.l.b16 %v172
  %v1541 = vunpack.c.l.b16 %v173
  %v1542 = vunpack.c.l.b16 %v174
  %v1543 = vunpack.c.l.b16 %v175
  %v1544 = vunpack.c.l.b16 %v176
  %v1545 = vunpack.c.l.b16 %v177
  %v1546 = vunpack.c.l.b16 %v178
  %v1547 = vunpack.c.l.b16 %v179
  %v1548 = vunpack.c.l.b16 %v180
  %v1549 = vunpack.c.l.b16 %v181
  %v1550 = vunpack.c.l.b16 %v182
  %v1551 = vunpack.c.l.b16 %v183
  %v1552 = vunpack.c.l.b16 %v184
  %v1553 = vunpack.c.l.b16 %v185
  %v1554 = vunpack.c.l.b16 %v186
  %v1555 = vunpack.c.l.b16 %v187
  %v1556 = vunpack.c.l.b16 %v188
  %v1557 = vunpack.c.l.b16 %v189
  %v1558 = vunpack.c.l.b16 %v190
  %v1559 = vunpack.c.l.b16 %v191
  %v1560 = vunpack.c.l.b16 %v192
  %v1561 = vunpack.c.l.b16 %v193
  %v1562 = vunpack.c.l.b16 %v194
  %v1563 = vunpack.c.l.b16 %v195
  %v1564 = vunpack.c.l.b16 %v196
  %v1565 = vunpack.c.l.b16 %v197
  %v1566 = vunpack.c.l.b16 %v198
  %v1567 = vunpack.c.l.b16 %v199
  %v1568 = vunpack.c.l.b16 %v200
  %v1569 = vunpack.c.l.b16 %v201
  %v1570 = vunpack.c.l.b16 %v202
  %v1571 = vunpack.c.l.b16 %v203
  %v1572 = vunpack.c.l.b16 %v204
  %v1573 = vunpack.c.l.b16 %v205
  %v1574 = vunpack.c.l.b16 %v206
  %v1575 = vunpack.c.l.b16 %v207
  %v1576 = vunpack.c.l.b16 %v208
  %v1577 = vunpack.c.l.b16 %v209
  %v1578 = vunpack.c.l.b16 %v210
  %v1579 = vunpack.c.l.b16 %v211
  %v1580 = vunpack.c.l.b16 %v212
  %v1581 = vunpack.c.l.b16 %v213
  %v1582 = vunpack.c.l.b16 %v214
  %v1583 = vunpack.c.l.b16 %v215
  %v1584 = vunpack.c.l.b16 %v216
  %v1585 = vunpack.c.l.b16 %v217
  %v1586 = vunpack.c.l.b16 %v218
  %v1587 = vunpack.c.l.b16 %v219
  %v1588 = vunpack.c.l.b16 %v220
  %v1589 = vunpack.c.l.b16 %v221
  %v1590 = vunpack.c.l.b16 %v222
  %v1591 = vunpack.c.l.b16 %v223
  %v1592 = vunpack.c.l.b16 %v224
  %v1593 = vunpack.c.l.b16 %v225
  %v1594 = vunpack.c.l.b16 %v226
  %v1595 = vunpack.c.l.b16 %v227
  %v1596 = vunpack.c.l.b16 %v228
  %v1597 = vunpack.c.l.b16 %v229
  %v1598 = vunpack.c.l.b16 %v230
  %v1599 = vunpack.c.l.b16 %v231
  %v1600 = vunpack.c.l.b16 %v232
  %v1601 = vunpack.c.l.b16 %v233
  %v1602 = vunpack.c.l.b16 %v234
  %v1603 = vunpack.c.l.b16 %v235
  %v1604 = vunpack.c.l.b16 %v236
  %v1605 = vunpack.c.l.b16 %v237
  %v1606 = vunpack.c.l.b16 %v238
  %v1607 = vunpack.c.l.b16 %v239
  %v1608 = vunpack.c.l.b16 %v240
  %v1609 = vunpack.c.l.b16 %v241
  %v1610 = vunpack.c.l.b16 %v242
  %v1611 = vunpack.c.l.b16 %v243
  %v1612 = vunpack.c.l.b16 %v244
  %v1613 = vunpack.c.l.b16 %v245
  %v1614 = vunpack.c.l.b16 %v246
  %v1615 = vunpack.c.l.b16 %v247
  %v1616 = vunpack.c.l.b16 %v248
  %v1617 = vunpack.c.l.b16 %v249
  %v1618 = vunpack.c.l.b16 %v250
  %v1619 = vunpack.c.l.b16 %v251
  %v1620 = vunpack.c.l.b16 %v252
  %v1621 = vunpack.c.l.b16 %v253
  %v1622 = vunpack.c.l.b16 %v254
  %v1623 = vunpack.c.l.b16 %v255
  %v1624 = vunpack.c.l.b16 %v256
  %v1625 = vunpack.c.l.b16 %v257
  %v1626 = vunpack.c.l.b16 %v258
  %v1627 = vunpack.c.l.b16 %v259
  %v1628 = vunpack.c.l.b16 %v260
  %v1629 = vunpack.c.l.b16 %v261
  %v1630 = vunpack.c.l.b16 %v262
  %v1631 = vunpack.c.l.b16 %v263
  %v1632 = vunpack.c.l.b16 %v264
  %v1633 = vunpack.c.l.b16 %v265
  %v1634 = vunpack.c.l.b16 %v266
  %v1635 = vunpack.c.l.b16 %v267
  %v1636 = vunpack.c.l.b16 %v268
  %v1637 = vunpack.c.l.b16 %v269
  %v1638 = vunpack.c.l.b16 %v270
  %v1639 = vunpack.c.l.b16 %v271
  %v1640 = vunpack.c.l.b16 %v272
  %v1641 = vunpack.c.l.b16 %v273
  %v1642 = vunpack.c.l.b16 %v274
  %v1643 = vunpack.c.l.b16 %v275
  %v1644 = vunpack.c.l.b16 %v276
  %v1645 = vunpack.c.l.b16 %v277
  %v1646 = vunpack.c.l.b16 %v278
  %v1647 = vunpack.c.l.b16 %v279
  %v1648 = vunpack.c.l.b16 %v280
  %v1649 = vunpack.c.l.b16 %v281
  %v1650 = vunpack.c.l.b16 %v282
  %v1651 = vunpack.c.l.b16 %v283
  %v1652 = vunpack.c.l.b16 %v284
  %v1653 = vunpack.c.l.b16 %v285
  %v1654 = vunpack.c.l.b16 %v286
  %v1655 = vunpack.c.l.b16 %v287
  %v1656 = vunpack.c.l.b16 %v288
  %v1657 = vunpack.c.l.b16 %v289
  %v1658 = vunpack.c.l.b16 %v290
  %v1659 = vunpack.c.l.b16 %v291
  %v1660 = vunpack.c.l.b16 %v292
  %v1661 = vunpack.c.l.b16 %v293
  %v1662 = vunpack.c.l.b16 %v294
  %v1663 = vunpack.c.l.b16 %v295
  %v1664 = vunpack.c.l.b16 %v296
  %v1665 = vunpack.c.l.b16 %v297
  %v1666 = vunpack.c.l.b16 %v298
  %v1667 = vunpack.c.l.b16 %v299
  %v1668 = vunpack.c.l.b16 %v300
  %v1669 = vunpack.c.l.b16 %v301
  %v1670 = vunpack.c.l.b16 %v302
  %v1671 = vunpack.c.l.b16 %v303
  %v1672 = vunpack.c.l.b16 %v304
  %v1673 = vunpack.c.l.b16 %v305
  %v1674 = vunpack.c.l.b16 %v306
  %v1675 = vunpack.c.l.b16 %v307
  %v1676 = vunpack.c.l.b16 %v308
  %v1677 = vunpack.c.l.b16 %v309
  %v1678 = vunpack.c.l.b16 %v310
  %v1679 = vunpack.c.l.b16 %v311
  %v1680 = vunpack.c.l.b16 %v312
  %v1681 = vunpack.c.l.b16 %v313
  %v1682 = vunpack.c.l.b16 %v314
  %v1683 = vunpack.c.l.b16 %v315
  %v1684 = vunpack.c.l.b16 %v316
  %v1685 = vunpack.c.l.b16 %v317
  %v1686 = vunpack.c.l.b16 %v318
  %v1687 = vunpack.c.l.b16 %v319
  %v1688 = vunpack.c.l.b16 %v320
  %v1689 = vunpack.c.l.b16 %v321
  %v1690 = vunpack.c.l.b16 %v322
  %v1691 = vunpack.c.l.b16 %v323
  %v1692 = vunpack.c.l.b16 %v324
  %v1693 = vunpack.c.l.b16 %v325
  %v1694 = vunpack.c.l.b16 %v326
  %v1695 = vunpack.c.l.b16 %v327
  %v1696 = vunpack.c.l.b16 %v328
  %v1697 = vunpack.c.l.b16 %v329
  %v1698 = vunpack.c.l.b16 %v330
  %v1699 = vunpack.c.l.b16 %v331
  %v1700 = vunpack.c.l.b16 %v332
  %v1701 = vunpack.c.l.b16 %v333
  %v1702 = vunpack.c.l.b16 %v334
  %v1703 = vunpack.c.l.b16 %v335
  %v1704 = vunpack.c.l.b16 %v336
  %v1705 = vunpack.c.l.b16 %v337
  %v1706 = vunpack.c.l.b16 %v338
  %v1707 = vunpack.c.l.b16 %v339
  %v1708 = vunpack.c.l.b16 %v340
  %v1709 = vunpack.c.l.b16 %v341
  %v1710 = vunpack.c.l.b16 %v342
  %v1711 = vunpack.c.l.b16 %v343
  %v1712 = vunpack.c.l.b16 %v344
  %v1713 = vunpack.c.l.b16 %v345
  %v1714 = vunpack.c.l.b16 %v346
  %v1715 = vunpack.c.l.b16 %v347
  %v1716 = vunpack.c.l.b16 %v348
  %v1717 = vunpack.c.l.b16 %v349
  %v1718 = vunpack.c.l.b16 %v350
  %v1719 = vunpack.c.l.b16 %v351
  %v1720 = vunpack.c.l.b16 %v352
  %v1721 = vunpack.c.l.b16 %v353
  %v1722 = vunpack.c.l.b16 %v354
  %v1723 = vunpack.c.l.b16 %v355
  %v1724 = vunpack.c.l.b16 %v356
  %v1725 = vunpack.c.l.b16 %v357
  %v1726 = vunpack.c.l.b16 %v358
  %v1727 = vunpack.c.l.b16 %v359
  %v1728 = vunpack.c.l.b16 %v360
  %v1729 = vunpack.c.l.b16 %v361
  %v1730 = vunpack.c.l.b16 %v362
  %v1731 = vunpack.c.l.b16 %v363
  %v1732 = vunpack.c.l.b16 %v364
  %v1733 = vunpack.c.l.b16 %v365
  %v1734 = vunpack.c.l.b16 %v366
  %v1735 = vunpack.c.l.b16 %v367
  %v1736 = vunpack.c.l.b16 %v368
  %v1737 = vunpack.c.l.b16 %v369
  %v1738 = vunpack.c.l.b16 %v370
  %v1739 = vunpack.c.l.b16 %v371
  %v1740 = vunpack.c.l.b16 %v372
  %v1741 = vunpack.c.l.b16 %v373
  %v1742 = vunpack.c.l.b16 %v374
  %v1743 = vunpack.c.l.b16 %v375
  %v1744 = vunpack.c.l.b16 %v376
  %v1745 = vunpack.c.l.b16 %v377
  %v1746 = vunpack.c.l.b16 %v378
  %v1747 = vunpack.c.l.b16 %v379
  %v1748 = vunpack.c.l.b16 %v380
  %v1749 = vunpack.c.l.b16 %v381
  %v1750 = vunpack.c.l.b16 %v382
  %v1751 = vunpack.c.l.b16 %v383
  %v1752 = vunpack.c.l.b16 %v384
  %v1753 = vunpack.c.l.b16 %v385
  %v1754 = vunpack.c.l.b16 %v386
  %v1755 = vunpack.c.l.b16 %v387
  %v1756 = vunpack.c.l.b16 %v388
  %v1757 = vunpack.c.l.b16 %v389
  %v1758 = vunpack.c.l.b16 %v390
  %v1759 = vunpack.c.l.b16 %v391
  %v1760 = vunpack.c.l.b16 %v392
  %v1761 = vunpack.c.l.b16 %v393
  %v1762 = vunpack.c.l.b16 %v394
  %v1763 = vunpack.c.l.b16 %v395
  %v1764 = vunpack.c.l.b16 %v396
  %v1765 = vunpack.c.l.b16 %v397
  %v1766 = vunpack.c.l.b16 %v398
  %v1767 = vunpack.c.l.b16 %v399
  %v1768 = vunpack.c.l.b16 %v400
  %v1769 = vunpack.c.l.b16 %v401
  %v1770 = vunpack.c.l.b16 %v402
  %v1771 = vunpack.c.l.b16 %v403
  %v1772 = vunpack.c.l.b16 %v404
  %v1773 = vunpack.c.l.b16 %v405
  %v1774 = vunpack.c.l.b16 %v406
  %v1775 = vunpack.c.l.b16 %v407
  %v1776 = vunpack.c.l.b16 %v408
  %v1777 = vunpack.c.l.b16 %v409
  %v1778 = vunpack.c.l.b16 %v410
  %v1779 = vunpack.c.l.b16 %v411
  %v1780 = vunpack.c.l.b16 %v412
  %v1781 = vunpack.c.l.b16 %v413
  %v1782 = vunpack.c.l.b16 %v414
  %v1783 = vunpack.c.l.b16 %v415
  %v1784 = vunpack.c.l.b16 %v416
  %v1785 = vunpack.c.l.b16 %v417
  %v1786 = vunpack.c.l.b16 %v418
  %v1787 = vunpack.c.l.b16 %v419
  %v1788 = vunpack.c.l.b16 %v420
  %v1789 = vunpack.c.l.b16 %v421
  %v1790 = vunpack.c.l.b16 %v422
  %v1791 = vunpack.c.l.b16 %v423
  %v1792 = vunpack.c.l.b16 %v424
  %v1793 = vunpack.c.l.b16 %v425
  %v1794 = vunpack.c.l.b16 %v426
  %v1795 = vunpack.c.l.b16 %v427
  %v1796 = vunpack.c.l.b16 %v428
  %v1797 = vunpack.c.l.b16 %v429
  %v1798 = vunpack.c.l.b16 %v430
  %v1799 = vunpack.c.l.b16 %v431
  %v1800 = vunpack.c.l.b16 %v432
  %v1801 = vunpack.c.l.b16 %v433
  %v1802 = vunpack.c.l.b16 %v434
  %v1803 = vunpack.c.l.b16 %v435
  %v1804 = vunpack.c.l.b16 %v436
  %v1805 = vunpack.c.l.b16 %v437
  %v1806 = vunpack.c.l.b16 %v438
  %v1807 = vunpack.c.l.b16 %v439
  %v1808 = vunpack.c.l.b16 %v440
  %v1809 = vunpack.c.l.b16 %v441
  %v1810 = vunpack.c.l.b16 %v442
  %v1811 = vunpack.c.l.b16 %v443
  %v1812 = vunpack.c.l.b16 %v444
  %v1813 = vunpack.c.l.b16 %v445
  %v1814 = vunpack.c.l.b16 %v446
  %v1815 = vunpack.c.l.b16 %v447
  %v1816 = vunpack.c.l.b16 %v448
  %v1817 = vunpack.c.l.b16 %v449
  %v1818 = vunpack.c.l.b16 %v450
  %v1819 = vunpack.c.l.b16 %v451
  %v1820 = vunpack.c.l.b16 %v452
  %v1821 = vunpack.c.l.b16 %v453
  %v1822 = vunpack.c.l.b16 %v454
  %v1823 = vunpack.c.l.b16 %v455
  %v1824 = vunpack.c.l.b16 %v456
  %v1825 = vunpack.c.l.b16 %v457
  %v1826 = vunpack.c.l.b16 %v458
  %v1827 = vunpack.c.l.b16 %v459
  %v1828 = vunpack.c.l.b16 %v460
  %v1829 = vunpack.c.l.b16 %v461
  %v1830 = vunpack.c.l.b16 %v462
  %v1831 = vunpack.c.l.b16 %v463
  %v1832 = vunpack.c.l.b16 %v464
  %v1833 = vunpack.c.l.b16 %v465
  %v1834 = vunpack.c.l.b16 %v466
  %v1835 = vunpack.c.l.b16 %v467
  %v1836 = vunpack.c.l.b16 %v468
  %v1837 = vunpack.c.l.b16 %v469
  %v1838 = vunpack.c.l.b16 %v470
  %v1839 = vunpack.c.l.b16 %v471
  %v1840 = vunpack.c.l.b16 %v472
  %v1841 = vunpack.c.l.b16 %v473
  %v1842 = vunpack.c.l.b16 %v474
  %v1843 = vunpack.c.l.b16 %v475
  %v1844 = vunpack.c.l.b16 %v476
  %v1845 = vunpack.c.l.b16 %v477
  %v1846 = vunpack.c.l.b16 %v478
  %v1847 = vunpack.c.l.b16 %v479
  %v1848 = vunpack.c.l.b16 %v480
  %v1849 = vunpack.c.l.b16 %v481
  %v1850 = vunpack.c.l.b16 %v482
  %v1851 = vunpack.c.l.b16 %v483
  %v1852 = vunpack.c.l.b16 %v484
  %v1853 = vunpack.c.l.b16 %v485
  %v1854 = vunpack.c.l.b16 %v486
  %v1855 = vunpack.c.l.b16 %v487
  %v1856 = vunpack.c.l.b16 %v488
  %v1857 = vunpack.c.l.b16 %v489
  %v1858 = vunpack.c.l.b16 %v490
  %v1859 = vunpack.c.l.b16 %v491
  %v1860 = vunpack.c.l.b16 %v492
  %v1861 = vunpack.c.l.b16 %v493
  %v1862 = vunpack.c.l.b16 %v494
  %v1863 = vunpack.c.l.b16 %v495
  %v1864 = vunpack.c.l.b16 %v496
  %v1865 = vunpack.c.l.b16 %v497
  %v1866 = vunpack.c.l.b16 %v498
  %v1867 = vunpack.c.l.b16 %v499
  %v1868 = vunpack.c.l.b16 %v500
  %v1869 = vunpack.c.l.b16 %v501
  %v1870 = vunpack.c.l.b16 %v502
  %v1871 = vunpack.c.l.b16 %v503
  %v1872 = vunpack.c.l.b16 %v504
  %v1873 = vunpack.c.l.b16 %v505
  %v1874 = vunpack.c.l.b16 %v506
  %v1875 = vunpack.c.l.b16 %v507
  %v1876 = vunpack.c.l.b16 %v508
  %v1877 = vunpack.c.l.b16 %v509
  %v1878 = vunpack.c.l.b16 %v510
  %v1879 = vunpack.c.l.b16 %v511
  %v1880 = vunpack.c.l.b16 %v512
  %v1881 = vunpack.c.l.b16 %v513
  %v1882 = vunpack.c.l.b16 %v514
  %v1883 = vunpack.c.l.b16 %v515
  %v1884 = vunpack.c.l.b16 %v516
  %v1885 = vunpack.c.l.b16 %v517
  %v1886 = vunpack.c.l.b16 %v518
  %v1887 = vunpack.c.l.b16 %v519
  %v1888 = vunpack.c.l.b16 %v520
  %v1889 = vunpack.c.l.b16 %v521
  %v1890 = vunpack.c.l.b16 %v522
  %v1891 = vunpack.c.l.b16 %v523
  %v1892 = vunpack.c.l.b16 %v524
  %v1893 = vunpack.c.l.b16 %v525
  %v1894 = vunpack.c.l.b16 %v526
  %v1895 = vunpack.c.l.b16 %v527
  %v1896 = vunpack.c.l.b16 %v528
  %v1897 = vunpack.c.l.b16 %v529
  %v1898 = vunpack.c.l.b16 %v530
  %v1899 = vunpack.c.l.b16 %v531
  %v1900 = vunpack.c.l.b16 %v532
  %v1901 = vunpack.c.l.b16 %v533
  %v1902 = vunpack.c.l.b16 %v534
  %v1903 = vunpack.c.l.b16 %v535
  %v1904 = vunpack.c.l.b16 %v536
  %v1905 = vunpack.c.l.b16 %v537
  %v1906 = vunpack.c.l.b16 %v538
  %v1907 = vunpack.c.l.b16 %v539
  %v1908 = vunpack.c.l.b16 %v540
  %v1909 = vunpack.c.l.b16 %v541
  %v1910 = vunpack.c.l.b16 %v542
  %v1911 = vunpack.c.l.b16 %v543
  %v1912 = vunpack.c.l.b16 %v544
  %v1913 = vunpack.c.l.b16 %v545
  %v1914 = vunpack.c.l.b16 %v546
  %v1915 = vunpack.c.l.b16 %v547
  %v1916 = vunpack.c.l.b16 %v548
  %v1917 = vunpack.c.l.b16 %v549
  %v1918 = vunpack.c.l.b16 %v550
  %v1919 = vunpack.c.l.b16 %v551
  %v1920 = vunpack.c.l.b16 %v552
  %v1921 = vunpack.c.l.b16 %v553
  %v1922 = vunpack.c.l.b16 %v554
  %v1923 = vunpack.c.l.b16 %v555
  %v1924 = vunpack.c.l.b16 %v556
  %v1925 = vunpack.c.l.b16 %v557
  %v1926 = vunpack.c.l.b16 %v558
  %v1927 = vunpack.c.l.b16 %v559
  %v1928 = vunpack.c.l.b16 %v560
  %v1929 = vunpack.c.l.b16 %v561
  %v1930 = vunpack.c.l.b16 %v562
  %v1931 = vunpack.c.l.b16 %v563
  %v1932 = vunpack.c.l.b16 %v564
  %v1933 = vunpack.c.l.b16 %v565
  %v1934 = vunpack.c.l.b16 %v566
  %v1935 = vunpack.c.l.b16 %v567
  %v1936 = vunpack.c.l.b16 %v568
  %v1937 = vunpack.c.l.b16 %v569
  %v1938 = vunpack.c.l.b16 %v570
  %v1939 = vunpack.c.l.b16 %v571
  %v1940 = vunpack.c.l.b16 %v572
  %v1941 = vunpack.c.l.b16 %v573
  %v1942 = vunpack.c.l.b16 %v574
  %v1943 = vunpack.c.l.b16 %v575
  %v1944 = vunpack.c.l.b16 %v576
  %v1945 = vunpack.c.l.b16 %v577
  %v1946 = vunpack.c.l.b16 %v578
  %v1947 = vunpack.c.l.b16 %v579
  %v1948 = vunpack.c.l.b16 %v580
  %v1949 = vunpack.c.l.b16 %v581
  %v1950 = vunpack.c.l.b16 %v582
  %v1951 = vunpack.c.l.b16 %v583
  %v1952 = vunpack.c.l.b16 %v584
  %v1953 = vunpack.c.l.b16 %v585
  %v1954 = vunpack.c.l.b16 %v586
  %v1955 = vunpack.c.l.b16 %v587
  %v1956 = vunpack.c.l.b16 %v588
  %v1957 = vunpack.c.l.b16 %v589
  %v1958 = vunpack.c.l.b16 %v590
  %v1959 = vunpack.c.l.b16 %v591
  %v1960 = vunpack.c.l.b16 %v592
  %v1961 = vunpack.c.l.b16 %v593
  %v1962 = vunpack.c.l.b16 %v594
  %v1963 = vunpack.c.l.b16 %v595
  %v1964 = vunpack.c.l.b16 %v596
  %v1965 = vpack.c.b16 %v1454, %v1453
  %v1966 = vpack.c.b16 %v1456, %v1455
  %v1967 = vpack.c.b16 %v1458, %v1457
  %v1968 = vpack.c.b16 %v1460, %v1459
  %v1969 = vpack.c.b16 %v1462, %v1461
  %v1970 = vpack.c.b16 %v1464, %v1463
  %v1971 = vpack.c.b16 %v1466, %v1465
  %v1972 = vpack.c.b16 %v1468, %v1467
  %v1973 = vpack.c.b16 %v1470, %v1469
  %v1974 = vpack.c.b16 %v1472, %v1471
  %v1975 = vpack.c.b16 %v1474, %v1473
  %v1976 = vpack.c.b16 %v1476, %v1475
  %v1977 = vpack.c.b16 %v1478, %v1477
  %v1978 = vpack.c.b16 %v1480, %v1479
  %v1979 = vpack.c.b16 %v1482, %v1481
  %v1980 = vpack.c.b16 %v1484, %v1483
  %v1981 = vpack.c.b16 %v1486, %v1485
  %v1982 = vpack.c.b16 %v1488, %v1487
  %v1983 = vpack.c.b16 %v1490, %v1489
  %v1984 = vpack.c.b16 %v1492, %v1491
  %v1985 = vpack.c.b16 %v1494, %v1493
  %v1986 = vpack.c.b16 %v1496, %v1495
  %v1987 = vpack.c.b16 %v1498, %v1497
  %v1988 = vpack.c.b16 %v1500, %v1499
  %v1989 = vpack.c.b16 %v1502, %v1501
  %v1990 = vpack.c.b16 %v1504, %v1503
  %v1991 = vpack.c.b16 %v1506, %v1505
  %v1992 = vpack.c.b16 %v1508, %v1507
  %v1993 = vpack.c.b16 %v1510, %v1509
  %v1994 = vpack.c.b16 %v1512, %v1511
  %v1995 = vpack.c.b16 %v1514, %v1513
  %v1996 = vpack.c.b16 %v1516, %v1515
  %v1997 = vpack.c.b16 %v1518, %v1517
  %v1998 = vpack.c.b16 %v1520, %v1519
  %v1999 = vpack.c.b16 %v1522, %v1521
  %v2000 = vpack.c.b16 %v1524, %v1523
  %v2001 = vpack.c.b16 %v1526, %v1525
  %v2002 = vpack.c.b16 %v1528, %v1527
  %v2003 = vpack.c.b16 %v1530, %v1529
  %v2004 = vpack.c.b16 %v1532, %v1531
  %v2005 = vpack.c.b16 %v1534, %v1533
  %v2006 = vpack.c.b16 %v1536, %v1535
  %v2007 = vpack.c.b16 %v1538, %v1537
  %v2008 = vpack.c.b16 %v1540, %v1539
  %v2009 = vpack.c.b16 %v1542, %v1541
  %v2010 = vpack.c.b16 %v1544, %v1543
  %v2011 = vpack.c.b16 %v1546, %v1545
  %v2012 = vpack.c.b16 %v1548, %v1547
  %v2013 = vpack.c.b16 %v1550, %v1549
  %v2014 = vpack.c.b16 %v1552, %v1551
  %v2015 = vpack.c.b16 %v1554, %v1553
  %v2016 = vpack.c.b16 %v1556, %v1555
  %v2017 = vpack.c.b16 %v1558, %v1557
  %v2018 = vpack.c.b16 %v1560, %v1559
  %v2019 = vpack.c.b16 %v1562, %v1561
  %v2020 = vpack.c.b16 %v1564, %v1563
  %v2021 = vpack.c.b16 %v1566, %v1565
  %v2022 = vpack.c.b16 %v1568, %v1567
  %v2023 = vpack.c.b16 %v1570, %v1569
  %v2024 = vpack.c.b16 %v1572, %v1571
  %v2025 = vpack.c.b16 %v1574, %v1573
  %v2026 = vpack.c.b16 %v1576, %v1575
  %v2027 = vpack.c.b16 %v1578, %v1577
  %v2028 = vpack.c.b16 %v1580, %v1579
  %v2029 = vpack.c.b16 %v1582, %v1581
  %v2030 = vpack.c.b16 %v1584, %v1583
  %v2031 = vpack.c.b16 %v1586, %v1585
  %v2032 = vpack.c.b16 %v1588, %v1587
  %v2033 = vpack.c.b16 %v1590, %v1589
  %v2034 = vpack.c.b16 %v1592, %v1591
  %v2035 = vpack.c.b16 %v1594, %v1593
  %v2036 = vpack.c.b16 %v1596, %v1595
  %v2037 = vpack.c.b16 %v1598, %v1597
  %v2038 = vpack.c.b16 %v1600, %v1599
  %v2039 = vpack.c.b16 %v1602, %v1601
  %v2040 = vpack.c.b16 %v1604, %v1603
  %v2041 = vpack.c.b16 %v1606, %v1605
  %v2042 = vpack.c.b16 %v1608, %v1607
  %v2043 = vpack.c.b16 %v1610, %v1609
  %v2044 = vpack.c.b16 %v1612, %v1611
  %v2045 = vpack.c.b16 %v1614, %v1613
  %v2046 = vpack.c.b16 %v1616, %v1615
  %v2047 = vpack.c.b16 %v1618, %v1617
  %v2048 = vpack.c.b16 %v1620, %v1619
  %v2049 = vpack.c.b16 %v1622, %v1621
  %v2050 = vpack.c.b16 %v1624, %v1623
  %v2051 = vpack.c.b16 %v1626, %v1625
  %v2052 = vpack.c.b16 %v1628, %v1627
  %v2053 = vpack.c.b16 %v1630, %v1629
  %v2054 = vpack.c.b16 %v1632, %v1631
  %v2055 = vpack.c.b16 %v1634, %v1633
  %v2056 = vpack.c.b16 %v1636, %v1635
  %v2057 = vpack.c.b16 %v1638, %v1637
  %v2058 = vpack.c.b16 %v1640, %v1639
  %v2059 = vpack.c.b16 %v1642, %v1641
  %v2060 = vpack.c.b16 %v1644, %v1643
  %v2061 = vpack.c.b16 %v1646, %v1645
  %v2062 = vpack.c.b16 %v1648, %v1647
  %v2063 = vpack.c.b16 %v1650, %v1649
  %v2064 = vpack.c.b16 %v1652, %v1651
  %v2065 = vpack.c.b16 %v1654, %v1653
  %v2066 = vpack.c.b16 %v1656, %v1655
  %v2067 = vpack.c.b16 %v1658, %v1657
  %v2068 = vpack.c.b16 %v1660, %v1659
  %v2069 = vpack.c.b16 %v1662, %v1661
  %v2070 = vpack.c.b16 %v1664, %v1663
  %v2071 = vpack.c.b16 %v1666, %v1665
  %v2072 = vpack.c.b16 %v1668, %v1667
  %v2073 = vpack.c.b16 %v1670, %v1669
  %v2074 = vpack.c.b16 %v1672, %v1671
  %v2075 = vpack.c.b16 %v1674, %v1673
  %v2076 = vpack.c.b16 %v1676, %v1675
  %v2077 = vpack.c.b16 %v1678, %v1677
  %v2078 = vpack.c.b16 %v1680, %v1679
  %v2079 = vpack.c.b16 %v1682, %v1681
  %v2080 = vpack.c.b16 %v1684, %v1683
  %v2081 = vpack.c.b16 %v1686, %v1685
  %v2082 = vpack.c.b16 %v1688, %v1687
  %v2083 = vpack.c.b16 %v1690, %v1689
  %v2084 = vpack.c.b16 %v1692, %v1691
  %v2085 = vpack.c.b16 %v1694, %v1693
  %v2086 = vpack.c.b16 %v1696, %v1695
  %v2087 = vpack.c.b16 %v1698, %v1697
  %v2088 = vpack.c.b16 %v1700, %v1699
  %v2089 = vpack.c.b16 %v1702, %v1701
  %v2090 = vpack.c.b16 %v1704, %v1703
  %v2091 = vpack.c.b16 %v1706, %v1705
  %v2092 = vpack.c.b16 %v1708, %v1707
  %v2093 = vpack.c.b16 %v1710, %v1709
  %v2094 = vpack.c.b16 %v1712, %v1711
  %v2095 = vpack.c.b16 %v1714, %v1713
  %v2096 = vpack.c.b16 %v1716, %v1715
  %v2097 = vpack.c.b16 %v1718, %v1717
  %v2098 = vpack.c.b16 %v1720, %v1719
  %v2099 = vpack.c.b16 %v1722, %v1721
  %v2100 = vpack.c.b16 %v1724, %v1723
  %v2101 = vpack.c.b16 %v1726, %v1725
  %v2102 = vpack.c.b16 %v1728, %v1727
  %v2103 = vpack.c.b16 %v1730, %v1729
  %v2104 = vpack.c.b16 %v1732, %v1731
  %v2105 = vpack.c.b16 %v1734, %v1733
  %v2106 = vpack.c.b16 %v1736, %v1735
  %v2107 = vpack.c.b16 %v1738, %v1737
  %v2108 = vpack.c.b16 %v1740, %v1739
  %v2109 = vpack.c.b16 %v1742, %v1741
  %v2110 = vpack.c.b16 %v1744, %v1743
  %v2111 = vpack.c.b16 %v1746, %v1745
  %v2112 = vpack.c.b16 %v1748, %v1747
  %v2113 = vpack.c.b16 %v1750, %v1749
  %v2114 = vpack.c.b16 %v1752, %v1751
  %v2115 = vpack.c.b16 %v1754, %v1753
  %v2116 = vpack.c.b16 %v1756, %v1755
  %v2117 = vpack.c.b16 %v1758, %v1757
  %v2118 = vpack.c.b16 %v1760, %v1759
  %v2119 = vpack.c.b16 %v1762, %v1761
  %v2120 = vpack.c.b16 %v1764, %v1763
  %v2121 = vpack.c.b16 %v1766, %v1765
  %v2122 = vpack.c.b16 %v1768, %v1767
  %v2123 = vpack.c.b16 %v1770, %v1769
  %v2124 = vpack.c.b16 %v1772, %v1771
  %v2125 = vpack.c.b16 %v1774, %v1773
  %v2126 = vpack.c.b16 %v1776, %v1775
  %v2127 = vpack.c.b16 %v1778, %v1777
  %v2128 = vpack.c.b16 %v1780, %v1779
  %v2129 = vpack.c.b16 %v1782, %v1781
  %v2130 = vpack.c.b16 %v1784, %v1783
  %v2131 = vpack.c.b16 %v1786, %v1785
  %v2132 = vpack.c.b16 %v1788, %v1787
  %v2133 = vpack.c.b16 %v1790, %v1789
  %v2134 = vpack.c.b16 %v1792, %v1791
  %v2135 = vpack.c.b16 %v1794, %v1793
  %v2136 = vpack.c.b16 %v1796, %v1795
  %v2137 = vpack.c.b16 %v1798, %v1797
  %v2138 = vpack.c.b16 %v1800, %v1799
  %v2139 = vpack.c.b16 %v1802, %v1801
  %v2140 = vpack.c.b16 %v1804, %v1803
  %v2141 = vpack.c.b16 %v1806, %v1805
  %v2142 = vpack.c.b16 %v1808, %v1807
  %v2143 = vpack.c.b16 %v1810, %v1809
  %v2144 = vpack.c.b16 %v1812, %v1811
  %v2145 = vpack.c.b16 %v1814, %v1813
  %v2146 = vpack.c.b16 %v1816, %v1815
  %v2147 = vpack.c.b16 %v1818, %v1817
  %v2148 = vpack.c.b16 %v1820, %v1819
  %v2149 = vpack.c.b16 %v1822, %v1821
  %v2150 = vpack.c.b16 %v1824, %v1823
  %v2151 = vpack.c.b16 %v1826, %v1825
  %v2152 = vpack.c.b16 %v1828, %v1827
  %v2153 = vpack.c.b16 %v1830, %v1829
  %v2154 = vpack.c.b16 %v1832, %v1831
  %v2155 = vpack.c.b16 %v1834, %v1833
  %v2156 = vpack.c.b16 %v1836, %v1835
  %v2157 = vpack.c.b16 %v1838, %v1837
  %v2158 = vpack.c.b16 %v1840, %v1839
  %v2159 = vpack.c.b16 %v1842, %v1841
  %v2160 = vpack.c.b16 %v1844, %v1843
  %v2161 = vpack.c.b16 %v1846, %v1845
  %v2162 = vpack.c.b16 %v1848, %v1847
  %v2163 = vpack.c.b16 %v1850, %v1849
  %v2164 = vpack.c.b16 %v1852, %v1851
  %v2165 = vpack.c.b16 %v1854, %v1853
  %v2166 = vpack.c.b16 %v1856, %v1855
  %v2167 = vpack.c.b16 %v1858, %v1857
  %v2168 = vpack.c.b16 %v1860, %v1859
  %v2169 = vpack.c.b16 %v1862, %v1861
  %v2170 = vpack.c.b16 %v1864, %v1863
  %v2171 = vpack.c.b16 %v1866, %v1865
  %v2172 = vpack.c.b16 %v1868, %v1867
  %v2173 = vpack.c.b16 %v1870, %v1869
  %v2174 = vpack.c.b16 %v1872, %v1871
  %v2175 = vpack.c.b16 %v1874, %v1873
  %v2176 = vpack.c.b16 %v1876, %v1875
  %v2177 = vpack.c.b16 %v1878, %v1877
  %v2178 = vpack.c.b16 %v1880, %v1879
  %v2179 = vpack.c.b16 %v1882, %v1881
  %v2180 = vpack.c.b16 %v1884, %v1883
  %v2181 = vpack.c.b16 %v1886, %v1885
  %v2182 = vpack.c.b16 %v1888, %v1887
  %v2183 = vpack.c.b16 %v1890, %v1889
  %v2184 = vpack.c.b16 %v1892, %v1891
  %v2185 = vpack.c.b16 %v1894, %v1893
  %v2186 = vpack.c.b16 %v1896, %v1895
  %v2187 = vpack.c.b16 %v1898, %v1897
  %v2188 = vpack.c.b16 %v1900, %v1899
  %v2189 = vpack.c.b16 %v1902, %v1901
  %v2190 = vpack.c.b16 %v1904, %v1903
  %v2191 = vpack.c.b16 %v1906, %v1905
  %v2192 = vpack.c.b16 %v1908, %v1907
  %v2193 = vpack.c.b16 %v1910, %v1909
  %v2194 = vpack.c.b16 %v1912, %v1911
  %v2195 = vpack.c.b16 %v1914, %v1913
  %v2196 = vpack.c.b16 %v1916, %v1915
  %v2197 = vpack.c.b16 %v1918, %v1917
  %v2198 = vpack.c.b16 %v1920, %v1919
  %v2199 = vpack.c.b16 %v1922, %v1921
  %v2200 = vpack.c.b16 %v1924, %v1923
  %v2201 = vpack.c.b16 %v1926, %v1925
  %v2202 = vpack.c.b16 %v1928, %v1927
  %v2203 = vpack.c.b16 %v1930, %v1929
  %v2204 = vpack.c.b16 %v1932, %v1931
  %v2205 = vpack.c.b16 %v1934, %v1933
  %v2206 = vpack.c.b16 %v1936, %v1935
  %v2207 = vpack.c.b16 %v1938, %v1937
  %v2208 = vpack.c.b16 %v1940, %v1939
  %v2209 = vpack.c.b16 %v1942, %v1941
  %v2210 = vpack.c.b16 %v1944, %v1943
  %v2211 = vpack.c.b16 %v1946, %v1945
  %v2212 = vpack.c.b16 %v1948, %v1947
  %v2213 = vpack.c.b16 %v1950, %v1949
  %v2214 = vpack.c.b16 %v1952, %v1951
  %v2215 = vpack.c.b16 %v1954, %v1953
  %v2216 = vpack.c.b16 %v1956, %v1955
  %v2217 = vpack.c.b16 %v1958, %v1957
  %v2218 = vpack.c.b16 %v1960, %v1959
  %v2219 = vpack.c.b16 %v1962, %v1961
  %v2220 = vpack.c.b16 %v1964, %v1963
  %2477 = vmatpush.bf16.msra.mxu0 %v1972
  %2478 = vmatpush.bf16.msra.mxu0 %v1971
  %2479 = vmatpush.bf16.msra.mxu0 %v1970
  %2480 = vmatpush.bf16.msra.mxu0 %v1969
  %2481 = vmatpush.bf16.msra.mxu0 %v1968
  %2482 = vmatpush.bf16.msra.mxu0 %v1967
  %2483 = vmatpush.bf16.msra.mxu0 %v1966
  %2484 = vmatpush.bf16.msra.mxu0 %v1965
  %2485 = vmatmul.bf16.gmra.mxu0 %v813
  %v2486 = vpop.f32.mrf.mxu0
  %v2487 = vadd.f32 %v604, %v2486
  %v2488 = vpop.f32.mrf.mxu0
  %v2489 = vadd.f32 %v609, %v2488
  %2490 = vmatmul.bf16.gmra.mxu0 %v845
  %v2491 = vpop.f32.mrf.mxu0
  %v2492 = vadd.f32 %v614, %v2491
  %v2493 = vpop.f32.mrf.mxu0
  %v2494 = vadd.f32 %v619, %v2493
  %2495 = vdwg.mxu0
  %2496 = vmatpush.bf16.msra.mxu0 %v1980
  %2497 = vmatpush.bf16.msra.mxu0 %v1979
  %2498 = vmatpush.bf16.msra.mxu0 %v1978
  %2499 = vmatpush.bf16.msra.mxu0 %v1977
  %2500 = vmatpush.bf16.msra.mxu0 %v1976
  %2501 = vmatpush.bf16.msra.mxu0 %v1975
  %2502 = vmatpush.bf16.msra.mxu0 %v1974
  %2503 = vmatpush.bf16.msra.mxu0 %v1973
  %2504 = vmatmul.bf16.gmra.mxu0 %v814
  %v2505 = vpop.f32.mrf.mxu0
  %v2506 = vadd.f32 %v2487, %v2505
  %v2507 = vpop.f32.mrf.mxu0
  %v2508 = vadd.f32 %v2489, %v2507
  %2509 = vmatmul.bf16.gmra.mxu0 %v846
  %v2510 = vpop.f32.mrf.mxu0
  %v2511 = vadd.f32 %v2492, %v2510
  %v2512 = vpop.f32.mrf.mxu0
  %v2513 = vadd.f32 %v2494, %v2512
  %2514 = vdwg.mxu0
  %2515 = vmatpush.bf16.msra.mxu0 %v1988
  %2516 = vmatpush.bf16.msra.mxu0 %v1987
  %2517 = vmatpush.bf16.msra.mxu0 %v1986
  %2518 = vmatpush.bf16.msra.mxu0 %v1985
  %2519 = vmatpush.bf16.msra.mxu0 %v1984
  %2520 = vmatpush.bf16.msra.mxu0 %v1983
  %2521 = vmatpush.bf16.msra.mxu0 %v1982
  %2522 = vmatpush.bf16.msra.mxu0 %v1981
  %2523 = vmatmul.bf16.gmra.mxu0 %v815
  %v2524 = vpop.f32.mrf.mxu0
  %v2525 = vadd.f32 %v2506, %v2524
  %v2526 = vpop.f32.mrf.mxu0
  %v2527 = vadd.f32 %v2508, %v2526
  %2528 = vmatmul.bf16.gmra.mxu0 %v847
  %v2529 = vpop.f32.mrf.mxu0
  %v2530 = vadd.f32 %v2511, %v2529
  %v2531 = vpop.f32.mrf.mxu0
  %v2532 = vadd.f32 %v2513, %v2531
  %2533 = vdwg.mxu0
  %2534 = vmatpush.bf16.msra.mxu0 %v1996
  %2535 = vmatpush.bf16.msra.mxu0 %v1995
  %2536 = vmatpush.bf16.msra.mxu0 %v1994
  %2537 = vmatpush.bf16.msra.mxu0 %v1993
  %2538 = vmatpush.bf16.msra.mxu0 %v1992
  %2539 = vmatpush.bf16.msra.mxu0 %v1991
  %2540 = vmatpush.bf16.msra.mxu0 %v1990
  %2541 = vmatpush.bf16.msra.mxu0 %v1989
  %2542 = vmatmul.bf16.gmra.mxu0 %v816
  %v2543 = vpop.f32.mrf.mxu0
  %v2544 = vadd.f32 %v2525, %v2543
  %v2545 = vpop.f32.mrf.mxu0
  %v2546 = vadd.f32 %v2527, %v2545
  %2547 = vmatmul.bf16.gmra.mxu0 %v848
  %v2548 = vpop.f32.mrf.mxu0
  %v2549 = vadd.f32 %v2530, %v2548
  %v2550 = vpop.f32.mrf.mxu0
  %v2551 = vadd.f32 %v2532, %v2550
  %2552 = vdwg.mxu0
  %2553 = vmatpush.bf16.msra.mxu0 %v2004
  %2554 = vmatpush.bf16.msra.mxu0 %v2003
  %2555 = vmatpush.bf16.msra.mxu0 %v2002
  %2556 = vmatpush.bf16.msra.mxu0 %v2001
  %2557 = vmatpush.bf16.msra.mxu0 %v2000
  %2558 = vmatpush.bf16.msra.mxu0 %v1999
  %2559 = vmatpush.bf16.msra.mxu0 %v1998
  %2560 = vmatpush.bf16.msra.mxu0 %v1997
  %2561 = vmatmul.bf16.gmra.mxu0 %v817
  %v2562 = vpop.f32.mrf.mxu0
  %v2563 = vadd.f32 %v2544, %v2562
  %v2564 = vpop.f32.mrf.mxu0
  %v2565 = vadd.f32 %v2546, %v2564
  %2566 = vmatmul.bf16.gmra.mxu0 %v849
  %v2567 = vpop.f32.mrf.mxu0
  %v2568 = vadd.f32 %v2549, %v2567
  %v2569 = vpop.f32.mrf.mxu0
  %v2570 = vadd.f32 %v2551, %v2569
  %2571 = vdwg.mxu0
  %2572 = vmatpush.bf16.msra.mxu0 %v2012
  %2573 = vmatpush.bf16.msra.mxu0 %v2011
  %2574 = vmatpush.bf16.msra.mxu0 %v2010
  %2575 = vmatpush.bf16.msra.mxu0 %v2009
  %2576 = vmatpush.bf16.msra.mxu0 %v2008
  %2577 = vmatpush.bf16.msra.mxu0 %v2007
  %2578 = vmatpush.bf16.msra.mxu0 %v2006
  %2579 = vmatpush.bf16.msra.mxu0 %v2005
  %2580 = vmatmul.bf16.gmra.mxu0 %v818
  %v2581 = vpop.f32.mrf.mxu0
  %v2582 = vadd.f32 %v2563, %v2581
  %v2583 = vpop.f32.mrf.mxu0
  %v2584 = vadd.f32 %v2565, %v2583
  %2585 = vmatmul.bf16.gmra.mxu0 %v850
  %v2586 = vpop.f32.mrf.mxu0
  %v2587 = vadd.f32 %v2568, %v2586
  %v2588 = vpop.f32.mrf.mxu0
  %v2589 = vadd.f32 %v2570, %v2588
  %2590 = vdwg.mxu0
  %2591 = vmatpush.bf16.msra.mxu0 %v2020
  %2592 = vmatpush.bf16.msra.mxu0 %v2019
  %2593 = vmatpush.bf16.msra.mxu0 %v2018
  %2594 = vmatpush.bf16.msra.mxu0 %v2017
  %2595 = vmatpush.bf16.msra.mxu0 %v2016
  %2596 = vmatpush.bf16.msra.mxu0 %v2015
  %2597 = vmatpush.bf16.msra.mxu0 %v2014
  %2598 = vmatpush.bf16.msra.mxu0 %v2013
  %2599 = vmatmul.bf16.gmra.mxu0 %v819
  %v2600 = vpop.f32.mrf.mxu0
  %v2601 = vadd.f32 %v2582, %v2600
  %v2602 = vpop.f32.mrf.mxu0
  %v2603 = vadd.f32 %v2584, %v2602
  %2604 = vmatmul.bf16.gmra.mxu0 %v851
  %v2605 = vpop.f32.mrf.mxu0
  %v2606 = vadd.f32 %v2587, %v2605
  %v2607 = vpop.f32.mrf.mxu0
  %v2608 = vadd.f32 %v2589, %v2607
  %2609 = vdwg.mxu0
  %2610 = vmatpush.bf16.msra.mxu0 %v2028
  %2611 = vmatpush.bf16.msra.mxu0 %v2027
  %2612 = vmatpush.bf16.msra.mxu0 %v2026
  %2613 = vmatpush.bf16.msra.mxu0 %v2025
  %2614 = vmatpush.bf16.msra.mxu0 %v2024
  %2615 = vmatpush.bf16.msra.mxu0 %v2023
  %2616 = vmatpush.bf16.msra.mxu0 %v2022
  %2617 = vmatpush.bf16.msra.mxu0 %v2021
  %2618 = vmatmul.bf16.gmra.mxu0 %v820
  %v2619 = vpop.f32.mrf.mxu0
  %v2620 = vadd.f32 %v2601, %v2619
  %v2621 = vpop.f32.mrf.mxu0
  %v2622 = vadd.f32 %v2603, %v2621
  %2623 = vmatmul.bf16.gmra.mxu0 %v852
  %v2624 = vpop.f32.mrf.mxu0
  %v2625 = vadd.f32 %v2606, %v2624
  %v2626 = vpop.f32.mrf.mxu0
  %v2627 = vadd.f32 %v2608, %v2626
  %2628 = vdwg.mxu0
  %2629 = vmatpush.bf16.msra.mxu0 %v2036
  %2630 = vmatpush.bf16.msra.mxu0 %v2035
  %2631 = vmatpush.bf16.msra.mxu0 %v2034
  %2632 = vmatpush.bf16.msra.mxu0 %v2033
  %2633 = vmatpush.bf16.msra.mxu0 %v2032
  %2634 = vmatpush.bf16.msra.mxu0 %v2031
  %2635 = vmatpush.bf16.msra.mxu0 %v2030
  %2636 = vmatpush.bf16.msra.mxu0 %v2029
  %2637 = vmatmul.bf16.gmra.mxu0 %v821
  %v2638 = vpop.f32.mrf.mxu0
  %v2639 = vadd.f32 %v2620, %v2638
  %v2640 = vpop.f32.mrf.mxu0
  %v2641 = vadd.f32 %v2622, %v2640
  %2642 = vmatmul.bf16.gmra.mxu0 %v853
  %v2643 = vpop.f32.mrf.mxu0
  %v2644 = vadd.f32 %v2625, %v2643
  %v2645 = vpop.f32.mrf.mxu0
  %v2646 = vadd.f32 %v2627, %v2645
  %2647 = vdwg.mxu0
  %2648 = vmatpush.bf16.msra.mxu0 %v2044
  %2649 = vmatpush.bf16.msra.mxu0 %v2043
  %2650 = vmatpush.bf16.msra.mxu0 %v2042
  %2651 = vmatpush.bf16.msra.mxu0 %v2041
  %2652 = vmatpush.bf16.msra.mxu0 %v2040
  %2653 = vmatpush.bf16.msra.mxu0 %v2039
  %2654 = vmatpush.bf16.msra.mxu0 %v2038
  %2655 = vmatpush.bf16.msra.mxu0 %v2037
  %2656 = vmatmul.bf16.gmra.mxu0 %v822
  %v2657 = vpop.f32.mrf.mxu0
  %v2658 = vadd.f32 %v2639, %v2657
  %v2659 = vpop.f32.mrf.mxu0
  %v2660 = vadd.f32 %v2641, %v2659
  %2661 = vmatmul.bf16.gmra.mxu0 %v854
  %v2662 = vpop.f32.mrf.mxu0
  %v2663 = vadd.f32 %v2644, %v2662
  %v2664 = vpop.f32.mrf.mxu0
  %v2665 = vadd.f32 %v2646, %v2664
  %2666 = vdwg.mxu0
  %2667 = vmatpush.bf16.msra.mxu0 %v2052
  %2668 = vmatpush.bf16.msra.mxu0 %v2051
  %2669 = vmatpush.bf16.msra.mxu0 %v2050
  %2670 = vmatpush.bf16.msra.mxu0 %v2049
  %2671 = vmatpush.bf16.msra.mxu0 %v2048
  %2672 = vmatpush.bf16.msra.mxu0 %v2047
  %2673 = vmatpush.bf16.msra.mxu0 %v2046
  %2674 = vmatpush.bf16.msra.mxu0 %v2045
  %2675 = vmatmul.bf16.gmra.mxu0 %v823
  %v2676 = vpop.f32.mrf.mxu0
  %v2677 = vadd.f32 %v2658, %v2676
  %v2678 = vpop.f32.mrf.mxu0
  %v2679 = vadd.f32 %v2660, %v2678
  %2680 = vmatmul.bf16.gmra.mxu0 %v855
  %v2681 = vpop.f32.mrf.mxu0
  %v2682 = vadd.f32 %v2663, %v2681
  %v2683 = vpop.f32.mrf.mxu0
  %v2684 = vadd.f32 %v2665, %v2683
  %2685 = vdwg.mxu0
  %2686 = vmatpush.bf16.msra.mxu0 %v2060
  %2687 = vmatpush.bf16.msra.mxu0 %v2059
  %2688 = vmatpush.bf16.msra.mxu0 %v2058
  %2689 = vmatpush.bf16.msra.mxu0 %v2057
  %2690 = vmatpush.bf16.msra.mxu0 %v2056
  %2691 = vmatpush.bf16.msra.mxu0 %v2055
  %2692 = vmatpush.bf16.msra.mxu0 %v2054
  %2693 = vmatpush.bf16.msra.mxu0 %v2053
  %2694 = vmatmul.bf16.gmra.mxu0 %v824
  %v2695 = vpop.f32.mrf.mxu0
  %v2696 = vadd.f32 %v2677, %v2695
  %v2697 = vpop.f32.mrf.mxu0
  %v2698 = vadd.f32 %v2679, %v2697
  %2699 = vmatmul.bf16.gmra.mxu0 %v856
  %v2700 = vpop.f32.mrf.mxu0
  %v2701 = vadd.f32 %v2682, %v2700
  %v2702 = vpop.f32.mrf.mxu0
  %v2703 = vadd.f32 %v2684, %v2702
  %2704 = vdwg.mxu0
  %2705 = vmatpush.bf16.msra.mxu0 %v2068
  %2706 = vmatpush.bf16.msra.mxu0 %v2067
  %2707 = vmatpush.bf16.msra.mxu0 %v2066
  %2708 = vmatpush.bf16.msra.mxu0 %v2065
  %2709 = vmatpush.bf16.msra.mxu0 %v2064
  %2710 = vmatpush.bf16.msra.mxu0 %v2063
  %2711 = vmatpush.bf16.msra.mxu0 %v2062
  %2712 = vmatpush.bf16.msra.mxu0 %v2061
  %2713 = vmatmul.bf16.gmra.mxu0 %v825
  %v2714 = vpop.f32.mrf.mxu0
  %v2715 = vadd.f32 %v2696, %v2714
  %v2716 = vpop.f32.mrf.mxu0
  %v2717 = vadd.f32 %v2698, %v2716
  %2718 = vmatmul.bf16.gmra.mxu0 %v857
  %v2719 = vpop.f32.mrf.mxu0
  %v2720 = vadd.f32 %v2701, %v2719
  %v2721 = vpop.f32.mrf.mxu0
  %v2722 = vadd.f32 %v2703, %v2721
  %2723 = vdwg.mxu0
  %2724 = vmatpush.bf16.msra.mxu0 %v2076
  %2725 = vmatpush.bf16.msra.mxu0 %v2075
  %2726 = vmatpush.bf16.msra.mxu0 %v2074
  %2727 = vmatpush.bf16.msra.mxu0 %v2073
  %2728 = vmatpush.bf16.msra.mxu0 %v2072
  %2729 = vmatpush.bf16.msra.mxu0 %v2071
  %2730 = vmatpush.bf16.msra.mxu0 %v2070
  %2731 = vmatpush.bf16.msra.mxu0 %v2069
  %2732 = vmatmul.bf16.gmra.mxu0 %v826
  %v2733 = vpop.f32.mrf.mxu0
  %v2734 = vadd.f32 %v2715, %v2733
  %v2735 = vpop.f32.mrf.mxu0
  %v2736 = vadd.f32 %v2717, %v2735
  %2737 = vmatmul.bf16.gmra.mxu0 %v858
  %v2738 = vpop.f32.mrf.mxu0
  %v2739 = vadd.f32 %v2720, %v2738
  %v2740 = vpop.f32.mrf.mxu0
  %v2741 = vadd.f32 %v2722, %v2740
  %2742 = vdwg.mxu0
  %2743 = vmatpush.bf16.msra.mxu0 %v2084
  %2744 = vmatpush.bf16.msra.mxu0 %v2083
  %2745 = vmatpush.bf16.msra.mxu0 %v2082
  %2746 = vmatpush.bf16.msra.mxu0 %v2081
  %2747 = vmatpush.bf16.msra.mxu0 %v2080
  %2748 = vmatpush.bf16.msra.mxu0 %v2079
  %2749 = vmatpush.bf16.msra.mxu0 %v2078
  %2750 = vmatpush.bf16.msra.mxu0 %v2077
  %2751 = vmatmul.bf16.gmra.mxu0 %v827
  %v2752 = vpop.f32.mrf.mxu0
  %v2753 = vadd.f32 %v2734, %v2752
  %v2754 = vpop.f32.mrf.mxu0
  %v2755 = vadd.f32 %v2736, %v2754
  %2756 = vmatmul.bf16.gmra.mxu0 %v859
  %v2757 = vpop.f32.mrf.mxu0
  %v2758 = vadd.f32 %v2739, %v2757
  %v2759 = vpop.f32.mrf.mxu0
  %v2760 = vadd.f32 %v2741, %v2759
  %2761 = vdwg.mxu0
  %2762 = vmatpush.bf16.msra.mxu0 %v2092
  %2763 = vmatpush.bf16.msra.mxu0 %v2091
  %2764 = vmatpush.bf16.msra.mxu0 %v2090
  %2765 = vmatpush.bf16.msra.mxu0 %v2089
  %2766 = vmatpush.bf16.msra.mxu0 %v2088
  %2767 = vmatpush.bf16.msra.mxu0 %v2087
  %2768 = vmatpush.bf16.msra.mxu0 %v2086
  %2769 = vmatpush.bf16.msra.mxu0 %v2085
  %2770 = vmatmul.bf16.gmra.mxu0 %v828
  %v2771 = vpop.f32.mrf.mxu0
  %v2772 = vadd.f32 %v2753, %v2771
  %v2773 = vpop.f32.mrf.mxu0
  %v2774 = vadd.f32 %v2755, %v2773
  %2775 = vmatmul.bf16.gmra.mxu0 %v860
  %v2776 = vpop.f32.mrf.mxu0
  %v2777 = vadd.f32 %v2758, %v2776
  %v2778 = vpop.f32.mrf.mxu0
  %v2779 = vadd.f32 %v2760, %v2778
  %2780 = vdwg.mxu0
  %2781 = vmatpush.bf16.msra.mxu0 %v2100
  %2782 = vmatpush.bf16.msra.mxu0 %v2099
  %2783 = vmatpush.bf16.msra.mxu0 %v2098
  %2784 = vmatpush.bf16.msra.mxu0 %v2097
  %2785 = vmatpush.bf16.msra.mxu0 %v2096
  %2786 = vmatpush.bf16.msra.mxu0 %v2095
  %2787 = vmatpush.bf16.msra.mxu0 %v2094
  %2788 = vmatpush.bf16.msra.mxu0 %v2093
  %2789 = vmatmul.bf16.gmra.mxu0 %v829
  %v2790 = vpop.f32.mrf.mxu0
  %v2791 = vadd.f32 %v2772, %v2790
  %v2792 = vpop.f32.mrf.mxu0
  %v2793 = vadd.f32 %v2774, %v2792
  %2794 = vmatmul.bf16.gmra.mxu0 %v861
  %v2795 = vpop.f32.mrf.mxu0
  %v2796 = vadd.f32 %v2777, %v2795
  %v2797 = vpop.f32.mrf.mxu0
  %v2798 = vadd.f32 %v2779, %v2797
  %2799 = vdwg.mxu0
  %2800 = vmatpush.bf16.msra.mxu0 %v2108
  %2801 = vmatpush.bf16.msra.mxu0 %v2107
  %2802 = vmatpush.bf16.msra.mxu0 %v2106
  %2803 = vmatpush.bf16.msra.mxu0 %v2105
  %2804 = vmatpush.bf16.msra.mxu0 %v2104
  %2805 = vmatpush.bf16.msra.mxu0 %v2103
  %2806 = vmatpush.bf16.msra.mxu0 %v2102
  %2807 = vmatpush.bf16.msra.mxu0 %v2101
  %2808 = vmatmul.bf16.gmra.mxu0 %v830
  %v2809 = vpop.f32.mrf.mxu0
  %v2810 = vadd.f32 %v2791, %v2809
  %v2811 = vpop.f32.mrf.mxu0
  %v2812 = vadd.f32 %v2793, %v2811
  %2813 = vmatmul.bf16.gmra.mxu0 %v862
  %v2814 = vpop.f32.mrf.mxu0
  %v2815 = vadd.f32 %v2796, %v2814
  %v2816 = vpop.f32.mrf.mxu0
  %v2817 = vadd.f32 %v2798, %v2816
  %2818 = vdwg.mxu0
  %2819 = vmatpush.bf16.msra.mxu0 %v2116
  %2820 = vmatpush.bf16.msra.mxu0 %v2115
  %2821 = vmatpush.bf16.msra.mxu0 %v2114
  %2822 = vmatpush.bf16.msra.mxu0 %v2113
  %2823 = vmatpush.bf16.msra.mxu0 %v2112
  %2824 = vmatpush.bf16.msra.mxu0 %v2111
  %2825 = vmatpush.bf16.msra.mxu0 %v2110
  %2826 = vmatpush.bf16.msra.mxu0 %v2109
  %2827 = vmatmul.bf16.gmra.mxu0 %v831
  %v2828 = vpop.f32.mrf.mxu0
  %v2829 = vadd.f32 %v2810, %v2828
  %v2830 = vpop.f32.mrf.mxu0
  %v2831 = vadd.f32 %v2812, %v2830
  %2832 = vmatmul.bf16.gmra.mxu0 %v863
  %v2833 = vpop.f32.mrf.mxu0
  %v2834 = vadd.f32 %v2815, %v2833
  %v2835 = vpop.f32.mrf.mxu0
  %v2836 = vadd.f32 %v2817, %v2835
  %2837 = vdwg.mxu0
  %2838 = vmatpush.bf16.msra.mxu0 %v2124
  %2839 = vmatpush.bf16.msra.mxu0 %v2123
  %2840 = vmatpush.bf16.msra.mxu0 %v2122
  %2841 = vmatpush.bf16.msra.mxu0 %v2121
  %2842 = vmatpush.bf16.msra.mxu0 %v2120
  %2843 = vmatpush.bf16.msra.mxu0 %v2119
  %2844 = vmatpush.bf16.msra.mxu0 %v2118
  %2845 = vmatpush.bf16.msra.mxu0 %v2117
  %2846 = vmatmul.bf16.gmra.mxu0 %v832
  %v2847 = vpop.f32.mrf.mxu0
  %v2848 = vadd.f32 %v2829, %v2847
  %v2849 = vpop.f32.mrf.mxu0
  %v2850 = vadd.f32 %v2831, %v2849
  %2851 = vmatmul.bf16.gmra.mxu0 %v864
  %v2852 = vpop.f32.mrf.mxu0
  %v2853 = vadd.f32 %v2834, %v2852
  %v2854 = vpop.f32.mrf.mxu0
  %v2855 = vadd.f32 %v2836, %v2854
  %2856 = vdwg.mxu0
  %2857 = vmatpush.bf16.msra.mxu0 %v2132
  %2858 = vmatpush.bf16.msra.mxu0 %v2131
  %2859 = vmatpush.bf16.msra.mxu0 %v2130
  %2860 = vmatpush.bf16.msra.mxu0 %v2129
  %2861 = vmatpush.bf16.msra.mxu0 %v2128
  %2862 = vmatpush.bf16.msra.mxu0 %v2127
  %2863 = vmatpush.bf16.msra.mxu0 %v2126
  %2864 = vmatpush.bf16.msra.mxu0 %v2125
  %2865 = vmatmul.bf16.gmra.mxu0 %v833
  %v2866 = vpop.f32.mrf.mxu0
  %v2867 = vadd.f32 %v2848, %v2866
  %v2868 = vpop.f32.mrf.mxu0
  %v2869 = vadd.f32 %v2850, %v2868
  %2870 = vmatmul.bf16.gmra.mxu0 %v865
  %v2871 = vpop.f32.mrf.mxu0
  %v2872 = vadd.f32 %v2853, %v2871
  %v2873 = vpop.f32.mrf.mxu0
  %v2874 = vadd.f32 %v2855, %v2873
  %2875 = vdwg.mxu0
  %2876 = vmatpush.bf16.msra.mxu0 %v2140
  %2877 = vmatpush.bf16.msra.mxu0 %v2139
  %2878 = vmatpush.bf16.msra.mxu0 %v2138
  %2879 = vmatpush.bf16.msra.mxu0 %v2137
  %2880 = vmatpush.bf16.msra.mxu0 %v2136
  %2881 = vmatpush.bf16.msra.mxu0 %v2135
  %2882 = vmatpush.bf16.msra.mxu0 %v2134
  %2883 = vmatpush.bf16.msra.mxu0 %v2133
  %2884 = vmatmul.bf16.gmra.mxu0 %v834
  %v2885 = vpop.f32.mrf.mxu0
  %v2886 = vadd.f32 %v2867, %v2885
  %v2887 = vpop.f32.mrf.mxu0
  %v2888 = vadd.f32 %v2869, %v2887
  %2889 = vmatmul.bf16.gmra.mxu0 %v866
  %v2890 = vpop.f32.mrf.mxu0
  %v2891 = vadd.f32 %v2872, %v2890
  %v2892 = vpop.f32.mrf.mxu0
  %v2893 = vadd.f32 %v2874, %v2892
  %2894 = vdwg.mxu0
  %2895 = vmatpush.bf16.msra.mxu0 %v2148
  %2896 = vmatpush.bf16.msra.mxu0 %v2147
  %2897 = vmatpush.bf16.msra.mxu0 %v2146
  %2898 = vmatpush.bf16.msra.mxu0 %v2145
  %2899 = vmatpush.bf16.msra.mxu0 %v2144
  %2900 = vmatpush.bf16.msra.mxu0 %v2143
  %2901 = vmatpush.bf16.msra.mxu0 %v2142
  %2902 = vmatpush.bf16.msra.mxu0 %v2141
  %2903 = vmatmul.bf16.gmra.mxu0 %v835
  %v2904 = vpop.f32.mrf.mxu0
  %v2905 = vadd.f32 %v2886, %v2904
  %v2906 = vpop.f32.mrf.mxu0
  %v2907 = vadd.f32 %v2888, %v2906
  %2908 = vmatmul.bf16.gmra.mxu0 %v867
  %v2909 = vpop.f32.mrf.mxu0
  %v2910 = vadd.f32 %v2891, %v2909
  %v2911 = vpop.f32.mrf.mxu0
  %v2912 = vadd.f32 %v2893, %v2911
  %2913 = vdwg.mxu0
  %2914 = vmatpush.bf16.msra.mxu0 %v2156
  %2915 = vmatpush.bf16.msra.mxu0 %v2155
  %2916 = vmatpush.bf16.msra.mxu0 %v2154
  %2917 = vmatpush.bf16.msra.mxu0 %v2153
  %2918 = vmatpush.bf16.msra.mxu0 %v2152
  %2919 = vmatpush.bf16.msra.mxu0 %v2151
  %2920 = vmatpush.bf16.msra.mxu0 %v2150
  %2921 = vmatpush.bf16.msra.mxu0 %v2149
  %2922 = vmatmul.bf16.gmra.mxu0 %v836
  %v2923 = vpop.f32.mrf.mxu0
  %v2924 = vadd.f32 %v2905, %v2923
  %v2925 = vpop.f32.mrf.mxu0
  %v2926 = vadd.f32 %v2907, %v2925
  %2927 = vmatmul.bf16.gmra.mxu0 %v868
  %v2928 = vpop.f32.mrf.mxu0
  %v2929 = vadd.f32 %v2910, %v2928
  %v2930 = vpop.f32.mrf.mxu0
  %v2931 = vadd.f32 %v2912, %v2930
  %2932 = vdwg.mxu0
  %2933 = vmatpush.bf16.msra.mxu0 %v2164
  %2934 = vmatpush.bf16.msra.mxu0 %v2163
  %2935 = vmatpush.bf16.msra.mxu0 %v2162
  %2936 = vmatpush.bf16.msra.mxu0 %v2161
  %2937 = vmatpush.bf16.msra.mxu0 %v2160
  %2938 = vmatpush.bf16.msra.mxu0 %v2159
  %2939 = vmatpush.bf16.msra.mxu0 %v2158
  %2940 = vmatpush.bf16.msra.mxu0 %v2157
  %2941 = vmatmul.bf16.gmra.mxu0 %v837
  %v2942 = vpop.f32.mrf.mxu0
  %v2943 = vadd.f32 %v2924, %v2942
  %v2944 = vpop.f32.mrf.mxu0
  %v2945 = vadd.f32 %v2926, %v2944
  %2946 = vmatmul.bf16.gmra.mxu0 %v869
  %v2947 = vpop.f32.mrf.mxu0
  %v2948 = vadd.f32 %v2929, %v2947
  %v2949 = vpop.f32.mrf.mxu0
  %v2950 = vadd.f32 %v2931, %v2949
  %2951 = vdwg.mxu0
  %2952 = vmatpush.bf16.msra.mxu0 %v2172
  %2953 = vmatpush.bf16.msra.mxu0 %v2171
  %2954 = vmatpush.bf16.msra.mxu0 %v2170
  %2955 = vmatpush.bf16.msra.mxu0 %v2169
  %2956 = vmatpush.bf16.msra.mxu0 %v2168
  %2957 = vmatpush.bf16.msra.mxu0 %v2167
  %2958 = vmatpush.bf16.msra.mxu0 %v2166
  %2959 = vmatpush.bf16.msra.mxu0 %v2165
  %2960 = vmatmul.bf16.gmra.mxu0 %v838
  %v2961 = vpop.f32.mrf.mxu0
  %v2962 = vadd.f32 %v2943, %v2961
  %v2963 = vpop.f32.mrf.mxu0
  %v2964 = vadd.f32 %v2945, %v2963
  %2965 = vmatmul.bf16.gmra.mxu0 %v870
  %v2966 = vpop.f32.mrf.mxu0
  %v2967 = vadd.f32 %v2948, %v2966
  %v2968 = vpop.f32.mrf.mxu0
  %v2969 = vadd.f32 %v2950, %v2968
  %2970 = vdwg.mxu0
  %2971 = vmatpush.bf16.msra.mxu0 %v2180
  %2972 = vmatpush.bf16.msra.mxu0 %v2179
  %2973 = vmatpush.bf16.msra.mxu0 %v2178
  %2974 = vmatpush.bf16.msra.mxu0 %v2177
  %2975 = vmatpush.bf16.msra.mxu0 %v2176
  %2976 = vmatpush.bf16.msra.mxu0 %v2175
  %2977 = vmatpush.bf16.msra.mxu0 %v2174
  %2978 = vmatpush.bf16.msra.mxu0 %v2173
  %2979 = vmatmul.bf16.gmra.mxu0 %v839
  %v2980 = vpop.f32.mrf.mxu0
  %v2981 = vadd.f32 %v2962, %v2980
  %v2982 = vpop.f32.mrf.mxu0
  %v2983 = vadd.f32 %v2964, %v2982
  %2984 = vmatmul.bf16.gmra.mxu0 %v871
  %v2985 = vpop.f32.mrf.mxu0
  %v2986 = vadd.f32 %v2967, %v2985
  %v2987 = vpop.f32.mrf.mxu0
  %v2988 = vadd.f32 %v2969, %v2987
  %2989 = vdwg.mxu0
  %2990 = vmatpush.bf16.msra.mxu0 %v2188
  %2991 = vmatpush.bf16.msra.mxu0 %v2187
  %2992 = vmatpush.bf16.msra.mxu0 %v2186
  %2993 = vmatpush.bf16.msra.mxu0 %v2185
  %2994 = vmatpush.bf16.msra.mxu0 %v2184
  %2995 = vmatpush.bf16.msra.mxu0 %v2183
  %2996 = vmatpush.bf16.msra.mxu0 %v2182
  %2997 = vmatpush.bf16.msra.mxu0 %v2181
  %2998 = vmatmul.bf16.gmra.mxu0 %v840
  %v2999 = vpop.f32.mrf.mxu0
  %v3000 = vadd.f32 %v2981, %v2999
  %v3001 = vpop.f32.mrf.mxu0
  %v3002 = vadd.f32 %v2983, %v3001
  %3003 = vmatmul.bf16.gmra.mxu0 %v872
  %v3004 = vpop.f32.mrf.mxu0
  %v3005 = vadd.f32 %v2986, %v3004
  %v3006 = vpop.f32.mrf.mxu0
  %v3007 = vadd.f32 %v2988, %v3006
  %3008 = vdwg.mxu0
  %3009 = vmatpush.bf16.msra.mxu0 %v2196
  %3010 = vmatpush.bf16.msra.mxu0 %v2195
  %3011 = vmatpush.bf16.msra.mxu0 %v2194
  %3012 = vmatpush.bf16.msra.mxu0 %v2193
  %3013 = vmatpush.bf16.msra.mxu0 %v2192
  %3014 = vmatpush.bf16.msra.mxu0 %v2191
  %3015 = vmatpush.bf16.msra.mxu0 %v2190
  %3016 = vmatpush.bf16.msra.mxu0 %v2189
  %3017 = vmatmul.bf16.gmra.mxu0 %v841
  %v3018 = vpop.f32.mrf.mxu0
  %v3019 = vadd.f32 %v3000, %v3018
  %v3020 = vpop.f32.mrf.mxu0
  %v3021 = vadd.f32 %v3002, %v3020
  %3022 = vmatmul.bf16.gmra.mxu0 %v873
  %v3023 = vpop.f32.mrf.mxu0
  %v3024 = vadd.f32 %v3005, %v3023
  %v3025 = vpop.f32.mrf.mxu0
  %v3026 = vadd.f32 %v3007, %v3025
  %3027 = vdwg.mxu0
  %3028 = vmatpush.bf16.msra.mxu0 %v2204
  %3029 = vmatpush.bf16.msra.mxu0 %v2203
  %3030 = vmatpush.bf16.msra.mxu0 %v2202
  %3031 = vmatpush.bf16.msra.mxu0 %v2201
  %3032 = vmatpush.bf16.msra.mxu0 %v2200
  %3033 = vmatpush.bf16.msra.mxu0 %v2199
  %3034 = vmatpush.bf16.msra.mxu0 %v2198
  %3035 = vmatpush.bf16.msra.mxu0 %v2197
  %3036 = vmatmul.bf16.gmra.mxu0 %v842
  %v3037 = vpop.f32.mrf.mxu0
  %v3038 = vadd.f32 %v3019, %v3037
  %v3039 = vpop.f32.mrf.mxu0
  %v3040 = vadd.f32 %v3021, %v3039
  %3041 = vmatmul.bf16.gmra.mxu0 %v874
  %v3042 = vpop.f32.mrf.mxu0
  %v3043 = vadd.f32 %v3024, %v3042
  %v3044 = vpop.f32.mrf.mxu0
  %v3045 = vadd.f32 %v3026, %v3044
  %3046 = vdwg.mxu0
  %3047 = vmatpush.bf16.msra.mxu0 %v2212
  %3048 = vmatpush.bf16.msra.mxu0 %v2211
  %3049 = vmatpush.bf16.msra.mxu0 %v2210
  %3050 = vmatpush.bf16.msra.mxu0 %v2209
  %3051 = vmatpush.bf16.msra.mxu0 %v2208
  %3052 = vmatpush.bf16.msra.mxu0 %v2207
  %3053 = vmatpush.bf16.msra.mxu0 %v2206
  %3054 = vmatpush.bf16.msra.mxu0 %v2205
  %3055 = vmatmul.bf16.gmra.mxu0 %v843
  %v3056 = vpop.f32.mrf.mxu0
  %v3057 = vadd.f32 %v3038, %v3056
  %v3058 = vpop.f32.mrf.mxu0
  %v3059 = vadd.f32 %v3040, %v3058
  %3060 = vmatmul.bf16.gmra.mxu0 %v875
  %v3061 = vpop.f32.mrf.mxu0
  %v3062 = vadd.f32 %v3043, %v3061
  %v3063 = vpop.f32.mrf.mxu0
  %v3064 = vadd.f32 %v3045, %v3063
  %3065 = vdwg.mxu0
  %3066 = vmatpush.bf16.msra.mxu0 %v2220
  %3067 = vmatpush.bf16.msra.mxu0 %v2219
  %3068 = vmatpush.bf16.msra.mxu0 %v2218
  %3069 = vmatpush.bf16.msra.mxu0 %v2217
  %3070 = vmatpush.bf16.msra.mxu0 %v2216
  %3071 = vmatpush.bf16.msra.mxu0 %v2215
  %3072 = vmatpush.bf16.msra.mxu0 %v2214
  %3073 = vmatpush.bf16.msra.mxu0 %v2213
  %3074 = vmatmul.bf16.gmra.mxu0 %v844
  %v3075 = vpop.f32.mrf.mxu0
  %v3076 = vadd.f32 %v3057, %v3075
  %v3077 = vpop.f32.mrf.mxu0
  %v3078 = vadd.f32 %v3059, %v3077
  %3079 = vmatmul.bf16.gmra.mxu0 %v876
  %v3080 = vpop.f32.mrf.mxu0
  %v3081 = vadd.f32 %v3062, %v3080
  %v3082 = vpop.f32.mrf.mxu0
  %v3083 = vadd.f32 %v3064, %v3082
  %3084 = vdwg.mxu0
  %v3085 = vld [vmem:[%s3] sm:$0xf]
  %v3086 = vld [vmem:[%s3 + $0x4] sm:$0xf]
  %v3087 = vld [vmem:[%s3 + $0x8] sm:$0xf]
  %v3088 = vld [vmem:[%s3 + $0xc] sm:$0xf]
  %v3089 = vld [vmem:[%s3 + $0x10] sm:$0xf]
  %v3090 = vld [vmem:[%s3 + $0x14] sm:$0xf]
  %v3091 = vld [vmem:[%s3 + $0x18] sm:$0xf]
  %v3092 = vld [vmem:[%s3 + $0x1c] sm:$0xf]
  %v3093 = vld [vmem:[%s3 + $0x20] sm:$0xf]
  %v3094 = vld [vmem:[%s3 + $0x24] sm:$0xf]
  %v3095 = vld [vmem:[%s3 + $0x28] sm:$0xf]
  %v3096 = vld [vmem:[%s3 + $0x2c] sm:$0xf]
  %v3097 = vld [vmem:[%s3 + $0x30] sm:$0xf]
  %v3098 = vld [vmem:[%s3 + $0x34] sm:$0xf]
  %v3099 = vld [vmem:[%s3 + $0x38] sm:$0xf]
  %v3100 = vld [vmem:[%s3 + $0x3c] sm:$0xf]
  %v3101 = vld [vmem:[%s3 + $0x40] sm:$0xf]
  %v3102 = vld [vmem:[%s3 + $0x44] sm:$0xf]
  %v3103 = vld [vmem:[%s3 + $0x48] sm:$0xf]
  %v3104 = vld [vmem:[%s3 + $0x4c] sm:$0xf]
  %v3105 = vld [vmem:[%s3 + $0x50] sm:$0xf]
  %v3106 = vld [vmem:[%s3 + $0x54] sm:$0xf]
  %v3107 = vld [vmem:[%s3 + $0x58] sm:$0xf]
  %v3108 = vld [vmem:[%s3 + $0x5c] sm:$0xf]
  %v3109 = vld [vmem:[%s3 + $0x60] sm:$0xf]
  %v3110 = vld [vmem:[%s3 + $0x64] sm:$0xf]
  %v3111 = vld [vmem:[%s3 + $0x68] sm:$0xf]
  %v3112 = vld [vmem:[%s3 + $0x6c] sm:$0xf]
  %v3113 = vld [vmem:[%s3 + $0x70] sm:$0xf]
  %v3114 = vld [vmem:[%s3 + $0x74] sm:$0xf]
  %v3115 = vld [vmem:[%s3 + $0x78] sm:$0xf]
  %v3116 = vld [vmem:[%s3 + $0x7c] sm:$0xf]
  %v3117 = vld [vmem:[%s3 + $0x80] sm:$0xf]
  %v3118 = vld [vmem:[%s3 + $0x84] sm:$0xf]
  %v3119 = vld [vmem:[%s3 + $0x88] sm:$0xf]
  %v3120 = vld [vmem:[%s3 + $0x8c] sm:$0xf]
  %v3121 = vld [vmem:[%s3 + $0x90] sm:$0xf]
  %v3122 = vld [vmem:[%s3 + $0x94] sm:$0xf]
  %v3123 = vld [vmem:[%s3 + $0x98] sm:$0xf]
  %v3124 = vld [vmem:[%s3 + $0x9c] sm:$0xf]
  %v3125 = vld [vmem:[%s3 + $0xa0] sm:$0xf]
  %v3126 = vld [vmem:[%s3 + $0xa4] sm:$0xf]
  %v3127 = vld [vmem:[%s3 + $0xa8] sm:$0xf]
  %v3128 = vld [vmem:[%s3 + $0xac] sm:$0xf]
  %v3129 = vld [vmem:[%s3 + $0xb0] sm:$0xf]
  %v3130 = vld [vmem:[%s3 + $0xb4] sm:$0xf]
  %v3131 = vld [vmem:[%s3 + $0xb8] sm:$0xf]
  %v3132 = vld [vmem:[%s3 + $0xbc] sm:$0xf]
  %v3133 = vld [vmem:[%s3 + $0xc0] sm:$0xf]
  %v3134 = vld [vmem:[%s3 + $0xc4] sm:$0xf]
  %v3135 = vld [vmem:[%s3 + $0xc8] sm:$0xf]
  %v3136 = vld [vmem:[%s3 + $0xcc] sm:$0xf]
  %v3137 = vld [vmem:[%s3 + $0xd0] sm:$0xf]
  %v3138 = vld [vmem:[%s3 + $0xd4] sm:$0xf]
  %v3139 = vld [vmem:[%s3 + $0xd8] sm:$0xf]
  %v3140 = vld [vmem:[%s3 + $0xdc] sm:$0xf]
  %v3141 = vld [vmem:[%s3 + $0xe0] sm:$0xf]
  %v3142 = vld [vmem:[%s3 + $0xe4] sm:$0xf]
  %v3143 = vld [vmem:[%s3 + $0xe8] sm:$0xf]
  %v3144 = vld [vmem:[%s3 + $0xec] sm:$0xf]
  %v3145 = vld [vmem:[%s3 + $0xf0] sm:$0xf]
  %v3146 = vld [vmem:[%s3 + $0xf4] sm:$0xf]
  %v3147 = vld [vmem:[%s3 + $0xf8] sm:$0xf]
  %v3148 = vld [vmem:[%s3 + $0xfc] sm:$0xf]
  %v3149 = vld [vmem:[%s3 + $0x100] sm:$0xf]
  %v3150 = vld [vmem:[%s3 + $0x104] sm:$0xf]
  %v3151 = vld [vmem:[%s3 + $0x108] sm:$0xf]
  %v3152 = vld [vmem:[%s3 + $0x10c] sm:$0xf]
  %v3153 = vld [vmem:[%s3 + $0x110] sm:$0xf]
  %v3154 = vld [vmem:[%s3 + $0x114] sm:$0xf]
  %v3155 = vld [vmem:[%s3 + $0x118] sm:$0xf]
  %v3156 = vld [vmem:[%s3 + $0x11c] sm:$0xf]
  %v3157 = vld [vmem:[%s3 + $0x120] sm:$0xf]
  %v3158 = vld [vmem:[%s3 + $0x124] sm:$0xf]
  %v3159 = vld [vmem:[%s3 + $0x128] sm:$0xf]
  %v3160 = vld [vmem:[%s3 + $0x12c] sm:$0xf]
  %v3161 = vld [vmem:[%s3 + $0x130] sm:$0xf]
  %v3162 = vld [vmem:[%s3 + $0x134] sm:$0xf]
  %v3163 = vld [vmem:[%s3 + $0x138] sm:$0xf]
  %v3164 = vld [vmem:[%s3 + $0x13c] sm:$0xf]
  %v3165 = vld [vmem:[%s3 + $0x140] sm:$0xf]
  %v3166 = vld [vmem:[%s3 + $0x144] sm:$0xf]
  %v3167 = vld [vmem:[%s3 + $0x148] sm:$0xf]
  %v3168 = vld [vmem:[%s3 + $0x14c] sm:$0xf]
  %v3169 = vld [vmem:[%s3 + $0x150] sm:$0xf]
  %v3170 = vld [vmem:[%s3 + $0x154] sm:$0xf]
  %v3171 = vld [vmem:[%s3 + $0x158] sm:$0xf]
  %v3172 = vld [vmem:[%s3 + $0x15c] sm:$0xf]
  %v3173 = vld [vmem:[%s3 + $0x160] sm:$0xf]
  %v3174 = vld [vmem:[%s3 + $0x164] sm:$0xf]
  %v3175 = vld [vmem:[%s3 + $0x168] sm:$0xf]
  %v3176 = vld [vmem:[%s3 + $0x16c] sm:$0xf]
  %v3177 = vld [vmem:[%s3 + $0x170] sm:$0xf]
  %v3178 = vld [vmem:[%s3 + $0x174] sm:$0xf]
  %v3179 = vld [vmem:[%s3 + $0x178] sm:$0xf]
  %v3180 = vld [vmem:[%s3 + $0x17c] sm:$0xf]
  %v3181 = vld [vmem:[%s3 + $0x180] sm:$0xf]
  %v3182 = vld [vmem:[%s3 + $0x184] sm:$0xf]
  %v3183 = vld [vmem:[%s3 + $0x188] sm:$0xf]
  %v3184 = vld [vmem:[%s3 + $0x18c] sm:$0xf]
  %v3185 = vld [vmem:[%s3 + $0x190] sm:$0xf]
  %v3186 = vld [vmem:[%s3 + $0x194] sm:$0xf]
  %v3187 = vld [vmem:[%s3 + $0x198] sm:$0xf]
  %v3188 = vld [vmem:[%s3 + $0x19c] sm:$0xf]
  %v3189 = vld [vmem:[%s3 + $0x1a0] sm:$0xf]
  %v3190 = vld [vmem:[%s3 + $0x1a4] sm:$0xf]
  %v3191 = vld [vmem:[%s3 + $0x1a8] sm:$0xf]
  %v3192 = vld [vmem:[%s3 + $0x1ac] sm:$0xf]
  %v3193 = vld [vmem:[%s3 + $0x1b0] sm:$0xf]
  %v3194 = vld [vmem:[%s3 + $0x1b4] sm:$0xf]
  %v3195 = vld [vmem:[%s3 + $0x1b8] sm:$0xf]
  %v3196 = vld [vmem:[%s3 + $0x1bc] sm:$0xf]
  %v3197 = vld [vmem:[%s3 + $0x1c0] sm:$0xf]
  %v3198 = vld [vmem:[%s3 + $0x1c4] sm:$0xf]
  %v3199 = vld [vmem:[%s3 + $0x1c8] sm:$0xf]
  %v3200 = vld [vmem:[%s3 + $0x1cc] sm:$0xf]
  %v3201 = vld [vmem:[%s3 + $0x1d0] sm:$0xf]
  %v3202 = vld [vmem:[%s3 + $0x1d4] sm:$0xf]
  %v3203 = vld [vmem:[%s3 + $0x1d8] sm:$0xf]
  %v3204 = vld [vmem:[%s3 + $0x1dc] sm:$0xf]
  %v3205 = vld [vmem:[%s3 + $0x1e0] sm:$0xf]
  %v3206 = vld [vmem:[%s3 + $0x1e4] sm:$0xf]
  %v3207 = vld [vmem:[%s3 + $0x1e8] sm:$0xf]
  %v3208 = vld [vmem:[%s3 + $0x1ec] sm:$0xf]
  %v3209 = vld [vmem:[%s3 + $0x1f0] sm:$0xf]
  %v3210 = vld [vmem:[%s3 + $0x1f4] sm:$0xf]
  %v3211 = vld [vmem:[%s3 + $0x1f8] sm:$0xf]
  %v3212 = vld [vmem:[%s3 + $0x1fc] sm:$0xf]
  %v3213 = vld [vmem:[%s3 + $0x200] sm:$0xf]
  %v3214 = vld [vmem:[%s3 + $0x204] sm:$0xf]
  %v3215 = vld [vmem:[%s3 + $0x208] sm:$0xf]
  %v3216 = vld [vmem:[%s3 + $0x20c] sm:$0xf]
  %v3217 = vld [vmem:[%s3 + $0x210] sm:$0xf]
  %v3218 = vld [vmem:[%s3 + $0x214] sm:$0xf]
  %v3219 = vld [vmem:[%s3 + $0x218] sm:$0xf]
  %v3220 = vld [vmem:[%s3 + $0x21c] sm:$0xf]
  %v3221 = vld [vmem:[%s3 + $0x220] sm:$0xf]
  %v3222 = vld [vmem:[%s3 + $0x224] sm:$0xf]
  %v3223 = vld [vmem:[%s3 + $0x228] sm:$0xf]
  %v3224 = vld [vmem:[%s3 + $0x22c] sm:$0xf]
  %v3225 = vld [vmem:[%s3 + $0x230] sm:$0xf]
  %v3226 = vld [vmem:[%s3 + $0x234] sm:$0xf]
  %v3227 = vld [vmem:[%s3 + $0x238] sm:$0xf]
  %v3228 = vld [vmem:[%s3 + $0x23c] sm:$0xf]
  %v3229 = vld [vmem:[%s3 + $0x240] sm:$0xf]
  %v3230 = vld [vmem:[%s3 + $0x244] sm:$0xf]
  %v3231 = vld [vmem:[%s3 + $0x248] sm:$0xf]
  %v3232 = vld [vmem:[%s3 + $0x24c] sm:$0xf]
  %v3233 = vld [vmem:[%s3 + $0x250] sm:$0xf]
  %v3234 = vld [vmem:[%s3 + $0x254] sm:$0xf]
  %v3235 = vld [vmem:[%s3 + $0x258] sm:$0xf]
  %v3236 = vld [vmem:[%s3 + $0x25c] sm:$0xf]
  %v3237 = vld [vmem:[%s3 + $0x260] sm:$0xf]
  %v3238 = vld [vmem:[%s3 + $0x264] sm:$0xf]
  %v3239 = vld [vmem:[%s3 + $0x268] sm:$0xf]
  %v3240 = vld [vmem:[%s3 + $0x26c] sm:$0xf]
  %v3241 = vld [vmem:[%s3 + $0x270] sm:$0xf]
  %v3242 = vld [vmem:[%s3 + $0x274] sm:$0xf]
  %v3243 = vld [vmem:[%s3 + $0x278] sm:$0xf]
  %v3244 = vld [vmem:[%s3 + $0x27c] sm:$0xf]
  %v3245 = vld [vmem:[%s3 + $0x280] sm:$0xf]
  %v3246 = vld [vmem:[%s3 + $0x284] sm:$0xf]
  %v3247 = vld [vmem:[%s3 + $0x288] sm:$0xf]
  %v3248 = vld [vmem:[%s3 + $0x28c] sm:$0xf]
  %v3249 = vld [vmem:[%s3 + $0x290] sm:$0xf]
  %v3250 = vld [vmem:[%s3 + $0x294] sm:$0xf]
  %v3251 = vld [vmem:[%s3 + $0x298] sm:$0xf]
  %v3252 = vld [vmem:[%s3 + $0x29c] sm:$0xf]
  %v3253 = vld [vmem:[%s3 + $0x2a0] sm:$0xf]
  %v3254 = vld [vmem:[%s3 + $0x2a4] sm:$0xf]
  %v3255 = vld [vmem:[%s3 + $0x2a8] sm:$0xf]
  %v3256 = vld [vmem:[%s3 + $0x2ac] sm:$0xf]
  %v3257 = vld [vmem:[%s3 + $0x2b0] sm:$0xf]
  %v3258 = vld [vmem:[%s3 + $0x2b4] sm:$0xf]
  %v3259 = vld [vmem:[%s3 + $0x2b8] sm:$0xf]
  %v3260 = vld [vmem:[%s3 + $0x2bc] sm:$0xf]
  %v3261 = vld [vmem:[%s3 + $0x2c0] sm:$0xf]
  %v3262 = vld [vmem:[%s3 + $0x2c4] sm:$0xf]
  %v3263 = vld [vmem:[%s3 + $0x2c8] sm:$0xf]
  %v3264 = vld [vmem:[%s3 + $0x2cc] sm:$0xf]
  %v3265 = vld [vmem:[%s3 + $0x2d0] sm:$0xf]
  %v3266 = vld [vmem:[%s3 + $0x2d4] sm:$0xf]
  %v3267 = vld [vmem:[%s3 + $0x2d8] sm:$0xf]
  %v3268 = vld [vmem:[%s3 + $0x2dc] sm:$0xf]
  %v3269 = vld [vmem:[%s3 + $0x2e0] sm:$0xf]
  %v3270 = vld [vmem:[%s3 + $0x2e4] sm:$0xf]
  %v3271 = vld [vmem:[%s3 + $0x2e8] sm:$0xf]
  %v3272 = vld [vmem:[%s3 + $0x2ec] sm:$0xf]
  %v3273 = vld [vmem:[%s3 + $0x2f0] sm:$0xf]
  %v3274 = vld [vmem:[%s3 + $0x2f4] sm:$0xf]
  %v3275 = vld [vmem:[%s3 + $0x2f8] sm:$0xf]
  %v3276 = vld [vmem:[%s3 + $0x2fc] sm:$0xf]
  %v3277 = vld [vmem:[%s3 + $0x300] sm:$0xf]
  %v3278 = vld [vmem:[%s3 + $0x304] sm:$0xf]
  %v3279 = vld [vmem:[%s3 + $0x308] sm:$0xf]
  %v3280 = vld [vmem:[%s3 + $0x30c] sm:$0xf]
  %v3281 = vld [vmem:[%s3 + $0x310] sm:$0xf]
  %v3282 = vld [vmem:[%s3 + $0x314] sm:$0xf]
  %v3283 = vld [vmem:[%s3 + $0x318] sm:$0xf]
  %v3284 = vld [vmem:[%s3 + $0x31c] sm:$0xf]
  %v3285 = vld [vmem:[%s3 + $0x320] sm:$0xf]
  %v3286 = vld [vmem:[%s3 + $0x324] sm:$0xf]
  %v3287 = vld [vmem:[%s3 + $0x328] sm:$0xf]
  %v3288 = vld [vmem:[%s3 + $0x32c] sm:$0xf]
  %v3289 = vld [vmem:[%s3 + $0x330] sm:$0xf]
  %v3290 = vld [vmem:[%s3 + $0x334] sm:$0xf]
  %v3291 = vld [vmem:[%s3 + $0x338] sm:$0xf]
  %v3292 = vld [vmem:[%s3 + $0x33c] sm:$0xf]
  %v3293 = vld [vmem:[%s3 + $0x340] sm:$0xf]
  %v3294 = vld [vmem:[%s3 + $0x344] sm:$0xf]
  %v3295 = vld [vmem:[%s3 + $0x348] sm:$0xf]
  %v3296 = vld [vmem:[%s3 + $0x34c] sm:$0xf]
  %v3297 = vld [vmem:[%s3 + $0x350] sm:$0xf]
  %v3298 = vld [vmem:[%s3 + $0x354] sm:$0xf]
  %v3299 = vld [vmem:[%s3 + $0x358] sm:$0xf]
  %v3300 = vld [vmem:[%s3 + $0x35c] sm:$0xf]
  %v3301 = vld [vmem:[%s3 + $0x360] sm:$0xf]
  %v3302 = vld [vmem:[%s3 + $0x364] sm:$0xf]
  %v3303 = vld [vmem:[%s3 + $0x368] sm:$0xf]
  %v3304 = vld [vmem:[%s3 + $0x36c] sm:$0xf]
  %v3305 = vld [vmem:[%s3 + $0x370] sm:$0xf]
  %v3306 = vld [vmem:[%s3 + $0x374] sm:$0xf]
  %v3307 = vld [vmem:[%s3 + $0x378] sm:$0xf]
  %v3308 = vld [vmem:[%s3 + $0x37c] sm:$0xf]
  %v3309 = vld [vmem:[%s3 + $0x380] sm:$0xf]
  %v3310 = vld [vmem:[%s3 + $0x384] sm:$0xf]
  %v3311 = vld [vmem:[%s3 + $0x388] sm:$0xf]
  %v3312 = vld [vmem:[%s3 + $0x38c] sm:$0xf]
  %v3313 = vld [vmem:[%s3 + $0x390] sm:$0xf]
  %v3314 = vld [vmem:[%s3 + $0x394] sm:$0xf]
  %v3315 = vld [vmem:[%s3 + $0x398] sm:$0xf]
  %v3316 = vld [vmem:[%s3 + $0x39c] sm:$0xf]
  %v3317 = vld [vmem:[%s3 + $0x3a0] sm:$0xf]
  %v3318 = vld [vmem:[%s3 + $0x3a4] sm:$0xf]
  %v3319 = vld [vmem:[%s3 + $0x3a8] sm:$0xf]
  %v3320 = vld [vmem:[%s3 + $0x3ac] sm:$0xf]
  %v3321 = vld [vmem:[%s3 + $0x3b0] sm:$0xf]
  %v3322 = vld [vmem:[%s3 + $0x3b4] sm:$0xf]
  %v3323 = vld [vmem:[%s3 + $0x3b8] sm:$0xf]
  %v3324 = vld [vmem:[%s3 + $0x3bc] sm:$0xf]
  %v3325 = vld [vmem:[%s3 + $0x3c0] sm:$0xf]
  %v3326 = vld [vmem:[%s3 + $0x3c4] sm:$0xf]
  %v3327 = vld [vmem:[%s3 + $0x3c8] sm:$0xf]
  %v3328 = vld [vmem:[%s3 + $0x3cc] sm:$0xf]
  %v3329 = vld [vmem:[%s3 + $0x3d0] sm:$0xf]
  %v3330 = vld [vmem:[%s3 + $0x3d4] sm:$0xf]
  %v3331 = vld [vmem:[%s3 + $0x3d8] sm:$0xf]
  %v3332 = vld [vmem:[%s3 + $0x3dc] sm:$0xf]
  %v3333 = vld [vmem:[%s3 + $0x3e0] sm:$0xf]
  %v3334 = vld [vmem:[%s3 + $0x3e4] sm:$0xf]
  %v3335 = vld [vmem:[%s3 + $0x3e8] sm:$0xf]
  %v3336 = vld [vmem:[%s3 + $0x3ec] sm:$0xf]
  %v3337 = vld [vmem:[%s3 + $0x3f0] sm:$0xf]
  %v3338 = vld [vmem:[%s3 + $0x3f4] sm:$0xf]
  %v3339 = vld [vmem:[%s3 + $0x3f8] sm:$0xf]
  %v3340 = vld [vmem:[%s3 + $0x3fc] sm:$0xf]
  %v3341 = vld [vmem:[%s3 + $0x400] sm:$0xf]
  %v3342 = vld [vmem:[%s3 + $0x404] sm:$0xf]
  %v3343 = vld [vmem:[%s3 + $0x408] sm:$0xf]
  %v3344 = vld [vmem:[%s3 + $0x40c] sm:$0xf]
  %v3345 = vld [vmem:[%s3 + $0x410] sm:$0xf]
  %v3346 = vld [vmem:[%s3 + $0x414] sm:$0xf]
  %v3347 = vld [vmem:[%s3 + $0x418] sm:$0xf]
  %v3348 = vld [vmem:[%s3 + $0x41c] sm:$0xf]
  %v3349 = vld [vmem:[%s3 + $0x420] sm:$0xf]
  %v3350 = vld [vmem:[%s3 + $0x424] sm:$0xf]
  %v3351 = vld [vmem:[%s3 + $0x428] sm:$0xf]
  %v3352 = vld [vmem:[%s3 + $0x42c] sm:$0xf]
  %v3353 = vld [vmem:[%s3 + $0x430] sm:$0xf]
  %v3354 = vld [vmem:[%s3 + $0x434] sm:$0xf]
  %v3355 = vld [vmem:[%s3 + $0x438] sm:$0xf]
  %v3356 = vld [vmem:[%s3 + $0x43c] sm:$0xf]
  %v3357 = vld [vmem:[%s3 + $0x440] sm:$0xf]
  %v3358 = vld [vmem:[%s3 + $0x444] sm:$0xf]
  %v3359 = vld [vmem:[%s3 + $0x448] sm:$0xf]
  %v3360 = vld [vmem:[%s3 + $0x44c] sm:$0xf]
  %v3361 = vld [vmem:[%s3 + $0x450] sm:$0xf]
  %v3362 = vld [vmem:[%s3 + $0x454] sm:$0xf]
  %v3363 = vld [vmem:[%s3 + $0x458] sm:$0xf]
  %v3364 = vld [vmem:[%s3 + $0x45c] sm:$0xf]
  %v3365 = vld [vmem:[%s3 + $0x460] sm:$0xf]
  %v3366 = vld [vmem:[%s3 + $0x464] sm:$0xf]
  %v3367 = vld [vmem:[%s3 + $0x468] sm:$0xf]
  %v3368 = vld [vmem:[%s3 + $0x46c] sm:$0xf]
  %v3369 = vld [vmem:[%s3 + $0x470] sm:$0xf]
  %v3370 = vld [vmem:[%s3 + $0x474] sm:$0xf]
  %v3371 = vld [vmem:[%s3 + $0x478] sm:$0xf]
  %v3372 = vld [vmem:[%s3 + $0x47c] sm:$0xf]
  %v3373 = vld [vmem:[%s3 + $0x480] sm:$0xf]
  %v3374 = vld [vmem:[%s3 + $0x484] sm:$0xf]
  %v3375 = vld [vmem:[%s3 + $0x488] sm:$0xf]
  %v3376 = vld [vmem:[%s3 + $0x48c] sm:$0xf]
  %v3377 = vld [vmem:[%s3 + $0x490] sm:$0xf]
  %v3378 = vld [vmem:[%s3 + $0x494] sm:$0xf]
  %v3379 = vld [vmem:[%s3 + $0x498] sm:$0xf]
  %v3380 = vld [vmem:[%s3 + $0x49c] sm:$0xf]
  %v3381 = vld [vmem:[%s3 + $0x4a0] sm:$0xf]
  %v3382 = vld [vmem:[%s3 + $0x4a4] sm:$0xf]
  %v3383 = vld [vmem:[%s3 + $0x4a8] sm:$0xf]
  %v3384 = vld [vmem:[%s3 + $0x4ac] sm:$0xf]
  %v3385 = vld [vmem:[%s3 + $0x4b0] sm:$0xf]
  %v3386 = vld [vmem:[%s3 + $0x4b4] sm:$0xf]
  %v3387 = vld [vmem:[%s3 + $0x4b8] sm:$0xf]
  %v3388 = vld [vmem:[%s3 + $0x4bc] sm:$0xf]
  %v3389 = vld [vmem:[%s3 + $0x4c0] sm:$0xf]
  %v3390 = vld [vmem:[%s3 + $0x4c4] sm:$0xf]
  %v3391 = vld [vmem:[%s3 + $0x4c8] sm:$0xf]
  %v3392 = vld [vmem:[%s3 + $0x4cc] sm:$0xf]
  %v3393 = vld [vmem:[%s3 + $0x4d0] sm:$0xf]
  %v3394 = vld [vmem:[%s3 + $0x4d4] sm:$0xf]
  %v3395 = vld [vmem:[%s3 + $0x4d8] sm:$0xf]
  %v3396 = vld [vmem:[%s3 + $0x4dc] sm:$0xf]
  %v3397 = vld [vmem:[%s3 + $0x4e0] sm:$0xf]
  %v3398 = vld [vmem:[%s3 + $0x4e4] sm:$0xf]
  %v3399 = vld [vmem:[%s3 + $0x4e8] sm:$0xf]
  %v3400 = vld [vmem:[%s3 + $0x4ec] sm:$0xf]
  %v3401 = vld [vmem:[%s3 + $0x4f0] sm:$0xf]
  %v3402 = vld [vmem:[%s3 + $0x4f4] sm:$0xf]
  %v3403 = vld [vmem:[%s3 + $0x4f8] sm:$0xf]
  %v3404 = vld [vmem:[%s3 + $0x4fc] sm:$0xf]
  %v3405 = vld [vmem:[%s3 + $0x500] sm:$0xf]
  %v3406 = vld [vmem:[%s3 + $0x504] sm:$0xf]
  %v3407 = vld [vmem:[%s3 + $0x508] sm:$0xf]
  %v3408 = vld [vmem:[%s3 + $0x50c] sm:$0xf]
  %v3409 = vld [vmem:[%s3 + $0x510] sm:$0xf]
  %v3410 = vld [vmem:[%s3 + $0x514] sm:$0xf]
  %v3411 = vld [vmem:[%s3 + $0x518] sm:$0xf]
  %v3412 = vld [vmem:[%s3 + $0x51c] sm:$0xf]
  %v3413 = vld [vmem:[%s3 + $0x520] sm:$0xf]
  %v3414 = vld [vmem:[%s3 + $0x524] sm:$0xf]
  %v3415 = vld [vmem:[%s3 + $0x528] sm:$0xf]
  %v3416 = vld [vmem:[%s3 + $0x52c] sm:$0xf]
  %v3417 = vld [vmem:[%s3 + $0x530] sm:$0xf]
  %v3418 = vld [vmem:[%s3 + $0x534] sm:$0xf]
  %v3419 = vld [vmem:[%s3 + $0x538] sm:$0xf]
  %v3420 = vld [vmem:[%s3 + $0x53c] sm:$0xf]
  %v3421 = vld [vmem:[%s3 + $0x540] sm:$0xf]
  %v3422 = vld [vmem:[%s3 + $0x544] sm:$0xf]
  %v3423 = vld [vmem:[%s3 + $0x548] sm:$0xf]
  %v3424 = vld [vmem:[%s3 + $0x54c] sm:$0xf]
  %v3425 = vld [vmem:[%s3 + $0x550] sm:$0xf]
  %v3426 = vld [vmem:[%s3 + $0x554] sm:$0xf]
  %v3427 = vld [vmem:[%s3 + $0x558] sm:$0xf]
  %v3428 = vld [vmem:[%s3 + $0x55c] sm:$0xf]
  %v3429 = vld [vmem:[%s3 + $0x560] sm:$0xf]
  %v3430 = vld [vmem:[%s3 + $0x564] sm:$0xf]
  %v3431 = vld [vmem:[%s3 + $0x568] sm:$0xf]
  %v3432 = vld [vmem:[%s3 + $0x56c] sm:$0xf]
  %v3433 = vld [vmem:[%s3 + $0x570] sm:$0xf]
  %v3434 = vld [vmem:[%s3 + $0x574] sm:$0xf]
  %v3435 = vld [vmem:[%s3 + $0x578] sm:$0xf]
  %v3436 = vld [vmem:[%s3 + $0x57c] sm:$0xf]
  %v3437 = vld [vmem:[%s3 + $0x580] sm:$0xf]
  %v3438 = vld [vmem:[%s3 + $0x584] sm:$0xf]
  %v3439 = vld [vmem:[%s3 + $0x588] sm:$0xf]
  %v3440 = vld [vmem:[%s3 + $0x58c] sm:$0xf]
  %v3441 = vld [vmem:[%s3 + $0x590] sm:$0xf]
  %v3442 = vld [vmem:[%s3 + $0x594] sm:$0xf]
  %v3443 = vld [vmem:[%s3 + $0x598] sm:$0xf]
  %v3444 = vld [vmem:[%s3 + $0x59c] sm:$0xf]
  %v3445 = vld [vmem:[%s3 + $0x5a0] sm:$0xf]
  %v3446 = vld [vmem:[%s3 + $0x5a4] sm:$0xf]
  %v3447 = vld [vmem:[%s3 + $0x5a8] sm:$0xf]
  %v3448 = vld [vmem:[%s3 + $0x5ac] sm:$0xf]
  %v3449 = vld [vmem:[%s3 + $0x5b0] sm:$0xf]
  %v3450 = vld [vmem:[%s3 + $0x5b4] sm:$0xf]
  %v3451 = vld [vmem:[%s3 + $0x5b8] sm:$0xf]
  %v3452 = vld [vmem:[%s3 + $0x5bc] sm:$0xf]
  %v3453 = vld [vmem:[%s3 + $0x5c0] sm:$0xf]
  %v3454 = vld [vmem:[%s3 + $0x5c4] sm:$0xf]
  %v3455 = vld [vmem:[%s3 + $0x5c8] sm:$0xf]
  %v3456 = vld [vmem:[%s3 + $0x5cc] sm:$0xf]
  %v3457 = vld [vmem:[%s3 + $0x5d0] sm:$0xf]
  %v3458 = vld [vmem:[%s3 + $0x5d4] sm:$0xf]
  %v3459 = vld [vmem:[%s3 + $0x5d8] sm:$0xf]
  %v3460 = vld [vmem:[%s3 + $0x5dc] sm:$0xf]
  %v3461 = vld [vmem:[%s3 + $0x5e0] sm:$0xf]
  %v3462 = vld [vmem:[%s3 + $0x5e4] sm:$0xf]
  %v3463 = vld [vmem:[%s3 + $0x5e8] sm:$0xf]
  %v3464 = vld [vmem:[%s3 + $0x5ec] sm:$0xf]
  %v3465 = vld [vmem:[%s3 + $0x5f0] sm:$0xf]
  %v3466 = vld [vmem:[%s3 + $0x5f4] sm:$0xf]
  %v3467 = vld [vmem:[%s3 + $0x5f8] sm:$0xf]
  %v3468 = vld [vmem:[%s3 + $0x5fc] sm:$0xf]
  %v3469 = vld [vmem:[%s3 + $0x600] sm:$0xf]
  %v3470 = vld [vmem:[%s3 + $0x604] sm:$0xf]
  %v3471 = vld [vmem:[%s3 + $0x608] sm:$0xf]
  %v3472 = vld [vmem:[%s3 + $0x60c] sm:$0xf]
  %v3473 = vld [vmem:[%s3 + $0x610] sm:$0xf]
  %v3474 = vld [vmem:[%s3 + $0x614] sm:$0xf]
  %v3475 = vld [vmem:[%s3 + $0x618] sm:$0xf]
  %v3476 = vld [vmem:[%s3 + $0x61c] sm:$0xf]
  %v3477 = vld [vmem:[%s3 + $0x620] sm:$0xf]
  %v3478 = vld [vmem:[%s3 + $0x624] sm:$0xf]
  %v3479 = vld [vmem:[%s3 + $0x628] sm:$0xf]
  %v3480 = vld [vmem:[%s3 + $0x62c] sm:$0xf]
  %v3481 = vld [vmem:[%s3 + $0x630] sm:$0xf]
  %v3482 = vld [vmem:[%s3 + $0x634] sm:$0xf]
  %v3483 = vld [vmem:[%s3 + $0x638] sm:$0xf]
  %v3484 = vld [vmem:[%s3 + $0x63c] sm:$0xf]
  %v3485 = vld [vmem:[%s3 + $0x640] sm:$0xf]
  %v3486 = vld [vmem:[%s3 + $0x644] sm:$0xf]
  %v3487 = vld [vmem:[%s3 + $0x648] sm:$0xf]
  %v3488 = vld [vmem:[%s3 + $0x64c] sm:$0xf]
  %v3489 = vld [vmem:[%s3 + $0x650] sm:$0xf]
  %v3490 = vld [vmem:[%s3 + $0x654] sm:$0xf]
  %v3491 = vld [vmem:[%s3 + $0x658] sm:$0xf]
  %v3492 = vld [vmem:[%s3 + $0x65c] sm:$0xf]
  %v3493 = vld [vmem:[%s3 + $0x660] sm:$0xf]
  %v3494 = vld [vmem:[%s3 + $0x664] sm:$0xf]
  %v3495 = vld [vmem:[%s3 + $0x668] sm:$0xf]
  %v3496 = vld [vmem:[%s3 + $0x66c] sm:$0xf]
  %v3497 = vld [vmem:[%s3 + $0x670] sm:$0xf]
  %v3498 = vld [vmem:[%s3 + $0x674] sm:$0xf]
  %v3499 = vld [vmem:[%s3 + $0x678] sm:$0xf]
  %v3500 = vld [vmem:[%s3 + $0x67c] sm:$0xf]
  %v3501 = vld [vmem:[%s3 + $0x680] sm:$0xf]
  %v3502 = vld [vmem:[%s3 + $0x684] sm:$0xf]
  %v3503 = vld [vmem:[%s3 + $0x688] sm:$0xf]
  %v3504 = vld [vmem:[%s3 + $0x68c] sm:$0xf]
  %v3505 = vld [vmem:[%s3 + $0x690] sm:$0xf]
  %v3506 = vld [vmem:[%s3 + $0x694] sm:$0xf]
  %v3507 = vld [vmem:[%s3 + $0x698] sm:$0xf]
  %v3508 = vld [vmem:[%s3 + $0x69c] sm:$0xf]
  %v3509 = vld [vmem:[%s3 + $0x6a0] sm:$0xf]
  %v3510 = vld [vmem:[%s3 + $0x6a4] sm:$0xf]
  %v3511 = vld [vmem:[%s3 + $0x6a8] sm:$0xf]
  %v3512 = vld [vmem:[%s3 + $0x6ac] sm:$0xf]
  %v3513 = vld [vmem:[%s3 + $0x6b0] sm:$0xf]
  %v3514 = vld [vmem:[%s3 + $0x6b4] sm:$0xf]
  %v3515 = vld [vmem:[%s3 + $0x6b8] sm:$0xf]
  %v3516 = vld [vmem:[%s3 + $0x6bc] sm:$0xf]
  %v3517 = vld [vmem:[%s3 + $0x6c0] sm:$0xf]
  %v3518 = vld [vmem:[%s3 + $0x6c4] sm:$0xf]
  %v3519 = vld [vmem:[%s3 + $0x6c8] sm:$0xf]
  %v3520 = vld [vmem:[%s3 + $0x6cc] sm:$0xf]
  %v3521 = vld [vmem:[%s3 + $0x6d0] sm:$0xf]
  %v3522 = vld [vmem:[%s3 + $0x6d4] sm:$0xf]
  %v3523 = vld [vmem:[%s3 + $0x6d8] sm:$0xf]
  %v3524 = vld [vmem:[%s3 + $0x6dc] sm:$0xf]
  %v3525 = vld [vmem:[%s3 + $0x6e0] sm:$0xf]
  %v3526 = vld [vmem:[%s3 + $0x6e4] sm:$0xf]
  %v3527 = vld [vmem:[%s3 + $0x6e8] sm:$0xf]
  %v3528 = vld [vmem:[%s3 + $0x6ec] sm:$0xf]
  %v3529 = vld [vmem:[%s3 + $0x6f0] sm:$0xf]
  %v3530 = vld [vmem:[%s3 + $0x6f4] sm:$0xf]
  %v3531 = vld [vmem:[%s3 + $0x6f8] sm:$0xf]
  %v3532 = vld [vmem:[%s3 + $0x6fc] sm:$0xf]
  %v3533 = vld [vmem:[%s3 + $0x700] sm:$0xf]
  %v3534 = vld [vmem:[%s3 + $0x704] sm:$0xf]
  %v3535 = vld [vmem:[%s3 + $0x708] sm:$0xf]
  %v3536 = vld [vmem:[%s3 + $0x70c] sm:$0xf]
  %v3537 = vld [vmem:[%s3 + $0x710] sm:$0xf]
  %v3538 = vld [vmem:[%s3 + $0x714] sm:$0xf]
  %v3539 = vld [vmem:[%s3 + $0x718] sm:$0xf]
  %v3540 = vld [vmem:[%s3 + $0x71c] sm:$0xf]
  %v3541 = vld [vmem:[%s3 + $0x720] sm:$0xf]
  %v3542 = vld [vmem:[%s3 + $0x724] sm:$0xf]
  %v3543 = vld [vmem:[%s3 + $0x728] sm:$0xf]
  %v3544 = vld [vmem:[%s3 + $0x72c] sm:$0xf]
  %v3545 = vld [vmem:[%s3 + $0x730] sm:$0xf]
  %v3546 = vld [vmem:[%s3 + $0x734] sm:$0xf]
  %v3547 = vld [vmem:[%s3 + $0x738] sm:$0xf]
  %v3548 = vld [vmem:[%s3 + $0x73c] sm:$0xf]
  %v3549 = vld [vmem:[%s3 + $0x740] sm:$0xf]
  %v3550 = vld [vmem:[%s3 + $0x744] sm:$0xf]
  %v3551 = vld [vmem:[%s3 + $0x748] sm:$0xf]
  %v3552 = vld [vmem:[%s3 + $0x74c] sm:$0xf]
  %v3553 = vld [vmem:[%s3 + $0x750] sm:$0xf]
  %v3554 = vld [vmem:[%s3 + $0x754] sm:$0xf]
  %v3555 = vld [vmem:[%s3 + $0x758] sm:$0xf]
  %v3556 = vld [vmem:[%s3 + $0x75c] sm:$0xf]
  %v3557 = vld [vmem:[%s3 + $0x760] sm:$0xf]
  %v3558 = vld [vmem:[%s3 + $0x764] sm:$0xf]
  %v3559 = vld [vmem:[%s3 + $0x768] sm:$0xf]
  %v3560 = vld [vmem:[%s3 + $0x76c] sm:$0xf]
  %v3561 = vld [vmem:[%s3 + $0x770] sm:$0xf]
  %v3562 = vld [vmem:[%s3 + $0x774] sm:$0xf]
  %v3563 = vld [vmem:[%s3 + $0x778] sm:$0xf]
  %v3564 = vld [vmem:[%s3 + $0x77c] sm:$0xf]
  %v3565 = vld [vmem:[%s3 + $0x780] sm:$0xf]
  %v3566 = vld [vmem:[%s3 + $0x784] sm:$0xf]
  %v3567 = vld [vmem:[%s3 + $0x788] sm:$0xf]
  %v3568 = vld [vmem:[%s3 + $0x78c] sm:$0xf]
  %v3569 = vld [vmem:[%s3 + $0x790] sm:$0xf]
  %v3570 = vld [vmem:[%s3 + $0x794] sm:$0xf]
  %v3571 = vld [vmem:[%s3 + $0x798] sm:$0xf]
  %v3572 = vld [vmem:[%s3 + $0x79c] sm:$0xf]
  %v3573 = vld [vmem:[%s3 + $0x7a0] sm:$0xf]
  %v3574 = vld [vmem:[%s3 + $0x7a4] sm:$0xf]
  %v3575 = vld [vmem:[%s3 + $0x7a8] sm:$0xf]
  %v3576 = vld [vmem:[%s3 + $0x7ac] sm:$0xf]
  %v3577 = vld [vmem:[%s3 + $0x7b0] sm:$0xf]
  %v3578 = vld [vmem:[%s3 + $0x7b4] sm:$0xf]
  %v3579 = vld [vmem:[%s3 + $0x7b8] sm:$0xf]
  %v3580 = vld [vmem:[%s3 + $0x7bc] sm:$0xf]
  %v3581 = vld [vmem:[%s3 + $0x7c0] sm:$0xf]
  %v3582 = vld [vmem:[%s3 + $0x7c4] sm:$0xf]
  %v3583 = vld [vmem:[%s3 + $0x7c8] sm:$0xf]
  %v3584 = vld [vmem:[%s3 + $0x7cc] sm:$0xf]
  %v3585 = vld [vmem:[%s3 + $0x7d0] sm:$0xf]
  %v3586 = vld [vmem:[%s3 + $0x7d4] sm:$0xf]
  %v3587 = vld [vmem:[%s3 + $0x7d8] sm:$0xf]
  %v3588 = vld [vmem:[%s3 + $0x7dc] sm:$0xf]
  %v3589 = vld [vmem:[%s3 + $0x7e0] sm:$0xf]
  %v3590 = vld [vmem:[%s3 + $0x7e4] sm:$0xf]
  %v3591 = vld [vmem:[%s3 + $0x7e8] sm:$0xf]
  %v3592 = vld [vmem:[%s3 + $0x7ec] sm:$0xf]
  %v3593 = vld [vmem:[%s3 + $0x7f0] sm:$0xf]
  %v3594 = vld [vmem:[%s3 + $0x7f4] sm:$0xf]
  %v3595 = vld [vmem:[%s3 + $0x7f8] sm:$0xf]
  %v3596 = vld [vmem:[%s3 + $0x7fc] sm:$0xf]
  %v3597 = vpack.c.bf16 %v3078, %v3076
  %v3598 = vpack.c.bf16 %v3083, %v3081
  %v3599 = vld [vmem:[%s4] sm:$0xff]
  %v3600 = vld [vmem:[%s4 + $0x8] sm:$0xff]
  %v3601 = vld [vmem:[%s4 + $0x10] sm:$0xff]
  %v3602 = vld [vmem:[%s4 + $0x18] sm:$0xff]
  %v3603 = vld [vmem:[%s4 + $0x20] sm:$0xff]
  %v3604 = vld [vmem:[%s4 + $0x28] sm:$0xff]
  %v3605 = vld [vmem:[%s4 + $0x30] sm:$0xff]
  %v3606 = vld [vmem:[%s4 + $0x38] sm:$0xff]
  %v3607 = vld [vmem:[%s4 + $0x40] sm:$0xff]
  %v3608 = vld [vmem:[%s4 + $0x48] sm:$0xff]
  %v3609 = vld [vmem:[%s4 + $0x50] sm:$0xff]
  %v3610 = vld [vmem:[%s4 + $0x58] sm:$0xff]
  %v3611 = vld [vmem:[%s4 + $0x60] sm:$0xff]
  %v3612 = vld [vmem:[%s4 + $0x68] sm:$0xff]
  %v3613 = vld [vmem:[%s4 + $0x70] sm:$0xff]
  %v3614 = vld [vmem:[%s4 + $0x78] sm:$0xff]
  %v3615 = vld [vmem:[%s4 + $0x80] sm:$0xff]
  %v3616 = vld [vmem:[%s4 + $0x88] sm:$0xff]
  %v3617 = vld [vmem:[%s4 + $0x90] sm:$0xff]
  %v3618 = vld [vmem:[%s4 + $0x98] sm:$0xff]
  %v3619 = vld [vmem:[%s4 + $0xa0] sm:$0xff]
  %v3620 = vld [vmem:[%s4 + $0xa8] sm:$0xff]
  %v3621 = vld [vmem:[%s4 + $0xb0] sm:$0xff]
  %v3622 = vld [vmem:[%s4 + $0xb8] sm:$0xff]
  %v3623 = vld [vmem:[%s4 + $0xc0] sm:$0xff]
  %v3624 = vld [vmem:[%s4 + $0xc8] sm:$0xff]
  %v3625 = vld [vmem:[%s4 + $0xd0] sm:$0xff]
  %v3626 = vld [vmem:[%s4 + $0xd8] sm:$0xff]
  %v3627 = vld [vmem:[%s4 + $0xe0] sm:$0xff]
  %v3628 = vld [vmem:[%s4 + $0xe8] sm:$0xff]
  %v3629 = vld [vmem:[%s4 + $0xf0] sm:$0xff]
  %v3630 = vld [vmem:[%s4 + $0xf8] sm:$0xff]
  %v3631 = vld [vmem:[%s4 + $0x100] sm:$0xff]
  %v3632 = vld [vmem:[%s4 + $0x108] sm:$0xff]
  %v3633 = vld [vmem:[%s4 + $0x110] sm:$0xff]
  %v3634 = vld [vmem:[%s4 + $0x118] sm:$0xff]
  %v3635 = vld [vmem:[%s4 + $0x120] sm:$0xff]
  %v3636 = vld [vmem:[%s4 + $0x128] sm:$0xff]
  %v3637 = vld [vmem:[%s4 + $0x130] sm:$0xff]
  %v3638 = vld [vmem:[%s4 + $0x138] sm:$0xff]
  %v3639 = vld [vmem:[%s4 + $0x140] sm:$0xff]
  %v3640 = vld [vmem:[%s4 + $0x148] sm:$0xff]
  %v3641 = vld [vmem:[%s4 + $0x150] sm:$0xff]
  %v3642 = vld [vmem:[%s4 + $0x158] sm:$0xff]
  %v3643 = vld [vmem:[%s4 + $0x160] sm:$0xff]
  %v3644 = vld [vmem:[%s4 + $0x168] sm:$0xff]
  %v3645 = vld [vmem:[%s4 + $0x170] sm:$0xff]
  %v3646 = vld [vmem:[%s4 + $0x178] sm:$0xff]
  %v3647 = vld [vmem:[%s4 + $0x180] sm:$0xff]
  %v3648 = vld [vmem:[%s4 + $0x188] sm:$0xff]
  %v3649 = vld [vmem:[%s4 + $0x190] sm:$0xff]
  %v3650 = vld [vmem:[%s4 + $0x198] sm:$0xff]
  %v3651 = vld [vmem:[%s4 + $0x1a0] sm:$0xff]
  %v3652 = vld [vmem:[%s4 + $0x1a8] sm:$0xff]
  %v3653 = vld [vmem:[%s4 + $0x1b0] sm:$0xff]
  %v3654 = vld [vmem:[%s4 + $0x1b8] sm:$0xff]
  %v3655 = vld [vmem:[%s4 + $0x1c0] sm:$0xff]
  %v3656 = vld [vmem:[%s4 + $0x1c8] sm:$0xff]
  %v3657 = vld [vmem:[%s4 + $0x1d0] sm:$0xff]
  %v3658 = vld [vmem:[%s4 + $0x1d8] sm:$0xff]
  %v3659 = vld [vmem:[%s4 + $0x1e0] sm:$0xff]
  %v3660 = vld [vmem:[%s4 + $0x1e8] sm:$0xff]
  %v3661 = vld [vmem:[%s4 + $0x1f0] sm:$0xff]
  %v3662 = vld [vmem:[%s4 + $0x1f8] sm:$0xff]
  %v3663 = vld [vmem:[%s4 + $0x200] sm:$0xff]
  %v3664 = vld [vmem:[%s4 + $0x208] sm:$0xff]
  %v3665 = vld [vmem:[%s4 + $0x210] sm:$0xff]
  %v3666 = vld [vmem:[%s4 + $0x218] sm:$0xff]
  %v3667 = vld [vmem:[%s4 + $0x220] sm:$0xff]
  %v3668 = vld [vmem:[%s4 + $0x228] sm:$0xff]
  %v3669 = vld [vmem:[%s4 + $0x230] sm:$0xff]
  %v3670 = vld [vmem:[%s4 + $0x238] sm:$0xff]
  %v3671 = vld [vmem:[%s4 + $0x240] sm:$0xff]
  %v3672 = vld [vmem:[%s4 + $0x248] sm:$0xff]
  %v3673 = vld [vmem:[%s4 + $0x250] sm:$0xff]
  %v3674 = vld [vmem:[%s4 + $0x258] sm:$0xff]
  %v3675 = vld [vmem:[%s4 + $0x260] sm:$0xff]
  %v3676 = vld [vmem:[%s4 + $0x268] sm:$0xff]
  %v3677 = vld [vmem:[%s4 + $0x270] sm:$0xff]
  %v3678 = vld [vmem:[%s4 + $0x278] sm:$0xff]
  %v3679 = vld [vmem:[%s4 + $0x280] sm:$0xff]
  %v3680 = vld [vmem:[%s4 + $0x288] sm:$0xff]
  %v3681 = vld [vmem:[%s4 + $0x290] sm:$0xff]
  %v3682 = vld [vmem:[%s4 + $0x298] sm:$0xff]
  %v3683 = vld [vmem:[%s4 + $0x2a0] sm:$0xff]
  %v3684 = vld [vmem:[%s4 + $0x2a8] sm:$0xff]
  %v3685 = vld [vmem:[%s4 + $0x2b0] sm:$0xff]
  %v3686 = vld [vmem:[%s4 + $0x2b8] sm:$0xff]
  %v3687 = vld [vmem:[%s4 + $0x2c0] sm:$0xff]
  %v3688 = vld [vmem:[%s4 + $0x2c8] sm:$0xff]
  %v3689 = vld [vmem:[%s4 + $0x2d0] sm:$0xff]
  %v3690 = vld [vmem:[%s4 + $0x2d8] sm:$0xff]
  %v3691 = vld [vmem:[%s4 + $0x2e0] sm:$0xff]
  %v3692 = vld [vmem:[%s4 + $0x2e8] sm:$0xff]
  %v3693 = vld [vmem:[%s4 + $0x2f0] sm:$0xff]
  %v3694 = vld [vmem:[%s4 + $0x2f8] sm:$0xff]
  %v3695 = vld [vmem:[%s4 + $0x300] sm:$0xff]
  %v3696 = vld [vmem:[%s4 + $0x308] sm:$0xff]
  %v3697 = vld [vmem:[%s4 + $0x310] sm:$0xff]
  %v3698 = vld [vmem:[%s4 + $0x318] sm:$0xff]
  %v3699 = vld [vmem:[%s4 + $0x320] sm:$0xff]
  %v3700 = vld [vmem:[%s4 + $0x328] sm:$0xff]
  %v3701 = vld [vmem:[%s4 + $0x330] sm:$0xff]
  %v3702 = vld [vmem:[%s4 + $0x338] sm:$0xff]
  %v3703 = vld [vmem:[%s4 + $0x340] sm:$0xff]
  %v3704 = vld [vmem:[%s4 + $0x348] sm:$0xff]
  %v3705 = vld [vmem:[%s4 + $0x350] sm:$0xff]
  %v3706 = vld [vmem:[%s4 + $0x358] sm:$0xff]
  %v3707 = vld [vmem:[%s4 + $0x360] sm:$0xff]
  %v3708 = vld [vmem:[%s4 + $0x368] sm:$0xff]
  %v3709 = vld [vmem:[%s4 + $0x370] sm:$0xff]
  %v3710 = vld [vmem:[%s4 + $0x378] sm:$0xff]
  %v3711 = vld [vmem:[%s4 + $0x380] sm:$0xff]
  %v3712 = vld [vmem:[%s4 + $0x388] sm:$0xff]
  %v3713 = vld [vmem:[%s4 + $0x390] sm:$0xff]
  %v3714 = vld [vmem:[%s4 + $0x398] sm:$0xff]
  %v3715 = vld [vmem:[%s4 + $0x3a0] sm:$0xff]
  %v3716 = vld [vmem:[%s4 + $0x3a8] sm:$0xff]
  %v3717 = vld [vmem:[%s4 + $0x3b0] sm:$0xff]
  %v3718 = vld [vmem:[%s4 + $0x3b8] sm:$0xff]
  %v3719 = vld [vmem:[%s4 + $0x3c0] sm:$0xff]
  %v3720 = vld [vmem:[%s4 + $0x3c8] sm:$0xff]
  %v3721 = vld [vmem:[%s4 + $0x3d0] sm:$0xff]
  %v3722 = vld [vmem:[%s4 + $0x3d8] sm:$0xff]
  %v3723 = vld [vmem:[%s4 + $0x3e0] sm:$0xff]
  %v3724 = vld [vmem:[%s4 + $0x3e8] sm:$0xff]
  %v3725 = vld [vmem:[%s4 + $0x3f0] sm:$0xff]
  %v3726 = vld [vmem:[%s4 + $0x3f8] sm:$0xff]
  %v3727 = vld [vmem:[%s4 + $0x400] sm:$0xff]
  %v3728 = vld [vmem:[%s4 + $0x408] sm:$0xff]
  %v3729 = vld [vmem:[%s4 + $0x410] sm:$0xff]
  %v3730 = vld [vmem:[%s4 + $0x418] sm:$0xff]
  %v3731 = vld [vmem:[%s4 + $0x420] sm:$0xff]
  %v3732 = vld [vmem:[%s4 + $0x428] sm:$0xff]
  %v3733 = vld [vmem:[%s4 + $0x430] sm:$0xff]
  %v3734 = vld [vmem:[%s4 + $0x438] sm:$0xff]
  %v3735 = vld [vmem:[%s4 + $0x440] sm:$0xff]
  %v3736 = vld [vmem:[%s4 + $0x448] sm:$0xff]
  %v3737 = vld [vmem:[%s4 + $0x450] sm:$0xff]
  %v3738 = vld [vmem:[%s4 + $0x458] sm:$0xff]
  %v3739 = vld [vmem:[%s4 + $0x460] sm:$0xff]
  %v3740 = vld [vmem:[%s4 + $0x468] sm:$0xff]
  %v3741 = vld [vmem:[%s4 + $0x470] sm:$0xff]
  %v3742 = vld [vmem:[%s4 + $0x478] sm:$0xff]
  %v3743 = vld [vmem:[%s4 + $0x480] sm:$0xff]
  %v3744 = vld [vmem:[%s4 + $0x488] sm:$0xff]
  %v3745 = vld [vmem:[%s4 + $0x490] sm:$0xff]
  %v3746 = vld [vmem:[%s4 + $0x498] sm:$0xff]
  %v3747 = vld [vmem:[%s4 + $0x4a0] sm:$0xff]
  %v3748 = vld [vmem:[%s4 + $0x4a8] sm:$0xff]
  %v3749 = vld [vmem:[%s4 + $0x4b0] sm:$0xff]
  %v3750 = vld [vmem:[%s4 + $0x4b8] sm:$0xff]
  %v3751 = vld [vmem:[%s4 + $0x4c0] sm:$0xff]
  %v3752 = vld [vmem:[%s4 + $0x4c8] sm:$0xff]
  %v3753 = vld [vmem:[%s4 + $0x4d0] sm:$0xff]
  %v3754 = vld [vmem:[%s4 + $0x4d8] sm:$0xff]
  %v3755 = vld [vmem:[%s4 + $0x4e0] sm:$0xff]
  %v3756 = vld [vmem:[%s4 + $0x4e8] sm:$0xff]
  %v3757 = vld [vmem:[%s4 + $0x4f0] sm:$0xff]
  %v3758 = vld [vmem:[%s4 + $0x4f8] sm:$0xff]
  %v3759 = vld [vmem:[%s4 + $0x500] sm:$0xff]
  %v3760 = vld [vmem:[%s4 + $0x508] sm:$0xff]
  %v3761 = vld [vmem:[%s4 + $0x510] sm:$0xff]
  %v3762 = vld [vmem:[%s4 + $0x518] sm:$0xff]
  %v3763 = vld [vmem:[%s4 + $0x520] sm:$0xff]
  %v3764 = vld [vmem:[%s4 + $0x528] sm:$0xff]
  %v3765 = vld [vmem:[%s4 + $0x530] sm:$0xff]
  %v3766 = vld [vmem:[%s4 + $0x538] sm:$0xff]
  %v3767 = vld [vmem:[%s4 + $0x540] sm:$0xff]
  %v3768 = vld [vmem:[%s4 + $0x548] sm:$0xff]
  %v3769 = vld [vmem:[%s4 + $0x550] sm:$0xff]
  %v3770 = vld [vmem:[%s4 + $0x558] sm:$0xff]
  %v3771 = vld [vmem:[%s4 + $0x560] sm:$0xff]
  %v3772 = vld [vmem:[%s4 + $0x568] sm:$0xff]
  %v3773 = vld [vmem:[%s4 + $0x570] sm:$0xff]
  %v3774 = vld [vmem:[%s4 + $0x578] sm:$0xff]
  %v3775 = vld [vmem:[%s4 + $0x580] sm:$0xff]
  %v3776 = vld [vmem:[%s4 + $0x588] sm:$0xff]
  %v3777 = vld [vmem:[%s4 + $0x590] sm:$0xff]
  %v3778 = vld [vmem:[%s4 + $0x598] sm:$0xff]
  %v3779 = vld [vmem:[%s4 + $0x5a0] sm:$0xff]
  %v3780 = vld [vmem:[%s4 + $0x5a8] sm:$0xff]
  %v3781 = vld [vmem:[%s4 + $0x5b0] sm:$0xff]
  %v3782 = vld [vmem:[%s4 + $0x5b8] sm:$0xff]
  %v3783 = vld [vmem:[%s4 + $0x5c0] sm:$0xff]
  %v3784 = vld [vmem:[%s4 + $0x5c8] sm:$0xff]
  %v3785 = vld [vmem:[%s4 + $0x5d0] sm:$0xff]
  %v3786 = vld [vmem:[%s4 + $0x5d8] sm:$0xff]
  %v3787 = vld [vmem:[%s4 + $0x5e0] sm:$0xff]
  %v3788 = vld [vmem:[%s4 + $0x5e8] sm:$0xff]
  %v3789 = vld [vmem:[%s4 + $0x5f0] sm:$0xff]
  %v3790 = vld [vmem:[%s4 + $0x5f8] sm:$0xff]
  %v3791 = vld [vmem:[%s4 + $0x600] sm:$0xff]
  %v3792 = vld [vmem:[%s4 + $0x608] sm:$0xff]
  %v3793 = vld [vmem:[%s4 + $0x610] sm:$0xff]
  %v3794 = vld [vmem:[%s4 + $0x618] sm:$0xff]
  %v3795 = vld [vmem:[%s4 + $0x620] sm:$0xff]
  %v3796 = vld [vmem:[%s4 + $0x628] sm:$0xff]
  %v3797 = vld [vmem:[%s4 + $0x630] sm:$0xff]
  %v3798 = vld [vmem:[%s4 + $0x638] sm:$0xff]
  %v3799 = vld [vmem:[%s4 + $0x640] sm:$0xff]
  %v3800 = vld [vmem:[%s4 + $0x648] sm:$0xff]
  %v3801 = vld [vmem:[%s4 + $0x650] sm:$0xff]
  %v3802 = vld [vmem:[%s4 + $0x658] sm:$0xff]
  %v3803 = vld [vmem:[%s4 + $0x660] sm:$0xff]
  %v3804 = vld [vmem:[%s4 + $0x668] sm:$0xff]
  %v3805 = vld [vmem:[%s4 + $0x670] sm:$0xff]
  %v3806 = vld [vmem:[%s4 + $0x678] sm:$0xff]
  %v3807 = vld [vmem:[%s4 + $0x680] sm:$0xff]
  %v3808 = vld [vmem:[%s4 + $0x688] sm:$0xff]
  %v3809 = vld [vmem:[%s4 + $0x690] sm:$0xff]
  %v3810 = vld [vmem:[%s4 + $0x698] sm:$0xff]
  %v3811 = vld [vmem:[%s4 + $0x6a0] sm:$0xff]
  %v3812 = vld [vmem:[%s4 + $0x6a8] sm:$0xff]
  %v3813 = vld [vmem:[%s4 + $0x6b0] sm:$0xff]
  %v3814 = vld [vmem:[%s4 + $0x6b8] sm:$0xff]
  %v3815 = vld [vmem:[%s4 + $0x6c0] sm:$0xff]
  %v3816 = vld [vmem:[%s4 + $0x6c8] sm:$0xff]
  %v3817 = vld [vmem:[%s4 + $0x6d0] sm:$0xff]
  %v3818 = vld [vmem:[%s4 + $0x6d8] sm:$0xff]
  %v3819 = vld [vmem:[%s4 + $0x6e0] sm:$0xff]
  %v3820 = vld [vmem:[%s4 + $0x6e8] sm:$0xff]
  %v3821 = vld [vmem:[%s4 + $0x6f0] sm:$0xff]
  %v3822 = vld [vmem:[%s4 + $0x6f8] sm:$0xff]
  %v3823 = vld [vmem:[%s4 + $0x700] sm:$0xff]
  %v3824 = vld [vmem:[%s4 + $0x708] sm:$0xff]
  %v3825 = vld [vmem:[%s4 + $0x710] sm:$0xff]
  %v3826 = vld [vmem:[%s4 + $0x718] sm:$0xff]
  %v3827 = vld [vmem:[%s4 + $0x720] sm:$0xff]
  %v3828 = vld [vmem:[%s4 + $0x728] sm:$0xff]
  %v3829 = vld [vmem:[%s4 + $0x730] sm:$0xff]
  %v3830 = vld [vmem:[%s4 + $0x738] sm:$0xff]
  %v3831 = vld [vmem:[%s4 + $0x740] sm:$0xff]
  %v3832 = vld [vmem:[%s4 + $0x748] sm:$0xff]
  %v3833 = vld [vmem:[%s4 + $0x750] sm:$0xff]
  %v3834 = vld [vmem:[%s4 + $0x758] sm:$0xff]
  %v3835 = vld [vmem:[%s4 + $0x760] sm:$0xff]
  %v3836 = vld [vmem:[%s4 + $0x768] sm:$0xff]
  %v3837 = vld [vmem:[%s4 + $0x770] sm:$0xff]
  %v3838 = vld [vmem:[%s4 + $0x778] sm:$0xff]
  %v3839 = vld [vmem:[%s4 + $0x780] sm:$0xff]
  %v3840 = vld [vmem:[%s4 + $0x788] sm:$0xff]
  %v3841 = vld [vmem:[%s4 + $0x790] sm:$0xff]
  %v3842 = vld [vmem:[%s4 + $0x798] sm:$0xff]
  %v3843 = vld [vmem:[%s4 + $0x7a0] sm:$0xff]
  %v3844 = vld [vmem:[%s4 + $0x7a8] sm:$0xff]
  %v3845 = vld [vmem:[%s4 + $0x7b0] sm:$0xff]
  %v3846 = vld [vmem:[%s4 + $0x7b8] sm:$0xff]
  %v3847 = vld [vmem:[%s4 + $0x7c0] sm:$0xff]
  %v3848 = vld [vmem:[%s4 + $0x7c8] sm:$0xff]
  %v3849 = vld [vmem:[%s4 + $0x7d0] sm:$0xff]
  %v3850 = vld [vmem:[%s4 + $0x7d8] sm:$0xff]
  %v3851 = vld [vmem:[%s4 + $0x7e0] sm:$0xff]
  %v3852 = vld [vmem:[%s4 + $0x7e8] sm:$0xff]
  %v3853 = vld [vmem:[%s4 + $0x7f0] sm:$0xff]
  %v3854 = vld [vmem:[%s4 + $0x7f8] sm:$0xff]
  %v3855 = vld [vmem:[%s4 + $0x800] sm:$0xff]
  %v3856 = vld [vmem:[%s4 + $0x808] sm:$0xff]
  %v3857 = vld [vmem:[%s4 + $0x810] sm:$0xff]
  %v3858 = vld [vmem:[%s4 + $0x818] sm:$0xff]
  %v3859 = vld [vmem:[%s4 + $0x820] sm:$0xff]
  %v3860 = vld [vmem:[%s4 + $0x828] sm:$0xff]
  %v3861 = vld [vmem:[%s4 + $0x830] sm:$0xff]
  %v3862 = vld [vmem:[%s4 + $0x838] sm:$0xff]
  %v3863 = vld [vmem:[%s4 + $0x840] sm:$0xff]
  %v3864 = vld [vmem:[%s4 + $0x848] sm:$0xff]
  %v3865 = vld [vmem:[%s4 + $0x850] sm:$0xff]
  %v3866 = vld [vmem:[%s4 + $0x858] sm:$0xff]
  %v3867 = vld [vmem:[%s4 + $0x860] sm:$0xff]
  %v3868 = vld [vmem:[%s4 + $0x868] sm:$0xff]
  %v3869 = vld [vmem:[%s4 + $0x870] sm:$0xff]
  %v3870 = vld [vmem:[%s4 + $0x878] sm:$0xff]
  %v3871 = vld [vmem:[%s4 + $0x880] sm:$0xff]
  %v3872 = vld [vmem:[%s4 + $0x888] sm:$0xff]
  %v3873 = vld [vmem:[%s4 + $0x890] sm:$0xff]
  %v3874 = vld [vmem:[%s4 + $0x898] sm:$0xff]
  %v3875 = vld [vmem:[%s4 + $0x8a0] sm:$0xff]
  %v3876 = vld [vmem:[%s4 + $0x8a8] sm:$0xff]
  %v3877 = vld [vmem:[%s4 + $0x8b0] sm:$0xff]
  %v3878 = vld [vmem:[%s4 + $0x8b8] sm:$0xff]
  %v3879 = vld [vmem:[%s4 + $0x8c0] sm:$0xff]
  %v3880 = vld [vmem:[%s4 + $0x8c8] sm:$0xff]
  %v3881 = vld [vmem:[%s4 + $0x8d0] sm:$0xff]
  %v3882 = vld [vmem:[%s4 + $0x8d8] sm:$0xff]
  %v3883 = vld [vmem:[%s4 + $0x8e0] sm:$0xff]
  %v3884 = vld [vmem:[%s4 + $0x8e8] sm:$0xff]
  %v3885 = vld [vmem:[%s4 + $0x8f0] sm:$0xff]
  %v3886 = vld [vmem:[%s4 + $0x8f8] sm:$0xff]
  %v3887 = vld [vmem:[%s4 + $0x900] sm:$0xff]
  %v3888 = vld [vmem:[%s4 + $0x908] sm:$0xff]
  %v3889 = vld [vmem:[%s4 + $0x910] sm:$0xff]
  %v3890 = vld [vmem:[%s4 + $0x918] sm:$0xff]
  %v3891 = vld [vmem:[%s4 + $0x920] sm:$0xff]
  %v3892 = vld [vmem:[%s4 + $0x928] sm:$0xff]
  %v3893 = vld [vmem:[%s4 + $0x930] sm:$0xff]
  %v3894 = vld [vmem:[%s4 + $0x938] sm:$0xff]
  %v3895 = vld [vmem:[%s4 + $0x940] sm:$0xff]
  %v3896 = vld [vmem:[%s4 + $0x948] sm:$0xff]
  %v3897 = vld [vmem:[%s4 + $0x950] sm:$0xff]
  %v3898 = vld [vmem:[%s4 + $0x958] sm:$0xff]
  %v3899 = vld [vmem:[%s4 + $0x960] sm:$0xff]
  %v3900 = vld [vmem:[%s4 + $0x968] sm:$0xff]
  %v3901 = vld [vmem:[%s4 + $0x970] sm:$0xff]
  %v3902 = vld [vmem:[%s4 + $0x978] sm:$0xff]
  %v3903 = vld [vmem:[%s4 + $0x980] sm:$0xff]
  %v3904 = vld [vmem:[%s4 + $0x988] sm:$0xff]
  %v3905 = vld [vmem:[%s4 + $0x990] sm:$0xff]
  %v3906 = vld [vmem:[%s4 + $0x998] sm:$0xff]
  %v3907 = vld [vmem:[%s4 + $0x9a0] sm:$0xff]
  %v3908 = vld [vmem:[%s4 + $0x9a8] sm:$0xff]
  %v3909 = vld [vmem:[%s4 + $0x9b0] sm:$0xff]
  %v3910 = vld [vmem:[%s4 + $0x9b8] sm:$0xff]
  %v3911 = vld [vmem:[%s4 + $0x9c0] sm:$0xff]
  %v3912 = vld [vmem:[%s4 + $0x9c8] sm:$0xff]
  %v3913 = vld [vmem:[%s4 + $0x9d0] sm:$0xff]
  %v3914 = vld [vmem:[%s4 + $0x9d8] sm:$0xff]
  %v3915 = vld [vmem:[%s4 + $0x9e0] sm:$0xff]
  %v3916 = vld [vmem:[%s4 + $0x9e8] sm:$0xff]
  %v3917 = vld [vmem:[%s4 + $0x9f0] sm:$0xff]
  %v3918 = vld [vmem:[%s4 + $0x9f8] sm:$0xff]
  %v3919 = vld [vmem:[%s4 + $0xa00] sm:$0xff]
  %v3920 = vld [vmem:[%s4 + $0xa08] sm:$0xff]
  %v3921 = vld [vmem:[%s4 + $0xa10] sm:$0xff]
  %v3922 = vld [vmem:[%s4 + $0xa18] sm:$0xff]
  %v3923 = vld [vmem:[%s4 + $0xa20] sm:$0xff]
  %v3924 = vld [vmem:[%s4 + $0xa28] sm:$0xff]
  %v3925 = vld [vmem:[%s4 + $0xa30] sm:$0xff]
  %v3926 = vld [vmem:[%s4 + $0xa38] sm:$0xff]
  %v3927 = vld [vmem:[%s4 + $0xa40] sm:$0xff]
  %v3928 = vld [vmem:[%s4 + $0xa48] sm:$0xff]
  %v3929 = vld [vmem:[%s4 + $0xa50] sm:$0xff]
  %v3930 = vld [vmem:[%s4 + $0xa58] sm:$0xff]
  %v3931 = vld [vmem:[%s4 + $0xa60] sm:$0xff]
  %v3932 = vld [vmem:[%s4 + $0xa68] sm:$0xff]
  %v3933 = vld [vmem:[%s4 + $0xa70] sm:$0xff]
  %v3934 = vld [vmem:[%s4 + $0xa78] sm:$0xff]
  %v3935 = vld [vmem:[%s4 + $0xa80] sm:$0xff]
  %v3936 = vld [vmem:[%s4 + $0xa88] sm:$0xff]
  %v3937 = vld [vmem:[%s4 + $0xa90] sm:$0xff]
  %v3938 = vld [vmem:[%s4 + $0xa98] sm:$0xff]
  %v3939 = vld [vmem:[%s4 + $0xaa0] sm:$0xff]
  %v3940 = vld [vmem:[%s4 + $0xaa8] sm:$0xff]
  %v3941 = vld [vmem:[%s4 + $0xab0] sm:$0xff]
  %v3942 = vld [vmem:[%s4 + $0xab8] sm:$0xff]
  %v3943 = vld [vmem:[%s4 + $0xac0] sm:$0xff]
  %v3944 = vld [vmem:[%s4 + $0xac8] sm:$0xff]
  %v3945 = vld [vmem:[%s4 + $0xad0] sm:$0xff]
  %v3946 = vld [vmem:[%s4 + $0xad8] sm:$0xff]
  %v3947 = vld [vmem:[%s4 + $0xae0] sm:$0xff]
  %v3948 = vld [vmem:[%s4 + $0xae8] sm:$0xff]
  %v3949 = vld [vmem:[%s4 + $0xaf0] sm:$0xff]
  %v3950 = vld [vmem:[%s4 + $0xaf8] sm:$0xff]
  %v3951 = vld [vmem:[%s4 + $0xb00] sm:$0xff]
  %v3952 = vld [vmem:[%s4 + $0xb08] sm:$0xff]
  %v3953 = vld [vmem:[%s4 + $0xb10] sm:$0xff]
  %v3954 = vld [vmem:[%s4 + $0xb18] sm:$0xff]
  %v3955 = vld [vmem:[%s4 + $0xb20] sm:$0xff]
  %v3956 = vld [vmem:[%s4 + $0xb28] sm:$0xff]
  %v3957 = vld [vmem:[%s4 + $0xb30] sm:$0xff]
  %v3958 = vld [vmem:[%s4 + $0xb38] sm:$0xff]
  %v3959 = vld [vmem:[%s4 + $0xb40] sm:$0xff]
  %v3960 = vld [vmem:[%s4 + $0xb48] sm:$0xff]
  %v3961 = vld [vmem:[%s4 + $0xb50] sm:$0xff]
  %v3962 = vld [vmem:[%s4 + $0xb58] sm:$0xff]
  %v3963 = vld [vmem:[%s4 + $0xb60] sm:$0xff]
  %v3964 = vld [vmem:[%s4 + $0xb68] sm:$0xff]
  %v3965 = vld [vmem:[%s4 + $0xb70] sm:$0xff]
  %v3966 = vld [vmem:[%s4 + $0xb78] sm:$0xff]
  %v3967 = vld [vmem:[%s4 + $0xb80] sm:$0xff]
  %v3968 = vld [vmem:[%s4 + $0xb88] sm:$0xff]
  %v3969 = vld [vmem:[%s4 + $0xb90] sm:$0xff]
  %v3970 = vld [vmem:[%s4 + $0xb98] sm:$0xff]
  %v3971 = vld [vmem:[%s4 + $0xba0] sm:$0xff]
  %v3972 = vld [vmem:[%s4 + $0xba8] sm:$0xff]
  %v3973 = vld [vmem:[%s4 + $0xbb0] sm:$0xff]
  %v3974 = vld [vmem:[%s4 + $0xbb8] sm:$0xff]
  %v3975 = vld [vmem:[%s4 + $0xbc0] sm:$0xff]
  %v3976 = vld [vmem:[%s4 + $0xbc8] sm:$0xff]
  %v3977 = vld [vmem:[%s4 + $0xbd0] sm:$0xff]
  %v3978 = vld [vmem:[%s4 + $0xbd8] sm:$0xff]
  %v3979 = vld [vmem:[%s4 + $0xbe0] sm:$0xff]
  %v3980 = vld [vmem:[%s4 + $0xbe8] sm:$0xff]
  %v3981 = vld [vmem:[%s4 + $0xbf0] sm:$0xff]
  %v3982 = vld [vmem:[%s4 + $0xbf8] sm:$0xff]
  %v3983 = vld [vmem:[%s4 + $0xc00] sm:$0xff]
  %v3984 = vld [vmem:[%s4 + $0xc08] sm:$0xff]
  %v3985 = vld [vmem:[%s4 + $0xc10] sm:$0xff]
  %v3986 = vld [vmem:[%s4 + $0xc18] sm:$0xff]
  %v3987 = vld [vmem:[%s4 + $0xc20] sm:$0xff]
  %v3988 = vld [vmem:[%s4 + $0xc28] sm:$0xff]
  %v3989 = vld [vmem:[%s4 + $0xc30] sm:$0xff]
  %v3990 = vld [vmem:[%s4 + $0xc38] sm:$0xff]
  %v3991 = vld [vmem:[%s4 + $0xc40] sm:$0xff]
  %v3992 = vld [vmem:[%s4 + $0xc48] sm:$0xff]
  %v3993 = vld [vmem:[%s4 + $0xc50] sm:$0xff]
  %v3994 = vld [vmem:[%s4 + $0xc58] sm:$0xff]
  %v3995 = vld [vmem:[%s4 + $0xc60] sm:$0xff]
  %v3996 = vld [vmem:[%s4 + $0xc68] sm:$0xff]
  %v3997 = vld [vmem:[%s4 + $0xc70] sm:$0xff]
  %v3998 = vld [vmem:[%s4 + $0xc78] sm:$0xff]
  %v3999 = vld [vmem:[%s4 + $0xc80] sm:$0xff]
  %v4000 = vld [vmem:[%s4 + $0xc88] sm:$0xff]
  %v4001 = vld [vmem:[%s4 + $0xc90] sm:$0xff]
  %v4002 = vld [vmem:[%s4 + $0xc98] sm:$0xff]
  %v4003 = vld [vmem:[%s4 + $0xca0] sm:$0xff]
  %v4004 = vld [vmem:[%s4 + $0xca8] sm:$0xff]
  %v4005 = vld [vmem:[%s4 + $0xcb0] sm:$0xff]
  %v4006 = vld [vmem:[%s4 + $0xcb8] sm:$0xff]
  %v4007 = vld [vmem:[%s4 + $0xcc0] sm:$0xff]
  %v4008 = vld [vmem:[%s4 + $0xcc8] sm:$0xff]
  %v4009 = vld [vmem:[%s4 + $0xcd0] sm:$0xff]
  %v4010 = vld [vmem:[%s4 + $0xcd8] sm:$0xff]
  %v4011 = vld [vmem:[%s4 + $0xce0] sm:$0xff]
  %v4012 = vld [vmem:[%s4 + $0xce8] sm:$0xff]
  %v4013 = vld [vmem:[%s4 + $0xcf0] sm:$0xff]
  %v4014 = vld [vmem:[%s4 + $0xcf8] sm:$0xff]
  %v4015 = vld [vmem:[%s4 + $0xd00] sm:$0xff]
  %v4016 = vld [vmem:[%s4 + $0xd08] sm:$0xff]
  %v4017 = vld [vmem:[%s4 + $0xd10] sm:$0xff]
  %v4018 = vld [vmem:[%s4 + $0xd18] sm:$0xff]
  %v4019 = vld [vmem:[%s4 + $0xd20] sm:$0xff]
  %v4020 = vld [vmem:[%s4 + $0xd28] sm:$0xff]
  %v4021 = vld [vmem:[%s4 + $0xd30] sm:$0xff]
  %v4022 = vld [vmem:[%s4 + $0xd38] sm:$0xff]
  %v4023 = vld [vmem:[%s4 + $0xd40] sm:$0xff]
  %v4024 = vld [vmem:[%s4 + $0xd48] sm:$0xff]
  %v4025 = vld [vmem:[%s4 + $0xd50] sm:$0xff]
  %v4026 = vld [vmem:[%s4 + $0xd58] sm:$0xff]
  %v4027 = vld [vmem:[%s4 + $0xd60] sm:$0xff]
  %v4028 = vld [vmem:[%s4 + $0xd68] sm:$0xff]
  %v4029 = vld [vmem:[%s4 + $0xd70] sm:$0xff]
  %v4030 = vld [vmem:[%s4 + $0xd78] sm:$0xff]
  %v4031 = vld [vmem:[%s4 + $0xd80] sm:$0xff]
  %v4032 = vld [vmem:[%s4 + $0xd88] sm:$0xff]
  %v4033 = vld [vmem:[%s4 + $0xd90] sm:$0xff]
  %v4034 = vld [vmem:[%s4 + $0xd98] sm:$0xff]
  %v4035 = vld [vmem:[%s4 + $0xda0] sm:$0xff]
  %v4036 = vld [vmem:[%s4 + $0xda8] sm:$0xff]
  %v4037 = vld [vmem:[%s4 + $0xdb0] sm:$0xff]
  %v4038 = vld [vmem:[%s4 + $0xdb8] sm:$0xff]
  %v4039 = vld [vmem:[%s4 + $0xdc0] sm:$0xff]
  %v4040 = vld [vmem:[%s4 + $0xdc8] sm:$0xff]
  %v4041 = vld [vmem:[%s4 + $0xdd0] sm:$0xff]
  %v4042 = vld [vmem:[%s4 + $0xdd8] sm:$0xff]
  %v4043 = vld [vmem:[%s4 + $0xde0] sm:$0xff]
  %v4044 = vld [vmem:[%s4 + $0xde8] sm:$0xff]
  %v4045 = vld [vmem:[%s4 + $0xdf0] sm:$0xff]
  %v4046 = vld [vmem:[%s4 + $0xdf8] sm:$0xff]
  %v4047 = vld [vmem:[%s4 + $0xe00] sm:$0xff]
  %v4048 = vld [vmem:[%s4 + $0xe08] sm:$0xff]
  %v4049 = vld [vmem:[%s4 + $0xe10] sm:$0xff]
  %v4050 = vld [vmem:[%s4 + $0xe18] sm:$0xff]
  %v4051 = vld [vmem:[%s4 + $0xe20] sm:$0xff]
  %v4052 = vld [vmem:[%s4 + $0xe28] sm:$0xff]
  %v4053 = vld [vmem:[%s4 + $0xe30] sm:$0xff]
  %v4054 = vld [vmem:[%s4 + $0xe38] sm:$0xff]
  %v4055 = vld [vmem:[%s4 + $0xe40] sm:$0xff]
  %v4056 = vld [vmem:[%s4 + $0xe48] sm:$0xff]
  %v4057 = vld [vmem:[%s4 + $0xe50] sm:$0xff]
  %v4058 = vld [vmem:[%s4 + $0xe58] sm:$0xff]
  %v4059 = vld [vmem:[%s4 + $0xe60] sm:$0xff]
  %v4060 = vld [vmem:[%s4 + $0xe68] sm:$0xff]
  %v4061 = vld [vmem:[%s4 + $0xe70] sm:$0xff]
  %v4062 = vld [vmem:[%s4 + $0xe78] sm:$0xff]
  %v4063 = vld [vmem:[%s4 + $0xe80] sm:$0xff]
  %v4064 = vld [vmem:[%s4 + $0xe88] sm:$0xff]
  %v4065 = vld [vmem:[%s4 + $0xe90] sm:$0xff]
  %v4066 = vld [vmem:[%s4 + $0xe98] sm:$0xff]
  %v4067 = vld [vmem:[%s4 + $0xea0] sm:$0xff]
  %v4068 = vld [vmem:[%s4 + $0xea8] sm:$0xff]
  %v4069 = vld [vmem:[%s4 + $0xeb0] sm:$0xff]
  %v4070 = vld [vmem:[%s4 + $0xeb8] sm:$0xff]
  %v4071 = vld [vmem:[%s4 + $0xec0] sm:$0xff]
  %v4072 = vld [vmem:[%s4 + $0xec8] sm:$0xff]
  %v4073 = vld [vmem:[%s4 + $0xed0] sm:$0xff]
  %v4074 = vld [vmem:[%s4 + $0xed8] sm:$0xff]
  %v4075 = vld [vmem:[%s4 + $0xee0] sm:$0xff]
  %v4076 = vld [vmem:[%s4 + $0xee8] sm:$0xff]
  %v4077 = vld [vmem:[%s4 + $0xef0] sm:$0xff]
  %v4078 = vld [vmem:[%s4 + $0xef8] sm:$0xff]
  %v4079 = vld [vmem:[%s4 + $0xf00] sm:$0xff]
  %v4080 = vld [vmem:[%s4 + $0xf08] sm:$0xff]
  %v4081 = vld [vmem:[%s4 + $0xf10] sm:$0xff]
  %v4082 = vld [vmem:[%s4 + $0xf18] sm:$0xff]
  %v4083 = vld [vmem:[%s4 + $0xf20] sm:$0xff]
  %v4084 = vld [vmem:[%s4 + $0xf28] sm:$0xff]
  %v4085 = vld [vmem:[%s4 + $0xf30] sm:$0xff]
  %v4086 = vld [vmem:[%s4 + $0xf38] sm:$0xff]
  %v4087 = vld [vmem:[%s4 + $0xf40] sm:$0xff]
  %v4088 = vld [vmem:[%s4 + $0xf48] sm:$0xff]
  %v4089 = vld [vmem:[%s4 + $0xf50] sm:$0xff]
  %v4090 = vld [vmem:[%s4 + $0xf58] sm:$0xff]
  %v4091 = vld [vmem:[%s4 + $0xf60] sm:$0xff]
  %v4092 = vld [vmem:[%s4 + $0xf68] sm:$0xff]
  %v4093 = vld [vmem:[%s4 + $0xf70] sm:$0xff]
  %v4094 = vld [vmem:[%s4 + $0xf78] sm:$0xff]
  %v4095 = vld [vmem:[%s4 + $0xf80] sm:$0xff]
  %v4096 = vld [vmem:[%s4 + $0xf88] sm:$0xff]
  %v4097 = vld [vmem:[%s4 + $0xf90] sm:$0xff]
  %v4098 = vld [vmem:[%s4 + $0xf98] sm:$0xff]
  %v4099 = vld [vmem:[%s4 + $0xfa0] sm:$0xff]
  %v4100 = vld [vmem:[%s4 + $0xfa8] sm:$0xff]
  %v4101 = vld [vmem:[%s4 + $0xfb0] sm:$0xff]
  %v4102 = vld [vmem:[%s4 + $0xfb8] sm:$0xff]
  %v4103 = vld [vmem:[%s4 + $0xfc0] sm:$0xff]
  %v4104 = vld [vmem:[%s4 + $0xfc8] sm:$0xff]
  %v4105 = vld [vmem:[%s4 + $0xfd0] sm:$0xff]
  %v4106 = vld [vmem:[%s4 + $0xfd8] sm:$0xff]
  %v4107 = vld [vmem:[%s4 + $0xfe0] sm:$0xff]
  %v4108 = vld [vmem:[%s4 + $0xfe8] sm:$0xff]
  %v4109 = vld [vmem:[%s4 + $0xff0] sm:$0xff]
  %v4110 = vld [vmem:[%s4 + $0xff8] sm:$0xff]
  %4112 = vset.pattern.permute.xlu0 0
  %4113 = vperm.xlu0 %4112, %v3599
  %v4114 = vpop.permute.xlu0 %4113
  %4117 = vset.pattern.permute.xlu0 0
  %4118 = vperm.xlu0 %4117, %v3600
  %v4119 = vpop.permute.xlu0 %4118
  %4122 = vset.pattern.permute.xlu0 0
  %4123 = vperm.xlu0 %4122, %v3601
  %v4124 = vpop.permute.xlu0 %4123
  %4127 = vset.pattern.permute.xlu0 0
  %4128 = vperm.xlu0 %4127, %v3602
  %v4129 = vpop.permute.xlu0 %4128
  %4132 = vset.pattern.permute.xlu0 0
  %4133 = vperm.xlu0 %4132, %v3603
  %v4134 = vpop.permute.xlu0 %4133
  %4137 = vset.pattern.permute.xlu0 0
  %4138 = vperm.xlu0 %4137, %v3604
  %v4139 = vpop.permute.xlu0 %4138
  %4142 = vset.pattern.permute.xlu0 0
  %4143 = vperm.xlu0 %4142, %v3605
  %v4144 = vpop.permute.xlu0 %4143
  %4147 = vset.pattern.permute.xlu0 0
  %4148 = vperm.xlu0 %4147, %v3606
  %v4149 = vpop.permute.xlu0 %4148
  %4152 = vset.pattern.permute.xlu0 0
  %4153 = vperm.xlu0 %4152, %v3607
  %v4154 = vpop.permute.xlu0 %4153
  %4157 = vset.pattern.permute.xlu0 0
  %4158 = vperm.xlu0 %4157, %v3608
  %v4159 = vpop.permute.xlu0 %4158
  %4162 = vset.pattern.permute.xlu0 0
  %4163 = vperm.xlu0 %4162, %v3609
  %v4164 = vpop.permute.xlu0 %4163
  %4167 = vset.pattern.permute.xlu0 0
  %4168 = vperm.xlu0 %4167, %v3610
  %v4169 = vpop.permute.xlu0 %4168
  %4172 = vset.pattern.permute.xlu0 0
  %4173 = vperm.xlu0 %4172, %v3611
  %v4174 = vpop.permute.xlu0 %4173
  %4177 = vset.pattern.permute.xlu0 0
  %4178 = vperm.xlu0 %4177, %v3612
  %v4179 = vpop.permute.xlu0 %4178
  %4182 = vset.pattern.permute.xlu0 0
  %4183 = vperm.xlu0 %4182, %v3613
  %v4184 = vpop.permute.xlu0 %4183
  %4187 = vset.pattern.permute.xlu0 0
  %4188 = vperm.xlu0 %4187, %v3614
  %v4189 = vpop.permute.xlu0 %4188
  %4192 = vset.pattern.permute.xlu0 0
  %4193 = vperm.xlu0 %4192, %v3615
  %v4194 = vpop.permute.xlu0 %4193
  %4197 = vset.pattern.permute.xlu0 0
  %4198 = vperm.xlu0 %4197, %v3616
  %v4199 = vpop.permute.xlu0 %4198
  %4202 = vset.pattern.permute.xlu0 0
  %4203 = vperm.xlu0 %4202, %v3617
  %v4204 = vpop.permute.xlu0 %4203
  %4207 = vset.pattern.permute.xlu0 0
  %4208 = vperm.xlu0 %4207, %v3618
  %v4209 = vpop.permute.xlu0 %4208
  %4212 = vset.pattern.permute.xlu0 0
  %4213 = vperm.xlu0 %4212, %v3619
  %v4214 = vpop.permute.xlu0 %4213
  %4217 = vset.pattern.permute.xlu0 0
  %4218 = vperm.xlu0 %4217, %v3620
  %v4219 = vpop.permute.xlu0 %4218
  %4222 = vset.pattern.permute.xlu0 0
  %4223 = vperm.xlu0 %4222, %v3621
  %v4224 = vpop.permute.xlu0 %4223
  %4227 = vset.pattern.permute.xlu0 0
  %4228 = vperm.xlu0 %4227, %v3622
  %v4229 = vpop.permute.xlu0 %4228
  %4232 = vset.pattern.permute.xlu0 0
  %4233 = vperm.xlu0 %4232, %v3623
  %v4234 = vpop.permute.xlu0 %4233
  %4237 = vset.pattern.permute.xlu0 0
  %4238 = vperm.xlu0 %4237, %v3624
  %v4239 = vpop.permute.xlu0 %4238
  %4242 = vset.pattern.permute.xlu0 0
  %4243 = vperm.xlu0 %4242, %v3625
  %v4244 = vpop.permute.xlu0 %4243
  %4247 = vset.pattern.permute.xlu0 0
  %4248 = vperm.xlu0 %4247, %v3626
  %v4249 = vpop.permute.xlu0 %4248
  %4252 = vset.pattern.permute.xlu0 0
  %4253 = vperm.xlu0 %4252, %v3627
  %v4254 = vpop.permute.xlu0 %4253
  %4257 = vset.pattern.permute.xlu0 0
  %4258 = vperm.xlu0 %4257, %v3628
  %v4259 = vpop.permute.xlu0 %4258
  %4262 = vset.pattern.permute.xlu0 0
  %4263 = vperm.xlu0 %4262, %v3629
  %v4264 = vpop.permute.xlu0 %4263
  %4267 = vset.pattern.permute.xlu0 0
  %4268 = vperm.xlu0 %4267, %v3630
  %v4269 = vpop.permute.xlu0 %4268
  %4272 = vset.pattern.permute.xlu0 0
  %4273 = vperm.xlu0 %4272, %v3631
  %v4274 = vpop.permute.xlu0 %4273
  %4277 = vset.pattern.permute.xlu0 0
  %4278 = vperm.xlu0 %4277, %v3632
  %v4279 = vpop.permute.xlu0 %4278
  %4282 = vset.pattern.permute.xlu0 0
  %4283 = vperm.xlu0 %4282, %v3633
  %v4284 = vpop.permute.xlu0 %4283
  %4287 = vset.pattern.permute.xlu0 0
  %4288 = vperm.xlu0 %4287, %v3634
  %v4289 = vpop.permute.xlu0 %4288
  %4292 = vset.pattern.permute.xlu0 0
  %4293 = vperm.xlu0 %4292, %v3635
  %v4294 = vpop.permute.xlu0 %4293
  %4297 = vset.pattern.permute.xlu0 0
  %4298 = vperm.xlu0 %4297, %v3636
  %v4299 = vpop.permute.xlu0 %4298
  %4302 = vset.pattern.permute.xlu0 0
  %4303 = vperm.xlu0 %4302, %v3637
  %v4304 = vpop.permute.xlu0 %4303
  %4307 = vset.pattern.permute.xlu0 0
  %4308 = vperm.xlu0 %4307, %v3638
  %v4309 = vpop.permute.xlu0 %4308
  %4312 = vset.pattern.permute.xlu0 0
  %4313 = vperm.xlu0 %4312, %v3639
  %v4314 = vpop.permute.xlu0 %4313
  %4317 = vset.pattern.permute.xlu0 0
  %4318 = vperm.xlu0 %4317, %v3640
  %v4319 = vpop.permute.xlu0 %4318
  %4322 = vset.pattern.permute.xlu0 0
  %4323 = vperm.xlu0 %4322, %v3641
  %v4324 = vpop.permute.xlu0 %4323
  %4327 = vset.pattern.permute.xlu0 0
  %4328 = vperm.xlu0 %4327, %v3642
  %v4329 = vpop.permute.xlu0 %4328
  %4332 = vset.pattern.permute.xlu0 0
  %4333 = vperm.xlu0 %4332, %v3643
  %v4334 = vpop.permute.xlu0 %4333
  %4337 = vset.pattern.permute.xlu0 0
  %4338 = vperm.xlu0 %4337, %v3644
  %v4339 = vpop.permute.xlu0 %4338
  %4342 = vset.pattern.permute.xlu0 0
  %4343 = vperm.xlu0 %4342, %v3645
  %v4344 = vpop.permute.xlu0 %4343
  %4347 = vset.pattern.permute.xlu0 0
  %4348 = vperm.xlu0 %4347, %v3646
  %v4349 = vpop.permute.xlu0 %4348
  %4352 = vset.pattern.permute.xlu0 0
  %4353 = vperm.xlu0 %4352, %v3647
  %v4354 = vpop.permute.xlu0 %4353
  %4357 = vset.pattern.permute.xlu0 0
  %4358 = vperm.xlu0 %4357, %v3648
  %v4359 = vpop.permute.xlu0 %4358
  %4362 = vset.pattern.permute.xlu0 0
  %4363 = vperm.xlu0 %4362, %v3649
  %v4364 = vpop.permute.xlu0 %4363
  %4367 = vset.pattern.permute.xlu0 0
  %4368 = vperm.xlu0 %4367, %v3650
  %v4369 = vpop.permute.xlu0 %4368
  %4372 = vset.pattern.permute.xlu0 0
  %4373 = vperm.xlu0 %4372, %v3651
  %v4374 = vpop.permute.xlu0 %4373
  %4377 = vset.pattern.permute.xlu0 0
  %4378 = vperm.xlu0 %4377, %v3652
  %v4379 = vpop.permute.xlu0 %4378
  %4382 = vset.pattern.permute.xlu0 0
  %4383 = vperm.xlu0 %4382, %v3653
  %v4384 = vpop.permute.xlu0 %4383
  %4387 = vset.pattern.permute.xlu0 0
  %4388 = vperm.xlu0 %4387, %v3654
  %v4389 = vpop.permute.xlu0 %4388
  %4392 = vset.pattern.permute.xlu0 0
  %4393 = vperm.xlu0 %4392, %v3655
  %v4394 = vpop.permute.xlu0 %4393
  %4397 = vset.pattern.permute.xlu0 0
  %4398 = vperm.xlu0 %4397, %v3656
  %v4399 = vpop.permute.xlu0 %4398
  %4402 = vset.pattern.permute.xlu0 0
  %4403 = vperm.xlu0 %4402, %v3657
  %v4404 = vpop.permute.xlu0 %4403
  %4407 = vset.pattern.permute.xlu0 0
  %4408 = vperm.xlu0 %4407, %v3658
  %v4409 = vpop.permute.xlu0 %4408
  %4412 = vset.pattern.permute.xlu0 0
  %4413 = vperm.xlu0 %4412, %v3659
  %v4414 = vpop.permute.xlu0 %4413
  %4417 = vset.pattern.permute.xlu0 0
  %4418 = vperm.xlu0 %4417, %v3660
  %v4419 = vpop.permute.xlu0 %4418
  %4422 = vset.pattern.permute.xlu0 0
  %4423 = vperm.xlu0 %4422, %v3661
  %v4424 = vpop.permute.xlu0 %4423
  %4427 = vset.pattern.permute.xlu0 0
  %4428 = vperm.xlu0 %4427, %v3662
  %v4429 = vpop.permute.xlu0 %4428
  %4432 = vset.pattern.permute.xlu0 0
  %4433 = vperm.xlu0 %4432, %v3663
  %v4434 = vpop.permute.xlu0 %4433
  %4437 = vset.pattern.permute.xlu0 0
  %4438 = vperm.xlu0 %4437, %v3664
  %v4439 = vpop.permute.xlu0 %4438
  %4442 = vset.pattern.permute.xlu0 0
  %4443 = vperm.xlu0 %4442, %v3665
  %v4444 = vpop.permute.xlu0 %4443
  %4447 = vset.pattern.permute.xlu0 0
  %4448 = vperm.xlu0 %4447, %v3666
  %v4449 = vpop.permute.xlu0 %4448
  %4452 = vset.pattern.permute.xlu0 0
  %4453 = vperm.xlu0 %4452, %v3667
  %v4454 = vpop.permute.xlu0 %4453
  %4457 = vset.pattern.permute.xlu0 0
  %4458 = vperm.xlu0 %4457, %v3668
  %v4459 = vpop.permute.xlu0 %4458
  %4462 = vset.pattern.permute.xlu0 0
  %4463 = vperm.xlu0 %4462, %v3669
  %v4464 = vpop.permute.xlu0 %4463
  %4467 = vset.pattern.permute.xlu0 0
  %4468 = vperm.xlu0 %4467, %v3670
  %v4469 = vpop.permute.xlu0 %4468
  %4472 = vset.pattern.permute.xlu0 0
  %4473 = vperm.xlu0 %4472, %v3671
  %v4474 = vpop.permute.xlu0 %4473
  %4477 = vset.pattern.permute.xlu0 0
  %4478 = vperm.xlu0 %4477, %v3672
  %v4479 = vpop.permute.xlu0 %4478
  %4482 = vset.pattern.permute.xlu0 0
  %4483 = vperm.xlu0 %4482, %v3673
  %v4484 = vpop.permute.xlu0 %4483
  %4487 = vset.pattern.permute.xlu0 0
  %4488 = vperm.xlu0 %4487, %v3674
  %v4489 = vpop.permute.xlu0 %4488
  %4492 = vset.pattern.permute.xlu0 0
  %4493 = vperm.xlu0 %4492, %v3675
  %v4494 = vpop.permute.xlu0 %4493
  %4497 = vset.pattern.permute.xlu0 0
  %4498 = vperm.xlu0 %4497, %v3676
  %v4499 = vpop.permute.xlu0 %4498
  %4502 = vset.pattern.permute.xlu0 0
  %4503 = vperm.xlu0 %4502, %v3677
  %v4504 = vpop.permute.xlu0 %4503
  %4507 = vset.pattern.permute.xlu0 0
  %4508 = vperm.xlu0 %4507, %v3678
  %v4509 = vpop.permute.xlu0 %4508
  %4512 = vset.pattern.permute.xlu0 0
  %4513 = vperm.xlu0 %4512, %v3679
  %v4514 = vpop.permute.xlu0 %4513
  %4517 = vset.pattern.permute.xlu0 0
  %4518 = vperm.xlu0 %4517, %v3680
  %v4519 = vpop.permute.xlu0 %4518
  %4522 = vset.pattern.permute.xlu0 0
  %4523 = vperm.xlu0 %4522, %v3681
  %v4524 = vpop.permute.xlu0 %4523
  %4527 = vset.pattern.permute.xlu0 0
  %4528 = vperm.xlu0 %4527, %v3682
  %v4529 = vpop.permute.xlu0 %4528
  %4532 = vset.pattern.permute.xlu0 0
  %4533 = vperm.xlu0 %4532, %v3683
  %v4534 = vpop.permute.xlu0 %4533
  %4537 = vset.pattern.permute.xlu0 0
  %4538 = vperm.xlu0 %4537, %v3684
  %v4539 = vpop.permute.xlu0 %4538
  %4542 = vset.pattern.permute.xlu0 0
  %4543 = vperm.xlu0 %4542, %v3685
  %v4544 = vpop.permute.xlu0 %4543
  %4547 = vset.pattern.permute.xlu0 0
  %4548 = vperm.xlu0 %4547, %v3686
  %v4549 = vpop.permute.xlu0 %4548
  %4552 = vset.pattern.permute.xlu0 0
  %4553 = vperm.xlu0 %4552, %v3687
  %v4554 = vpop.permute.xlu0 %4553
  %4557 = vset.pattern.permute.xlu0 0
  %4558 = vperm.xlu0 %4557, %v3688
  %v4559 = vpop.permute.xlu0 %4558
  %4562 = vset.pattern.permute.xlu0 0
  %4563 = vperm.xlu0 %4562, %v3689
  %v4564 = vpop.permute.xlu0 %4563
  %4567 = vset.pattern.permute.xlu0 0
  %4568 = vperm.xlu0 %4567, %v3690
  %v4569 = vpop.permute.xlu0 %4568
  %4572 = vset.pattern.permute.xlu0 0
  %4573 = vperm.xlu0 %4572, %v3691
  %v4574 = vpop.permute.xlu0 %4573
  %4577 = vset.pattern.permute.xlu0 0
  %4578 = vperm.xlu0 %4577, %v3692
  %v4579 = vpop.permute.xlu0 %4578
  %4582 = vset.pattern.permute.xlu0 0
  %4583 = vperm.xlu0 %4582, %v3693
  %v4584 = vpop.permute.xlu0 %4583
  %4587 = vset.pattern.permute.xlu0 0
  %4588 = vperm.xlu0 %4587, %v3694
  %v4589 = vpop.permute.xlu0 %4588
  %4592 = vset.pattern.permute.xlu0 0
  %4593 = vperm.xlu0 %4592, %v3695
  %v4594 = vpop.permute.xlu0 %4593
  %4597 = vset.pattern.permute.xlu0 0
  %4598 = vperm.xlu0 %4597, %v3696
  %v4599 = vpop.permute.xlu0 %4598
  %4602 = vset.pattern.permute.xlu0 0
  %4603 = vperm.xlu0 %4602, %v3697
  %v4604 = vpop.permute.xlu0 %4603
  %4607 = vset.pattern.permute.xlu0 0
  %4608 = vperm.xlu0 %4607, %v3698
  %v4609 = vpop.permute.xlu0 %4608
  %4612 = vset.pattern.permute.xlu0 0
  %4613 = vperm.xlu0 %4612, %v3699
  %v4614 = vpop.permute.xlu0 %4613
  %4617 = vset.pattern.permute.xlu0 0
  %4618 = vperm.xlu0 %4617, %v3700
  %v4619 = vpop.permute.xlu0 %4618
  %4622 = vset.pattern.permute.xlu0 0
  %4623 = vperm.xlu0 %4622, %v3701
  %v4624 = vpop.permute.xlu0 %4623
  %4627 = vset.pattern.permute.xlu0 0
  %4628 = vperm.xlu0 %4627, %v3702
  %v4629 = vpop.permute.xlu0 %4628
  %4632 = vset.pattern.permute.xlu0 0
  %4633 = vperm.xlu0 %4632, %v3703
  %v4634 = vpop.permute.xlu0 %4633
  %4637 = vset.pattern.permute.xlu0 0
  %4638 = vperm.xlu0 %4637, %v3704
  %v4639 = vpop.permute.xlu0 %4638
  %4642 = vset.pattern.permute.xlu0 0
  %4643 = vperm.xlu0 %4642, %v3705
  %v4644 = vpop.permute.xlu0 %4643
  %4647 = vset.pattern.permute.xlu0 0
  %4648 = vperm.xlu0 %4647, %v3706
  %v4649 = vpop.permute.xlu0 %4648
  %4652 = vset.pattern.permute.xlu0 0
  %4653 = vperm.xlu0 %4652, %v3707
  %v4654 = vpop.permute.xlu0 %4653
  %4657 = vset.pattern.permute.xlu0 0
  %4658 = vperm.xlu0 %4657, %v3708
  %v4659 = vpop.permute.xlu0 %4658
  %4662 = vset.pattern.permute.xlu0 0
  %4663 = vperm.xlu0 %4662, %v3709
  %v4664 = vpop.permute.xlu0 %4663
  %4667 = vset.pattern.permute.xlu0 0
  %4668 = vperm.xlu0 %4667, %v3710
  %v4669 = vpop.permute.xlu0 %4668
  %4672 = vset.pattern.permute.xlu0 0
  %4673 = vperm.xlu0 %4672, %v3711
  %v4674 = vpop.permute.xlu0 %4673
  %4677 = vset.pattern.permute.xlu0 0
  %4678 = vperm.xlu0 %4677, %v3712
  %v4679 = vpop.permute.xlu0 %4678
  %4682 = vset.pattern.permute.xlu0 0
  %4683 = vperm.xlu0 %4682, %v3713
  %v4684 = vpop.permute.xlu0 %4683
  %4687 = vset.pattern.permute.xlu0 0
  %4688 = vperm.xlu0 %4687, %v3714
  %v4689 = vpop.permute.xlu0 %4688
  %4692 = vset.pattern.permute.xlu0 0
  %4693 = vperm.xlu0 %4692, %v3715
  %v4694 = vpop.permute.xlu0 %4693
  %4697 = vset.pattern.permute.xlu0 0
  %4698 = vperm.xlu0 %4697, %v3716
  %v4699 = vpop.permute.xlu0 %4698
  %4702 = vset.pattern.permute.xlu0 0
  %4703 = vperm.xlu0 %4702, %v3717
  %v4704 = vpop.permute.xlu0 %4703
  %4707 = vset.pattern.permute.xlu0 0
  %4708 = vperm.xlu0 %4707, %v3718
  %v4709 = vpop.permute.xlu0 %4708
  %4712 = vset.pattern.permute.xlu0 0
  %4713 = vperm.xlu0 %4712, %v3719
  %v4714 = vpop.permute.xlu0 %4713
  %4717 = vset.pattern.permute.xlu0 0
  %4718 = vperm.xlu0 %4717, %v3720
  %v4719 = vpop.permute.xlu0 %4718
  %4722 = vset.pattern.permute.xlu0 0
  %4723 = vperm.xlu0 %4722, %v3721
  %v4724 = vpop.permute.xlu0 %4723
  %4727 = vset.pattern.permute.xlu0 0
  %4728 = vperm.xlu0 %4727, %v3722
  %v4729 = vpop.permute.xlu0 %4728
  %4732 = vset.pattern.permute.xlu0 0
  %4733 = vperm.xlu0 %4732, %v3723
  %v4734 = vpop.permute.xlu0 %4733
  %4737 = vset.pattern.permute.xlu0 0
  %4738 = vperm.xlu0 %4737, %v3724
  %v4739 = vpop.permute.xlu0 %4738
  %4742 = vset.pattern.permute.xlu0 0
  %4743 = vperm.xlu0 %4742, %v3725
  %v4744 = vpop.permute.xlu0 %4743
  %4747 = vset.pattern.permute.xlu0 0
  %4748 = vperm.xlu0 %4747, %v3726
  %v4749 = vpop.permute.xlu0 %4748
  %4752 = vset.pattern.permute.xlu0 0
  %4753 = vperm.xlu0 %4752, %v3727
  %v4754 = vpop.permute.xlu0 %4753
  %4757 = vset.pattern.permute.xlu0 0
  %4758 = vperm.xlu0 %4757, %v3728
  %v4759 = vpop.permute.xlu0 %4758
  %4762 = vset.pattern.permute.xlu0 0
  %4763 = vperm.xlu0 %4762, %v3729
  %v4764 = vpop.permute.xlu0 %4763
  %4767 = vset.pattern.permute.xlu0 0
  %4768 = vperm.xlu0 %4767, %v3730
  %v4769 = vpop.permute.xlu0 %4768
  %4772 = vset.pattern.permute.xlu0 0
  %4773 = vperm.xlu0 %4772, %v3731
  %v4774 = vpop.permute.xlu0 %4773
  %4777 = vset.pattern.permute.xlu0 0
  %4778 = vperm.xlu0 %4777, %v3732
  %v4779 = vpop.permute.xlu0 %4778
  %4782 = vset.pattern.permute.xlu0 0
  %4783 = vperm.xlu0 %4782, %v3733
  %v4784 = vpop.permute.xlu0 %4783
  %4787 = vset.pattern.permute.xlu0 0
  %4788 = vperm.xlu0 %4787, %v3734
  %v4789 = vpop.permute.xlu0 %4788
  %4792 = vset.pattern.permute.xlu0 0
  %4793 = vperm.xlu0 %4792, %v3735
  %v4794 = vpop.permute.xlu0 %4793
  %4797 = vset.pattern.permute.xlu0 0
  %4798 = vperm.xlu0 %4797, %v3736
  %v4799 = vpop.permute.xlu0 %4798
  %4802 = vset.pattern.permute.xlu0 0
  %4803 = vperm.xlu0 %4802, %v3737
  %v4804 = vpop.permute.xlu0 %4803
  %4807 = vset.pattern.permute.xlu0 0
  %4808 = vperm.xlu0 %4807, %v3738
  %v4809 = vpop.permute.xlu0 %4808
  %4812 = vset.pattern.permute.xlu0 0
  %4813 = vperm.xlu0 %4812, %v3739
  %v4814 = vpop.permute.xlu0 %4813
  %4817 = vset.pattern.permute.xlu0 0
  %4818 = vperm.xlu0 %4817, %v3740
  %v4819 = vpop.permute.xlu0 %4818
  %4822 = vset.pattern.permute.xlu0 0
  %4823 = vperm.xlu0 %4822, %v3741
  %v4824 = vpop.permute.xlu0 %4823
  %4827 = vset.pattern.permute.xlu0 0
  %4828 = vperm.xlu0 %4827, %v3742
  %v4829 = vpop.permute.xlu0 %4828
  %4832 = vset.pattern.permute.xlu0 0
  %4833 = vperm.xlu0 %4832, %v3743
  %v4834 = vpop.permute.xlu0 %4833
  %4837 = vset.pattern.permute.xlu0 0
  %4838 = vperm.xlu0 %4837, %v3744
  %v4839 = vpop.permute.xlu0 %4838
  %4842 = vset.pattern.permute.xlu0 0
  %4843 = vperm.xlu0 %4842, %v3745
  %v4844 = vpop.permute.xlu0 %4843
  %4847 = vset.pattern.permute.xlu0 0
  %4848 = vperm.xlu0 %4847, %v3746
  %v4849 = vpop.permute.xlu0 %4848
  %4852 = vset.pattern.permute.xlu0 0
  %4853 = vperm.xlu0 %4852, %v3747
  %v4854 = vpop.permute.xlu0 %4853
  %4857 = vset.pattern.permute.xlu0 0
  %4858 = vperm.xlu0 %4857, %v3748
  %v4859 = vpop.permute.xlu0 %4858
  %4862 = vset.pattern.permute.xlu0 0
  %4863 = vperm.xlu0 %4862, %v3749
  %v4864 = vpop.permute.xlu0 %4863
  %4867 = vset.pattern.permute.xlu0 0
  %4868 = vperm.xlu0 %4867, %v3750
  %v4869 = vpop.permute.xlu0 %4868
  %4872 = vset.pattern.permute.xlu0 0
  %4873 = vperm.xlu0 %4872, %v3751
  %v4874 = vpop.permute.xlu0 %4873
  %4877 = vset.pattern.permute.xlu0 0
  %4878 = vperm.xlu0 %4877, %v3752
  %v4879 = vpop.permute.xlu0 %4878
  %4882 = vset.pattern.permute.xlu0 0
  %4883 = vperm.xlu0 %4882, %v3753
  %v4884 = vpop.permute.xlu0 %4883
  %4887 = vset.pattern.permute.xlu0 0
  %4888 = vperm.xlu0 %4887, %v3754
  %v4889 = vpop.permute.xlu0 %4888
  %4892 = vset.pattern.permute.xlu0 0
  %4893 = vperm.xlu0 %4892, %v3755
  %v4894 = vpop.permute.xlu0 %4893
  %4897 = vset.pattern.permute.xlu0 0
  %4898 = vperm.xlu0 %4897, %v3756
  %v4899 = vpop.permute.xlu0 %4898
  %4902 = vset.pattern.permute.xlu0 0
  %4903 = vperm.xlu0 %4902, %v3757
  %v4904 = vpop.permute.xlu0 %4903
  %4907 = vset.pattern.permute.xlu0 0
  %4908 = vperm.xlu0 %4907, %v3758
  %v4909 = vpop.permute.xlu0 %4908
  %4912 = vset.pattern.permute.xlu0 0
  %4913 = vperm.xlu0 %4912, %v3759
  %v4914 = vpop.permute.xlu0 %4913
  %4917 = vset.pattern.permute.xlu0 0
  %4918 = vperm.xlu0 %4917, %v3760
  %v4919 = vpop.permute.xlu0 %4918
  %4922 = vset.pattern.permute.xlu0 0
  %4923 = vperm.xlu0 %4922, %v3761
  %v4924 = vpop.permute.xlu0 %4923
  %4927 = vset.pattern.permute.xlu0 0
  %4928 = vperm.xlu0 %4927, %v3762
  %v4929 = vpop.permute.xlu0 %4928
  %4932 = vset.pattern.permute.xlu0 0
  %4933 = vperm.xlu0 %4932, %v3763
  %v4934 = vpop.permute.xlu0 %4933
  %4937 = vset.pattern.permute.xlu0 0
  %4938 = vperm.xlu0 %4937, %v3764
  %v4939 = vpop.permute.xlu0 %4938
  %4942 = vset.pattern.permute.xlu0 0
  %4943 = vperm.xlu0 %4942, %v3765
  %v4944 = vpop.permute.xlu0 %4943
  %4947 = vset.pattern.permute.xlu0 0
  %4948 = vperm.xlu0 %4947, %v3766
  %v4949 = vpop.permute.xlu0 %4948
  %4952 = vset.pattern.permute.xlu0 0
  %4953 = vperm.xlu0 %4952, %v3767
  %v4954 = vpop.permute.xlu0 %4953
  %4957 = vset.pattern.permute.xlu0 0
  %4958 = vperm.xlu0 %4957, %v3768
  %v4959 = vpop.permute.xlu0 %4958
  %4962 = vset.pattern.permute.xlu0 0
  %4963 = vperm.xlu0 %4962, %v3769
  %v4964 = vpop.permute.xlu0 %4963
  %4967 = vset.pattern.permute.xlu0 0
  %4968 = vperm.xlu0 %4967, %v3770
  %v4969 = vpop.permute.xlu0 %4968
  %4972 = vset.pattern.permute.xlu0 0
  %4973 = vperm.xlu0 %4972, %v3771
  %v4974 = vpop.permute.xlu0 %4973
  %4977 = vset.pattern.permute.xlu0 0
  %4978 = vperm.xlu0 %4977, %v3772
  %v4979 = vpop.permute.xlu0 %4978
  %4982 = vset.pattern.permute.xlu0 0
  %4983 = vperm.xlu0 %4982, %v3773
  %v4984 = vpop.permute.xlu0 %4983
  %4987 = vset.pattern.permute.xlu0 0
  %4988 = vperm.xlu0 %4987, %v3774
  %v4989 = vpop.permute.xlu0 %4988
  %4992 = vset.pattern.permute.xlu0 0
  %4993 = vperm.xlu0 %4992, %v3775
  %v4994 = vpop.permute.xlu0 %4993
  %4997 = vset.pattern.permute.xlu0 0
  %4998 = vperm.xlu0 %4997, %v3776
  %v4999 = vpop.permute.xlu0 %4998
  %5002 = vset.pattern.permute.xlu0 0
  %5003 = vperm.xlu0 %5002, %v3777
  %v5004 = vpop.permute.xlu0 %5003
  %5007 = vset.pattern.permute.xlu0 0
  %5008 = vperm.xlu0 %5007, %v3778
  %v5009 = vpop.permute.xlu0 %5008
  %5012 = vset.pattern.permute.xlu0 0
  %5013 = vperm.xlu0 %5012, %v3779
  %v5014 = vpop.permute.xlu0 %5013
  %5017 = vset.pattern.permute.xlu0 0
  %5018 = vperm.xlu0 %5017, %v3780
  %v5019 = vpop.permute.xlu0 %5018
  %5022 = vset.pattern.permute.xlu0 0
  %5023 = vperm.xlu0 %5022, %v3781
  %v5024 = vpop.permute.xlu0 %5023
  %5027 = vset.pattern.permute.xlu0 0
  %5028 = vperm.xlu0 %5027, %v3782
  %v5029 = vpop.permute.xlu0 %5028
  %5032 = vset.pattern.permute.xlu0 0
  %5033 = vperm.xlu0 %5032, %v3783
  %v5034 = vpop.permute.xlu0 %5033
  %5037 = vset.pattern.permute.xlu0 0
  %5038 = vperm.xlu0 %5037, %v3784
  %v5039 = vpop.permute.xlu0 %5038
  %5042 = vset.pattern.permute.xlu0 0
  %5043 = vperm.xlu0 %5042, %v3785
  %v5044 = vpop.permute.xlu0 %5043
  %5047 = vset.pattern.permute.xlu0 0
  %5048 = vperm.xlu0 %5047, %v3786
  %v5049 = vpop.permute.xlu0 %5048
  %5052 = vset.pattern.permute.xlu0 0
  %5053 = vperm.xlu0 %5052, %v3787
  %v5054 = vpop.permute.xlu0 %5053
  %5057 = vset.pattern.permute.xlu0 0
  %5058 = vperm.xlu0 %5057, %v3788
  %v5059 = vpop.permute.xlu0 %5058
  %5062 = vset.pattern.permute.xlu0 0
  %5063 = vperm.xlu0 %5062, %v3789
  %v5064 = vpop.permute.xlu0 %5063
  %5067 = vset.pattern.permute.xlu0 0
  %5068 = vperm.xlu0 %5067, %v3790
  %v5069 = vpop.permute.xlu0 %5068
  %5072 = vset.pattern.permute.xlu0 0
  %5073 = vperm.xlu0 %5072, %v3791
  %v5074 = vpop.permute.xlu0 %5073
  %5077 = vset.pattern.permute.xlu0 0
  %5078 = vperm.xlu0 %5077, %v3792
  %v5079 = vpop.permute.xlu0 %5078
  %5082 = vset.pattern.permute.xlu0 0
  %5083 = vperm.xlu0 %5082, %v3793
  %v5084 = vpop.permute.xlu0 %5083
  %5087 = vset.pattern.permute.xlu0 0
  %5088 = vperm.xlu0 %5087, %v3794
  %v5089 = vpop.permute.xlu0 %5088
  %5092 = vset.pattern.permute.xlu0 0
  %5093 = vperm.xlu0 %5092, %v3795
  %v5094 = vpop.permute.xlu0 %5093
  %5097 = vset.pattern.permute.xlu0 0
  %5098 = vperm.xlu0 %5097, %v3796
  %v5099 = vpop.permute.xlu0 %5098
  %5102 = vset.pattern.permute.xlu0 0
  %5103 = vperm.xlu0 %5102, %v3797
  %v5104 = vpop.permute.xlu0 %5103
  %5107 = vset.pattern.permute.xlu0 0
  %5108 = vperm.xlu0 %5107, %v3798
  %v5109 = vpop.permute.xlu0 %5108
  %5112 = vset.pattern.permute.xlu0 0
  %5113 = vperm.xlu0 %5112, %v3799
  %v5114 = vpop.permute.xlu0 %5113
  %5117 = vset.pattern.permute.xlu0 0
  %5118 = vperm.xlu0 %5117, %v3800
  %v5119 = vpop.permute.xlu0 %5118
  %5122 = vset.pattern.permute.xlu0 0
  %5123 = vperm.xlu0 %5122, %v3801
  %v5124 = vpop.permute.xlu0 %5123
  %5127 = vset.pattern.permute.xlu0 0
  %5128 = vperm.xlu0 %5127, %v3802
  %v5129 = vpop.permute.xlu0 %5128
  %5132 = vset.pattern.permute.xlu0 0
  %5133 = vperm.xlu0 %5132, %v3803
  %v5134 = vpop.permute.xlu0 %5133
  %5137 = vset.pattern.permute.xlu0 0
  %5138 = vperm.xlu0 %5137, %v3804
  %v5139 = vpop.permute.xlu0 %5138
  %5142 = vset.pattern.permute.xlu0 0
  %5143 = vperm.xlu0 %5142, %v3805
  %v5144 = vpop.permute.xlu0 %5143
  %5147 = vset.pattern.permute.xlu0 0
  %5148 = vperm.xlu0 %5147, %v3806
  %v5149 = vpop.permute.xlu0 %5148
  %5152 = vset.pattern.permute.xlu0 0
  %5153 = vperm.xlu0 %5152, %v3807
  %v5154 = vpop.permute.xlu0 %5153
  %5157 = vset.pattern.permute.xlu0 0
  %5158 = vperm.xlu0 %5157, %v3808
  %v5159 = vpop.permute.xlu0 %5158
  %5162 = vset.pattern.permute.xlu0 0
  %5163 = vperm.xlu0 %5162, %v3809
  %v5164 = vpop.permute.xlu0 %5163
  %5167 = vset.pattern.permute.xlu0 0
  %5168 = vperm.xlu0 %5167, %v3810
  %v5169 = vpop.permute.xlu0 %5168
  %5172 = vset.pattern.permute.xlu0 0
  %5173 = vperm.xlu0 %5172, %v3811
  %v5174 = vpop.permute.xlu0 %5173
  %5177 = vset.pattern.permute.xlu0 0
  %5178 = vperm.xlu0 %5177, %v3812
  %v5179 = vpop.permute.xlu0 %5178
  %5182 = vset.pattern.permute.xlu0 0
  %5183 = vperm.xlu0 %5182, %v3813
  %v5184 = vpop.permute.xlu0 %5183
  %5187 = vset.pattern.permute.xlu0 0
  %5188 = vperm.xlu0 %5187, %v3814
  %v5189 = vpop.permute.xlu0 %5188
  %5192 = vset.pattern.permute.xlu0 0
  %5193 = vperm.xlu0 %5192, %v3815
  %v5194 = vpop.permute.xlu0 %5193
  %5197 = vset.pattern.permute.xlu0 0
  %5198 = vperm.xlu0 %5197, %v3816
  %v5199 = vpop.permute.xlu0 %5198
  %5202 = vset.pattern.permute.xlu0 0
  %5203 = vperm.xlu0 %5202, %v3817
  %v5204 = vpop.permute.xlu0 %5203
  %5207 = vset.pattern.permute.xlu0 0
  %5208 = vperm.xlu0 %5207, %v3818
  %v5209 = vpop.permute.xlu0 %5208
  %5212 = vset.pattern.permute.xlu0 0
  %5213 = vperm.xlu0 %5212, %v3819
  %v5214 = vpop.permute.xlu0 %5213
  %5217 = vset.pattern.permute.xlu0 0
  %5218 = vperm.xlu0 %5217, %v3820
  %v5219 = vpop.permute.xlu0 %5218
  %5222 = vset.pattern.permute.xlu0 0
  %5223 = vperm.xlu0 %5222, %v3821
  %v5224 = vpop.permute.xlu0 %5223
  %5227 = vset.pattern.permute.xlu0 0
  %5228 = vperm.xlu0 %5227, %v3822
  %v5229 = vpop.permute.xlu0 %5228
  %5232 = vset.pattern.permute.xlu0 0
  %5233 = vperm.xlu0 %5232, %v3823
  %v5234 = vpop.permute.xlu0 %5233
  %5237 = vset.pattern.permute.xlu0 0
  %5238 = vperm.xlu0 %5237, %v3824
  %v5239 = vpop.permute.xlu0 %5238
  %5242 = vset.pattern.permute.xlu0 0
  %5243 = vperm.xlu0 %5242, %v3825
  %v5244 = vpop.permute.xlu0 %5243
  %5247 = vset.pattern.permute.xlu0 0
  %5248 = vperm.xlu0 %5247, %v3826
  %v5249 = vpop.permute.xlu0 %5248
  %5252 = vset.pattern.permute.xlu0 0
  %5253 = vperm.xlu0 %5252, %v3827
  %v5254 = vpop.permute.xlu0 %5253
  %5257 = vset.pattern.permute.xlu0 0
  %5258 = vperm.xlu0 %5257, %v3828
  %v5259 = vpop.permute.xlu0 %5258
  %5262 = vset.pattern.permute.xlu0 0
  %5263 = vperm.xlu0 %5262, %v3829
  %v5264 = vpop.permute.xlu0 %5263
  %5267 = vset.pattern.permute.xlu0 0
  %5268 = vperm.xlu0 %5267, %v3830
  %v5269 = vpop.permute.xlu0 %5268
  %5272 = vset.pattern.permute.xlu0 0
  %5273 = vperm.xlu0 %5272, %v3831
  %v5274 = vpop.permute.xlu0 %5273
  %5277 = vset.pattern.permute.xlu0 0
  %5278 = vperm.xlu0 %5277, %v3832
  %v5279 = vpop.permute.xlu0 %5278
  %5282 = vset.pattern.permute.xlu0 0
  %5283 = vperm.xlu0 %5282, %v3833
  %v5284 = vpop.permute.xlu0 %5283
  %5287 = vset.pattern.permute.xlu0 0
  %5288 = vperm.xlu0 %5287, %v3834
  %v5289 = vpop.permute.xlu0 %5288
  %5292 = vset.pattern.permute.xlu0 0
  %5293 = vperm.xlu0 %5292, %v3835
  %v5294 = vpop.permute.xlu0 %5293
  %5297 = vset.pattern.permute.xlu0 0
  %5298 = vperm.xlu0 %5297, %v3836
  %v5299 = vpop.permute.xlu0 %5298
  %5302 = vset.pattern.permute.xlu0 0
  %5303 = vperm.xlu0 %5302, %v3837
  %v5304 = vpop.permute.xlu0 %5303
  %5307 = vset.pattern.permute.xlu0 0
  %5308 = vperm.xlu0 %5307, %v3838
  %v5309 = vpop.permute.xlu0 %5308
  %5312 = vset.pattern.permute.xlu0 0
  %5313 = vperm.xlu0 %5312, %v3839
  %v5314 = vpop.permute.xlu0 %5313
  %5317 = vset.pattern.permute.xlu0 0
  %5318 = vperm.xlu0 %5317, %v3840
  %v5319 = vpop.permute.xlu0 %5318
  %5322 = vset.pattern.permute.xlu0 0
  %5323 = vperm.xlu0 %5322, %v3841
  %v5324 = vpop.permute.xlu0 %5323
  %5327 = vset.pattern.permute.xlu0 0
  %5328 = vperm.xlu0 %5327, %v3842
  %v5329 = vpop.permute.xlu0 %5328
  %5332 = vset.pattern.permute.xlu0 0
  %5333 = vperm.xlu0 %5332, %v3843
  %v5334 = vpop.permute.xlu0 %5333
  %5337 = vset.pattern.permute.xlu0 0
  %5338 = vperm.xlu0 %5337, %v3844
  %v5339 = vpop.permute.xlu0 %5338
  %5342 = vset.pattern.permute.xlu0 0
  %5343 = vperm.xlu0 %5342, %v3845
  %v5344 = vpop.permute.xlu0 %5343
  %5347 = vset.pattern.permute.xlu0 0
  %5348 = vperm.xlu0 %5347, %v3846
  %v5349 = vpop.permute.xlu0 %5348
  %5352 = vset.pattern.permute.xlu0 0
  %5353 = vperm.xlu0 %5352, %v3847
  %v5354 = vpop.permute.xlu0 %5353
  %5357 = vset.pattern.permute.xlu0 0
  %5358 = vperm.xlu0 %5357, %v3848
  %v5359 = vpop.permute.xlu0 %5358
  %5362 = vset.pattern.permute.xlu0 0
  %5363 = vperm.xlu0 %5362, %v3849
  %v5364 = vpop.permute.xlu0 %5363
  %5367 = vset.pattern.permute.xlu0 0
  %5368 = vperm.xlu0 %5367, %v3850
  %v5369 = vpop.permute.xlu0 %5368
  %5372 = vset.pattern.permute.xlu0 0
  %5373 = vperm.xlu0 %5372, %v3851
  %v5374 = vpop.permute.xlu0 %5373
  %5377 = vset.pattern.permute.xlu0 0
  %5378 = vperm.xlu0 %5377, %v3852
  %v5379 = vpop.permute.xlu0 %5378
  %5382 = vset.pattern.permute.xlu0 0
  %5383 = vperm.xlu0 %5382, %v3853
  %v5384 = vpop.permute.xlu0 %5383
  %5387 = vset.pattern.permute.xlu0 0
  %5388 = vperm.xlu0 %5387, %v3854
  %v5389 = vpop.permute.xlu0 %5388
  %5392 = vset.pattern.permute.xlu0 0
  %5393 = vperm.xlu0 %5392, %v3855
  %v5394 = vpop.permute.xlu0 %5393
  %5397 = vset.pattern.permute.xlu0 0
  %5398 = vperm.xlu0 %5397, %v3856
  %v5399 = vpop.permute.xlu0 %5398
  %5402 = vset.pattern.permute.xlu0 0
  %5403 = vperm.xlu0 %5402, %v3857
  %v5404 = vpop.permute.xlu0 %5403
  %5407 = vset.pattern.permute.xlu0 0
  %5408 = vperm.xlu0 %5407, %v3858
  %v5409 = vpop.permute.xlu0 %5408
  %5412 = vset.pattern.permute.xlu0 0
  %5413 = vperm.xlu0 %5412, %v3859
  %v5414 = vpop.permute.xlu0 %5413
  %5417 = vset.pattern.permute.xlu0 0
  %5418 = vperm.xlu0 %5417, %v3860
  %v5419 = vpop.permute.xlu0 %5418
  %5422 = vset.pattern.permute.xlu0 0
  %5423 = vperm.xlu0 %5422, %v3861
  %v5424 = vpop.permute.xlu0 %5423
  %5427 = vset.pattern.permute.xlu0 0
  %5428 = vperm.xlu0 %5427, %v3862
  %v5429 = vpop.permute.xlu0 %5428
  %5432 = vset.pattern.permute.xlu0 0
  %5433 = vperm.xlu0 %5432, %v3863
  %v5434 = vpop.permute.xlu0 %5433
  %5437 = vset.pattern.permute.xlu0 0
  %5438 = vperm.xlu0 %5437, %v3864
  %v5439 = vpop.permute.xlu0 %5438
  %5442 = vset.pattern.permute.xlu0 0
  %5443 = vperm.xlu0 %5442, %v3865
  %v5444 = vpop.permute.xlu0 %5443
  %5447 = vset.pattern.permute.xlu0 0
  %5448 = vperm.xlu0 %5447, %v3866
  %v5449 = vpop.permute.xlu0 %5448
  %5452 = vset.pattern.permute.xlu0 0
  %5453 = vperm.xlu0 %5452, %v3867
  %v5454 = vpop.permute.xlu0 %5453
  %5457 = vset.pattern.permute.xlu0 0
  %5458 = vperm.xlu0 %5457, %v3868
  %v5459 = vpop.permute.xlu0 %5458
  %5462 = vset.pattern.permute.xlu0 0
  %5463 = vperm.xlu0 %5462, %v3869
  %v5464 = vpop.permute.xlu0 %5463
  %5467 = vset.pattern.permute.xlu0 0
  %5468 = vperm.xlu0 %5467, %v3870
  %v5469 = vpop.permute.xlu0 %5468
  %5472 = vset.pattern.permute.xlu0 0
  %5473 = vperm.xlu0 %5472, %v3871
  %v5474 = vpop.permute.xlu0 %5473
  %5477 = vset.pattern.permute.xlu0 0
  %5478 = vperm.xlu0 %5477, %v3872
  %v5479 = vpop.permute.xlu0 %5478
  %5482 = vset.pattern.permute.xlu0 0
  %5483 = vperm.xlu0 %5482, %v3873
  %v5484 = vpop.permute.xlu0 %5483
  %5487 = vset.pattern.permute.xlu0 0
  %5488 = vperm.xlu0 %5487, %v3874
  %v5489 = vpop.permute.xlu0 %5488
  %5492 = vset.pattern.permute.xlu0 0
  %5493 = vperm.xlu0 %5492, %v3875
  %v5494 = vpop.permute.xlu0 %5493
  %5497 = vset.pattern.permute.xlu0 0
  %5498 = vperm.xlu0 %5497, %v3876
  %v5499 = vpop.permute.xlu0 %5498
  %5502 = vset.pattern.permute.xlu0 0
  %5503 = vperm.xlu0 %5502, %v3877
  %v5504 = vpop.permute.xlu0 %5503
  %5507 = vset.pattern.permute.xlu0 0
  %5508 = vperm.xlu0 %5507, %v3878
  %v5509 = vpop.permute.xlu0 %5508
  %5512 = vset.pattern.permute.xlu0 0
  %5513 = vperm.xlu0 %5512, %v3879
  %v5514 = vpop.permute.xlu0 %5513
  %5517 = vset.pattern.permute.xlu0 0
  %5518 = vperm.xlu0 %5517, %v3880
  %v5519 = vpop.permute.xlu0 %5518
  %5522 = vset.pattern.permute.xlu0 0
  %5523 = vperm.xlu0 %5522, %v3881
  %v5524 = vpop.permute.xlu0 %5523
  %5527 = vset.pattern.permute.xlu0 0
  %5528 = vperm.xlu0 %5527, %v3882
  %v5529 = vpop.permute.xlu0 %5528
  %5532 = vset.pattern.permute.xlu0 0
  %5533 = vperm.xlu0 %5532, %v3883
  %v5534 = vpop.permute.xlu0 %5533
  %5537 = vset.pattern.permute.xlu0 0
  %5538 = vperm.xlu0 %5537, %v3884
  %v5539 = vpop.permute.xlu0 %5538
  %5542 = vset.pattern.permute.xlu0 0
  %5543 = vperm.xlu0 %5542, %v3885
  %v5544 = vpop.permute.xlu0 %5543
  %5547 = vset.pattern.permute.xlu0 0
  %5548 = vperm.xlu0 %5547, %v3886
  %v5549 = vpop.permute.xlu0 %5548
  %5552 = vset.pattern.permute.xlu0 0
  %5553 = vperm.xlu0 %5552, %v3887
  %v5554 = vpop.permute.xlu0 %5553
  %5557 = vset.pattern.permute.xlu0 0
  %5558 = vperm.xlu0 %5557, %v3888
  %v5559 = vpop.permute.xlu0 %5558
  %5562 = vset.pattern.permute.xlu0 0
  %5563 = vperm.xlu0 %5562, %v3889
  %v5564 = vpop.permute.xlu0 %5563
  %5567 = vset.pattern.permute.xlu0 0
  %5568 = vperm.xlu0 %5567, %v3890
  %v5569 = vpop.permute.xlu0 %5568
  %5572 = vset.pattern.permute.xlu0 0
  %5573 = vperm.xlu0 %5572, %v3891
  %v5574 = vpop.permute.xlu0 %5573
  %5577 = vset.pattern.permute.xlu0 0
  %5578 = vperm.xlu0 %5577, %v3892
  %v5579 = vpop.permute.xlu0 %5578
  %5582 = vset.pattern.permute.xlu0 0
  %5583 = vperm.xlu0 %5582, %v3893
  %v5584 = vpop.permute.xlu0 %5583
  %5587 = vset.pattern.permute.xlu0 0
  %5588 = vperm.xlu0 %5587, %v3894
  %v5589 = vpop.permute.xlu0 %5588
  %5592 = vset.pattern.permute.xlu0 0
  %5593 = vperm.xlu0 %5592, %v3895
  %v5594 = vpop.permute.xlu0 %5593
  %5597 = vset.pattern.permute.xlu0 0
  %5598 = vperm.xlu0 %5597, %v3896
  %v5599 = vpop.permute.xlu0 %5598
  %5602 = vset.pattern.permute.xlu0 0
  %5603 = vperm.xlu0 %5602, %v3897
  %v5604 = vpop.permute.xlu0 %5603
  %5607 = vset.pattern.permute.xlu0 0
  %5608 = vperm.xlu0 %5607, %v3898
  %v5609 = vpop.permute.xlu0 %5608
  %5612 = vset.pattern.permute.xlu0 0
  %5613 = vperm.xlu0 %5612, %v3899
  %v5614 = vpop.permute.xlu0 %5613
  %5617 = vset.pattern.permute.xlu0 0
  %5618 = vperm.xlu0 %5617, %v3900
  %v5619 = vpop.permute.xlu0 %5618
  %5622 = vset.pattern.permute.xlu0 0
  %5623 = vperm.xlu0 %5622, %v3901
  %v5624 = vpop.permute.xlu0 %5623
  %5627 = vset.pattern.permute.xlu0 0
  %5628 = vperm.xlu0 %5627, %v3902
  %v5629 = vpop.permute.xlu0 %5628
  %5632 = vset.pattern.permute.xlu0 0
  %5633 = vperm.xlu0 %5632, %v3903
  %v5634 = vpop.permute.xlu0 %5633
  %5637 = vset.pattern.permute.xlu0 0
  %5638 = vperm.xlu0 %5637, %v3904
  %v5639 = vpop.permute.xlu0 %5638
  %5642 = vset.pattern.permute.xlu0 0
  %5643 = vperm.xlu0 %5642, %v3905
  %v5644 = vpop.permute.xlu0 %5643
  %5647 = vset.pattern.permute.xlu0 0
  %5648 = vperm.xlu0 %5647, %v3906
  %v5649 = vpop.permute.xlu0 %5648
  %5652 = vset.pattern.permute.xlu0 0
  %5653 = vperm.xlu0 %5652, %v3907
  %v5654 = vpop.permute.xlu0 %5653
  %5657 = vset.pattern.permute.xlu0 0
  %5658 = vperm.xlu0 %5657, %v3908
  %v5659 = vpop.permute.xlu0 %5658
  %5662 = vset.pattern.permute.xlu0 0
  %5663 = vperm.xlu0 %5662, %v3909
  %v5664 = vpop.permute.xlu0 %5663
  %5667 = vset.pattern.permute.xlu0 0
  %5668 = vperm.xlu0 %5667, %v3910
  %v5669 = vpop.permute.xlu0 %5668
  %5672 = vset.pattern.permute.xlu0 0
  %5673 = vperm.xlu0 %5672, %v3911
  %v5674 = vpop.permute.xlu0 %5673
  %5677 = vset.pattern.permute.xlu0 0
  %5678 = vperm.xlu0 %5677, %v3912
  %v5679 = vpop.permute.xlu0 %5678
  %5682 = vset.pattern.permute.xlu0 0
  %5683 = vperm.xlu0 %5682, %v3913
  %v5684 = vpop.permute.xlu0 %5683
  %5687 = vset.pattern.permute.xlu0 0
  %5688 = vperm.xlu0 %5687, %v3914
  %v5689 = vpop.permute.xlu0 %5688
  %5692 = vset.pattern.permute.xlu0 0
  %5693 = vperm.xlu0 %5692, %v3915
  %v5694 = vpop.permute.xlu0 %5693
  %5697 = vset.pattern.permute.xlu0 0
  %5698 = vperm.xlu0 %5697, %v3916
  %v5699 = vpop.permute.xlu0 %5698
  %5702 = vset.pattern.permute.xlu0 0
  %5703 = vperm.xlu0 %5702, %v3917
  %v5704 = vpop.permute.xlu0 %5703
  %5707 = vset.pattern.permute.xlu0 0
  %5708 = vperm.xlu0 %5707, %v3918
  %v5709 = vpop.permute.xlu0 %5708
  %5712 = vset.pattern.permute.xlu0 0
  %5713 = vperm.xlu0 %5712, %v3919
  %v5714 = vpop.permute.xlu0 %5713
  %5717 = vset.pattern.permute.xlu0 0
  %5718 = vperm.xlu0 %5717, %v3920
  %v5719 = vpop.permute.xlu0 %5718
  %5722 = vset.pattern.permute.xlu0 0
  %5723 = vperm.xlu0 %5722, %v3921
  %v5724 = vpop.permute.xlu0 %5723
  %5727 = vset.pattern.permute.xlu0 0
  %5728 = vperm.xlu0 %5727, %v3922
  %v5729 = vpop.permute.xlu0 %5728
  %5732 = vset.pattern.permute.xlu0 0
  %5733 = vperm.xlu0 %5732, %v3923
  %v5734 = vpop.permute.xlu0 %5733
  %5737 = vset.pattern.permute.xlu0 0
  %5738 = vperm.xlu0 %5737, %v3924
  %v5739 = vpop.permute.xlu0 %5738
  %5742 = vset.pattern.permute.xlu0 0
  %5743 = vperm.xlu0 %5742, %v3925
  %v5744 = vpop.permute.xlu0 %5743
  %5747 = vset.pattern.permute.xlu0 0
  %5748 = vperm.xlu0 %5747, %v3926
  %v5749 = vpop.permute.xlu0 %5748
  %5752 = vset.pattern.permute.xlu0 0
  %5753 = vperm.xlu0 %5752, %v3927
  %v5754 = vpop.permute.xlu0 %5753
  %5757 = vset.pattern.permute.xlu0 0
  %5758 = vperm.xlu0 %5757, %v3928
  %v5759 = vpop.permute.xlu0 %5758
  %5762 = vset.pattern.permute.xlu0 0
  %5763 = vperm.xlu0 %5762, %v3929
  %v5764 = vpop.permute.xlu0 %5763
  %5767 = vset.pattern.permute.xlu0 0
  %5768 = vperm.xlu0 %5767, %v3930
  %v5769 = vpop.permute.xlu0 %5768
  %5772 = vset.pattern.permute.xlu0 0
  %5773 = vperm.xlu0 %5772, %v3931
  %v5774 = vpop.permute.xlu0 %5773
  %5777 = vset.pattern.permute.xlu0 0
  %5778 = vperm.xlu0 %5777, %v3932
  %v5779 = vpop.permute.xlu0 %5778
  %5782 = vset.pattern.permute.xlu0 0
  %5783 = vperm.xlu0 %5782, %v3933
  %v5784 = vpop.permute.xlu0 %5783
  %5787 = vset.pattern.permute.xlu0 0
  %5788 = vperm.xlu0 %5787, %v3934
  %v5789 = vpop.permute.xlu0 %5788
  %5792 = vset.pattern.permute.xlu0 0
  %5793 = vperm.xlu0 %5792, %v3935
  %v5794 = vpop.permute.xlu0 %5793
  %5797 = vset.pattern.permute.xlu0 0
  %5798 = vperm.xlu0 %5797, %v3936
  %v5799 = vpop.permute.xlu0 %5798
  %5802 = vset.pattern.permute.xlu0 0
  %5803 = vperm.xlu0 %5802, %v3937
  %v5804 = vpop.permute.xlu0 %5803
  %5807 = vset.pattern.permute.xlu0 0
  %5808 = vperm.xlu0 %5807, %v3938
  %v5809 = vpop.permute.xlu0 %5808
  %5812 = vset.pattern.permute.xlu0 0
  %5813 = vperm.xlu0 %5812, %v3939
  %v5814 = vpop.permute.xlu0 %5813
  %5817 = vset.pattern.permute.xlu0 0
  %5818 = vperm.xlu0 %5817, %v3940
  %v5819 = vpop.permute.xlu0 %5818
  %5822 = vset.pattern.permute.xlu0 0
  %5823 = vperm.xlu0 %5822, %v3941
  %v5824 = vpop.permute.xlu0 %5823
  %5827 = vset.pattern.permute.xlu0 0
  %5828 = vperm.xlu0 %5827, %v3942
  %v5829 = vpop.permute.xlu0 %5828
  %5832 = vset.pattern.permute.xlu0 0
  %5833 = vperm.xlu0 %5832, %v3943
  %v5834 = vpop.permute.xlu0 %5833
  %5837 = vset.pattern.permute.xlu0 0
  %5838 = vperm.xlu0 %5837, %v3944
  %v5839 = vpop.permute.xlu0 %5838
  %5842 = vset.pattern.permute.xlu0 0
  %5843 = vperm.xlu0 %5842, %v3945
  %v5844 = vpop.permute.xlu0 %5843
  %5847 = vset.pattern.permute.xlu0 0
  %5848 = vperm.xlu0 %5847, %v3946
  %v5849 = vpop.permute.xlu0 %5848
  %5852 = vset.pattern.permute.xlu0 0
  %5853 = vperm.xlu0 %5852, %v3947
  %v5854 = vpop.permute.xlu0 %5853
  %5857 = vset.pattern.permute.xlu0 0
  %5858 = vperm.xlu0 %5857, %v3948
  %v5859 = vpop.permute.xlu0 %5858
  %5862 = vset.pattern.permute.xlu0 0
  %5863 = vperm.xlu0 %5862, %v3949
  %v5864 = vpop.permute.xlu0 %5863
  %5867 = vset.pattern.permute.xlu0 0
  %5868 = vperm.xlu0 %5867, %v3950
  %v5869 = vpop.permute.xlu0 %5868
  %5872 = vset.pattern.permute.xlu0 0
  %5873 = vperm.xlu0 %5872, %v3951
  %v5874 = vpop.permute.xlu0 %5873
  %5877 = vset.pattern.permute.xlu0 0
  %5878 = vperm.xlu0 %5877, %v3952
  %v5879 = vpop.permute.xlu0 %5878
  %5882 = vset.pattern.permute.xlu0 0
  %5883 = vperm.xlu0 %5882, %v3953
  %v5884 = vpop.permute.xlu0 %5883
  %5887 = vset.pattern.permute.xlu0 0
  %5888 = vperm.xlu0 %5887, %v3954
  %v5889 = vpop.permute.xlu0 %5888
  %5892 = vset.pattern.permute.xlu0 0
  %5893 = vperm.xlu0 %5892, %v3955
  %v5894 = vpop.permute.xlu0 %5893
  %5897 = vset.pattern.permute.xlu0 0
  %5898 = vperm.xlu0 %5897, %v3956
  %v5899 = vpop.permute.xlu0 %5898
  %5902 = vset.pattern.permute.xlu0 0
  %5903 = vperm.xlu0 %5902, %v3957
  %v5904 = vpop.permute.xlu0 %5903
  %5907 = vset.pattern.permute.xlu0 0
  %5908 = vperm.xlu0 %5907, %v3958
  %v5909 = vpop.permute.xlu0 %5908
  %5912 = vset.pattern.permute.xlu0 0
  %5913 = vperm.xlu0 %5912, %v3959
  %v5914 = vpop.permute.xlu0 %5913
  %5917 = vset.pattern.permute.xlu0 0
  %5918 = vperm.xlu0 %5917, %v3960
  %v5919 = vpop.permute.xlu0 %5918
  %5922 = vset.pattern.permute.xlu0 0
  %5923 = vperm.xlu0 %5922, %v3961
  %v5924 = vpop.permute.xlu0 %5923
  %5927 = vset.pattern.permute.xlu0 0
  %5928 = vperm.xlu0 %5927, %v3962
  %v5929 = vpop.permute.xlu0 %5928
  %5932 = vset.pattern.permute.xlu0 0
  %5933 = vperm.xlu0 %5932, %v3963
  %v5934 = vpop.permute.xlu0 %5933
  %5937 = vset.pattern.permute.xlu0 0
  %5938 = vperm.xlu0 %5937, %v3964
  %v5939 = vpop.permute.xlu0 %5938
  %5942 = vset.pattern.permute.xlu0 0
  %5943 = vperm.xlu0 %5942, %v3965
  %v5944 = vpop.permute.xlu0 %5943
  %5947 = vset.pattern.permute.xlu0 0
  %5948 = vperm.xlu0 %5947, %v3966
  %v5949 = vpop.permute.xlu0 %5948
  %5952 = vset.pattern.permute.xlu0 0
  %5953 = vperm.xlu0 %5952, %v3967
  %v5954 = vpop.permute.xlu0 %5953
  %5957 = vset.pattern.permute.xlu0 0
  %5958 = vperm.xlu0 %5957, %v3968
  %v5959 = vpop.permute.xlu0 %5958
  %5962 = vset.pattern.permute.xlu0 0
  %5963 = vperm.xlu0 %5962, %v3969
  %v5964 = vpop.permute.xlu0 %5963
  %5967 = vset.pattern.permute.xlu0 0
  %5968 = vperm.xlu0 %5967, %v3970
  %v5969 = vpop.permute.xlu0 %5968
  %5972 = vset.pattern.permute.xlu0 0
  %5973 = vperm.xlu0 %5972, %v3971
  %v5974 = vpop.permute.xlu0 %5973
  %5977 = vset.pattern.permute.xlu0 0
  %5978 = vperm.xlu0 %5977, %v3972
  %v5979 = vpop.permute.xlu0 %5978
  %5982 = vset.pattern.permute.xlu0 0
  %5983 = vperm.xlu0 %5982, %v3973
  %v5984 = vpop.permute.xlu0 %5983
  %5987 = vset.pattern.permute.xlu0 0
  %5988 = vperm.xlu0 %5987, %v3974
  %v5989 = vpop.permute.xlu0 %5988
  %5992 = vset.pattern.permute.xlu0 0
  %5993 = vperm.xlu0 %5992, %v3975
  %v5994 = vpop.permute.xlu0 %5993
  %5997 = vset.pattern.permute.xlu0 0
  %5998 = vperm.xlu0 %5997, %v3976
  %v5999 = vpop.permute.xlu0 %5998
  %6002 = vset.pattern.permute.xlu0 0
  %6003 = vperm.xlu0 %6002, %v3977
  %v6004 = vpop.permute.xlu0 %6003
  %6007 = vset.pattern.permute.xlu0 0
  %6008 = vperm.xlu0 %6007, %v3978
  %v6009 = vpop.permute.xlu0 %6008
  %6012 = vset.pattern.permute.xlu0 0
  %6013 = vperm.xlu0 %6012, %v3979
  %v6014 = vpop.permute.xlu0 %6013
  %6017 = vset.pattern.permute.xlu0 0
  %6018 = vperm.xlu0 %6017, %v3980
  %v6019 = vpop.permute.xlu0 %6018
  %6022 = vset.pattern.permute.xlu0 0
  %6023 = vperm.xlu0 %6022, %v3981
  %v6024 = vpop.permute.xlu0 %6023
  %6027 = vset.pattern.permute.xlu0 0
  %6028 = vperm.xlu0 %6027, %v3982
  %v6029 = vpop.permute.xlu0 %6028
  %6032 = vset.pattern.permute.xlu0 0
  %6033 = vperm.xlu0 %6032, %v3983
  %v6034 = vpop.permute.xlu0 %6033
  %6037 = vset.pattern.permute.xlu0 0
  %6038 = vperm.xlu0 %6037, %v3984
  %v6039 = vpop.permute.xlu0 %6038
  %6042 = vset.pattern.permute.xlu0 0
  %6043 = vperm.xlu0 %6042, %v3985
  %v6044 = vpop.permute.xlu0 %6043
  %6047 = vset.pattern.permute.xlu0 0
  %6048 = vperm.xlu0 %6047, %v3986
  %v6049 = vpop.permute.xlu0 %6048
  %6052 = vset.pattern.permute.xlu0 0
  %6053 = vperm.xlu0 %6052, %v3987
  %v6054 = vpop.permute.xlu0 %6053
  %6057 = vset.pattern.permute.xlu0 0
  %6058 = vperm.xlu0 %6057, %v3988
  %v6059 = vpop.permute.xlu0 %6058
  %6062 = vset.pattern.permute.xlu0 0
  %6063 = vperm.xlu0 %6062, %v3989
  %v6064 = vpop.permute.xlu0 %6063
  %6067 = vset.pattern.permute.xlu0 0
  %6068 = vperm.xlu0 %6067, %v3990
  %v6069 = vpop.permute.xlu0 %6068
  %6072 = vset.pattern.permute.xlu0 0
  %6073 = vperm.xlu0 %6072, %v3991
  %v6074 = vpop.permute.xlu0 %6073
  %6077 = vset.pattern.permute.xlu0 0
  %6078 = vperm.xlu0 %6077, %v3992
  %v6079 = vpop.permute.xlu0 %6078
  %6082 = vset.pattern.permute.xlu0 0
  %6083 = vperm.xlu0 %6082, %v3993
  %v6084 = vpop.permute.xlu0 %6083
  %6087 = vset.pattern.permute.xlu0 0
  %6088 = vperm.xlu0 %6087, %v3994
  %v6089 = vpop.permute.xlu0 %6088
  %6092 = vset.pattern.permute.xlu0 0
  %6093 = vperm.xlu0 %6092, %v3995
  %v6094 = vpop.permute.xlu0 %6093
  %6097 = vset.pattern.permute.xlu0 0
  %6098 = vperm.xlu0 %6097, %v3996
  %v6099 = vpop.permute.xlu0 %6098
  %6102 = vset.pattern.permute.xlu0 0
  %6103 = vperm.xlu0 %6102, %v3997
  %v6104 = vpop.permute.xlu0 %6103
  %6107 = vset.pattern.permute.xlu0 0
  %6108 = vperm.xlu0 %6107, %v3998
  %v6109 = vpop.permute.xlu0 %6108
  %6112 = vset.pattern.permute.xlu0 0
  %6113 = vperm.xlu0 %6112, %v3999
  %v6114 = vpop.permute.xlu0 %6113
  %6117 = vset.pattern.permute.xlu0 0
  %6118 = vperm.xlu0 %6117, %v4000
  %v6119 = vpop.permute.xlu0 %6118
  %6122 = vset.pattern.permute.xlu0 0
  %6123 = vperm.xlu0 %6122, %v4001
  %v6124 = vpop.permute.xlu0 %6123
  %6127 = vset.pattern.permute.xlu0 0
  %6128 = vperm.xlu0 %6127, %v4002
  %v6129 = vpop.permute.xlu0 %6128
  %6132 = vset.pattern.permute.xlu0 0
  %6133 = vperm.xlu0 %6132, %v4003
  %v6134 = vpop.permute.xlu0 %6133
  %6137 = vset.pattern.permute.xlu0 0
  %6138 = vperm.xlu0 %6137, %v4004
  %v6139 = vpop.permute.xlu0 %6138
  %6142 = vset.pattern.permute.xlu0 0
  %6143 = vperm.xlu0 %6142, %v4005
  %v6144 = vpop.permute.xlu0 %6143
  %6147 = vset.pattern.permute.xlu0 0
  %6148 = vperm.xlu0 %6147, %v4006
  %v6149 = vpop.permute.xlu0 %6148
  %6152 = vset.pattern.permute.xlu0 0
  %6153 = vperm.xlu0 %6152, %v4007
  %v6154 = vpop.permute.xlu0 %6153
  %6157 = vset.pattern.permute.xlu0 0
  %6158 = vperm.xlu0 %6157, %v4008
  %v6159 = vpop.permute.xlu0 %6158
  %6162 = vset.pattern.permute.xlu0 0
  %6163 = vperm.xlu0 %6162, %v4009
  %v6164 = vpop.permute.xlu0 %6163
  %6167 = vset.pattern.permute.xlu0 0
  %6168 = vperm.xlu0 %6167, %v4010
  %v6169 = vpop.permute.xlu0 %6168
  %6172 = vset.pattern.permute.xlu0 0
  %6173 = vperm.xlu0 %6172, %v4011
  %v6174 = vpop.permute.xlu0 %6173
  %6177 = vset.pattern.permute.xlu0 0
  %6178 = vperm.xlu0 %6177, %v4012
  %v6179 = vpop.permute.xlu0 %6178
  %6182 = vset.pattern.permute.xlu0 0
  %6183 = vperm.xlu0 %6182, %v4013
  %v6184 = vpop.permute.xlu0 %6183
  %6187 = vset.pattern.permute.xlu0 0
  %6188 = vperm.xlu0 %6187, %v4014
  %v6189 = vpop.permute.xlu0 %6188
  %6192 = vset.pattern.permute.xlu0 0
  %6193 = vperm.xlu0 %6192, %v4015
  %v6194 = vpop.permute.xlu0 %6193
  %6197 = vset.pattern.permute.xlu0 0
  %6198 = vperm.xlu0 %6197, %v4016
  %v6199 = vpop.permute.xlu0 %6198
  %6202 = vset.pattern.permute.xlu0 0
  %6203 = vperm.xlu0 %6202, %v4017
  %v6204 = vpop.permute.xlu0 %6203
  %6207 = vset.pattern.permute.xlu0 0
  %6208 = vperm.xlu0 %6207, %v4018
  %v6209 = vpop.permute.xlu0 %6208
  %6212 = vset.pattern.permute.xlu0 0
  %6213 = vperm.xlu0 %6212, %v4019
  %v6214 = vpop.permute.xlu0 %6213
  %6217 = vset.pattern.permute.xlu0 0
  %6218 = vperm.xlu0 %6217, %v4020
  %v6219 = vpop.permute.xlu0 %6218
  %6222 = vset.pattern.permute.xlu0 0
  %6223 = vperm.xlu0 %6222, %v4021
  %v6224 = vpop.permute.xlu0 %6223
  %6227 = vset.pattern.permute.xlu0 0
  %6228 = vperm.xlu0 %6227, %v4022
  %v6229 = vpop.permute.xlu0 %6228
  %6232 = vset.pattern.permute.xlu0 0
  %6233 = vperm.xlu0 %6232, %v4023
  %v6234 = vpop.permute.xlu0 %6233
  %6237 = vset.pattern.permute.xlu0 0
  %6238 = vperm.xlu0 %6237, %v4024
  %v6239 = vpop.permute.xlu0 %6238
  %6242 = vset.pattern.permute.xlu0 0
  %6243 = vperm.xlu0 %6242, %v4025
  %v6244 = vpop.permute.xlu0 %6243
  %6247 = vset.pattern.permute.xlu0 0
  %6248 = vperm.xlu0 %6247, %v4026
  %v6249 = vpop.permute.xlu0 %6248
  %6252 = vset.pattern.permute.xlu0 0
  %6253 = vperm.xlu0 %6252, %v4027
  %v6254 = vpop.permute.xlu0 %6253
  %6257 = vset.pattern.permute.xlu0 0
  %6258 = vperm.xlu0 %6257, %v4028
  %v6259 = vpop.permute.xlu0 %6258
  %6262 = vset.pattern.permute.xlu0 0
  %6263 = vperm.xlu0 %6262, %v4029
  %v6264 = vpop.permute.xlu0 %6263
  %6267 = vset.pattern.permute.xlu0 0
  %6268 = vperm.xlu0 %6267, %v4030
  %v6269 = vpop.permute.xlu0 %6268
  %6272 = vset.pattern.permute.xlu0 0
  %6273 = vperm.xlu0 %6272, %v4031
  %v6274 = vpop.permute.xlu0 %6273
  %6277 = vset.pattern.permute.xlu0 0
  %6278 = vperm.xlu0 %6277, %v4032
  %v6279 = vpop.permute.xlu0 %6278
  %6282 = vset.pattern.permute.xlu0 0
  %6283 = vperm.xlu0 %6282, %v4033
  %v6284 = vpop.permute.xlu0 %6283
  %6287 = vset.pattern.permute.xlu0 0
  %6288 = vperm.xlu0 %6287, %v4034
  %v6289 = vpop.permute.xlu0 %6288
  %6292 = vset.pattern.permute.xlu0 0
  %6293 = vperm.xlu0 %6292, %v4035
  %v6294 = vpop.permute.xlu0 %6293
  %6297 = vset.pattern.permute.xlu0 0
  %6298 = vperm.xlu0 %6297, %v4036
  %v6299 = vpop.permute.xlu0 %6298
  %6302 = vset.pattern.permute.xlu0 0
  %6303 = vperm.xlu0 %6302, %v4037
  %v6304 = vpop.permute.xlu0 %6303
  %6307 = vset.pattern.permute.xlu0 0
  %6308 = vperm.xlu0 %6307, %v4038
  %v6309 = vpop.permute.xlu0 %6308
  %6312 = vset.pattern.permute.xlu0 0
  %6313 = vperm.xlu0 %6312, %v4039
  %v6314 = vpop.permute.xlu0 %6313
  %6317 = vset.pattern.permute.xlu0 0
  %6318 = vperm.xlu0 %6317, %v4040
  %v6319 = vpop.permute.xlu0 %6318
  %6322 = vset.pattern.permute.xlu0 0
  %6323 = vperm.xlu0 %6322, %v4041
  %v6324 = vpop.permute.xlu0 %6323
  %6327 = vset.pattern.permute.xlu0 0
  %6328 = vperm.xlu0 %6327, %v4042
  %v6329 = vpop.permute.xlu0 %6328
  %6332 = vset.pattern.permute.xlu0 0
  %6333 = vperm.xlu0 %6332, %v4043
  %v6334 = vpop.permute.xlu0 %6333
  %6337 = vset.pattern.permute.xlu0 0
  %6338 = vperm.xlu0 %6337, %v4044
  %v6339 = vpop.permute.xlu0 %6338
  %6342 = vset.pattern.permute.xlu0 0
  %6343 = vperm.xlu0 %6342, %v4045
  %v6344 = vpop.permute.xlu0 %6343
  %6347 = vset.pattern.permute.xlu0 0
  %6348 = vperm.xlu0 %6347, %v4046
  %v6349 = vpop.permute.xlu0 %6348
  %6352 = vset.pattern.permute.xlu0 0
  %6353 = vperm.xlu0 %6352, %v4047
  %v6354 = vpop.permute.xlu0 %6353
  %6357 = vset.pattern.permute.xlu0 0
  %6358 = vperm.xlu0 %6357, %v4048
  %v6359 = vpop.permute.xlu0 %6358
  %6362 = vset.pattern.permute.xlu0 0
  %6363 = vperm.xlu0 %6362, %v4049
  %v6364 = vpop.permute.xlu0 %6363
  %6367 = vset.pattern.permute.xlu0 0
  %6368 = vperm.xlu0 %6367, %v4050
  %v6369 = vpop.permute.xlu0 %6368
  %6372 = vset.pattern.permute.xlu0 0
  %6373 = vperm.xlu0 %6372, %v4051
  %v6374 = vpop.permute.xlu0 %6373
  %6377 = vset.pattern.permute.xlu0 0
  %6378 = vperm.xlu0 %6377, %v4052
  %v6379 = vpop.permute.xlu0 %6378
  %6382 = vset.pattern.permute.xlu0 0
  %6383 = vperm.xlu0 %6382, %v4053
  %v6384 = vpop.permute.xlu0 %6383
  %6387 = vset.pattern.permute.xlu0 0
  %6388 = vperm.xlu0 %6387, %v4054
  %v6389 = vpop.permute.xlu0 %6388
  %6392 = vset.pattern.permute.xlu0 0
  %6393 = vperm.xlu0 %6392, %v4055
  %v6394 = vpop.permute.xlu0 %6393
  %6397 = vset.pattern.permute.xlu0 0
  %6398 = vperm.xlu0 %6397, %v4056
  %v6399 = vpop.permute.xlu0 %6398
  %6402 = vset.pattern.permute.xlu0 0
  %6403 = vperm.xlu0 %6402, %v4057
  %v6404 = vpop.permute.xlu0 %6403
  %6407 = vset.pattern.permute.xlu0 0
  %6408 = vperm.xlu0 %6407, %v4058
  %v6409 = vpop.permute.xlu0 %6408
  %6412 = vset.pattern.permute.xlu0 0
  %6413 = vperm.xlu0 %6412, %v4059
  %v6414 = vpop.permute.xlu0 %6413
  %6417 = vset.pattern.permute.xlu0 0
  %6418 = vperm.xlu0 %6417, %v4060
  %v6419 = vpop.permute.xlu0 %6418
  %6422 = vset.pattern.permute.xlu0 0
  %6423 = vperm.xlu0 %6422, %v4061
  %v6424 = vpop.permute.xlu0 %6423
  %6427 = vset.pattern.permute.xlu0 0
  %6428 = vperm.xlu0 %6427, %v4062
  %v6429 = vpop.permute.xlu0 %6428
  %6432 = vset.pattern.permute.xlu0 0
  %6433 = vperm.xlu0 %6432, %v4063
  %v6434 = vpop.permute.xlu0 %6433
  %6437 = vset.pattern.permute.xlu0 0
  %6438 = vperm.xlu0 %6437, %v4064
  %v6439 = vpop.permute.xlu0 %6438
  %6442 = vset.pattern.permute.xlu0 0
  %6443 = vperm.xlu0 %6442, %v4065
  %v6444 = vpop.permute.xlu0 %6443
  %6447 = vset.pattern.permute.xlu0 0
  %6448 = vperm.xlu0 %6447, %v4066
  %v6449 = vpop.permute.xlu0 %6448
  %6452 = vset.pattern.permute.xlu0 0
  %6453 = vperm.xlu0 %6452, %v4067
  %v6454 = vpop.permute.xlu0 %6453
  %6457 = vset.pattern.permute.xlu0 0
  %6458 = vperm.xlu0 %6457, %v4068
  %v6459 = vpop.permute.xlu0 %6458
  %6462 = vset.pattern.permute.xlu0 0
  %6463 = vperm.xlu0 %6462, %v4069
  %v6464 = vpop.permute.xlu0 %6463
  %6467 = vset.pattern.permute.xlu0 0
  %6468 = vperm.xlu0 %6467, %v4070
  %v6469 = vpop.permute.xlu0 %6468
  %6472 = vset.pattern.permute.xlu0 0
  %6473 = vperm.xlu0 %6472, %v4071
  %v6474 = vpop.permute.xlu0 %6473
  %6477 = vset.pattern.permute.xlu0 0
  %6478 = vperm.xlu0 %6477, %v4072
  %v6479 = vpop.permute.xlu0 %6478
  %6482 = vset.pattern.permute.xlu0 0
  %6483 = vperm.xlu0 %6482, %v4073
  %v6484 = vpop.permute.xlu0 %6483
  %6487 = vset.pattern.permute.xlu0 0
  %6488 = vperm.xlu0 %6487, %v4074
  %v6489 = vpop.permute.xlu0 %6488
  %6492 = vset.pattern.permute.xlu0 0
  %6493 = vperm.xlu0 %6492, %v4075
  %v6494 = vpop.permute.xlu0 %6493
  %6497 = vset.pattern.permute.xlu0 0
  %6498 = vperm.xlu0 %6497, %v4076
  %v6499 = vpop.permute.xlu0 %6498
  %6502 = vset.pattern.permute.xlu0 0
  %6503 = vperm.xlu0 %6502, %v4077
  %v6504 = vpop.permute.xlu0 %6503
  %6507 = vset.pattern.permute.xlu0 0
  %6508 = vperm.xlu0 %6507, %v4078
  %v6509 = vpop.permute.xlu0 %6508
  %6512 = vset.pattern.permute.xlu0 0
  %6513 = vperm.xlu0 %6512, %v4079
  %v6514 = vpop.permute.xlu0 %6513
  %6517 = vset.pattern.permute.xlu0 0
  %6518 = vperm.xlu0 %6517, %v4080
  %v6519 = vpop.permute.xlu0 %6518
  %6522 = vset.pattern.permute.xlu0 0
  %6523 = vperm.xlu0 %6522, %v4081
  %v6524 = vpop.permute.xlu0 %6523
  %6527 = vset.pattern.permute.xlu0 0
  %6528 = vperm.xlu0 %6527, %v4082
  %v6529 = vpop.permute.xlu0 %6528
  %6532 = vset.pattern.permute.xlu0 0
  %6533 = vperm.xlu0 %6532, %v4083
  %v6534 = vpop.permute.xlu0 %6533
  %6537 = vset.pattern.permute.xlu0 0
  %6538 = vperm.xlu0 %6537, %v4084
  %v6539 = vpop.permute.xlu0 %6538
  %6542 = vset.pattern.permute.xlu0 0
  %6543 = vperm.xlu0 %6542, %v4085
  %v6544 = vpop.permute.xlu0 %6543
  %6547 = vset.pattern.permute.xlu0 0
  %6548 = vperm.xlu0 %6547, %v4086
  %v6549 = vpop.permute.xlu0 %6548
  %6552 = vset.pattern.permute.xlu0 0
  %6553 = vperm.xlu0 %6552, %v4087
  %v6554 = vpop.permute.xlu0 %6553
  %6557 = vset.pattern.permute.xlu0 0
  %6558 = vperm.xlu0 %6557, %v4088
  %v6559 = vpop.permute.xlu0 %6558
  %6562 = vset.pattern.permute.xlu0 0
  %6563 = vperm.xlu0 %6562, %v4089
  %v6564 = vpop.permute.xlu0 %6563
  %6567 = vset.pattern.permute.xlu0 0
  %6568 = vperm.xlu0 %6567, %v4090
  %v6569 = vpop.permute.xlu0 %6568
  %6572 = vset.pattern.permute.xlu0 0
  %6573 = vperm.xlu0 %6572, %v4091
  %v6574 = vpop.permute.xlu0 %6573
  %6577 = vset.pattern.permute.xlu0 0
  %6578 = vperm.xlu0 %6577, %v4092
  %v6579 = vpop.permute.xlu0 %6578
  %6582 = vset.pattern.permute.xlu0 0
  %6583 = vperm.xlu0 %6582, %v4093
  %v6584 = vpop.permute.xlu0 %6583
  %6587 = vset.pattern.permute.xlu0 0
  %6588 = vperm.xlu0 %6587, %v4094
  %v6589 = vpop.permute.xlu0 %6588
  %6592 = vset.pattern.permute.xlu0 0
  %6593 = vperm.xlu0 %6592, %v4095
  %v6594 = vpop.permute.xlu0 %6593
  %6597 = vset.pattern.permute.xlu0 0
  %6598 = vperm.xlu0 %6597, %v4096
  %v6599 = vpop.permute.xlu0 %6598
  %6602 = vset.pattern.permute.xlu0 0
  %6603 = vperm.xlu0 %6602, %v4097
  %v6604 = vpop.permute.xlu0 %6603
  %6607 = vset.pattern.permute.xlu0 0
  %6608 = vperm.xlu0 %6607, %v4098
  %v6609 = vpop.permute.xlu0 %6608
  %6612 = vset.pattern.permute.xlu0 0
  %6613 = vperm.xlu0 %6612, %v4099
  %v6614 = vpop.permute.xlu0 %6613
  %6617 = vset.pattern.permute.xlu0 0
  %6618 = vperm.xlu0 %6617, %v4100
  %v6619 = vpop.permute.xlu0 %6618
  %6622 = vset.pattern.permute.xlu0 0
  %6623 = vperm.xlu0 %6622, %v4101
  %v6624 = vpop.permute.xlu0 %6623
  %6627 = vset.pattern.permute.xlu0 0
  %6628 = vperm.xlu0 %6627, %v4102
  %v6629 = vpop.permute.xlu0 %6628
  %6632 = vset.pattern.permute.xlu0 0
  %6633 = vperm.xlu0 %6632, %v4103
  %v6634 = vpop.permute.xlu0 %6633
  %6637 = vset.pattern.permute.xlu0 0
  %6638 = vperm.xlu0 %6637, %v4104
  %v6639 = vpop.permute.xlu0 %6638
  %6642 = vset.pattern.permute.xlu0 0
  %6643 = vperm.xlu0 %6642, %v4105
  %v6644 = vpop.permute.xlu0 %6643
  %6647 = vset.pattern.permute.xlu0 0
  %6648 = vperm.xlu0 %6647, %v4106
  %v6649 = vpop.permute.xlu0 %6648
  %6652 = vset.pattern.permute.xlu0 0
  %6653 = vperm.xlu0 %6652, %v4107
  %v6654 = vpop.permute.xlu0 %6653
  %6657 = vset.pattern.permute.xlu0 0
  %6658 = vperm.xlu0 %6657, %v4108
  %v6659 = vpop.permute.xlu0 %6658
  %6662 = vset.pattern.permute.xlu0 0
  %6663 = vperm.xlu0 %6662, %v4109
  %v6664 = vpop.permute.xlu0 %6663
  %6667 = vset.pattern.permute.xlu0 0
  %6668 = vperm.xlu0 %6667, %v4110
  %v6669 = vpop.permute.xlu0 %6668
  %v7183 = vunpack.c.l.b16 %v3085
  %v7184 = vunpack.c.l.b16 %v3086
  %v7185 = vunpack.c.l.b16 %v3087
  %v7186 = vunpack.c.l.b16 %v3088
  %v7187 = vunpack.c.l.b16 %v3089
  %v7188 = vunpack.c.l.b16 %v3090
  %v7189 = vunpack.c.l.b16 %v3091
  %v7190 = vunpack.c.l.b16 %v3092
  %v7191 = vunpack.c.l.b16 %v3093
  %v7192 = vunpack.c.l.b16 %v3094
  %v7193 = vunpack.c.l.b16 %v3095
  %v7194 = vunpack.c.l.b16 %v3096
  %v7195 = vunpack.c.l.b16 %v3097
  %v7196 = vunpack.c.l.b16 %v3098
  %v7197 = vunpack.c.l.b16 %v3099
  %v7198 = vunpack.c.l.b16 %v3100
  %v7199 = vunpack.c.l.b16 %v3101
  %v7200 = vunpack.c.l.b16 %v3102
  %v7201 = vunpack.c.l.b16 %v3103
  %v7202 = vunpack.c.l.b16 %v3104
  %v7203 = vunpack.c.l.b16 %v3105
  %v7204 = vunpack.c.l.b16 %v3106
  %v7205 = vunpack.c.l.b16 %v3107
  %v7206 = vunpack.c.l.b16 %v3108
  %v7207 = vunpack.c.l.b16 %v3109
  %v7208 = vunpack.c.l.b16 %v3110
  %v7209 = vunpack.c.l.b16 %v3111
  %v7210 = vunpack.c.l.b16 %v3112
  %v7211 = vunpack.c.l.b16 %v3113
  %v7212 = vunpack.c.l.b16 %v3114
  %v7213 = vunpack.c.l.b16 %v3115
  %v7214 = vunpack.c.l.b16 %v3116
  %v7215 = vunpack.c.l.b16 %v3117
  %v7216 = vunpack.c.l.b16 %v3118
  %v7217 = vunpack.c.l.b16 %v3119
  %v7218 = vunpack.c.l.b16 %v3120
  %v7219 = vunpack.c.l.b16 %v3121
  %v7220 = vunpack.c.l.b16 %v3122
  %v7221 = vunpack.c.l.b16 %v3123
  %v7222 = vunpack.c.l.b16 %v3124
  %v7223 = vunpack.c.l.b16 %v3125
  %v7224 = vunpack.c.l.b16 %v3126
  %v7225 = vunpack.c.l.b16 %v3127
  %v7226 = vunpack.c.l.b16 %v3128
  %v7227 = vunpack.c.l.b16 %v3129
  %v7228 = vunpack.c.l.b16 %v3130
  %v7229 = vunpack.c.l.b16 %v3131
  %v7230 = vunpack.c.l.b16 %v3132
  %v7231 = vunpack.c.l.b16 %v3133
  %v7232 = vunpack.c.l.b16 %v3134
  %v7233 = vunpack.c.l.b16 %v3135
  %v7234 = vunpack.c.l.b16 %v3136
  %v7235 = vunpack.c.l.b16 %v3137
  %v7236 = vunpack.c.l.b16 %v3138
  %v7237 = vunpack.c.l.b16 %v3139
  %v7238 = vunpack.c.l.b16 %v3140
  %v7239 = vunpack.c.l.b16 %v3141
  %v7240 = vunpack.c.l.b16 %v3142
  %v7241 = vunpack.c.l.b16 %v3143
  %v7242 = vunpack.c.l.b16 %v3144
  %v7243 = vunpack.c.l.b16 %v3145
  %v7244 = vunpack.c.l.b16 %v3146
  %v7245 = vunpack.c.l.b16 %v3147
  %v7246 = vunpack.c.l.b16 %v3148
  %v7247 = vunpack.c.l.b16 %v3149
  %v7248 = vunpack.c.l.b16 %v3150
  %v7249 = vunpack.c.l.b16 %v3151
  %v7250 = vunpack.c.l.b16 %v3152
  %v7251 = vunpack.c.l.b16 %v3153
  %v7252 = vunpack.c.l.b16 %v3154
  %v7253 = vunpack.c.l.b16 %v3155
  %v7254 = vunpack.c.l.b16 %v3156
  %v7255 = vunpack.c.l.b16 %v3157
  %v7256 = vunpack.c.l.b16 %v3158
  %v7257 = vunpack.c.l.b16 %v3159
  %v7258 = vunpack.c.l.b16 %v3160
  %v7259 = vunpack.c.l.b16 %v3161
  %v7260 = vunpack.c.l.b16 %v3162
  %v7261 = vunpack.c.l.b16 %v3163
  %v7262 = vunpack.c.l.b16 %v3164
  %v7263 = vunpack.c.l.b16 %v3165
  %v7264 = vunpack.c.l.b16 %v3166
  %v7265 = vunpack.c.l.b16 %v3167
  %v7266 = vunpack.c.l.b16 %v3168
  %v7267 = vunpack.c.l.b16 %v3169
  %v7268 = vunpack.c.l.b16 %v3170
  %v7269 = vunpack.c.l.b16 %v3171
  %v7270 = vunpack.c.l.b16 %v3172
  %v7271 = vunpack.c.l.b16 %v3173
  %v7272 = vunpack.c.l.b16 %v3174
  %v7273 = vunpack.c.l.b16 %v3175
  %v7274 = vunpack.c.l.b16 %v3176
  %v7275 = vunpack.c.l.b16 %v3177
  %v7276 = vunpack.c.l.b16 %v3178
  %v7277 = vunpack.c.l.b16 %v3179
  %v7278 = vunpack.c.l.b16 %v3180
  %v7279 = vunpack.c.l.b16 %v3181
  %v7280 = vunpack.c.l.b16 %v3182
  %v7281 = vunpack.c.l.b16 %v3183
  %v7282 = vunpack.c.l.b16 %v3184
  %v7283 = vunpack.c.l.b16 %v3185
  %v7284 = vunpack.c.l.b16 %v3186
  %v7285 = vunpack.c.l.b16 %v3187
  %v7286 = vunpack.c.l.b16 %v3188
  %v7287 = vunpack.c.l.b16 %v3189
  %v7288 = vunpack.c.l.b16 %v3190
  %v7289 = vunpack.c.l.b16 %v3191
  %v7290 = vunpack.c.l.b16 %v3192
  %v7291 = vunpack.c.l.b16 %v3193
  %v7292 = vunpack.c.l.b16 %v3194
  %v7293 = vunpack.c.l.b16 %v3195
  %v7294 = vunpack.c.l.b16 %v3196
  %v7295 = vunpack.c.l.b16 %v3197
  %v7296 = vunpack.c.l.b16 %v3198
  %v7297 = vunpack.c.l.b16 %v3199
  %v7298 = vunpack.c.l.b16 %v3200
  %v7299 = vunpack.c.l.b16 %v3201
  %v7300 = vunpack.c.l.b16 %v3202
  %v7301 = vunpack.c.l.b16 %v3203
  %v7302 = vunpack.c.l.b16 %v3204
  %v7303 = vunpack.c.l.b16 %v3205
  %v7304 = vunpack.c.l.b16 %v3206
  %v7305 = vunpack.c.l.b16 %v3207
  %v7306 = vunpack.c.l.b16 %v3208
  %v7307 = vunpack.c.l.b16 %v3209
  %v7308 = vunpack.c.l.b16 %v3210
  %v7309 = vunpack.c.l.b16 %v3211
  %v7310 = vunpack.c.l.b16 %v3212
  %v7311 = vunpack.c.l.b16 %v3213
  %v7312 = vunpack.c.l.b16 %v3214
  %v7313 = vunpack.c.l.b16 %v3215
  %v7314 = vunpack.c.l.b16 %v3216
  %v7315 = vunpack.c.l.b16 %v3217
  %v7316 = vunpack.c.l.b16 %v3218
  %v7317 = vunpack.c.l.b16 %v3219
  %v7318 = vunpack.c.l.b16 %v3220
  %v7319 = vunpack.c.l.b16 %v3221
  %v7320 = vunpack.c.l.b16 %v3222
  %v7321 = vunpack.c.l.b16 %v3223
  %v7322 = vunpack.c.l.b16 %v3224
  %v7323 = vunpack.c.l.b16 %v3225
  %v7324 = vunpack.c.l.b16 %v3226
  %v7325 = vunpack.c.l.b16 %v3227
  %v7326 = vunpack.c.l.b16 %v3228
  %v7327 = vunpack.c.l.b16 %v3229
  %v7328 = vunpack.c.l.b16 %v3230
  %v7329 = vunpack.c.l.b16 %v3231
  %v7330 = vunpack.c.l.b16 %v3232
  %v7331 = vunpack.c.l.b16 %v3233
  %v7332 = vunpack.c.l.b16 %v3234
  %v7333 = vunpack.c.l.b16 %v3235
  %v7334 = vunpack.c.l.b16 %v3236
  %v7335 = vunpack.c.l.b16 %v3237
  %v7336 = vunpack.c.l.b16 %v3238
  %v7337 = vunpack.c.l.b16 %v3239
  %v7338 = vunpack.c.l.b16 %v3240
  %v7339 = vunpack.c.l.b16 %v3241
  %v7340 = vunpack.c.l.b16 %v3242
  %v7341 = vunpack.c.l.b16 %v3243
  %v7342 = vunpack.c.l.b16 %v3244
  %v7343 = vunpack.c.l.b16 %v3245
  %v7344 = vunpack.c.l.b16 %v3246
  %v7345 = vunpack.c.l.b16 %v3247
  %v7346 = vunpack.c.l.b16 %v3248
  %v7347 = vunpack.c.l.b16 %v3249
  %v7348 = vunpack.c.l.b16 %v3250
  %v7349 = vunpack.c.l.b16 %v3251
  %v7350 = vunpack.c.l.b16 %v3252
  %v7351 = vunpack.c.l.b16 %v3253
  %v7352 = vunpack.c.l.b16 %v3254
  %v7353 = vunpack.c.l.b16 %v3255
  %v7354 = vunpack.c.l.b16 %v3256
  %v7355 = vunpack.c.l.b16 %v3257
  %v7356 = vunpack.c.l.b16 %v3258
  %v7357 = vunpack.c.l.b16 %v3259
  %v7358 = vunpack.c.l.b16 %v3260
  %v7359 = vunpack.c.l.b16 %v3261
  %v7360 = vunpack.c.l.b16 %v3262
  %v7361 = vunpack.c.l.b16 %v3263
  %v7362 = vunpack.c.l.b16 %v3264
  %v7363 = vunpack.c.l.b16 %v3265
  %v7364 = vunpack.c.l.b16 %v3266
  %v7365 = vunpack.c.l.b16 %v3267
  %v7366 = vunpack.c.l.b16 %v3268
  %v7367 = vunpack.c.l.b16 %v3269
  %v7368 = vunpack.c.l.b16 %v3270
  %v7369 = vunpack.c.l.b16 %v3271
  %v7370 = vunpack.c.l.b16 %v3272
  %v7371 = vunpack.c.l.b16 %v3273
  %v7372 = vunpack.c.l.b16 %v3274
  %v7373 = vunpack.c.l.b16 %v3275
  %v7374 = vunpack.c.l.b16 %v3276
  %v7375 = vunpack.c.l.b16 %v3277
  %v7376 = vunpack.c.l.b16 %v3278
  %v7377 = vunpack.c.l.b16 %v3279
  %v7378 = vunpack.c.l.b16 %v3280
  %v7379 = vunpack.c.l.b16 %v3281
  %v7380 = vunpack.c.l.b16 %v3282
  %v7381 = vunpack.c.l.b16 %v3283
  %v7382 = vunpack.c.l.b16 %v3284
  %v7383 = vunpack.c.l.b16 %v3285
  %v7384 = vunpack.c.l.b16 %v3286
  %v7385 = vunpack.c.l.b16 %v3287
  %v7386 = vunpack.c.l.b16 %v3288
  %v7387 = vunpack.c.l.b16 %v3289
  %v7388 = vunpack.c.l.b16 %v3290
  %v7389 = vunpack.c.l.b16 %v3291
  %v7390 = vunpack.c.l.b16 %v3292
  %v7391 = vunpack.c.l.b16 %v3293
  %v7392 = vunpack.c.l.b16 %v3294
  %v7393 = vunpack.c.l.b16 %v3295
  %v7394 = vunpack.c.l.b16 %v3296
  %v7395 = vunpack.c.l.b16 %v3297
  %v7396 = vunpack.c.l.b16 %v3298
  %v7397 = vunpack.c.l.b16 %v3299
  %v7398 = vunpack.c.l.b16 %v3300
  %v7399 = vunpack.c.l.b16 %v3301
  %v7400 = vunpack.c.l.b16 %v3302
  %v7401 = vunpack.c.l.b16 %v3303
  %v7402 = vunpack.c.l.b16 %v3304
  %v7403 = vunpack.c.l.b16 %v3305
  %v7404 = vunpack.c.l.b16 %v3306
  %v7405 = vunpack.c.l.b16 %v3307
  %v7406 = vunpack.c.l.b16 %v3308
  %v7407 = vunpack.c.l.b16 %v3309
  %v7408 = vunpack.c.l.b16 %v3310
  %v7409 = vunpack.c.l.b16 %v3311
  %v7410 = vunpack.c.l.b16 %v3312
  %v7411 = vunpack.c.l.b16 %v3313
  %v7412 = vunpack.c.l.b16 %v3314
  %v7413 = vunpack.c.l.b16 %v3315
  %v7414 = vunpack.c.l.b16 %v3316
  %v7415 = vunpack.c.l.b16 %v3317
  %v7416 = vunpack.c.l.b16 %v3318
  %v7417 = vunpack.c.l.b16 %v3319
  %v7418 = vunpack.c.l.b16 %v3320
  %v7419 = vunpack.c.l.b16 %v3321
  %v7420 = vunpack.c.l.b16 %v3322
  %v7421 = vunpack.c.l.b16 %v3323
  %v7422 = vunpack.c.l.b16 %v3324
  %v7423 = vunpack.c.l.b16 %v3325
  %v7424 = vunpack.c.l.b16 %v3326
  %v7425 = vunpack.c.l.b16 %v3327
  %v7426 = vunpack.c.l.b16 %v3328
  %v7427 = vunpack.c.l.b16 %v3329
  %v7428 = vunpack.c.l.b16 %v3330
  %v7429 = vunpack.c.l.b16 %v3331
  %v7430 = vunpack.c.l.b16 %v3332
  %v7431 = vunpack.c.l.b16 %v3333
  %v7432 = vunpack.c.l.b16 %v3334
  %v7433 = vunpack.c.l.b16 %v3335
  %v7434 = vunpack.c.l.b16 %v3336
  %v7435 = vunpack.c.l.b16 %v3337
  %v7436 = vunpack.c.l.b16 %v3338
  %v7437 = vunpack.c.l.b16 %v3339
  %v7438 = vunpack.c.l.b16 %v3340
  %v7439 = vunpack.c.l.b16 %v3341
  %v7440 = vunpack.c.l.b16 %v3342
  %v7441 = vunpack.c.l.b16 %v3343
  %v7442 = vunpack.c.l.b16 %v3344
  %v7443 = vunpack.c.l.b16 %v3345
  %v7444 = vunpack.c.l.b16 %v3346
  %v7445 = vunpack.c.l.b16 %v3347
  %v7446 = vunpack.c.l.b16 %v3348
  %v7447 = vunpack.c.l.b16 %v3349
  %v7448 = vunpack.c.l.b16 %v3350
  %v7449 = vunpack.c.l.b16 %v3351
  %v7450 = vunpack.c.l.b16 %v3352
  %v7451 = vunpack.c.l.b16 %v3353
  %v7452 = vunpack.c.l.b16 %v3354
  %v7453 = vunpack.c.l.b16 %v3355
  %v7454 = vunpack.c.l.b16 %v3356
  %v7455 = vunpack.c.l.b16 %v3357
  %v7456 = vunpack.c.l.b16 %v3358
  %v7457 = vunpack.c.l.b16 %v3359
  %v7458 = vunpack.c.l.b16 %v3360
  %v7459 = vunpack.c.l.b16 %v3361
  %v7460 = vunpack.c.l.b16 %v3362
  %v7461 = vunpack.c.l.b16 %v3363
  %v7462 = vunpack.c.l.b16 %v3364
  %v7463 = vunpack.c.l.b16 %v3365
  %v7464 = vunpack.c.l.b16 %v3366
  %v7465 = vunpack.c.l.b16 %v3367
  %v7466 = vunpack.c.l.b16 %v3368
  %v7467 = vunpack.c.l.b16 %v3369
  %v7468 = vunpack.c.l.b16 %v3370
  %v7469 = vunpack.c.l.b16 %v3371
  %v7470 = vunpack.c.l.b16 %v3372
  %v7471 = vunpack.c.l.b16 %v3373
  %v7472 = vunpack.c.l.b16 %v3374
  %v7473 = vunpack.c.l.b16 %v3375
  %v7474 = vunpack.c.l.b16 %v3376
  %v7475 = vunpack.c.l.b16 %v3377
  %v7476 = vunpack.c.l.b16 %v3378
  %v7477 = vunpack.c.l.b16 %v3379
  %v7478 = vunpack.c.l.b16 %v3380
  %v7479 = vunpack.c.l.b16 %v3381
  %v7480 = vunpack.c.l.b16 %v3382
  %v7481 = vunpack.c.l.b16 %v3383
  %v7482 = vunpack.c.l.b16 %v3384
  %v7483 = vunpack.c.l.b16 %v3385
  %v7484 = vunpack.c.l.b16 %v3386
  %v7485 = vunpack.c.l.b16 %v3387
  %v7486 = vunpack.c.l.b16 %v3388
  %v7487 = vunpack.c.l.b16 %v3389
  %v7488 = vunpack.c.l.b16 %v3390
  %v7489 = vunpack.c.l.b16 %v3391
  %v7490 = vunpack.c.l.b16 %v3392
  %v7491 = vunpack.c.l.b16 %v3393
  %v7492 = vunpack.c.l.b16 %v3394
  %v7493 = vunpack.c.l.b16 %v3395
  %v7494 = vunpack.c.l.b16 %v3396
  %v7495 = vunpack.c.l.b16 %v3397
  %v7496 = vunpack.c.l.b16 %v3398
  %v7497 = vunpack.c.l.b16 %v3399
  %v7498 = vunpack.c.l.b16 %v3400
  %v7499 = vunpack.c.l.b16 %v3401
  %v7500 = vunpack.c.l.b16 %v3402
  %v7501 = vunpack.c.l.b16 %v3403
  %v7502 = vunpack.c.l.b16 %v3404
  %v7503 = vunpack.c.l.b16 %v3405
  %v7504 = vunpack.c.l.b16 %v3406
  %v7505 = vunpack.c.l.b16 %v3407
  %v7506 = vunpack.c.l.b16 %v3408
  %v7507 = vunpack.c.l.b16 %v3409
  %v7508 = vunpack.c.l.b16 %v3410
  %v7509 = vunpack.c.l.b16 %v3411
  %v7510 = vunpack.c.l.b16 %v3412
  %v7511 = vunpack.c.l.b16 %v3413
  %v7512 = vunpack.c.l.b16 %v3414
  %v7513 = vunpack.c.l.b16 %v3415
  %v7514 = vunpack.c.l.b16 %v3416
  %v7515 = vunpack.c.l.b16 %v3417
  %v7516 = vunpack.c.l.b16 %v3418
  %v7517 = vunpack.c.l.b16 %v3419
  %v7518 = vunpack.c.l.b16 %v3420
  %v7519 = vunpack.c.l.b16 %v3421
  %v7520 = vunpack.c.l.b16 %v3422
  %v7521 = vunpack.c.l.b16 %v3423
  %v7522 = vunpack.c.l.b16 %v3424
  %v7523 = vunpack.c.l.b16 %v3425
  %v7524 = vunpack.c.l.b16 %v3426
  %v7525 = vunpack.c.l.b16 %v3427
  %v7526 = vunpack.c.l.b16 %v3428
  %v7527 = vunpack.c.l.b16 %v3429
  %v7528 = vunpack.c.l.b16 %v3430
  %v7529 = vunpack.c.l.b16 %v3431
  %v7530 = vunpack.c.l.b16 %v3432
  %v7531 = vunpack.c.l.b16 %v3433
  %v7532 = vunpack.c.l.b16 %v3434
  %v7533 = vunpack.c.l.b16 %v3435
  %v7534 = vunpack.c.l.b16 %v3436
  %v7535 = vunpack.c.l.b16 %v3437
  %v7536 = vunpack.c.l.b16 %v3438
  %v7537 = vunpack.c.l.b16 %v3439
  %v7538 = vunpack.c.l.b16 %v3440
  %v7539 = vunpack.c.l.b16 %v3441
  %v7540 = vunpack.c.l.b16 %v3442
  %v7541 = vunpack.c.l.b16 %v3443
  %v7542 = vunpack.c.l.b16 %v3444
  %v7543 = vunpack.c.l.b16 %v3445
  %v7544 = vunpack.c.l.b16 %v3446
  %v7545 = vunpack.c.l.b16 %v3447
  %v7546 = vunpack.c.l.b16 %v3448
  %v7547 = vunpack.c.l.b16 %v3449
  %v7548 = vunpack.c.l.b16 %v3450
  %v7549 = vunpack.c.l.b16 %v3451
  %v7550 = vunpack.c.l.b16 %v3452
  %v7551 = vunpack.c.l.b16 %v3453
  %v7552 = vunpack.c.l.b16 %v3454
  %v7553 = vunpack.c.l.b16 %v3455
  %v7554 = vunpack.c.l.b16 %v3456
  %v7555 = vunpack.c.l.b16 %v3457
  %v7556 = vunpack.c.l.b16 %v3458
  %v7557 = vunpack.c.l.b16 %v3459
  %v7558 = vunpack.c.l.b16 %v3460
  %v7559 = vunpack.c.l.b16 %v3461
  %v7560 = vunpack.c.l.b16 %v3462
  %v7561 = vunpack.c.l.b16 %v3463
  %v7562 = vunpack.c.l.b16 %v3464
  %v7563 = vunpack.c.l.b16 %v3465
  %v7564 = vunpack.c.l.b16 %v3466
  %v7565 = vunpack.c.l.b16 %v3467
  %v7566 = vunpack.c.l.b16 %v3468
  %v7567 = vunpack.c.l.b16 %v3469
  %v7568 = vunpack.c.l.b16 %v3470
  %v7569 = vunpack.c.l.b16 %v3471
  %v7570 = vunpack.c.l.b16 %v3472
  %v7571 = vunpack.c.l.b16 %v3473
  %v7572 = vunpack.c.l.b16 %v3474
  %v7573 = vunpack.c.l.b16 %v3475
  %v7574 = vunpack.c.l.b16 %v3476
  %v7575 = vunpack.c.l.b16 %v3477
  %v7576 = vunpack.c.l.b16 %v3478
  %v7577 = vunpack.c.l.b16 %v3479
  %v7578 = vunpack.c.l.b16 %v3480
  %v7579 = vunpack.c.l.b16 %v3481
  %v7580 = vunpack.c.l.b16 %v3482
  %v7581 = vunpack.c.l.b16 %v3483
  %v7582 = vunpack.c.l.b16 %v3484
  %v7583 = vunpack.c.l.b16 %v3485
  %v7584 = vunpack.c.l.b16 %v3486
  %v7585 = vunpack.c.l.b16 %v3487
  %v7586 = vunpack.c.l.b16 %v3488
  %v7587 = vunpack.c.l.b16 %v3489
  %v7588 = vunpack.c.l.b16 %v3490
  %v7589 = vunpack.c.l.b16 %v3491
  %v7590 = vunpack.c.l.b16 %v3492
  %v7591 = vunpack.c.l.b16 %v3493
  %v7592 = vunpack.c.l.b16 %v3494
  %v7593 = vunpack.c.l.b16 %v3495
  %v7594 = vunpack.c.l.b16 %v3496
  %v7595 = vunpack.c.l.b16 %v3497
  %v7596 = vunpack.c.l.b16 %v3498
  %v7597 = vunpack.c.l.b16 %v3499
  %v7598 = vunpack.c.l.b16 %v3500
  %v7599 = vunpack.c.l.b16 %v3501
  %v7600 = vunpack.c.l.b16 %v3502
  %v7601 = vunpack.c.l.b16 %v3503
  %v7602 = vunpack.c.l.b16 %v3504
  %v7603 = vunpack.c.l.b16 %v3505
  %v7604 = vunpack.c.l.b16 %v3506
  %v7605 = vunpack.c.l.b16 %v3507
  %v7606 = vunpack.c.l.b16 %v3508
  %v7607 = vunpack.c.l.b16 %v3509
  %v7608 = vunpack.c.l.b16 %v3510
  %v7609 = vunpack.c.l.b16 %v3511
  %v7610 = vunpack.c.l.b16 %v3512
  %v7611 = vunpack.c.l.b16 %v3513
  %v7612 = vunpack.c.l.b16 %v3514
  %v7613 = vunpack.c.l.b16 %v3515
  %v7614 = vunpack.c.l.b16 %v3516
  %v7615 = vunpack.c.l.b16 %v3517
  %v7616 = vunpack.c.l.b16 %v3518
  %v7617 = vunpack.c.l.b16 %v3519
  %v7618 = vunpack.c.l.b16 %v3520
  %v7619 = vunpack.c.l.b16 %v3521
  %v7620 = vunpack.c.l.b16 %v3522
  %v7621 = vunpack.c.l.b16 %v3523
  %v7622 = vunpack.c.l.b16 %v3524
  %v7623 = vunpack.c.l.b16 %v3525
  %v7624 = vunpack.c.l.b16 %v3526
  %v7625 = vunpack.c.l.b16 %v3527
  %v7626 = vunpack.c.l.b16 %v3528
  %v7627 = vunpack.c.l.b16 %v3529
  %v7628 = vunpack.c.l.b16 %v3530
  %v7629 = vunpack.c.l.b16 %v3531
  %v7630 = vunpack.c.l.b16 %v3532
  %v7631 = vunpack.c.l.b16 %v3533
  %v7632 = vunpack.c.l.b16 %v3534
  %v7633 = vunpack.c.l.b16 %v3535
  %v7634 = vunpack.c.l.b16 %v3536
  %v7635 = vunpack.c.l.b16 %v3537
  %v7636 = vunpack.c.l.b16 %v3538
  %v7637 = vunpack.c.l.b16 %v3539
  %v7638 = vunpack.c.l.b16 %v3540
  %v7639 = vunpack.c.l.b16 %v3541
  %v7640 = vunpack.c.l.b16 %v3542
  %v7641 = vunpack.c.l.b16 %v3543
  %v7642 = vunpack.c.l.b16 %v3544
  %v7643 = vunpack.c.l.b16 %v3545
  %v7644 = vunpack.c.l.b16 %v3546
  %v7645 = vunpack.c.l.b16 %v3547
  %v7646 = vunpack.c.l.b16 %v3548
  %v7647 = vunpack.c.l.b16 %v3549
  %v7648 = vunpack.c.l.b16 %v3550
  %v7649 = vunpack.c.l.b16 %v3551
  %v7650 = vunpack.c.l.b16 %v3552
  %v7651 = vunpack.c.l.b16 %v3553
  %v7652 = vunpack.c.l.b16 %v3554
  %v7653 = vunpack.c.l.b16 %v3555
  %v7654 = vunpack.c.l.b16 %v3556
  %v7655 = vunpack.c.l.b16 %v3557
  %v7656 = vunpack.c.l.b16 %v3558
  %v7657 = vunpack.c.l.b16 %v3559
  %v7658 = vunpack.c.l.b16 %v3560
  %v7659 = vunpack.c.l.b16 %v3561
  %v7660 = vunpack.c.l.b16 %v3562
  %v7661 = vunpack.c.l.b16 %v3563
  %v7662 = vunpack.c.l.b16 %v3564
  %v7663 = vunpack.c.l.b16 %v3565
  %v7664 = vunpack.c.l.b16 %v3566
  %v7665 = vunpack.c.l.b16 %v3567
  %v7666 = vunpack.c.l.b16 %v3568
  %v7667 = vunpack.c.l.b16 %v3569
  %v7668 = vunpack.c.l.b16 %v3570
  %v7669 = vunpack.c.l.b16 %v3571
  %v7670 = vunpack.c.l.b16 %v3572
  %v7671 = vunpack.c.l.b16 %v3573
  %v7672 = vunpack.c.l.b16 %v3574
  %v7673 = vunpack.c.l.b16 %v3575
  %v7674 = vunpack.c.l.b16 %v3576
  %v7675 = vunpack.c.l.b16 %v3577
  %v7676 = vunpack.c.l.b16 %v3578
  %v7677 = vunpack.c.l.b16 %v3579
  %v7678 = vunpack.c.l.b16 %v3580
  %v7679 = vunpack.c.l.b16 %v3581
  %v7680 = vunpack.c.l.b16 %v3582
  %v7681 = vunpack.c.l.b16 %v3583
  %v7682 = vunpack.c.l.b16 %v3584
  %v7683 = vunpack.c.l.b16 %v3585
  %v7684 = vunpack.c.l.b16 %v3586
  %v7685 = vunpack.c.l.b16 %v3587
  %v7686 = vunpack.c.l.b16 %v3588
  %v7687 = vunpack.c.l.b16 %v3589
  %v7688 = vunpack.c.l.b16 %v3590
  %v7689 = vunpack.c.l.b16 %v3591
  %v7690 = vunpack.c.l.b16 %v3592
  %v7691 = vunpack.c.l.b16 %v3593
  %v7692 = vunpack.c.l.b16 %v3594
  %v7693 = vunpack.c.l.b16 %v3595
  %v7694 = vunpack.c.l.b16 %v3596
  %v7695 = vpack.c.b16 %v7184, %v7183
  %v7696 = vpack.c.b16 %v7186, %v7185
  %v7697 = vpack.c.b16 %v7188, %v7187
  %v7698 = vpack.c.b16 %v7190, %v7189
  %v7699 = vpack.c.b16 %v7192, %v7191
  %v7700 = vpack.c.b16 %v7194, %v7193
  %v7701 = vpack.c.b16 %v7196, %v7195
  %v7702 = vpack.c.b16 %v7198, %v7197
  %v7703 = vpack.c.b16 %v7200, %v7199
  %v7704 = vpack.c.b16 %v7202, %v7201
  %v7705 = vpack.c.b16 %v7204, %v7203
  %v7706 = vpack.c.b16 %v7206, %v7205
  %v7707 = vpack.c.b16 %v7208, %v7207
  %v7708 = vpack.c.b16 %v7210, %v7209
  %v7709 = vpack.c.b16 %v7212, %v7211
  %v7710 = vpack.c.b16 %v7214, %v7213
  %v7711 = vpack.c.b16 %v7216, %v7215
  %v7712 = vpack.c.b16 %v7218, %v7217
  %v7713 = vpack.c.b16 %v7220, %v7219
  %v7714 = vpack.c.b16 %v7222, %v7221
  %v7715 = vpack.c.b16 %v7224, %v7223
  %v7716 = vpack.c.b16 %v7226, %v7225
  %v7717 = vpack.c.b16 %v7228, %v7227
  %v7718 = vpack.c.b16 %v7230, %v7229
  %v7719 = vpack.c.b16 %v7232, %v7231
  %v7720 = vpack.c.b16 %v7234, %v7233
  %v7721 = vpack.c.b16 %v7236, %v7235
  %v7722 = vpack.c.b16 %v7238, %v7237
  %v7723 = vpack.c.b16 %v7240, %v7239
  %v7724 = vpack.c.b16 %v7242, %v7241
  %v7725 = vpack.c.b16 %v7244, %v7243
  %v7726 = vpack.c.b16 %v7246, %v7245
  %v7727 = vpack.c.b16 %v7248, %v7247
  %v7728 = vpack.c.b16 %v7250, %v7249
  %v7729 = vpack.c.b16 %v7252, %v7251
  %v7730 = vpack.c.b16 %v7254, %v7253
  %v7731 = vpack.c.b16 %v7256, %v7255
  %v7732 = vpack.c.b16 %v7258, %v7257
  %v7733 = vpack.c.b16 %v7260, %v7259
  %v7734 = vpack.c.b16 %v7262, %v7261
  %v7735 = vpack.c.b16 %v7264, %v7263
  %v7736 = vpack.c.b16 %v7266, %v7265
  %v7737 = vpack.c.b16 %v7268, %v7267
  %v7738 = vpack.c.b16 %v7270, %v7269
  %v7739 = vpack.c.b16 %v7272, %v7271
  %v7740 = vpack.c.b16 %v7274, %v7273
  %v7741 = vpack.c.b16 %v7276, %v7275
  %v7742 = vpack.c.b16 %v7278, %v7277
  %v7743 = vpack.c.b16 %v7280, %v7279
  %v7744 = vpack.c.b16 %v7282, %v7281
  %v7745 = vpack.c.b16 %v7284, %v7283
  %v7746 = vpack.c.b16 %v7286, %v7285
  %v7747 = vpack.c.b16 %v7288, %v7287
  %v7748 = vpack.c.b16 %v7290, %v7289
  %v7749 = vpack.c.b16 %v7292, %v7291
  %v7750 = vpack.c.b16 %v7294, %v7293
  %v7751 = vpack.c.b16 %v7296, %v7295
  %v7752 = vpack.c.b16 %v7298, %v7297
  %v7753 = vpack.c.b16 %v7300, %v7299
  %v7754 = vpack.c.b16 %v7302, %v7301
  %v7755 = vpack.c.b16 %v7304, %v7303
  %v7756 = vpack.c.b16 %v7306, %v7305
  %v7757 = vpack.c.b16 %v7308, %v7307
  %v7758 = vpack.c.b16 %v7310, %v7309
  %v7759 = vpack.c.b16 %v7312, %v7311
  %v7760 = vpack.c.b16 %v7314, %v7313
  %v7761 = vpack.c.b16 %v7316, %v7315
  %v7762 = vpack.c.b16 %v7318, %v7317
  %v7763 = vpack.c.b16 %v7320, %v7319
  %v7764 = vpack.c.b16 %v7322, %v7321
  %v7765 = vpack.c.b16 %v7324, %v7323
  %v7766 = vpack.c.b16 %v7326, %v7325
  %v7767 = vpack.c.b16 %v7328, %v7327
  %v7768 = vpack.c.b16 %v7330, %v7329
  %v7769 = vpack.c.b16 %v7332, %v7331
  %v7770 = vpack.c.b16 %v7334, %v7333
  %v7771 = vpack.c.b16 %v7336, %v7335
  %v7772 = vpack.c.b16 %v7338, %v7337
  %v7773 = vpack.c.b16 %v7340, %v7339
  %v7774 = vpack.c.b16 %v7342, %v7341
  %v7775 = vpack.c.b16 %v7344, %v7343
  %v7776 = vpack.c.b16 %v7346, %v7345
  %v7777 = vpack.c.b16 %v7348, %v7347
  %v7778 = vpack.c.b16 %v7350, %v7349
  %v7779 = vpack.c.b16 %v7352, %v7351
  %v7780 = vpack.c.b16 %v7354, %v7353
  %v7781 = vpack.c.b16 %v7356, %v7355
  %v7782 = vpack.c.b16 %v7358, %v7357
  %v7783 = vpack.c.b16 %v7360, %v7359
  %v7784 = vpack.c.b16 %v7362, %v7361
  %v7785 = vpack.c.b16 %v7364, %v7363
  %v7786 = vpack.c.b16 %v7366, %v7365
  %v7787 = vpack.c.b16 %v7368, %v7367
  %v7788 = vpack.c.b16 %v7370, %v7369
  %v7789 = vpack.c.b16 %v7372, %v7371
  %v7790 = vpack.c.b16 %v7374, %v7373
  %v7791 = vpack.c.b16 %v7376, %v7375
  %v7792 = vpack.c.b16 %v7378, %v7377
  %v7793 = vpack.c.b16 %v7380, %v7379
  %v7794 = vpack.c.b16 %v7382, %v7381
  %v7795 = vpack.c.b16 %v7384, %v7383
  %v7796 = vpack.c.b16 %v7386, %v7385
  %v7797 = vpack.c.b16 %v7388, %v7387
  %v7798 = vpack.c.b16 %v7390, %v7389
  %v7799 = vpack.c.b16 %v7392, %v7391
  %v7800 = vpack.c.b16 %v7394, %v7393
  %v7801 = vpack.c.b16 %v7396, %v7395
  %v7802 = vpack.c.b16 %v7398, %v7397
  %v7803 = vpack.c.b16 %v7400, %v7399
  %v7804 = vpack.c.b16 %v7402, %v7401
  %v7805 = vpack.c.b16 %v7404, %v7403
  %v7806 = vpack.c.b16 %v7406, %v7405
  %v7807 = vpack.c.b16 %v7408, %v7407
  %v7808 = vpack.c.b16 %v7410, %v7409
  %v7809 = vpack.c.b16 %v7412, %v7411
  %v7810 = vpack.c.b16 %v7414, %v7413
  %v7811 = vpack.c.b16 %v7416, %v7415
  %v7812 = vpack.c.b16 %v7418, %v7417
  %v7813 = vpack.c.b16 %v7420, %v7419
  %v7814 = vpack.c.b16 %v7422, %v7421
  %v7815 = vpack.c.b16 %v7424, %v7423
  %v7816 = vpack.c.b16 %v7426, %v7425
  %v7817 = vpack.c.b16 %v7428, %v7427
  %v7818 = vpack.c.b16 %v7430, %v7429
  %v7819 = vpack.c.b16 %v7432, %v7431
  %v7820 = vpack.c.b16 %v7434, %v7433
  %v7821 = vpack.c.b16 %v7436, %v7435
  %v7822 = vpack.c.b16 %v7438, %v7437
  %v7823 = vpack.c.b16 %v7440, %v7439
  %v7824 = vpack.c.b16 %v7442, %v7441
  %v7825 = vpack.c.b16 %v7444, %v7443
  %v7826 = vpack.c.b16 %v7446, %v7445
  %v7827 = vpack.c.b16 %v7448, %v7447
  %v7828 = vpack.c.b16 %v7450, %v7449
  %v7829 = vpack.c.b16 %v7452, %v7451
  %v7830 = vpack.c.b16 %v7454, %v7453
  %v7831 = vpack.c.b16 %v7456, %v7455
  %v7832 = vpack.c.b16 %v7458, %v7457
  %v7833 = vpack.c.b16 %v7460, %v7459
  %v7834 = vpack.c.b16 %v7462, %v7461
  %v7835 = vpack.c.b16 %v7464, %v7463
  %v7836 = vpack.c.b16 %v7466, %v7465
  %v7837 = vpack.c.b16 %v7468, %v7467
  %v7838 = vpack.c.b16 %v7470, %v7469
  %v7839 = vpack.c.b16 %v7472, %v7471
  %v7840 = vpack.c.b16 %v7474, %v7473
  %v7841 = vpack.c.b16 %v7476, %v7475
  %v7842 = vpack.c.b16 %v7478, %v7477
  %v7843 = vpack.c.b16 %v7480, %v7479
  %v7844 = vpack.c.b16 %v7482, %v7481
  %v7845 = vpack.c.b16 %v7484, %v7483
  %v7846 = vpack.c.b16 %v7486, %v7485
  %v7847 = vpack.c.b16 %v7488, %v7487
  %v7848 = vpack.c.b16 %v7490, %v7489
  %v7849 = vpack.c.b16 %v7492, %v7491
  %v7850 = vpack.c.b16 %v7494, %v7493
  %v7851 = vpack.c.b16 %v7496, %v7495
  %v7852 = vpack.c.b16 %v7498, %v7497
  %v7853 = vpack.c.b16 %v7500, %v7499
  %v7854 = vpack.c.b16 %v7502, %v7501
  %v7855 = vpack.c.b16 %v7504, %v7503
  %v7856 = vpack.c.b16 %v7506, %v7505
  %v7857 = vpack.c.b16 %v7508, %v7507
  %v7858 = vpack.c.b16 %v7510, %v7509
  %v7859 = vpack.c.b16 %v7512, %v7511
  %v7860 = vpack.c.b16 %v7514, %v7513
  %v7861 = vpack.c.b16 %v7516, %v7515
  %v7862 = vpack.c.b16 %v7518, %v7517
  %v7863 = vpack.c.b16 %v7520, %v7519
  %v7864 = vpack.c.b16 %v7522, %v7521
  %v7865 = vpack.c.b16 %v7524, %v7523
  %v7866 = vpack.c.b16 %v7526, %v7525
  %v7867 = vpack.c.b16 %v7528, %v7527
  %v7868 = vpack.c.b16 %v7530, %v7529
  %v7869 = vpack.c.b16 %v7532, %v7531
  %v7870 = vpack.c.b16 %v7534, %v7533
  %v7871 = vpack.c.b16 %v7536, %v7535
  %v7872 = vpack.c.b16 %v7538, %v7537
  %v7873 = vpack.c.b16 %v7540, %v7539
  %v7874 = vpack.c.b16 %v7542, %v7541
  %v7875 = vpack.c.b16 %v7544, %v7543
  %v7876 = vpack.c.b16 %v7546, %v7545
  %v7877 = vpack.c.b16 %v7548, %v7547
  %v7878 = vpack.c.b16 %v7550, %v7549
  %v7879 = vpack.c.b16 %v7552, %v7551
  %v7880 = vpack.c.b16 %v7554, %v7553
  %v7881 = vpack.c.b16 %v7556, %v7555
  %v7882 = vpack.c.b16 %v7558, %v7557
  %v7883 = vpack.c.b16 %v7560, %v7559
  %v7884 = vpack.c.b16 %v7562, %v7561
  %v7885 = vpack.c.b16 %v7564, %v7563
  %v7886 = vpack.c.b16 %v7566, %v7565
  %v7887 = vpack.c.b16 %v7568, %v7567
  %v7888 = vpack.c.b16 %v7570, %v7569
  %v7889 = vpack.c.b16 %v7572, %v7571
  %v7890 = vpack.c.b16 %v7574, %v7573
  %v7891 = vpack.c.b16 %v7576, %v7575
  %v7892 = vpack.c.b16 %v7578, %v7577
  %v7893 = vpack.c.b16 %v7580, %v7579
  %v7894 = vpack.c.b16 %v7582, %v7581
  %v7895 = vpack.c.b16 %v7584, %v7583
  %v7896 = vpack.c.b16 %v7586, %v7585
  %v7897 = vpack.c.b16 %v7588, %v7587
  %v7898 = vpack.c.b16 %v7590, %v7589
  %v7899 = vpack.c.b16 %v7592, %v7591
  %v7900 = vpack.c.b16 %v7594, %v7593
  %v7901 = vpack.c.b16 %v7596, %v7595
  %v7902 = vpack.c.b16 %v7598, %v7597
  %v7903 = vpack.c.b16 %v7600, %v7599
  %v7904 = vpack.c.b16 %v7602, %v7601
  %v7905 = vpack.c.b16 %v7604, %v7603
  %v7906 = vpack.c.b16 %v7606, %v7605
  %v7907 = vpack.c.b16 %v7608, %v7607
  %v7908 = vpack.c.b16 %v7610, %v7609
  %v7909 = vpack.c.b16 %v7612, %v7611
  %v7910 = vpack.c.b16 %v7614, %v7613
  %v7911 = vpack.c.b16 %v7616, %v7615
  %v7912 = vpack.c.b16 %v7618, %v7617
  %v7913 = vpack.c.b16 %v7620, %v7619
  %v7914 = vpack.c.b16 %v7622, %v7621
  %v7915 = vpack.c.b16 %v7624, %v7623
  %v7916 = vpack.c.b16 %v7626, %v7625
  %v7917 = vpack.c.b16 %v7628, %v7627
  %v7918 = vpack.c.b16 %v7630, %v7629
  %v7919 = vpack.c.b16 %v7632, %v7631
  %v7920 = vpack.c.b16 %v7634, %v7633
  %v7921 = vpack.c.b16 %v7636, %v7635
  %v7922 = vpack.c.b16 %v7638, %v7637
  %v7923 = vpack.c.b16 %v7640, %v7639
  %v7924 = vpack.c.b16 %v7642, %v7641
  %v7925 = vpack.c.b16 %v7644, %v7643
  %v7926 = vpack.c.b16 %v7646, %v7645
  %v7927 = vpack.c.b16 %v7648, %v7647
  %v7928 = vpack.c.b16 %v7650, %v7649
  %v7929 = vpack.c.b16 %v7652, %v7651
  %v7930 = vpack.c.b16 %v7654, %v7653
  %v7931 = vpack.c.b16 %v7656, %v7655
  %v7932 = vpack.c.b16 %v7658, %v7657
  %v7933 = vpack.c.b16 %v7660, %v7659
  %v7934 = vpack.c.b16 %v7662, %v7661
  %v7935 = vpack.c.b16 %v7664, %v7663
  %v7936 = vpack.c.b16 %v7666, %v7665
  %v7937 = vpack.c.b16 %v7668, %v7667
  %v7938 = vpack.c.b16 %v7670, %v7669
  %v7939 = vpack.c.b16 %v7672, %v7671
  %v7940 = vpack.c.b16 %v7674, %v7673
  %v7941 = vpack.c.b16 %v7676, %v7675
  %v7942 = vpack.c.b16 %v7678, %v7677
  %v7943 = vpack.c.b16 %v7680, %v7679
  %v7944 = vpack.c.b16 %v7682, %v7681
  %v7945 = vpack.c.b16 %v7684, %v7683
  %v7946 = vpack.c.b16 %v7686, %v7685
  %v7947 = vpack.c.b16 %v7688, %v7687
  %v7948 = vpack.c.b16 %v7690, %v7689
  %v7949 = vpack.c.b16 %v7692, %v7691
  %v7950 = vpack.c.b16 %v7694, %v7693
  %vm7951 = vcmask 261120
  %v7953 = vsel %vm7951, %v7695, 0
  %v7956 = vsel %vm7951, %v7696, 0
  %v7959 = vsel %vm7951, %v7697, 0
  %v7962 = vsel %vm7951, %v7698, 0
  %v7965 = vsel %vm7951, %v7699, 0
  %v7968 = vsel %vm7951, %v7700, 0
  %v7971 = vsel %vm7951, %v7701, 0
  %v7974 = vsel %vm7951, %v7702, 0
  %v7977 = vsel %vm7951, %v7703, 0
  %v7980 = vsel %vm7951, %v7704, 0
  %v7983 = vsel %vm7951, %v7705, 0
  %v7986 = vsel %vm7951, %v7706, 0
  %v7989 = vsel %vm7951, %v7707, 0
  %v7992 = vsel %vm7951, %v7708, 0
  %v7995 = vsel %vm7951, %v7709, 0
  %v7998 = vsel %vm7951, %v7710, 0
  %v8001 = vsel %vm7951, %v7711, 0
  %v8004 = vsel %vm7951, %v7712, 0
  %v8007 = vsel %vm7951, %v7713, 0
  %v8010 = vsel %vm7951, %v7714, 0
  %v8013 = vsel %vm7951, %v7715, 0
  %v8016 = vsel %vm7951, %v7716, 0
  %v8019 = vsel %vm7951, %v7717, 0
  %v8022 = vsel %vm7951, %v7718, 0
  %v8025 = vsel %vm7951, %v7719, 0
  %v8028 = vsel %vm7951, %v7720, 0
  %v8031 = vsel %vm7951, %v7721, 0
  %v8034 = vsel %vm7951, %v7722, 0
  %v8037 = vsel %vm7951, %v7723, 0
  %v8040 = vsel %vm7951, %v7724, 0
  %v8043 = vsel %vm7951, %v7725, 0
  %v8046 = vsel %vm7951, %v7726, 0
  %v8049 = vsel %vm7951, %v7727, 0
  %v8052 = vsel %vm7951, %v7728, 0
  %v8055 = vsel %vm7951, %v7729, 0
  %v8058 = vsel %vm7951, %v7730, 0
  %v8061 = vsel %vm7951, %v7731, 0
  %v8064 = vsel %vm7951, %v7732, 0
  %v8067 = vsel %vm7951, %v7733, 0
  %v8070 = vsel %vm7951, %v7734, 0
  %v8073 = vsel %vm7951, %v7735, 0
  %v8076 = vsel %vm7951, %v7736, 0
  %v8079 = vsel %vm7951, %v7737, 0
  %v8082 = vsel %vm7951, %v7738, 0
  %v8085 = vsel %vm7951, %v7739, 0
  %v8088 = vsel %vm7951, %v7740, 0
  %v8091 = vsel %vm7951, %v7741, 0
  %v8094 = vsel %vm7951, %v7742, 0
  %v8097 = vsel %vm7951, %v7743, 0
  %v8100 = vsel %vm7951, %v7744, 0
  %v8103 = vsel %vm7951, %v7745, 0
  %v8106 = vsel %vm7951, %v7746, 0
  %v8109 = vsel %vm7951, %v7747, 0
  %v8112 = vsel %vm7951, %v7748, 0
  %v8115 = vsel %vm7951, %v7749, 0
  %v8118 = vsel %vm7951, %v7750, 0
  %v8121 = vsel %vm7951, %v7751, 0
  %v8124 = vsel %vm7951, %v7752, 0
  %v8127 = vsel %vm7951, %v7753, 0
  %v8130 = vsel %vm7951, %v7754, 0
  %v8133 = vsel %vm7951, %v7755, 0
  %v8136 = vsel %vm7951, %v7756, 0
  %v8139 = vsel %vm7951, %v7757, 0
  %v8142 = vsel %vm7951, %v7758, 0
  %v8145 = vsel %vm7951, %v7759, 0
  %v8148 = vsel %vm7951, %v7760, 0
  %v8151 = vsel %vm7951, %v7761, 0
  %v8154 = vsel %vm7951, %v7762, 0
  %v8157 = vsel %vm7951, %v7763, 0
  %v8160 = vsel %vm7951, %v7764, 0
  %v8163 = vsel %vm7951, %v7765, 0
  %v8166 = vsel %vm7951, %v7766, 0
  %v8169 = vsel %vm7951, %v7767, 0
  %v8172 = vsel %vm7951, %v7768, 0
  %v8175 = vsel %vm7951, %v7769, 0
  %v8178 = vsel %vm7951, %v7770, 0
  %v8181 = vsel %vm7951, %v7771, 0
  %v8184 = vsel %vm7951, %v7772, 0
  %v8187 = vsel %vm7951, %v7773, 0
  %v8190 = vsel %vm7951, %v7774, 0
  %v8193 = vsel %vm7951, %v7775, 0
  %v8196 = vsel %vm7951, %v7776, 0
  %v8199 = vsel %vm7951, %v7777, 0
  %v8202 = vsel %vm7951, %v7778, 0
  %v8205 = vsel %vm7951, %v7779, 0
  %v8208 = vsel %vm7951, %v7780, 0
  %v8211 = vsel %vm7951, %v7781, 0
  %v8214 = vsel %vm7951, %v7782, 0
  %v8217 = vsel %vm7951, %v7783, 0
  %v8220 = vsel %vm7951, %v7784, 0
  %v8223 = vsel %vm7951, %v7785, 0
  %v8226 = vsel %vm7951, %v7786, 0
  %v8229 = vsel %vm7951, %v7787, 0
  %v8232 = vsel %vm7951, %v7788, 0
  %v8235 = vsel %vm7951, %v7789, 0
  %v8238 = vsel %vm7951, %v7790, 0
  %v8241 = vsel %vm7951, %v7791, 0
  %v8244 = vsel %vm7951, %v7792, 0
  %v8247 = vsel %vm7951, %v7793, 0
  %v8250 = vsel %vm7951, %v7794, 0
  %v8253 = vsel %vm7951, %v7795, 0
  %v8256 = vsel %vm7951, %v7796, 0
  %v8259 = vsel %vm7951, %v7797, 0
  %v8262 = vsel %vm7951, %v7798, 0
  %v8265 = vsel %vm7951, %v7799, 0
  %v8268 = vsel %vm7951, %v7800, 0
  %v8271 = vsel %vm7951, %v7801, 0
  %v8274 = vsel %vm7951, %v7802, 0
  %v8277 = vsel %vm7951, %v7803, 0
  %v8280 = vsel %vm7951, %v7804, 0
  %v8283 = vsel %vm7951, %v7805, 0
  %v8286 = vsel %vm7951, %v7806, 0
  %v8289 = vsel %vm7951, %v7807, 0
  %v8292 = vsel %vm7951, %v7808, 0
  %v8295 = vsel %vm7951, %v7809, 0
  %v8298 = vsel %vm7951, %v7810, 0
  %v8301 = vsel %vm7951, %v7811, 0
  %v8304 = vsel %vm7951, %v7812, 0
  %v8307 = vsel %vm7951, %v7813, 0
  %v8310 = vsel %vm7951, %v7814, 0
  %v8313 = vsel %vm7951, %v7815, 0
  %v8316 = vsel %vm7951, %v7816, 0
  %v8319 = vsel %vm7951, %v7817, 0
  %v8322 = vsel %vm7951, %v7818, 0
  %v8325 = vsel %vm7951, %v7819, 0
  %v8328 = vsel %vm7951, %v7820, 0
  %v8331 = vsel %vm7951, %v7821, 0
  %v8334 = vsel %vm7951, %v7822, 0
  %v8337 = vsel %vm7951, %v7823, 0
  %v8340 = vsel %vm7951, %v7824, 0
  %v8343 = vsel %vm7951, %v7825, 0
  %v8346 = vsel %vm7951, %v7826, 0
  %v8349 = vsel %vm7951, %v7827, 0
  %v8352 = vsel %vm7951, %v7828, 0
  %v8355 = vsel %vm7951, %v7829, 0
  %v8358 = vsel %vm7951, %v7830, 0
  %v8361 = vsel %vm7951, %v7831, 0
  %v8364 = vsel %vm7951, %v7832, 0
  %v8367 = vsel %vm7951, %v7833, 0
  %v8370 = vsel %vm7951, %v7834, 0
  %v8373 = vsel %vm7951, %v7835, 0
  %v8376 = vsel %vm7951, %v7836, 0
  %v8379 = vsel %vm7951, %v7837, 0
  %v8382 = vsel %vm7951, %v7838, 0
  %v8385 = vsel %vm7951, %v7839, 0
  %v8388 = vsel %vm7951, %v7840, 0
  %v8391 = vsel %vm7951, %v7841, 0
  %v8394 = vsel %vm7951, %v7842, 0
  %v8397 = vsel %vm7951, %v7843, 0
  %v8400 = vsel %vm7951, %v7844, 0
  %v8403 = vsel %vm7951, %v7845, 0
  %v8406 = vsel %vm7951, %v7846, 0
  %v8409 = vsel %vm7951, %v7847, 0
  %v8412 = vsel %vm7951, %v7848, 0
  %v8415 = vsel %vm7951, %v7849, 0
  %v8418 = vsel %vm7951, %v7850, 0
  %v8421 = vsel %vm7951, %v7851, 0
  %v8424 = vsel %vm7951, %v7852, 0
  %v8427 = vsel %vm7951, %v7853, 0
  %v8430 = vsel %vm7951, %v7854, 0
  %v8433 = vsel %vm7951, %v7855, 0
  %v8436 = vsel %vm7951, %v7856, 0
  %v8439 = vsel %vm7951, %v7857, 0
  %v8442 = vsel %vm7951, %v7858, 0
  %v8445 = vsel %vm7951, %v7859, 0
  %v8448 = vsel %vm7951, %v7860, 0
  %v8451 = vsel %vm7951, %v7861, 0
  %v8454 = vsel %vm7951, %v7862, 0
  %v8457 = vsel %vm7951, %v7863, 0
  %v8460 = vsel %vm7951, %v7864, 0
  %v8463 = vsel %vm7951, %v7865, 0
  %v8466 = vsel %vm7951, %v7866, 0
  %v8469 = vsel %vm7951, %v7867, 0
  %v8472 = vsel %vm7951, %v7868, 0
  %v8475 = vsel %vm7951, %v7869, 0
  %v8478 = vsel %vm7951, %v7870, 0
  %v8481 = vsel %vm7951, %v7871, 0
  %v8484 = vsel %vm7951, %v7872, 0
  %v8487 = vsel %vm7951, %v7873, 0
  %v8490 = vsel %vm7951, %v7874, 0
  %v8493 = vsel %vm7951, %v7875, 0
  %v8496 = vsel %vm7951, %v7876, 0
  %v8499 = vsel %vm7951, %v7877, 0
  %v8502 = vsel %vm7951, %v7878, 0
  %v8505 = vsel %vm7951, %v7879, 0
  %v8508 = vsel %vm7951, %v7880, 0
  %v8511 = vsel %vm7951, %v7881, 0
  %v8514 = vsel %vm7951, %v7882, 0
  %v8517 = vsel %vm7951, %v7883, 0
  %v8520 = vsel %vm7951, %v7884, 0
  %v8523 = vsel %vm7951, %v7885, 0
  %v8526 = vsel %vm7951, %v7886, 0
  %v8529 = vsel %vm7951, %v7887, 0
  %v8532 = vsel %vm7951, %v7888, 0
  %v8535 = vsel %vm7951, %v7889, 0
  %v8538 = vsel %vm7951, %v7890, 0
  %v8541 = vsel %vm7951, %v7891, 0
  %v8544 = vsel %vm7951, %v7892, 0
  %v8547 = vsel %vm7951, %v7893, 0
  %v8550 = vsel %vm7951, %v7894, 0
  %v8553 = vsel %vm7951, %v7895, 0
  %v8556 = vsel %vm7951, %v7896, 0
  %v8559 = vsel %vm7951, %v7897, 0
  %v8562 = vsel %vm7951, %v7898, 0
  %v8565 = vsel %vm7951, %v7899, 0
  %v8568 = vsel %vm7951, %v7900, 0
  %v8571 = vsel %vm7951, %v7901, 0
  %v8574 = vsel %vm7951, %v7902, 0
  %v8577 = vsel %vm7951, %v7903, 0
  %v8580 = vsel %vm7951, %v7904, 0
  %v8583 = vsel %vm7951, %v7905, 0
  %v8586 = vsel %vm7951, %v7906, 0
  %v8589 = vsel %vm7951, %v7907, 0
  %v8592 = vsel %vm7951, %v7908, 0
  %v8595 = vsel %vm7951, %v7909, 0
  %v8598 = vsel %vm7951, %v7910, 0
  %v8601 = vsel %vm7951, %v7911, 0
  %v8604 = vsel %vm7951, %v7912, 0
  %v8607 = vsel %vm7951, %v7913, 0
  %v8610 = vsel %vm7951, %v7914, 0
  %v8613 = vsel %vm7951, %v7915, 0
  %v8616 = vsel %vm7951, %v7916, 0
  %v8619 = vsel %vm7951, %v7917, 0
  %v8622 = vsel %vm7951, %v7918, 0
  %v8625 = vsel %vm7951, %v7919, 0
  %v8628 = vsel %vm7951, %v7920, 0
  %v8631 = vsel %vm7951, %v7921, 0
  %v8634 = vsel %vm7951, %v7922, 0
  %v8637 = vsel %vm7951, %v7923, 0
  %v8640 = vsel %vm7951, %v7924, 0
  %v8643 = vsel %vm7951, %v7925, 0
  %v8646 = vsel %vm7951, %v7926, 0
  %v8649 = vsel %vm7951, %v7927, 0
  %v8652 = vsel %vm7951, %v7928, 0
  %v8655 = vsel %vm7951, %v7929, 0
  %v8658 = vsel %vm7951, %v7930, 0
  %v8661 = vsel %vm7951, %v7931, 0
  %v8664 = vsel %vm7951, %v7932, 0
  %v8667 = vsel %vm7951, %v7933, 0
  %v8670 = vsel %vm7951, %v7934, 0
  %v8673 = vsel %vm7951, %v7935, 0
  %v8676 = vsel %vm7951, %v7936, 0
  %v8679 = vsel %vm7951, %v7937, 0
  %v8682 = vsel %vm7951, %v7938, 0
  %v8685 = vsel %vm7951, %v7939, 0
  %v8688 = vsel %vm7951, %v7940, 0
  %v8691 = vsel %vm7951, %v7941, 0
  %v8694 = vsel %vm7951, %v7942, 0
  %v8697 = vsel %vm7951, %v7943, 0
  %v8700 = vsel %vm7951, %v7944, 0
  %v8703 = vsel %vm7951, %v7945, 0
  %v8706 = vsel %vm7951, %v7946, 0
  %v8709 = vsel %vm7951, %v7947, 0
  %v8712 = vsel %vm7951, %v7948, 0
  %v8715 = vsel %vm7951, %v7949, 0
  %v8718 = vsel %vm7951, %v7950, 0
  %8720 = vmatpush.bf16.msra.mxu0 0
  %8721 = vmatpush.bf16.msra.mxu0 0
  %8722 = vmatpush.bf16.msra.mxu0 0
  %8723 = vmatpush.bf16.msra.mxu0 0
  %8724 = vmatpush.bf16.msra.mxu0 0
  %8725 = vmatpush.bf16.msra.mxu0 0
  %8726 = vmatpush.bf16.msra.mxu0 %v3598
  %8727 = vmatpush.bf16.msra.mxu0 %v3597
  %8728 = vmatmul.bf16.gmra.mxu0 %v7953
  %v8729 = vpop.f32.mrf.mxu0
  %v8730 = vadd.f32 %v4114, %v8729
  %v8731 = vpop.f32.mrf.mxu0
  %v8732 = vadd.f32 %v4119, %v8731
  %8733 = vmatmul.bf16.gmra.mxu0 %v7956
  %v8734 = vpop.f32.mrf.mxu0
  %v8735 = vadd.f32 %v4124, %v8734
  %v8736 = vpop.f32.mrf.mxu0
  %v8737 = vadd.f32 %v4129, %v8736
  %8738 = vmatmul.bf16.gmra.mxu0 %v7959
  %v8739 = vpop.f32.mrf.mxu0
  %v8740 = vadd.f32 %v4134, %v8739
  %v8741 = vpop.f32.mrf.mxu0
  %v8742 = vadd.f32 %v4139, %v8741
  %8743 = vmatmul.bf16.gmra.mxu0 %v7962
  %v8744 = vpop.f32.mrf.mxu0
  %v8745 = vadd.f32 %v4144, %v8744
  %v8746 = vpop.f32.mrf.mxu0
  %v8747 = vadd.f32 %v4149, %v8746
  %8748 = vmatmul.bf16.gmra.mxu0 %v7965
  %v8749 = vpop.f32.mrf.mxu0
  %v8750 = vadd.f32 %v4154, %v8749
  %v8751 = vpop.f32.mrf.mxu0
  %v8752 = vadd.f32 %v4159, %v8751
  %8753 = vmatmul.bf16.gmra.mxu0 %v7968
  %v8754 = vpop.f32.mrf.mxu0
  %v8755 = vadd.f32 %v4164, %v8754
  %v8756 = vpop.f32.mrf.mxu0
  %v8757 = vadd.f32 %v4169, %v8756
  %8758 = vmatmul.bf16.gmra.mxu0 %v7971
  %v8759 = vpop.f32.mrf.mxu0
  %v8760 = vadd.f32 %v4174, %v8759
  %v8761 = vpop.f32.mrf.mxu0
  %v8762 = vadd.f32 %v4179, %v8761
  %8763 = vmatmul.bf16.gmra.mxu0 %v7974
  %v8764 = vpop.f32.mrf.mxu0
  %v8765 = vadd.f32 %v4184, %v8764
  %v8766 = vpop.f32.mrf.mxu0
  %v8767 = vadd.f32 %v4189, %v8766
  %8768 = vmatmul.bf16.gmra.mxu0 %v7977
  %v8769 = vpop.f32.mrf.mxu0
  %v8770 = vadd.f32 %v4194, %v8769
  %v8771 = vpop.f32.mrf.mxu0
  %v8772 = vadd.f32 %v4199, %v8771
  %8773 = vmatmul.bf16.gmra.mxu0 %v7980
  %v8774 = vpop.f32.mrf.mxu0
  %v8775 = vadd.f32 %v4204, %v8774
  %v8776 = vpop.f32.mrf.mxu0
  %v8777 = vadd.f32 %v4209, %v8776
  %8778 = vmatmul.bf16.gmra.mxu0 %v7983
  %v8779 = vpop.f32.mrf.mxu0
  %v8780 = vadd.f32 %v4214, %v8779
  %v8781 = vpop.f32.mrf.mxu0
  %v8782 = vadd.f32 %v4219, %v8781
  %8783 = vmatmul.bf16.gmra.mxu0 %v7986
  %v8784 = vpop.f32.mrf.mxu0
  %v8785 = vadd.f32 %v4224, %v8784
  %v8786 = vpop.f32.mrf.mxu0
  %v8787 = vadd.f32 %v4229, %v8786
  %8788 = vmatmul.bf16.gmra.mxu0 %v7989
  %v8789 = vpop.f32.mrf.mxu0
  %v8790 = vadd.f32 %v4234, %v8789
  %v8791 = vpop.f32.mrf.mxu0
  %v8792 = vadd.f32 %v4239, %v8791
  %8793 = vmatmul.bf16.gmra.mxu0 %v7992
  %v8794 = vpop.f32.mrf.mxu0
  %v8795 = vadd.f32 %v4244, %v8794
  %v8796 = vpop.f32.mrf.mxu0
  %v8797 = vadd.f32 %v4249, %v8796
  %8798 = vmatmul.bf16.gmra.mxu0 %v7995
  %v8799 = vpop.f32.mrf.mxu0
  %v8800 = vadd.f32 %v4254, %v8799
  %v8801 = vpop.f32.mrf.mxu0
  %v8802 = vadd.f32 %v4259, %v8801
  %8803 = vmatmul.bf16.gmra.mxu0 %v7998
  %v8804 = vpop.f32.mrf.mxu0
  %v8805 = vadd.f32 %v4264, %v8804
  %v8806 = vpop.f32.mrf.mxu0
  %v8807 = vadd.f32 %v4269, %v8806
  %8808 = vmatmul.bf16.gmra.mxu0 %v8001
  %v8809 = vpop.f32.mrf.mxu0
  %v8810 = vadd.f32 %v4274, %v8809
  %v8811 = vpop.f32.mrf.mxu0
  %v8812 = vadd.f32 %v4279, %v8811
  %8813 = vmatmul.bf16.gmra.mxu0 %v8004
  %v8814 = vpop.f32.mrf.mxu0
  %v8815 = vadd.f32 %v4284, %v8814
  %v8816 = vpop.f32.mrf.mxu0
  %v8817 = vadd.f32 %v4289, %v8816
  %8818 = vmatmul.bf16.gmra.mxu0 %v8007
  %v8819 = vpop.f32.mrf.mxu0
  %v8820 = vadd.f32 %v4294, %v8819
  %v8821 = vpop.f32.mrf.mxu0
  %v8822 = vadd.f32 %v4299, %v8821
  %8823 = vmatmul.bf16.gmra.mxu0 %v8010
  %v8824 = vpop.f32.mrf.mxu0
  %v8825 = vadd.f32 %v4304, %v8824
  %v8826 = vpop.f32.mrf.mxu0
  %v8827 = vadd.f32 %v4309, %v8826
  %8828 = vmatmul.bf16.gmra.mxu0 %v8013
  %v8829 = vpop.f32.mrf.mxu0
  %v8830 = vadd.f32 %v4314, %v8829
  %v8831 = vpop.f32.mrf.mxu0
  %v8832 = vadd.f32 %v4319, %v8831
  %8833 = vmatmul.bf16.gmra.mxu0 %v8016
  %v8834 = vpop.f32.mrf.mxu0
  %v8835 = vadd.f32 %v4324, %v8834
  %v8836 = vpop.f32.mrf.mxu0
  %v8837 = vadd.f32 %v4329, %v8836
  %8838 = vmatmul.bf16.gmra.mxu0 %v8019
  %v8839 = vpop.f32.mrf.mxu0
  %v8840 = vadd.f32 %v4334, %v8839
  %v8841 = vpop.f32.mrf.mxu0
  %v8842 = vadd.f32 %v4339, %v8841
  %8843 = vmatmul.bf16.gmra.mxu0 %v8022
  %v8844 = vpop.f32.mrf.mxu0
  %v8845 = vadd.f32 %v4344, %v8844
  %v8846 = vpop.f32.mrf.mxu0
  %v8847 = vadd.f32 %v4349, %v8846
  %8848 = vmatmul.bf16.gmra.mxu0 %v8025
  %v8849 = vpop.f32.mrf.mxu0
  %v8850 = vadd.f32 %v4354, %v8849
  %v8851 = vpop.f32.mrf.mxu0
  %v8852 = vadd.f32 %v4359, %v8851
  %8853 = vmatmul.bf16.gmra.mxu0 %v8028
  %v8854 = vpop.f32.mrf.mxu0
  %v8855 = vadd.f32 %v4364, %v8854
  %v8856 = vpop.f32.mrf.mxu0
  %v8857 = vadd.f32 %v4369, %v8856
  %8858 = vmatmul.bf16.gmra.mxu0 %v8031
  %v8859 = vpop.f32.mrf.mxu0
  %v8860 = vadd.f32 %v4374, %v8859
  %v8861 = vpop.f32.mrf.mxu0
  %v8862 = vadd.f32 %v4379, %v8861
  %8863 = vmatmul.bf16.gmra.mxu0 %v8034
  %v8864 = vpop.f32.mrf.mxu0
  %v8865 = vadd.f32 %v4384, %v8864
  %v8866 = vpop.f32.mrf.mxu0
  %v8867 = vadd.f32 %v4389, %v8866
  %8868 = vmatmul.bf16.gmra.mxu0 %v8037
  %v8869 = vpop.f32.mrf.mxu0
  %v8870 = vadd.f32 %v4394, %v8869
  %v8871 = vpop.f32.mrf.mxu0
  %v8872 = vadd.f32 %v4399, %v8871
  %8873 = vmatmul.bf16.gmra.mxu0 %v8040
  %v8874 = vpop.f32.mrf.mxu0
  %v8875 = vadd.f32 %v4404, %v8874
  %v8876 = vpop.f32.mrf.mxu0
  %v8877 = vadd.f32 %v4409, %v8876
  %8878 = vmatmul.bf16.gmra.mxu0 %v8043
  %v8879 = vpop.f32.mrf.mxu0
  %v8880 = vadd.f32 %v4414, %v8879
  %v8881 = vpop.f32.mrf.mxu0
  %v8882 = vadd.f32 %v4419, %v8881
  %8883 = vmatmul.bf16.gmra.mxu0 %v8046
  %v8884 = vpop.f32.mrf.mxu0
  %v8885 = vadd.f32 %v4424, %v8884
  %v8886 = vpop.f32.mrf.mxu0
  %v8887 = vadd.f32 %v4429, %v8886
  %8888 = vmatmul.bf16.gmra.mxu0 %v8049
  %v8889 = vpop.f32.mrf.mxu0
  %v8890 = vadd.f32 %v4434, %v8889
  %v8891 = vpop.f32.mrf.mxu0
  %v8892 = vadd.f32 %v4439, %v8891
  %8893 = vmatmul.bf16.gmra.mxu0 %v8052
  %v8894 = vpop.f32.mrf.mxu0
  %v8895 = vadd.f32 %v4444, %v8894
  %v8896 = vpop.f32.mrf.mxu0
  %v8897 = vadd.f32 %v4449, %v8896
  %8898 = vmatmul.bf16.gmra.mxu0 %v8055
  %v8899 = vpop.f32.mrf.mxu0
  %v8900 = vadd.f32 %v4454, %v8899
  %v8901 = vpop.f32.mrf.mxu0
  %v8902 = vadd.f32 %v4459, %v8901
  %8903 = vmatmul.bf16.gmra.mxu0 %v8058
  %v8904 = vpop.f32.mrf.mxu0
  %v8905 = vadd.f32 %v4464, %v8904
  %v8906 = vpop.f32.mrf.mxu0
  %v8907 = vadd.f32 %v4469, %v8906
  %8908 = vmatmul.bf16.gmra.mxu0 %v8061
  %v8909 = vpop.f32.mrf.mxu0
  %v8910 = vadd.f32 %v4474, %v8909
  %v8911 = vpop.f32.mrf.mxu0
  %v8912 = vadd.f32 %v4479, %v8911
  %8913 = vmatmul.bf16.gmra.mxu0 %v8064
  %v8914 = vpop.f32.mrf.mxu0
  %v8915 = vadd.f32 %v4484, %v8914
  %v8916 = vpop.f32.mrf.mxu0
  %v8917 = vadd.f32 %v4489, %v8916
  %8918 = vmatmul.bf16.gmra.mxu0 %v8067
  %v8919 = vpop.f32.mrf.mxu0
  %v8920 = vadd.f32 %v4494, %v8919
  %v8921 = vpop.f32.mrf.mxu0
  %v8922 = vadd.f32 %v4499, %v8921
  %8923 = vmatmul.bf16.gmra.mxu0 %v8070
  %v8924 = vpop.f32.mrf.mxu0
  %v8925 = vadd.f32 %v4504, %v8924
  %v8926 = vpop.f32.mrf.mxu0
  %v8927 = vadd.f32 %v4509, %v8926
  %8928 = vmatmul.bf16.gmra.mxu0 %v8073
  %v8929 = vpop.f32.mrf.mxu0
  %v8930 = vadd.f32 %v4514, %v8929
  %v8931 = vpop.f32.mrf.mxu0
  %v8932 = vadd.f32 %v4519, %v8931
  %8933 = vmatmul.bf16.gmra.mxu0 %v8076
  %v8934 = vpop.f32.mrf.mxu0
  %v8935 = vadd.f32 %v4524, %v8934
  %v8936 = vpop.f32.mrf.mxu0
  %v8937 = vadd.f32 %v4529, %v8936
  %8938 = vmatmul.bf16.gmra.mxu0 %v8079
  %v8939 = vpop.f32.mrf.mxu0
  %v8940 = vadd.f32 %v4534, %v8939
  %v8941 = vpop.f32.mrf.mxu0
  %v8942 = vadd.f32 %v4539, %v8941
  %8943 = vmatmul.bf16.gmra.mxu0 %v8082
  %v8944 = vpop.f32.mrf.mxu0
  %v8945 = vadd.f32 %v4544, %v8944
  %v8946 = vpop.f32.mrf.mxu0
  %v8947 = vadd.f32 %v4549, %v8946
  %8948 = vmatmul.bf16.gmra.mxu0 %v8085
  %v8949 = vpop.f32.mrf.mxu0
  %v8950 = vadd.f32 %v4554, %v8949
  %v8951 = vpop.f32.mrf.mxu0
  %v8952 = vadd.f32 %v4559, %v8951
  %8953 = vmatmul.bf16.gmra.mxu0 %v8088
  %v8954 = vpop.f32.mrf.mxu0
  %v8955 = vadd.f32 %v4564, %v8954
  %v8956 = vpop.f32.mrf.mxu0
  %v8957 = vadd.f32 %v4569, %v8956
  %8958 = vmatmul.bf16.gmra.mxu0 %v8091
  %v8959 = vpop.f32.mrf.mxu0
  %v8960 = vadd.f32 %v4574, %v8959
  %v8961 = vpop.f32.mrf.mxu0
  %v8962 = vadd.f32 %v4579, %v8961
  %8963 = vmatmul.bf16.gmra.mxu0 %v8094
  %v8964 = vpop.f32.mrf.mxu0
  %v8965 = vadd.f32 %v4584, %v8964
  %v8966 = vpop.f32.mrf.mxu0
  %v8967 = vadd.f32 %v4589, %v8966
  %8968 = vmatmul.bf16.gmra.mxu0 %v8097
  %v8969 = vpop.f32.mrf.mxu0
  %v8970 = vadd.f32 %v4594, %v8969
  %v8971 = vpop.f32.mrf.mxu0
  %v8972 = vadd.f32 %v4599, %v8971
  %8973 = vmatmul.bf16.gmra.mxu0 %v8100
  %v8974 = vpop.f32.mrf.mxu0
  %v8975 = vadd.f32 %v4604, %v8974
  %v8976 = vpop.f32.mrf.mxu0
  %v8977 = vadd.f32 %v4609, %v8976
  %8978 = vmatmul.bf16.gmra.mxu0 %v8103
  %v8979 = vpop.f32.mrf.mxu0
  %v8980 = vadd.f32 %v4614, %v8979
  %v8981 = vpop.f32.mrf.mxu0
  %v8982 = vadd.f32 %v4619, %v8981
  %8983 = vmatmul.bf16.gmra.mxu0 %v8106
  %v8984 = vpop.f32.mrf.mxu0
  %v8985 = vadd.f32 %v4624, %v8984
  %v8986 = vpop.f32.mrf.mxu0
  %v8987 = vadd.f32 %v4629, %v8986
  %8988 = vmatmul.bf16.gmra.mxu0 %v8109
  %v8989 = vpop.f32.mrf.mxu0
  %v8990 = vadd.f32 %v4634, %v8989
  %v8991 = vpop.f32.mrf.mxu0
  %v8992 = vadd.f32 %v4639, %v8991
  %8993 = vmatmul.bf16.gmra.mxu0 %v8112
  %v8994 = vpop.f32.mrf.mxu0
  %v8995 = vadd.f32 %v4644, %v8994
  %v8996 = vpop.f32.mrf.mxu0
  %v8997 = vadd.f32 %v4649, %v8996
  %8998 = vmatmul.bf16.gmra.mxu0 %v8115
  %v8999 = vpop.f32.mrf.mxu0
  %v9000 = vadd.f32 %v4654, %v8999
  %v9001 = vpop.f32.mrf.mxu0
  %v9002 = vadd.f32 %v4659, %v9001
  %9003 = vmatmul.bf16.gmra.mxu0 %v8118
  %v9004 = vpop.f32.mrf.mxu0
  %v9005 = vadd.f32 %v4664, %v9004
  %v9006 = vpop.f32.mrf.mxu0
  %v9007 = vadd.f32 %v4669, %v9006
  %9008 = vmatmul.bf16.gmra.mxu0 %v8121
  %v9009 = vpop.f32.mrf.mxu0
  %v9010 = vadd.f32 %v4674, %v9009
  %v9011 = vpop.f32.mrf.mxu0
  %v9012 = vadd.f32 %v4679, %v9011
  %9013 = vmatmul.bf16.gmra.mxu0 %v8124
  %v9014 = vpop.f32.mrf.mxu0
  %v9015 = vadd.f32 %v4684, %v9014
  %v9016 = vpop.f32.mrf.mxu0
  %v9017 = vadd.f32 %v4689, %v9016
  %9018 = vmatmul.bf16.gmra.mxu0 %v8127
  %v9019 = vpop.f32.mrf.mxu0
  %v9020 = vadd.f32 %v4694, %v9019
  %v9021 = vpop.f32.mrf.mxu0
  %v9022 = vadd.f32 %v4699, %v9021
  %9023 = vmatmul.bf16.gmra.mxu0 %v8130
  %v9024 = vpop.f32.mrf.mxu0
  %v9025 = vadd.f32 %v4704, %v9024
  %v9026 = vpop.f32.mrf.mxu0
  %v9027 = vadd.f32 %v4709, %v9026
  %9028 = vmatmul.bf16.gmra.mxu0 %v8133
  %v9029 = vpop.f32.mrf.mxu0
  %v9030 = vadd.f32 %v4714, %v9029
  %v9031 = vpop.f32.mrf.mxu0
  %v9032 = vadd.f32 %v4719, %v9031
  %9033 = vmatmul.bf16.gmra.mxu0 %v8136
  %v9034 = vpop.f32.mrf.mxu0
  %v9035 = vadd.f32 %v4724, %v9034
  %v9036 = vpop.f32.mrf.mxu0
  %v9037 = vadd.f32 %v4729, %v9036
  %9038 = vmatmul.bf16.gmra.mxu0 %v8139
  %v9039 = vpop.f32.mrf.mxu0
  %v9040 = vadd.f32 %v4734, %v9039
  %v9041 = vpop.f32.mrf.mxu0
  %v9042 = vadd.f32 %v4739, %v9041
  %9043 = vmatmul.bf16.gmra.mxu0 %v8142
  %v9044 = vpop.f32.mrf.mxu0
  %v9045 = vadd.f32 %v4744, %v9044
  %v9046 = vpop.f32.mrf.mxu0
  %v9047 = vadd.f32 %v4749, %v9046
  %9048 = vmatmul.bf16.gmra.mxu0 %v8145
  %v9049 = vpop.f32.mrf.mxu0
  %v9050 = vadd.f32 %v4754, %v9049
  %v9051 = vpop.f32.mrf.mxu0
  %v9052 = vadd.f32 %v4759, %v9051
  %9053 = vmatmul.bf16.gmra.mxu0 %v8148
  %v9054 = vpop.f32.mrf.mxu0
  %v9055 = vadd.f32 %v4764, %v9054
  %v9056 = vpop.f32.mrf.mxu0
  %v9057 = vadd.f32 %v4769, %v9056
  %9058 = vmatmul.bf16.gmra.mxu0 %v8151
  %v9059 = vpop.f32.mrf.mxu0
  %v9060 = vadd.f32 %v4774, %v9059
  %v9061 = vpop.f32.mrf.mxu0
  %v9062 = vadd.f32 %v4779, %v9061
  %9063 = vmatmul.bf16.gmra.mxu0 %v8154
  %v9064 = vpop.f32.mrf.mxu0
  %v9065 = vadd.f32 %v4784, %v9064
  %v9066 = vpop.f32.mrf.mxu0
  %v9067 = vadd.f32 %v4789, %v9066
  %9068 = vmatmul.bf16.gmra.mxu0 %v8157
  %v9069 = vpop.f32.mrf.mxu0
  %v9070 = vadd.f32 %v4794, %v9069
  %v9071 = vpop.f32.mrf.mxu0
  %v9072 = vadd.f32 %v4799, %v9071
  %9073 = vmatmul.bf16.gmra.mxu0 %v8160
  %v9074 = vpop.f32.mrf.mxu0
  %v9075 = vadd.f32 %v4804, %v9074
  %v9076 = vpop.f32.mrf.mxu0
  %v9077 = vadd.f32 %v4809, %v9076
  %9078 = vmatmul.bf16.gmra.mxu0 %v8163
  %v9079 = vpop.f32.mrf.mxu0
  %v9080 = vadd.f32 %v4814, %v9079
  %v9081 = vpop.f32.mrf.mxu0
  %v9082 = vadd.f32 %v4819, %v9081
  %9083 = vmatmul.bf16.gmra.mxu0 %v8166
  %v9084 = vpop.f32.mrf.mxu0
  %v9085 = vadd.f32 %v4824, %v9084
  %v9086 = vpop.f32.mrf.mxu0
  %v9087 = vadd.f32 %v4829, %v9086
  %9088 = vmatmul.bf16.gmra.mxu0 %v8169
  %v9089 = vpop.f32.mrf.mxu0
  %v9090 = vadd.f32 %v4834, %v9089
  %v9091 = vpop.f32.mrf.mxu0
  %v9092 = vadd.f32 %v4839, %v9091
  %9093 = vmatmul.bf16.gmra.mxu0 %v8172
  %v9094 = vpop.f32.mrf.mxu0
  %v9095 = vadd.f32 %v4844, %v9094
  %v9096 = vpop.f32.mrf.mxu0
  %v9097 = vadd.f32 %v4849, %v9096
  %9098 = vmatmul.bf16.gmra.mxu0 %v8175
  %v9099 = vpop.f32.mrf.mxu0
  %v9100 = vadd.f32 %v4854, %v9099
  %v9101 = vpop.f32.mrf.mxu0
  %v9102 = vadd.f32 %v4859, %v9101
  %9103 = vmatmul.bf16.gmra.mxu0 %v8178
  %v9104 = vpop.f32.mrf.mxu0
  %v9105 = vadd.f32 %v4864, %v9104
  %v9106 = vpop.f32.mrf.mxu0
  %v9107 = vadd.f32 %v4869, %v9106
  %9108 = vmatmul.bf16.gmra.mxu0 %v8181
  %v9109 = vpop.f32.mrf.mxu0
  %v9110 = vadd.f32 %v4874, %v9109
  %v9111 = vpop.f32.mrf.mxu0
  %v9112 = vadd.f32 %v4879, %v9111
  %9113 = vmatmul.bf16.gmra.mxu0 %v8184
  %v9114 = vpop.f32.mrf.mxu0
  %v9115 = vadd.f32 %v4884, %v9114
  %v9116 = vpop.f32.mrf.mxu0
  %v9117 = vadd.f32 %v4889, %v9116
  %9118 = vmatmul.bf16.gmra.mxu0 %v8187
  %v9119 = vpop.f32.mrf.mxu0
  %v9120 = vadd.f32 %v4894, %v9119
  %v9121 = vpop.f32.mrf.mxu0
  %v9122 = vadd.f32 %v4899, %v9121
  %9123 = vmatmul.bf16.gmra.mxu0 %v8190
  %v9124 = vpop.f32.mrf.mxu0
  %v9125 = vadd.f32 %v4904, %v9124
  %v9126 = vpop.f32.mrf.mxu0
  %v9127 = vadd.f32 %v4909, %v9126
  %9128 = vmatmul.bf16.gmra.mxu0 %v8193
  %v9129 = vpop.f32.mrf.mxu0
  %v9130 = vadd.f32 %v4914, %v9129
  %v9131 = vpop.f32.mrf.mxu0
  %v9132 = vadd.f32 %v4919, %v9131
  %9133 = vmatmul.bf16.gmra.mxu0 %v8196
  %v9134 = vpop.f32.mrf.mxu0
  %v9135 = vadd.f32 %v4924, %v9134
  %v9136 = vpop.f32.mrf.mxu0
  %v9137 = vadd.f32 %v4929, %v9136
  %9138 = vmatmul.bf16.gmra.mxu0 %v8199
  %v9139 = vpop.f32.mrf.mxu0
  %v9140 = vadd.f32 %v4934, %v9139
  %v9141 = vpop.f32.mrf.mxu0
  %v9142 = vadd.f32 %v4939, %v9141
  %9143 = vmatmul.bf16.gmra.mxu0 %v8202
  %v9144 = vpop.f32.mrf.mxu0
  %v9145 = vadd.f32 %v4944, %v9144
  %v9146 = vpop.f32.mrf.mxu0
  %v9147 = vadd.f32 %v4949, %v9146
  %9148 = vmatmul.bf16.gmra.mxu0 %v8205
  %v9149 = vpop.f32.mrf.mxu0
  %v9150 = vadd.f32 %v4954, %v9149
  %v9151 = vpop.f32.mrf.mxu0
  %v9152 = vadd.f32 %v4959, %v9151
  %9153 = vmatmul.bf16.gmra.mxu0 %v8208
  %v9154 = vpop.f32.mrf.mxu0
  %v9155 = vadd.f32 %v4964, %v9154
  %v9156 = vpop.f32.mrf.mxu0
  %v9157 = vadd.f32 %v4969, %v9156
  %9158 = vmatmul.bf16.gmra.mxu0 %v8211
  %v9159 = vpop.f32.mrf.mxu0
  %v9160 = vadd.f32 %v4974, %v9159
  %v9161 = vpop.f32.mrf.mxu0
  %v9162 = vadd.f32 %v4979, %v9161
  %9163 = vmatmul.bf16.gmra.mxu0 %v8214
  %v9164 = vpop.f32.mrf.mxu0
  %v9165 = vadd.f32 %v4984, %v9164
  %v9166 = vpop.f32.mrf.mxu0
  %v9167 = vadd.f32 %v4989, %v9166
  %9168 = vmatmul.bf16.gmra.mxu0 %v8217
  %v9169 = vpop.f32.mrf.mxu0
  %v9170 = vadd.f32 %v4994, %v9169
  %v9171 = vpop.f32.mrf.mxu0
  %v9172 = vadd.f32 %v4999, %v9171
  %9173 = vmatmul.bf16.gmra.mxu0 %v8220
  %v9174 = vpop.f32.mrf.mxu0
  %v9175 = vadd.f32 %v5004, %v9174
  %v9176 = vpop.f32.mrf.mxu0
  %v9177 = vadd.f32 %v5009, %v9176
  %9178 = vmatmul.bf16.gmra.mxu0 %v8223
  %v9179 = vpop.f32.mrf.mxu0
  %v9180 = vadd.f32 %v5014, %v9179
  %v9181 = vpop.f32.mrf.mxu0
  %v9182 = vadd.f32 %v5019, %v9181
  %9183 = vmatmul.bf16.gmra.mxu0 %v8226
  %v9184 = vpop.f32.mrf.mxu0
  %v9185 = vadd.f32 %v5024, %v9184
  %v9186 = vpop.f32.mrf.mxu0
  %v9187 = vadd.f32 %v5029, %v9186
  %9188 = vmatmul.bf16.gmra.mxu0 %v8229
  %v9189 = vpop.f32.mrf.mxu0
  %v9190 = vadd.f32 %v5034, %v9189
  %v9191 = vpop.f32.mrf.mxu0
  %v9192 = vadd.f32 %v5039, %v9191
  %9193 = vmatmul.bf16.gmra.mxu0 %v8232
  %v9194 = vpop.f32.mrf.mxu0
  %v9195 = vadd.f32 %v5044, %v9194
  %v9196 = vpop.f32.mrf.mxu0
  %v9197 = vadd.f32 %v5049, %v9196
  %9198 = vmatmul.bf16.gmra.mxu0 %v8235
  %v9199 = vpop.f32.mrf.mxu0
  %v9200 = vadd.f32 %v5054, %v9199
  %v9201 = vpop.f32.mrf.mxu0
  %v9202 = vadd.f32 %v5059, %v9201
  %9203 = vmatmul.bf16.gmra.mxu0 %v8238
  %v9204 = vpop.f32.mrf.mxu0
  %v9205 = vadd.f32 %v5064, %v9204
  %v9206 = vpop.f32.mrf.mxu0
  %v9207 = vadd.f32 %v5069, %v9206
  %9208 = vmatmul.bf16.gmra.mxu0 %v8241
  %v9209 = vpop.f32.mrf.mxu0
  %v9210 = vadd.f32 %v5074, %v9209
  %v9211 = vpop.f32.mrf.mxu0
  %v9212 = vadd.f32 %v5079, %v9211
  %9213 = vmatmul.bf16.gmra.mxu0 %v8244
  %v9214 = vpop.f32.mrf.mxu0
  %v9215 = vadd.f32 %v5084, %v9214
  %v9216 = vpop.f32.mrf.mxu0
  %v9217 = vadd.f32 %v5089, %v9216
  %9218 = vmatmul.bf16.gmra.mxu0 %v8247
  %v9219 = vpop.f32.mrf.mxu0
  %v9220 = vadd.f32 %v5094, %v9219
  %v9221 = vpop.f32.mrf.mxu0
  %v9222 = vadd.f32 %v5099, %v9221
  %9223 = vmatmul.bf16.gmra.mxu0 %v8250
  %v9224 = vpop.f32.mrf.mxu0
  %v9225 = vadd.f32 %v5104, %v9224
  %v9226 = vpop.f32.mrf.mxu0
  %v9227 = vadd.f32 %v5109, %v9226
  %9228 = vmatmul.bf16.gmra.mxu0 %v8253
  %v9229 = vpop.f32.mrf.mxu0
  %v9230 = vadd.f32 %v5114, %v9229
  %v9231 = vpop.f32.mrf.mxu0
  %v9232 = vadd.f32 %v5119, %v9231
  %9233 = vmatmul.bf16.gmra.mxu0 %v8256
  %v9234 = vpop.f32.mrf.mxu0
  %v9235 = vadd.f32 %v5124, %v9234
  %v9236 = vpop.f32.mrf.mxu0
  %v9237 = vadd.f32 %v5129, %v9236
  %9238 = vmatmul.bf16.gmra.mxu0 %v8259
  %v9239 = vpop.f32.mrf.mxu0
  %v9240 = vadd.f32 %v5134, %v9239
  %v9241 = vpop.f32.mrf.mxu0
  %v9242 = vadd.f32 %v5139, %v9241
  %9243 = vmatmul.bf16.gmra.mxu0 %v8262
  %v9244 = vpop.f32.mrf.mxu0
  %v9245 = vadd.f32 %v5144, %v9244
  %v9246 = vpop.f32.mrf.mxu0
  %v9247 = vadd.f32 %v5149, %v9246
  %9248 = vmatmul.bf16.gmra.mxu0 %v8265
  %v9249 = vpop.f32.mrf.mxu0
  %v9250 = vadd.f32 %v5154, %v9249
  %v9251 = vpop.f32.mrf.mxu0
  %v9252 = vadd.f32 %v5159, %v9251
  %9253 = vmatmul.bf16.gmra.mxu0 %v8268
  %v9254 = vpop.f32.mrf.mxu0
  %v9255 = vadd.f32 %v5164, %v9254
  %v9256 = vpop.f32.mrf.mxu0
  %v9257 = vadd.f32 %v5169, %v9256
  %9258 = vmatmul.bf16.gmra.mxu0 %v8271
  %v9259 = vpop.f32.mrf.mxu0
  %v9260 = vadd.f32 %v5174, %v9259
  %v9261 = vpop.f32.mrf.mxu0
  %v9262 = vadd.f32 %v5179, %v9261
  %9263 = vmatmul.bf16.gmra.mxu0 %v8274
  %v9264 = vpop.f32.mrf.mxu0
  %v9265 = vadd.f32 %v5184, %v9264
  %v9266 = vpop.f32.mrf.mxu0
  %v9267 = vadd.f32 %v5189, %v9266
  %9268 = vmatmul.bf16.gmra.mxu0 %v8277
  %v9269 = vpop.f32.mrf.mxu0
  %v9270 = vadd.f32 %v5194, %v9269
  %v9271 = vpop.f32.mrf.mxu0
  %v9272 = vadd.f32 %v5199, %v9271
  %9273 = vmatmul.bf16.gmra.mxu0 %v8280
  %v9274 = vpop.f32.mrf.mxu0
  %v9275 = vadd.f32 %v5204, %v9274
  %v9276 = vpop.f32.mrf.mxu0
  %v9277 = vadd.f32 %v5209, %v9276
  %9278 = vmatmul.bf16.gmra.mxu0 %v8283
  %v9279 = vpop.f32.mrf.mxu0
  %v9280 = vadd.f32 %v5214, %v9279
  %v9281 = vpop.f32.mrf.mxu0
  %v9282 = vadd.f32 %v5219, %v9281
  %9283 = vmatmul.bf16.gmra.mxu0 %v8286
  %v9284 = vpop.f32.mrf.mxu0
  %v9285 = vadd.f32 %v5224, %v9284
  %v9286 = vpop.f32.mrf.mxu0
  %v9287 = vadd.f32 %v5229, %v9286
  %9288 = vmatmul.bf16.gmra.mxu0 %v8289
  %v9289 = vpop.f32.mrf.mxu0
  %v9290 = vadd.f32 %v5234, %v9289
  %v9291 = vpop.f32.mrf.mxu0
  %v9292 = vadd.f32 %v5239, %v9291
  %9293 = vmatmul.bf16.gmra.mxu0 %v8292
  %v9294 = vpop.f32.mrf.mxu0
  %v9295 = vadd.f32 %v5244, %v9294
  %v9296 = vpop.f32.mrf.mxu0
  %v9297 = vadd.f32 %v5249, %v9296
  %9298 = vmatmul.bf16.gmra.mxu0 %v8295
  %v9299 = vpop.f32.mrf.mxu0
  %v9300 = vadd.f32 %v5254, %v9299
  %v9301 = vpop.f32.mrf.mxu0
  %v9302 = vadd.f32 %v5259, %v9301
  %9303 = vmatmul.bf16.gmra.mxu0 %v8298
  %v9304 = vpop.f32.mrf.mxu0
  %v9305 = vadd.f32 %v5264, %v9304
  %v9306 = vpop.f32.mrf.mxu0
  %v9307 = vadd.f32 %v5269, %v9306
  %9308 = vmatmul.bf16.gmra.mxu0 %v8301
  %v9309 = vpop.f32.mrf.mxu0
  %v9310 = vadd.f32 %v5274, %v9309
  %v9311 = vpop.f32.mrf.mxu0
  %v9312 = vadd.f32 %v5279, %v9311
  %9313 = vmatmul.bf16.gmra.mxu0 %v8304
  %v9314 = vpop.f32.mrf.mxu0
  %v9315 = vadd.f32 %v5284, %v9314
  %v9316 = vpop.f32.mrf.mxu0
  %v9317 = vadd.f32 %v5289, %v9316
  %9318 = vmatmul.bf16.gmra.mxu0 %v8307
  %v9319 = vpop.f32.mrf.mxu0
  %v9320 = vadd.f32 %v5294, %v9319
  %v9321 = vpop.f32.mrf.mxu0
  %v9322 = vadd.f32 %v5299, %v9321
  %9323 = vmatmul.bf16.gmra.mxu0 %v8310
  %v9324 = vpop.f32.mrf.mxu0
  %v9325 = vadd.f32 %v5304, %v9324
  %v9326 = vpop.f32.mrf.mxu0
  %v9327 = vadd.f32 %v5309, %v9326
  %9328 = vmatmul.bf16.gmra.mxu0 %v8313
  %v9329 = vpop.f32.mrf.mxu0
  %v9330 = vadd.f32 %v5314, %v9329
  %v9331 = vpop.f32.mrf.mxu0
  %v9332 = vadd.f32 %v5319, %v9331
  %9333 = vmatmul.bf16.gmra.mxu0 %v8316
  %v9334 = vpop.f32.mrf.mxu0
  %v9335 = vadd.f32 %v5324, %v9334
  %v9336 = vpop.f32.mrf.mxu0
  %v9337 = vadd.f32 %v5329, %v9336
  %9338 = vmatmul.bf16.gmra.mxu0 %v8319
  %v9339 = vpop.f32.mrf.mxu0
  %v9340 = vadd.f32 %v5334, %v9339
  %v9341 = vpop.f32.mrf.mxu0
  %v9342 = vadd.f32 %v5339, %v9341
  %9343 = vmatmul.bf16.gmra.mxu0 %v8322
  %v9344 = vpop.f32.mrf.mxu0
  %v9345 = vadd.f32 %v5344, %v9344
  %v9346 = vpop.f32.mrf.mxu0
  %v9347 = vadd.f32 %v5349, %v9346
  %9348 = vmatmul.bf16.gmra.mxu0 %v8325
  %v9349 = vpop.f32.mrf.mxu0
  %v9350 = vadd.f32 %v5354, %v9349
  %v9351 = vpop.f32.mrf.mxu0
  %v9352 = vadd.f32 %v5359, %v9351
  %9353 = vmatmul.bf16.gmra.mxu0 %v8328
  %v9354 = vpop.f32.mrf.mxu0
  %v9355 = vadd.f32 %v5364, %v9354
  %v9356 = vpop.f32.mrf.mxu0
  %v9357 = vadd.f32 %v5369, %v9356
  %9358 = vmatmul.bf16.gmra.mxu0 %v8331
  %v9359 = vpop.f32.mrf.mxu0
  %v9360 = vadd.f32 %v5374, %v9359
  %v9361 = vpop.f32.mrf.mxu0
  %v9362 = vadd.f32 %v5379, %v9361
  %9363 = vmatmul.bf16.gmra.mxu0 %v8334
  %v9364 = vpop.f32.mrf.mxu0
  %v9365 = vadd.f32 %v5384, %v9364
  %v9366 = vpop.f32.mrf.mxu0
  %v9367 = vadd.f32 %v5389, %v9366
  %9368 = vmatmul.bf16.gmra.mxu0 %v8337
  %v9369 = vpop.f32.mrf.mxu0
  %v9370 = vadd.f32 %v5394, %v9369
  %v9371 = vpop.f32.mrf.mxu0
  %v9372 = vadd.f32 %v5399, %v9371
  %9373 = vmatmul.bf16.gmra.mxu0 %v8340
  %v9374 = vpop.f32.mrf.mxu0
  %v9375 = vadd.f32 %v5404, %v9374
  %v9376 = vpop.f32.mrf.mxu0
  %v9377 = vadd.f32 %v5409, %v9376
  %9378 = vmatmul.bf16.gmra.mxu0 %v8343
  %v9379 = vpop.f32.mrf.mxu0
  %v9380 = vadd.f32 %v5414, %v9379
  %v9381 = vpop.f32.mrf.mxu0
  %v9382 = vadd.f32 %v5419, %v9381
  %9383 = vmatmul.bf16.gmra.mxu0 %v8346
  %v9384 = vpop.f32.mrf.mxu0
  %v9385 = vadd.f32 %v5424, %v9384
  %v9386 = vpop.f32.mrf.mxu0
  %v9387 = vadd.f32 %v5429, %v9386
  %9388 = vmatmul.bf16.gmra.mxu0 %v8349
  %v9389 = vpop.f32.mrf.mxu0
  %v9390 = vadd.f32 %v5434, %v9389
  %v9391 = vpop.f32.mrf.mxu0
  %v9392 = vadd.f32 %v5439, %v9391
  %9393 = vmatmul.bf16.gmra.mxu0 %v8352
  %v9394 = vpop.f32.mrf.mxu0
  %v9395 = vadd.f32 %v5444, %v9394
  %v9396 = vpop.f32.mrf.mxu0
  %v9397 = vadd.f32 %v5449, %v9396
  %9398 = vmatmul.bf16.gmra.mxu0 %v8355
  %v9399 = vpop.f32.mrf.mxu0
  %v9400 = vadd.f32 %v5454, %v9399
  %v9401 = vpop.f32.mrf.mxu0
  %v9402 = vadd.f32 %v5459, %v9401
  %9403 = vmatmul.bf16.gmra.mxu0 %v8358
  %v9404 = vpop.f32.mrf.mxu0
  %v9405 = vadd.f32 %v5464, %v9404
  %v9406 = vpop.f32.mrf.mxu0
  %v9407 = vadd.f32 %v5469, %v9406
  %9408 = vmatmul.bf16.gmra.mxu0 %v8361
  %v9409 = vpop.f32.mrf.mxu0
  %v9410 = vadd.f32 %v5474, %v9409
  %v9411 = vpop.f32.mrf.mxu0
  %v9412 = vadd.f32 %v5479, %v9411
  %9413 = vmatmul.bf16.gmra.mxu0 %v8364
  %v9414 = vpop.f32.mrf.mxu0
  %v9415 = vadd.f32 %v5484, %v9414
  %v9416 = vpop.f32.mrf.mxu0
  %v9417 = vadd.f32 %v5489, %v9416
  %9418 = vmatmul.bf16.gmra.mxu0 %v8367
  %v9419 = vpop.f32.mrf.mxu0
  %v9420 = vadd.f32 %v5494, %v9419
  %v9421 = vpop.f32.mrf.mxu0
  %v9422 = vadd.f32 %v5499, %v9421
  %9423 = vmatmul.bf16.gmra.mxu0 %v8370
  %v9424 = vpop.f32.mrf.mxu0
  %v9425 = vadd.f32 %v5504, %v9424
  %v9426 = vpop.f32.mrf.mxu0
  %v9427 = vadd.f32 %v5509, %v9426
  %9428 = vmatmul.bf16.gmra.mxu0 %v8373
  %v9429 = vpop.f32.mrf.mxu0
  %v9430 = vadd.f32 %v5514, %v9429
  %v9431 = vpop.f32.mrf.mxu0
  %v9432 = vadd.f32 %v5519, %v9431
  %9433 = vmatmul.bf16.gmra.mxu0 %v8376
  %v9434 = vpop.f32.mrf.mxu0
  %v9435 = vadd.f32 %v5524, %v9434
  %v9436 = vpop.f32.mrf.mxu0
  %v9437 = vadd.f32 %v5529, %v9436
  %9438 = vmatmul.bf16.gmra.mxu0 %v8379
  %v9439 = vpop.f32.mrf.mxu0
  %v9440 = vadd.f32 %v5534, %v9439
  %v9441 = vpop.f32.mrf.mxu0
  %v9442 = vadd.f32 %v5539, %v9441
  %9443 = vmatmul.bf16.gmra.mxu0 %v8382
  %v9444 = vpop.f32.mrf.mxu0
  %v9445 = vadd.f32 %v5544, %v9444
  %v9446 = vpop.f32.mrf.mxu0
  %v9447 = vadd.f32 %v5549, %v9446
  %9448 = vmatmul.bf16.gmra.mxu0 %v8385
  %v9449 = vpop.f32.mrf.mxu0
  %v9450 = vadd.f32 %v5554, %v9449
  %v9451 = vpop.f32.mrf.mxu0
  %v9452 = vadd.f32 %v5559, %v9451
  %9453 = vmatmul.bf16.gmra.mxu0 %v8388
  %v9454 = vpop.f32.mrf.mxu0
  %v9455 = vadd.f32 %v5564, %v9454
  %v9456 = vpop.f32.mrf.mxu0
  %v9457 = vadd.f32 %v5569, %v9456
  %9458 = vmatmul.bf16.gmra.mxu0 %v8391
  %v9459 = vpop.f32.mrf.mxu0
  %v9460 = vadd.f32 %v5574, %v9459
  %v9461 = vpop.f32.mrf.mxu0
  %v9462 = vadd.f32 %v5579, %v9461
  %9463 = vmatmul.bf16.gmra.mxu0 %v8394
  %v9464 = vpop.f32.mrf.mxu0
  %v9465 = vadd.f32 %v5584, %v9464
  %v9466 = vpop.f32.mrf.mxu0
  %v9467 = vadd.f32 %v5589, %v9466
  %9468 = vmatmul.bf16.gmra.mxu0 %v8397
  %v9469 = vpop.f32.mrf.mxu0
  %v9470 = vadd.f32 %v5594, %v9469
  %v9471 = vpop.f32.mrf.mxu0
  %v9472 = vadd.f32 %v5599, %v9471
  %9473 = vmatmul.bf16.gmra.mxu0 %v8400
  %v9474 = vpop.f32.mrf.mxu0
  %v9475 = vadd.f32 %v5604, %v9474
  %v9476 = vpop.f32.mrf.mxu0
  %v9477 = vadd.f32 %v5609, %v9476
  %9478 = vmatmul.bf16.gmra.mxu0 %v8403
  %v9479 = vpop.f32.mrf.mxu0
  %v9480 = vadd.f32 %v5614, %v9479
  %v9481 = vpop.f32.mrf.mxu0
  %v9482 = vadd.f32 %v5619, %v9481
  %9483 = vmatmul.bf16.gmra.mxu0 %v8406
  %v9484 = vpop.f32.mrf.mxu0
  %v9485 = vadd.f32 %v5624, %v9484
  %v9486 = vpop.f32.mrf.mxu0
  %v9487 = vadd.f32 %v5629, %v9486
  %9488 = vmatmul.bf16.gmra.mxu0 %v8409
  %v9489 = vpop.f32.mrf.mxu0
  %v9490 = vadd.f32 %v5634, %v9489
  %v9491 = vpop.f32.mrf.mxu0
  %v9492 = vadd.f32 %v5639, %v9491
  %9493 = vmatmul.bf16.gmra.mxu0 %v8412
  %v9494 = vpop.f32.mrf.mxu0
  %v9495 = vadd.f32 %v5644, %v9494
  %v9496 = vpop.f32.mrf.mxu0
  %v9497 = vadd.f32 %v5649, %v9496
  %9498 = vmatmul.bf16.gmra.mxu0 %v8415
  %v9499 = vpop.f32.mrf.mxu0
  %v9500 = vadd.f32 %v5654, %v9499
  %v9501 = vpop.f32.mrf.mxu0
  %v9502 = vadd.f32 %v5659, %v9501
  %9503 = vmatmul.bf16.gmra.mxu0 %v8418
  %v9504 = vpop.f32.mrf.mxu0
  %v9505 = vadd.f32 %v5664, %v9504
  %v9506 = vpop.f32.mrf.mxu0
  %v9507 = vadd.f32 %v5669, %v9506
  %9508 = vmatmul.bf16.gmra.mxu0 %v8421
  %v9509 = vpop.f32.mrf.mxu0
  %v9510 = vadd.f32 %v5674, %v9509
  %v9511 = vpop.f32.mrf.mxu0
  %v9512 = vadd.f32 %v5679, %v9511
  %9513 = vmatmul.bf16.gmra.mxu0 %v8424
  %v9514 = vpop.f32.mrf.mxu0
  %v9515 = vadd.f32 %v5684, %v9514
  %v9516 = vpop.f32.mrf.mxu0
  %v9517 = vadd.f32 %v5689, %v9516
  %9518 = vmatmul.bf16.gmra.mxu0 %v8427
  %v9519 = vpop.f32.mrf.mxu0
  %v9520 = vadd.f32 %v5694, %v9519
  %v9521 = vpop.f32.mrf.mxu0
  %v9522 = vadd.f32 %v5699, %v9521
  %9523 = vmatmul.bf16.gmra.mxu0 %v8430
  %v9524 = vpop.f32.mrf.mxu0
  %v9525 = vadd.f32 %v5704, %v9524
  %v9526 = vpop.f32.mrf.mxu0
  %v9527 = vadd.f32 %v5709, %v9526
  %9528 = vmatmul.bf16.gmra.mxu0 %v8433
  %v9529 = vpop.f32.mrf.mxu0
  %v9530 = vadd.f32 %v5714, %v9529
  %v9531 = vpop.f32.mrf.mxu0
  %v9532 = vadd.f32 %v5719, %v9531
  %9533 = vmatmul.bf16.gmra.mxu0 %v8436
  %v9534 = vpop.f32.mrf.mxu0
  %v9535 = vadd.f32 %v5724, %v9534
  %v9536 = vpop.f32.mrf.mxu0
  %v9537 = vadd.f32 %v5729, %v9536
  %9538 = vmatmul.bf16.gmra.mxu0 %v8439
  %v9539 = vpop.f32.mrf.mxu0
  %v9540 = vadd.f32 %v5734, %v9539
  %v9541 = vpop.f32.mrf.mxu0
  %v9542 = vadd.f32 %v5739, %v9541
  %9543 = vmatmul.bf16.gmra.mxu0 %v8442
  %v9544 = vpop.f32.mrf.mxu0
  %v9545 = vadd.f32 %v5744, %v9544
  %v9546 = vpop.f32.mrf.mxu0
  %v9547 = vadd.f32 %v5749, %v9546
  %9548 = vmatmul.bf16.gmra.mxu0 %v8445
  %v9549 = vpop.f32.mrf.mxu0
  %v9550 = vadd.f32 %v5754, %v9549
  %v9551 = vpop.f32.mrf.mxu0
  %v9552 = vadd.f32 %v5759, %v9551
  %9553 = vmatmul.bf16.gmra.mxu0 %v8448
  %v9554 = vpop.f32.mrf.mxu0
  %v9555 = vadd.f32 %v5764, %v9554
  %v9556 = vpop.f32.mrf.mxu0
  %v9557 = vadd.f32 %v5769, %v9556
  %9558 = vmatmul.bf16.gmra.mxu0 %v8451
  %v9559 = vpop.f32.mrf.mxu0
  %v9560 = vadd.f32 %v5774, %v9559
  %v9561 = vpop.f32.mrf.mxu0
  %v9562 = vadd.f32 %v5779, %v9561
  %9563 = vmatmul.bf16.gmra.mxu0 %v8454
  %v9564 = vpop.f32.mrf.mxu0
  %v9565 = vadd.f32 %v5784, %v9564
  %v9566 = vpop.f32.mrf.mxu0
  %v9567 = vadd.f32 %v5789, %v9566
  %9568 = vmatmul.bf16.gmra.mxu0 %v8457
  %v9569 = vpop.f32.mrf.mxu0
  %v9570 = vadd.f32 %v5794, %v9569
  %v9571 = vpop.f32.mrf.mxu0
  %v9572 = vadd.f32 %v5799, %v9571
  %9573 = vmatmul.bf16.gmra.mxu0 %v8460
  %v9574 = vpop.f32.mrf.mxu0
  %v9575 = vadd.f32 %v5804, %v9574
  %v9576 = vpop.f32.mrf.mxu0
  %v9577 = vadd.f32 %v5809, %v9576
  %9578 = vmatmul.bf16.gmra.mxu0 %v8463
  %v9579 = vpop.f32.mrf.mxu0
  %v9580 = vadd.f32 %v5814, %v9579
  %v9581 = vpop.f32.mrf.mxu0
  %v9582 = vadd.f32 %v5819, %v9581
  %9583 = vmatmul.bf16.gmra.mxu0 %v8466
  %v9584 = vpop.f32.mrf.mxu0
  %v9585 = vadd.f32 %v5824, %v9584
  %v9586 = vpop.f32.mrf.mxu0
  %v9587 = vadd.f32 %v5829, %v9586
  %9588 = vmatmul.bf16.gmra.mxu0 %v8469
  %v9589 = vpop.f32.mrf.mxu0
  %v9590 = vadd.f32 %v5834, %v9589
  %v9591 = vpop.f32.mrf.mxu0
  %v9592 = vadd.f32 %v5839, %v9591
  %9593 = vmatmul.bf16.gmra.mxu0 %v8472
  %v9594 = vpop.f32.mrf.mxu0
  %v9595 = vadd.f32 %v5844, %v9594
  %v9596 = vpop.f32.mrf.mxu0
  %v9597 = vadd.f32 %v5849, %v9596
  %9598 = vmatmul.bf16.gmra.mxu0 %v8475
  %v9599 = vpop.f32.mrf.mxu0
  %v9600 = vadd.f32 %v5854, %v9599
  %v9601 = vpop.f32.mrf.mxu0
  %v9602 = vadd.f32 %v5859, %v9601
  %9603 = vmatmul.bf16.gmra.mxu0 %v8478
  %v9604 = vpop.f32.mrf.mxu0
  %v9605 = vadd.f32 %v5864, %v9604
  %v9606 = vpop.f32.mrf.mxu0
  %v9607 = vadd.f32 %v5869, %v9606
  %9608 = vmatmul.bf16.gmra.mxu0 %v8481
  %v9609 = vpop.f32.mrf.mxu0
  %v9610 = vadd.f32 %v5874, %v9609
  %v9611 = vpop.f32.mrf.mxu0
  %v9612 = vadd.f32 %v5879, %v9611
  %9613 = vmatmul.bf16.gmra.mxu0 %v8484
  %v9614 = vpop.f32.mrf.mxu0
  %v9615 = vadd.f32 %v5884, %v9614
  %v9616 = vpop.f32.mrf.mxu0
  %v9617 = vadd.f32 %v5889, %v9616
  %9618 = vmatmul.bf16.gmra.mxu0 %v8487
  %v9619 = vpop.f32.mrf.mxu0
  %v9620 = vadd.f32 %v5894, %v9619
  %v9621 = vpop.f32.mrf.mxu0
  %v9622 = vadd.f32 %v5899, %v9621
  %9623 = vmatmul.bf16.gmra.mxu0 %v8490
  %v9624 = vpop.f32.mrf.mxu0
  %v9625 = vadd.f32 %v5904, %v9624
  %v9626 = vpop.f32.mrf.mxu0
  %v9627 = vadd.f32 %v5909, %v9626
  %9628 = vmatmul.bf16.gmra.mxu0 %v8493
  %v9629 = vpop.f32.mrf.mxu0
  %v9630 = vadd.f32 %v5914, %v9629
  %v9631 = vpop.f32.mrf.mxu0
  %v9632 = vadd.f32 %v5919, %v9631
  %9633 = vmatmul.bf16.gmra.mxu0 %v8496
  %v9634 = vpop.f32.mrf.mxu0
  %v9635 = vadd.f32 %v5924, %v9634
  %v9636 = vpop.f32.mrf.mxu0
  %v9637 = vadd.f32 %v5929, %v9636
  %9638 = vmatmul.bf16.gmra.mxu0 %v8499
  %v9639 = vpop.f32.mrf.mxu0
  %v9640 = vadd.f32 %v5934, %v9639
  %v9641 = vpop.f32.mrf.mxu0
  %v9642 = vadd.f32 %v5939, %v9641
  %9643 = vmatmul.bf16.gmra.mxu0 %v8502
  %v9644 = vpop.f32.mrf.mxu0
  %v9645 = vadd.f32 %v5944, %v9644
  %v9646 = vpop.f32.mrf.mxu0
  %v9647 = vadd.f32 %v5949, %v9646
  %9648 = vmatmul.bf16.gmra.mxu0 %v8505
  %v9649 = vpop.f32.mrf.mxu0
  %v9650 = vadd.f32 %v5954, %v9649
  %v9651 = vpop.f32.mrf.mxu0
  %v9652 = vadd.f32 %v5959, %v9651
  %9653 = vmatmul.bf16.gmra.mxu0 %v8508
  %v9654 = vpop.f32.mrf.mxu0
  %v9655 = vadd.f32 %v5964, %v9654
  %v9656 = vpop.f32.mrf.mxu0
  %v9657 = vadd.f32 %v5969, %v9656
  %9658 = vmatmul.bf16.gmra.mxu0 %v8511
  %v9659 = vpop.f32.mrf.mxu0
  %v9660 = vadd.f32 %v5974, %v9659
  %v9661 = vpop.f32.mrf.mxu0
  %v9662 = vadd.f32 %v5979, %v9661
  %9663 = vmatmul.bf16.gmra.mxu0 %v8514
  %v9664 = vpop.f32.mrf.mxu0
  %v9665 = vadd.f32 %v5984, %v9664
  %v9666 = vpop.f32.mrf.mxu0
  %v9667 = vadd.f32 %v5989, %v9666
  %9668 = vmatmul.bf16.gmra.mxu0 %v8517
  %v9669 = vpop.f32.mrf.mxu0
  %v9670 = vadd.f32 %v5994, %v9669
  %v9671 = vpop.f32.mrf.mxu0
  %v9672 = vadd.f32 %v5999, %v9671
  %9673 = vmatmul.bf16.gmra.mxu0 %v8520
  %v9674 = vpop.f32.mrf.mxu0
  %v9675 = vadd.f32 %v6004, %v9674
  %v9676 = vpop.f32.mrf.mxu0
  %v9677 = vadd.f32 %v6009, %v9676
  %9678 = vmatmul.bf16.gmra.mxu0 %v8523
  %v9679 = vpop.f32.mrf.mxu0
  %v9680 = vadd.f32 %v6014, %v9679
  %v9681 = vpop.f32.mrf.mxu0
  %v9682 = vadd.f32 %v6019, %v9681
  %9683 = vmatmul.bf16.gmra.mxu0 %v8526
  %v9684 = vpop.f32.mrf.mxu0
  %v9685 = vadd.f32 %v6024, %v9684
  %v9686 = vpop.f32.mrf.mxu0
  %v9687 = vadd.f32 %v6029, %v9686
  %9688 = vmatmul.bf16.gmra.mxu0 %v8529
  %v9689 = vpop.f32.mrf.mxu0
  %v9690 = vadd.f32 %v6034, %v9689
  %v9691 = vpop.f32.mrf.mxu0
  %v9692 = vadd.f32 %v6039, %v9691
  %9693 = vmatmul.bf16.gmra.mxu0 %v8532
  %v9694 = vpop.f32.mrf.mxu0
  %v9695 = vadd.f32 %v6044, %v9694
  %v9696 = vpop.f32.mrf.mxu0
  %v9697 = vadd.f32 %v6049, %v9696
  %9698 = vmatmul.bf16.gmra.mxu0 %v8535
  %v9699 = vpop.f32.mrf.mxu0
  %v9700 = vadd.f32 %v6054, %v9699
  %v9701 = vpop.f32.mrf.mxu0
  %v9702 = vadd.f32 %v6059, %v9701
  %9703 = vmatmul.bf16.gmra.mxu0 %v8538
  %v9704 = vpop.f32.mrf.mxu0
  %v9705 = vadd.f32 %v6064, %v9704
  %v9706 = vpop.f32.mrf.mxu0
  %v9707 = vadd.f32 %v6069, %v9706
  %9708 = vmatmul.bf16.gmra.mxu0 %v8541
  %v9709 = vpop.f32.mrf.mxu0
  %v9710 = vadd.f32 %v6074, %v9709
  %v9711 = vpop.f32.mrf.mxu0
  %v9712 = vadd.f32 %v6079, %v9711
  %9713 = vmatmul.bf16.gmra.mxu0 %v8544
  %v9714 = vpop.f32.mrf.mxu0
  %v9715 = vadd.f32 %v6084, %v9714
  %v9716 = vpop.f32.mrf.mxu0
  %v9717 = vadd.f32 %v6089, %v9716
  %9718 = vmatmul.bf16.gmra.mxu0 %v8547
  %v9719 = vpop.f32.mrf.mxu0
  %v9720 = vadd.f32 %v6094, %v9719
  %v9721 = vpop.f32.mrf.mxu0
  %v9722 = vadd.f32 %v6099, %v9721
  %9723 = vmatmul.bf16.gmra.mxu0 %v8550
  %v9724 = vpop.f32.mrf.mxu0
  %v9725 = vadd.f32 %v6104, %v9724
  %v9726 = vpop.f32.mrf.mxu0
  %v9727 = vadd.f32 %v6109, %v9726
  %9728 = vmatmul.bf16.gmra.mxu0 %v8553
  %v9729 = vpop.f32.mrf.mxu0
  %v9730 = vadd.f32 %v6114, %v9729
  %v9731 = vpop.f32.mrf.mxu0
  %v9732 = vadd.f32 %v6119, %v9731
  %9733 = vmatmul.bf16.gmra.mxu0 %v8556
  %v9734 = vpop.f32.mrf.mxu0
  %v9735 = vadd.f32 %v6124, %v9734
  %v9736 = vpop.f32.mrf.mxu0
  %v9737 = vadd.f32 %v6129, %v9736
  %9738 = vmatmul.bf16.gmra.mxu0 %v8559
  %v9739 = vpop.f32.mrf.mxu0
  %v9740 = vadd.f32 %v6134, %v9739
  %v9741 = vpop.f32.mrf.mxu0
  %v9742 = vadd.f32 %v6139, %v9741
  %9743 = vmatmul.bf16.gmra.mxu0 %v8562
  %v9744 = vpop.f32.mrf.mxu0
  %v9745 = vadd.f32 %v6144, %v9744
  %v9746 = vpop.f32.mrf.mxu0
  %v9747 = vadd.f32 %v6149, %v9746
  %9748 = vmatmul.bf16.gmra.mxu0 %v8565
  %v9749 = vpop.f32.mrf.mxu0
  %v9750 = vadd.f32 %v6154, %v9749
  %v9751 = vpop.f32.mrf.mxu0
  %v9752 = vadd.f32 %v6159, %v9751
  %9753 = vmatmul.bf16.gmra.mxu0 %v8568
  %v9754 = vpop.f32.mrf.mxu0
  %v9755 = vadd.f32 %v6164, %v9754
  %v9756 = vpop.f32.mrf.mxu0
  %v9757 = vadd.f32 %v6169, %v9756
  %9758 = vmatmul.bf16.gmra.mxu0 %v8571
  %v9759 = vpop.f32.mrf.mxu0
  %v9760 = vadd.f32 %v6174, %v9759
  %v9761 = vpop.f32.mrf.mxu0
  %v9762 = vadd.f32 %v6179, %v9761
  %9763 = vmatmul.bf16.gmra.mxu0 %v8574
  %v9764 = vpop.f32.mrf.mxu0
  %v9765 = vadd.f32 %v6184, %v9764
  %v9766 = vpop.f32.mrf.mxu0
  %v9767 = vadd.f32 %v6189, %v9766
  %9768 = vmatmul.bf16.gmra.mxu0 %v8577
  %v9769 = vpop.f32.mrf.mxu0
  %v9770 = vadd.f32 %v6194, %v9769
  %v9771 = vpop.f32.mrf.mxu0
  %v9772 = vadd.f32 %v6199, %v9771
  %9773 = vmatmul.bf16.gmra.mxu0 %v8580
  %v9774 = vpop.f32.mrf.mxu0
  %v9775 = vadd.f32 %v6204, %v9774
  %v9776 = vpop.f32.mrf.mxu0
  %v9777 = vadd.f32 %v6209, %v9776
  %9778 = vmatmul.bf16.gmra.mxu0 %v8583
  %v9779 = vpop.f32.mrf.mxu0
  %v9780 = vadd.f32 %v6214, %v9779
  %v9781 = vpop.f32.mrf.mxu0
  %v9782 = vadd.f32 %v6219, %v9781
  %9783 = vmatmul.bf16.gmra.mxu0 %v8586
  %v9784 = vpop.f32.mrf.mxu0
  %v9785 = vadd.f32 %v6224, %v9784
  %v9786 = vpop.f32.mrf.mxu0
  %v9787 = vadd.f32 %v6229, %v9786
  %9788 = vmatmul.bf16.gmra.mxu0 %v8589
  %v9789 = vpop.f32.mrf.mxu0
  %v9790 = vadd.f32 %v6234, %v9789
  %v9791 = vpop.f32.mrf.mxu0
  %v9792 = vadd.f32 %v6239, %v9791
  %9793 = vmatmul.bf16.gmra.mxu0 %v8592
  %v9794 = vpop.f32.mrf.mxu0
  %v9795 = vadd.f32 %v6244, %v9794
  %v9796 = vpop.f32.mrf.mxu0
  %v9797 = vadd.f32 %v6249, %v9796
  %9798 = vmatmul.bf16.gmra.mxu0 %v8595
  %v9799 = vpop.f32.mrf.mxu0
  %v9800 = vadd.f32 %v6254, %v9799
  %v9801 = vpop.f32.mrf.mxu0
  %v9802 = vadd.f32 %v6259, %v9801
  %9803 = vmatmul.bf16.gmra.mxu0 %v8598
  %v9804 = vpop.f32.mrf.mxu0
  %v9805 = vadd.f32 %v6264, %v9804
  %v9806 = vpop.f32.mrf.mxu0
  %v9807 = vadd.f32 %v6269, %v9806
  %9808 = vmatmul.bf16.gmra.mxu0 %v8601
  %v9809 = vpop.f32.mrf.mxu0
  %v9810 = vadd.f32 %v6274, %v9809
  %v9811 = vpop.f32.mrf.mxu0
  %v9812 = vadd.f32 %v6279, %v9811
  %9813 = vmatmul.bf16.gmra.mxu0 %v8604
  %v9814 = vpop.f32.mrf.mxu0
  %v9815 = vadd.f32 %v6284, %v9814
  %v9816 = vpop.f32.mrf.mxu0
  %v9817 = vadd.f32 %v6289, %v9816
  %9818 = vmatmul.bf16.gmra.mxu0 %v8607
  %v9819 = vpop.f32.mrf.mxu0
  %v9820 = vadd.f32 %v6294, %v9819
  %v9821 = vpop.f32.mrf.mxu0
  %v9822 = vadd.f32 %v6299, %v9821
  %9823 = vmatmul.bf16.gmra.mxu0 %v8610
  %v9824 = vpop.f32.mrf.mxu0
  %v9825 = vadd.f32 %v6304, %v9824
  %v9826 = vpop.f32.mrf.mxu0
  %v9827 = vadd.f32 %v6309, %v9826
  %9828 = vmatmul.bf16.gmra.mxu0 %v8613
  %v9829 = vpop.f32.mrf.mxu0
  %v9830 = vadd.f32 %v6314, %v9829
  %v9831 = vpop.f32.mrf.mxu0
  %v9832 = vadd.f32 %v6319, %v9831
  %9833 = vmatmul.bf16.gmra.mxu0 %v8616
  %v9834 = vpop.f32.mrf.mxu0
  %v9835 = vadd.f32 %v6324, %v9834
  %v9836 = vpop.f32.mrf.mxu0
  %v9837 = vadd.f32 %v6329, %v9836
  %9838 = vmatmul.bf16.gmra.mxu0 %v8619
  %v9839 = vpop.f32.mrf.mxu0
  %v9840 = vadd.f32 %v6334, %v9839
  %v9841 = vpop.f32.mrf.mxu0
  %v9842 = vadd.f32 %v6339, %v9841
  %9843 = vmatmul.bf16.gmra.mxu0 %v8622
  %v9844 = vpop.f32.mrf.mxu0
  %v9845 = vadd.f32 %v6344, %v9844
  %v9846 = vpop.f32.mrf.mxu0
  %v9847 = vadd.f32 %v6349, %v9846
  %9848 = vmatmul.bf16.gmra.mxu0 %v8625
  %v9849 = vpop.f32.mrf.mxu0
  %v9850 = vadd.f32 %v6354, %v9849
  %v9851 = vpop.f32.mrf.mxu0
  %v9852 = vadd.f32 %v6359, %v9851
  %9853 = vmatmul.bf16.gmra.mxu0 %v8628
  %v9854 = vpop.f32.mrf.mxu0
  %v9855 = vadd.f32 %v6364, %v9854
  %v9856 = vpop.f32.mrf.mxu0
  %v9857 = vadd.f32 %v6369, %v9856
  %9858 = vmatmul.bf16.gmra.mxu0 %v8631
  %v9859 = vpop.f32.mrf.mxu0
  %v9860 = vadd.f32 %v6374, %v9859
  %v9861 = vpop.f32.mrf.mxu0
  %v9862 = vadd.f32 %v6379, %v9861
  %9863 = vmatmul.bf16.gmra.mxu0 %v8634
  %v9864 = vpop.f32.mrf.mxu0
  %v9865 = vadd.f32 %v6384, %v9864
  %v9866 = vpop.f32.mrf.mxu0
  %v9867 = vadd.f32 %v6389, %v9866
  %9868 = vmatmul.bf16.gmra.mxu0 %v8637
  %v9869 = vpop.f32.mrf.mxu0
  %v9870 = vadd.f32 %v6394, %v9869
  %v9871 = vpop.f32.mrf.mxu0
  %v9872 = vadd.f32 %v6399, %v9871
  %9873 = vmatmul.bf16.gmra.mxu0 %v8640
  %v9874 = vpop.f32.mrf.mxu0
  %v9875 = vadd.f32 %v6404, %v9874
  %v9876 = vpop.f32.mrf.mxu0
  %v9877 = vadd.f32 %v6409, %v9876
  %9878 = vmatmul.bf16.gmra.mxu0 %v8643
  %v9879 = vpop.f32.mrf.mxu0
  %v9880 = vadd.f32 %v6414, %v9879
  %v9881 = vpop.f32.mrf.mxu0
  %v9882 = vadd.f32 %v6419, %v9881
  %9883 = vmatmul.bf16.gmra.mxu0 %v8646
  %v9884 = vpop.f32.mrf.mxu0
  %v9885 = vadd.f32 %v6424, %v9884
  %v9886 = vpop.f32.mrf.mxu0
  %v9887 = vadd.f32 %v6429, %v9886
  %9888 = vmatmul.bf16.gmra.mxu0 %v8649
  %v9889 = vpop.f32.mrf.mxu0
  %v9890 = vadd.f32 %v6434, %v9889
  %v9891 = vpop.f32.mrf.mxu0
  %v9892 = vadd.f32 %v6439, %v9891
  %9893 = vmatmul.bf16.gmra.mxu0 %v8652
  %v9894 = vpop.f32.mrf.mxu0
  %v9895 = vadd.f32 %v6444, %v9894
  %v9896 = vpop.f32.mrf.mxu0
  %v9897 = vadd.f32 %v6449, %v9896
  %9898 = vmatmul.bf16.gmra.mxu0 %v8655
  %v9899 = vpop.f32.mrf.mxu0
  %v9900 = vadd.f32 %v6454, %v9899
  %v9901 = vpop.f32.mrf.mxu0
  %v9902 = vadd.f32 %v6459, %v9901
  %9903 = vmatmul.bf16.gmra.mxu0 %v8658
  %v9904 = vpop.f32.mrf.mxu0
  %v9905 = vadd.f32 %v6464, %v9904
  %v9906 = vpop.f32.mrf.mxu0
  %v9907 = vadd.f32 %v6469, %v9906
  %9908 = vmatmul.bf16.gmra.mxu0 %v8661
  %v9909 = vpop.f32.mrf.mxu0
  %v9910 = vadd.f32 %v6474, %v9909
  %v9911 = vpop.f32.mrf.mxu0
  %v9912 = vadd.f32 %v6479, %v9911
  %9913 = vmatmul.bf16.gmra.mxu0 %v8664
  %v9914 = vpop.f32.mrf.mxu0
  %v9915 = vadd.f32 %v6484, %v9914
  %v9916 = vpop.f32.mrf.mxu0
  %v9917 = vadd.f32 %v6489, %v9916
  %9918 = vmatmul.bf16.gmra.mxu0 %v8667
  %v9919 = vpop.f32.mrf.mxu0
  %v9920 = vadd.f32 %v6494, %v9919
  %v9921 = vpop.f32.mrf.mxu0
  %v9922 = vadd.f32 %v6499, %v9921
  %9923 = vmatmul.bf16.gmra.mxu0 %v8670
  %v9924 = vpop.f32.mrf.mxu0
  %v9925 = vadd.f32 %v6504, %v9924
  %v9926 = vpop.f32.mrf.mxu0
  %v9927 = vadd.f32 %v6509, %v9926
  %9928 = vmatmul.bf16.gmra.mxu0 %v8673
  %v9929 = vpop.f32.mrf.mxu0
  %v9930 = vadd.f32 %v6514, %v9929
  %v9931 = vpop.f32.mrf.mxu0
  %v9932 = vadd.f32 %v6519, %v9931
  %9933 = vmatmul.bf16.gmra.mxu0 %v8676
  %v9934 = vpop.f32.mrf.mxu0
  %v9935 = vadd.f32 %v6524, %v9934
  %v9936 = vpop.f32.mrf.mxu0
  %v9937 = vadd.f32 %v6529, %v9936
  %9938 = vmatmul.bf16.gmra.mxu0 %v8679
  %v9939 = vpop.f32.mrf.mxu0
  %v9940 = vadd.f32 %v6534, %v9939
  %v9941 = vpop.f32.mrf.mxu0
  %v9942 = vadd.f32 %v6539, %v9941
  %9943 = vmatmul.bf16.gmra.mxu0 %v8682
  %v9944 = vpop.f32.mrf.mxu0
  %v9945 = vadd.f32 %v6544, %v9944
  %v9946 = vpop.f32.mrf.mxu0
  %v9947 = vadd.f32 %v6549, %v9946
  %9948 = vmatmul.bf16.gmra.mxu0 %v8685
  %v9949 = vpop.f32.mrf.mxu0
  %v9950 = vadd.f32 %v6554, %v9949
  %v9951 = vpop.f32.mrf.mxu0
  %v9952 = vadd.f32 %v6559, %v9951
  %9953 = vmatmul.bf16.gmra.mxu0 %v8688
  %v9954 = vpop.f32.mrf.mxu0
  %v9955 = vadd.f32 %v6564, %v9954
  %v9956 = vpop.f32.mrf.mxu0
  %v9957 = vadd.f32 %v6569, %v9956
  %9958 = vmatmul.bf16.gmra.mxu0 %v8691
  %v9959 = vpop.f32.mrf.mxu0
  %v9960 = vadd.f32 %v6574, %v9959
  %v9961 = vpop.f32.mrf.mxu0
  %v9962 = vadd.f32 %v6579, %v9961
  %9963 = vmatmul.bf16.gmra.mxu0 %v8694
  %v9964 = vpop.f32.mrf.mxu0
  %v9965 = vadd.f32 %v6584, %v9964
  %v9966 = vpop.f32.mrf.mxu0
  %v9967 = vadd.f32 %v6589, %v9966
  %9968 = vmatmul.bf16.gmra.mxu0 %v8697
  %v9969 = vpop.f32.mrf.mxu0
  %v9970 = vadd.f32 %v6594, %v9969
  %v9971 = vpop.f32.mrf.mxu0
  %v9972 = vadd.f32 %v6599, %v9971
  %9973 = vmatmul.bf16.gmra.mxu0 %v8700
  %v9974 = vpop.f32.mrf.mxu0
  %v9975 = vadd.f32 %v6604, %v9974
  %v9976 = vpop.f32.mrf.mxu0
  %v9977 = vadd.f32 %v6609, %v9976
  %9978 = vmatmul.bf16.gmra.mxu0 %v8703
  %v9979 = vpop.f32.mrf.mxu0
  %v9980 = vadd.f32 %v6614, %v9979
  %v9981 = vpop.f32.mrf.mxu0
  %v9982 = vadd.f32 %v6619, %v9981
  %9983 = vmatmul.bf16.gmra.mxu0 %v8706
  %v9984 = vpop.f32.mrf.mxu0
  %v9985 = vadd.f32 %v6624, %v9984
  %v9986 = vpop.f32.mrf.mxu0
  %v9987 = vadd.f32 %v6629, %v9986
  %9988 = vmatmul.bf16.gmra.mxu0 %v8709
  %v9989 = vpop.f32.mrf.mxu0
  %v9990 = vadd.f32 %v6634, %v9989
  %v9991 = vpop.f32.mrf.mxu0
  %v9992 = vadd.f32 %v6639, %v9991
  %9993 = vmatmul.bf16.gmra.mxu0 %v8712
  %v9994 = vpop.f32.mrf.mxu0
  %v9995 = vadd.f32 %v6644, %v9994
  %v9996 = vpop.f32.mrf.mxu0
  %v9997 = vadd.f32 %v6649, %v9996
  %9998 = vmatmul.bf16.gmra.mxu0 %v8715
  %v9999 = vpop.f32.mrf.mxu0
  %v10000 = vadd.f32 %v6654, %v9999
  %v10001 = vpop.f32.mrf.mxu0
  %v10002 = vadd.f32 %v6659, %v10001
  %10003 = vmatmul.bf16.gmra.mxu0 %v8718
  %v10004 = vpop.f32.mrf.mxu0
  %v10005 = vadd.f32 %v6664, %v10004
  %v10006 = vpop.f32.mrf.mxu0
  %v10007 = vadd.f32 %v6669, %v10006
  %10008 = vdwg.mxu0
  %v10009 = vpack.c.bf16 %v8730, %v8730
  %v10010 = vpack.c.bf16 %v8732, %v8732
  %v10011 = vpack.c.bf16 %v8735, %v8735
  %v10012 = vpack.c.bf16 %v8737, %v8737
  %v10013 = vpack.c.bf16 %v8740, %v8740
  %v10014 = vpack.c.bf16 %v8742, %v8742
  %v10015 = vpack.c.bf16 %v8745, %v8745
  %v10016 = vpack.c.bf16 %v8747, %v8747
  %v10017 = vpack.c.bf16 %v8750, %v8750
  %v10018 = vpack.c.bf16 %v8752, %v8752
  %v10019 = vpack.c.bf16 %v8755, %v8755
  %v10020 = vpack.c.bf16 %v8757, %v8757
  %v10021 = vpack.c.bf16 %v8760, %v8760
  %v10022 = vpack.c.bf16 %v8762, %v8762
  %v10023 = vpack.c.bf16 %v8765, %v8765
  %v10024 = vpack.c.bf16 %v8767, %v8767
  %v10025 = vpack.c.bf16 %v8770, %v8770
  %v10026 = vpack.c.bf16 %v8772, %v8772
  %v10027 = vpack.c.bf16 %v8775, %v8775
  %v10028 = vpack.c.bf16 %v8777, %v8777
  %v10029 = vpack.c.bf16 %v8780, %v8780
  %v10030 = vpack.c.bf16 %v8782, %v8782
  %v10031 = vpack.c.bf16 %v8785, %v8785
  %v10032 = vpack.c.bf16 %v8787, %v8787
  %v10033 = vpack.c.bf16 %v8790, %v8790
  %v10034 = vpack.c.bf16 %v8792, %v8792
  %v10035 = vpack.c.bf16 %v8795, %v8795
  %v10036 = vpack.c.bf16 %v8797, %v8797
  %v10037 = vpack.c.bf16 %v8800, %v8800
  %v10038 = vpack.c.bf16 %v8802, %v8802
  %v10039 = vpack.c.bf16 %v8805, %v8805
  %v10040 = vpack.c.bf16 %v8807, %v8807
  %v10041 = vpack.c.bf16 %v8810, %v8810
  %v10042 = vpack.c.bf16 %v8812, %v8812
  %v10043 = vpack.c.bf16 %v8815, %v8815
  %v10044 = vpack.c.bf16 %v8817, %v8817
  %v10045 = vpack.c.bf16 %v8820, %v8820
  %v10046 = vpack.c.bf16 %v8822, %v8822
  %v10047 = vpack.c.bf16 %v8825, %v8825
  %v10048 = vpack.c.bf16 %v8827, %v8827
  %v10049 = vpack.c.bf16 %v8830, %v8830
  %v10050 = vpack.c.bf16 %v8832, %v8832
  %v10051 = vpack.c.bf16 %v8835, %v8835
  %v10052 = vpack.c.bf16 %v8837, %v8837
  %v10053 = vpack.c.bf16 %v8840, %v8840
  %v10054 = vpack.c.bf16 %v8842, %v8842
  %v10055 = vpack.c.bf16 %v8845, %v8845
  %v10056 = vpack.c.bf16 %v8847, %v8847
  %v10057 = vpack.c.bf16 %v8850, %v8850
  %v10058 = vpack.c.bf16 %v8852, %v8852
  %v10059 = vpack.c.bf16 %v8855, %v8855
  %v10060 = vpack.c.bf16 %v8857, %v8857
  %v10061 = vpack.c.bf16 %v8860, %v8860
  %v10062 = vpack.c.bf16 %v8862, %v8862
  %v10063 = vpack.c.bf16 %v8865, %v8865
  %v10064 = vpack.c.bf16 %v8867, %v8867
  %v10065 = vpack.c.bf16 %v8870, %v8870
  %v10066 = vpack.c.bf16 %v8872, %v8872
  %v10067 = vpack.c.bf16 %v8875, %v8875
  %v10068 = vpack.c.bf16 %v8877, %v8877
  %v10069 = vpack.c.bf16 %v8880, %v8880
  %v10070 = vpack.c.bf16 %v8882, %v8882
  %v10071 = vpack.c.bf16 %v8885, %v8885
  %v10072 = vpack.c.bf16 %v8887, %v8887
  %v10073 = vpack.c.bf16 %v8890, %v8890
  %v10074 = vpack.c.bf16 %v8892, %v8892
  %v10075 = vpack.c.bf16 %v8895, %v8895
  %v10076 = vpack.c.bf16 %v8897, %v8897
  %v10077 = vpack.c.bf16 %v8900, %v8900
  %v10078 = vpack.c.bf16 %v8902, %v8902
  %v10079 = vpack.c.bf16 %v8905, %v8905
  %v10080 = vpack.c.bf16 %v8907, %v8907
  %v10081 = vpack.c.bf16 %v8910, %v8910
  %v10082 = vpack.c.bf16 %v8912, %v8912
  %v10083 = vpack.c.bf16 %v8915, %v8915
  %v10084 = vpack.c.bf16 %v8917, %v8917
  %v10085 = vpack.c.bf16 %v8920, %v8920
  %v10086 = vpack.c.bf16 %v8922, %v8922
  %v10087 = vpack.c.bf16 %v8925, %v8925
  %v10088 = vpack.c.bf16 %v8927, %v8927
  %v10089 = vpack.c.bf16 %v8930, %v8930
  %v10090 = vpack.c.bf16 %v8932, %v8932
  %v10091 = vpack.c.bf16 %v8935, %v8935
  %v10092 = vpack.c.bf16 %v8937, %v8937
  %v10093 = vpack.c.bf16 %v8940, %v8940
  %v10094 = vpack.c.bf16 %v8942, %v8942
  %v10095 = vpack.c.bf16 %v8945, %v8945
  %v10096 = vpack.c.bf16 %v8947, %v8947
  %v10097 = vpack.c.bf16 %v8950, %v8950
  %v10098 = vpack.c.bf16 %v8952, %v8952
  %v10099 = vpack.c.bf16 %v8955, %v8955
  %v10100 = vpack.c.bf16 %v8957, %v8957
  %v10101 = vpack.c.bf16 %v8960, %v8960
  %v10102 = vpack.c.bf16 %v8962, %v8962
  %v10103 = vpack.c.bf16 %v8965, %v8965
  %v10104 = vpack.c.bf16 %v8967, %v8967
  %v10105 = vpack.c.bf16 %v8970, %v8970
  %v10106 = vpack.c.bf16 %v8972, %v8972
  %v10107 = vpack.c.bf16 %v8975, %v8975
  %v10108 = vpack.c.bf16 %v8977, %v8977
  %v10109 = vpack.c.bf16 %v8980, %v8980
  %v10110 = vpack.c.bf16 %v8982, %v8982
  %v10111 = vpack.c.bf16 %v8985, %v8985
  %v10112 = vpack.c.bf16 %v8987, %v8987
  %v10113 = vpack.c.bf16 %v8990, %v8990
  %v10114 = vpack.c.bf16 %v8992, %v8992
  %v10115 = vpack.c.bf16 %v8995, %v8995
  %v10116 = vpack.c.bf16 %v8997, %v8997
  %v10117 = vpack.c.bf16 %v9000, %v9000
  %v10118 = vpack.c.bf16 %v9002, %v9002
  %v10119 = vpack.c.bf16 %v9005, %v9005
  %v10120 = vpack.c.bf16 %v9007, %v9007
  %v10121 = vpack.c.bf16 %v9010, %v9010
  %v10122 = vpack.c.bf16 %v9012, %v9012
  %v10123 = vpack.c.bf16 %v9015, %v9015
  %v10124 = vpack.c.bf16 %v9017, %v9017
  %v10125 = vpack.c.bf16 %v9020, %v9020
  %v10126 = vpack.c.bf16 %v9022, %v9022
  %v10127 = vpack.c.bf16 %v9025, %v9025
  %v10128 = vpack.c.bf16 %v9027, %v9027
  %v10129 = vpack.c.bf16 %v9030, %v9030
  %v10130 = vpack.c.bf16 %v9032, %v9032
  %v10131 = vpack.c.bf16 %v9035, %v9035
  %v10132 = vpack.c.bf16 %v9037, %v9037
  %v10133 = vpack.c.bf16 %v9040, %v9040
  %v10134 = vpack.c.bf16 %v9042, %v9042
  %v10135 = vpack.c.bf16 %v9045, %v9045
  %v10136 = vpack.c.bf16 %v9047, %v9047
  %v10137 = vpack.c.bf16 %v9050, %v9050
  %v10138 = vpack.c.bf16 %v9052, %v9052
  %v10139 = vpack.c.bf16 %v9055, %v9055
  %v10140 = vpack.c.bf16 %v9057, %v9057
  %v10141 = vpack.c.bf16 %v9060, %v9060
  %v10142 = vpack.c.bf16 %v9062, %v9062
  %v10143 = vpack.c.bf16 %v9065, %v9065
  %v10144 = vpack.c.bf16 %v9067, %v9067
  %v10145 = vpack.c.bf16 %v9070, %v9070
  %v10146 = vpack.c.bf16 %v9072, %v9072
  %v10147 = vpack.c.bf16 %v9075, %v9075
  %v10148 = vpack.c.bf16 %v9077, %v9077
  %v10149 = vpack.c.bf16 %v9080, %v9080
  %v10150 = vpack.c.bf16 %v9082, %v9082
  %v10151 = vpack.c.bf16 %v9085, %v9085
  %v10152 = vpack.c.bf16 %v9087, %v9087
  %v10153 = vpack.c.bf16 %v9090, %v9090
  %v10154 = vpack.c.bf16 %v9092, %v9092
  %v10155 = vpack.c.bf16 %v9095, %v9095
  %v10156 = vpack.c.bf16 %v9097, %v9097
  %v10157 = vpack.c.bf16 %v9100, %v9100
  %v10158 = vpack.c.bf16 %v9102, %v9102
  %v10159 = vpack.c.bf16 %v9105, %v9105
  %v10160 = vpack.c.bf16 %v9107, %v9107
  %v10161 = vpack.c.bf16 %v9110, %v9110
  %v10162 = vpack.c.bf16 %v9112, %v9112
  %v10163 = vpack.c.bf16 %v9115, %v9115
  %v10164 = vpack.c.bf16 %v9117, %v9117
  %v10165 = vpack.c.bf16 %v9120, %v9120
  %v10166 = vpack.c.bf16 %v9122, %v9122
  %v10167 = vpack.c.bf16 %v9125, %v9125
  %v10168 = vpack.c.bf16 %v9127, %v9127
  %v10169 = vpack.c.bf16 %v9130, %v9130
  %v10170 = vpack.c.bf16 %v9132, %v9132
  %v10171 = vpack.c.bf16 %v9135, %v9135
  %v10172 = vpack.c.bf16 %v9137, %v9137
  %v10173 = vpack.c.bf16 %v9140, %v9140
  %v10174 = vpack.c.bf16 %v9142, %v9142
  %v10175 = vpack.c.bf16 %v9145, %v9145
  %v10176 = vpack.c.bf16 %v9147, %v9147
  %v10177 = vpack.c.bf16 %v9150, %v9150
  %v10178 = vpack.c.bf16 %v9152, %v9152
  %v10179 = vpack.c.bf16 %v9155, %v9155
  %v10180 = vpack.c.bf16 %v9157, %v9157
  %v10181 = vpack.c.bf16 %v9160, %v9160
  %v10182 = vpack.c.bf16 %v9162, %v9162
  %v10183 = vpack.c.bf16 %v9165, %v9165
  %v10184 = vpack.c.bf16 %v9167, %v9167
  %v10185 = vpack.c.bf16 %v9170, %v9170
  %v10186 = vpack.c.bf16 %v9172, %v9172
  %v10187 = vpack.c.bf16 %v9175, %v9175
  %v10188 = vpack.c.bf16 %v9177, %v9177
  %v10189 = vpack.c.bf16 %v9180, %v9180
  %v10190 = vpack.c.bf16 %v9182, %v9182
  %v10191 = vpack.c.bf16 %v9185, %v9185
  %v10192 = vpack.c.bf16 %v9187, %v9187
  %v10193 = vpack.c.bf16 %v9190, %v9190
  %v10194 = vpack.c.bf16 %v9192, %v9192
  %v10195 = vpack.c.bf16 %v9195, %v9195
  %v10196 = vpack.c.bf16 %v9197, %v9197
  %v10197 = vpack.c.bf16 %v9200, %v9200
  %v10198 = vpack.c.bf16 %v9202, %v9202
  %v10199 = vpack.c.bf16 %v9205, %v9205
  %v10200 = vpack.c.bf16 %v9207, %v9207
  %v10201 = vpack.c.bf16 %v9210, %v9210
  %v10202 = vpack.c.bf16 %v9212, %v9212
  %v10203 = vpack.c.bf16 %v9215, %v9215
  %v10204 = vpack.c.bf16 %v9217, %v9217
  %v10205 = vpack.c.bf16 %v9220, %v9220
  %v10206 = vpack.c.bf16 %v9222, %v9222
  %v10207 = vpack.c.bf16 %v9225, %v9225
  %v10208 = vpack.c.bf16 %v9227, %v9227
  %v10209 = vpack.c.bf16 %v9230, %v9230
  %v10210 = vpack.c.bf16 %v9232, %v9232
  %v10211 = vpack.c.bf16 %v9235, %v9235
  %v10212 = vpack.c.bf16 %v9237, %v9237
  %v10213 = vpack.c.bf16 %v9240, %v9240
  %v10214 = vpack.c.bf16 %v9242, %v9242
  %v10215 = vpack.c.bf16 %v9245, %v9245
  %v10216 = vpack.c.bf16 %v9247, %v9247
  %v10217 = vpack.c.bf16 %v9250, %v9250
  %v10218 = vpack.c.bf16 %v9252, %v9252
  %v10219 = vpack.c.bf16 %v9255, %v9255
  %v10220 = vpack.c.bf16 %v9257, %v9257
  %v10221 = vpack.c.bf16 %v9260, %v9260
  %v10222 = vpack.c.bf16 %v9262, %v9262
  %v10223 = vpack.c.bf16 %v9265, %v9265
  %v10224 = vpack.c.bf16 %v9267, %v9267
  %v10225 = vpack.c.bf16 %v9270, %v9270
  %v10226 = vpack.c.bf16 %v9272, %v9272
  %v10227 = vpack.c.bf16 %v9275, %v9275
  %v10228 = vpack.c.bf16 %v9277, %v9277
  %v10229 = vpack.c.bf16 %v9280, %v9280
  %v10230 = vpack.c.bf16 %v9282, %v9282
  %v10231 = vpack.c.bf16 %v9285, %v9285
  %v10232 = vpack.c.bf16 %v9287, %v9287
  %v10233 = vpack.c.bf16 %v9290, %v9290
  %v10234 = vpack.c.bf16 %v9292, %v9292
  %v10235 = vpack.c.bf16 %v9295, %v9295
  %v10236 = vpack.c.bf16 %v9297, %v9297
  %v10237 = vpack.c.bf16 %v9300, %v9300
  %v10238 = vpack.c.bf16 %v9302, %v9302
  %v10239 = vpack.c.bf16 %v9305, %v9305
  %v10240 = vpack.c.bf16 %v9307, %v9307
  %v10241 = vpack.c.bf16 %v9310, %v9310
  %v10242 = vpack.c.bf16 %v9312, %v9312
  %v10243 = vpack.c.bf16 %v9315, %v9315
  %v10244 = vpack.c.bf16 %v9317, %v9317
  %v10245 = vpack.c.bf16 %v9320, %v9320
  %v10246 = vpack.c.bf16 %v9322, %v9322
  %v10247 = vpack.c.bf16 %v9325, %v9325
  %v10248 = vpack.c.bf16 %v9327, %v9327
  %v10249 = vpack.c.bf16 %v9330, %v9330
  %v10250 = vpack.c.bf16 %v9332, %v9332
  %v10251 = vpack.c.bf16 %v9335, %v9335
  %v10252 = vpack.c.bf16 %v9337, %v9337
  %v10253 = vpack.c.bf16 %v9340, %v9340
  %v10254 = vpack.c.bf16 %v9342, %v9342
  %v10255 = vpack.c.bf16 %v9345, %v9345
  %v10256 = vpack.c.bf16 %v9347, %v9347
  %v10257 = vpack.c.bf16 %v9350, %v9350
  %v10258 = vpack.c.bf16 %v9352, %v9352
  %v10259 = vpack.c.bf16 %v9355, %v9355
  %v10260 = vpack.c.bf16 %v9357, %v9357
  %v10261 = vpack.c.bf16 %v9360, %v9360
  %v10262 = vpack.c.bf16 %v9362, %v9362
  %v10263 = vpack.c.bf16 %v9365, %v9365
  %v10264 = vpack.c.bf16 %v9367, %v9367
  %v10265 = vpack.c.bf16 %v9370, %v9370
  %v10266 = vpack.c.bf16 %v9372, %v9372
  %v10267 = vpack.c.bf16 %v9375, %v9375
  %v10268 = vpack.c.bf16 %v9377, %v9377
  %v10269 = vpack.c.bf16 %v9380, %v9380
  %v10270 = vpack.c.bf16 %v9382, %v9382
  %v10271 = vpack.c.bf16 %v9385, %v9385
  %v10272 = vpack.c.bf16 %v9387, %v9387
  %v10273 = vpack.c.bf16 %v9390, %v9390
  %v10274 = vpack.c.bf16 %v9392, %v9392
  %v10275 = vpack.c.bf16 %v9395, %v9395
  %v10276 = vpack.c.bf16 %v9397, %v9397
  %v10277 = vpack.c.bf16 %v9400, %v9400
  %v10278 = vpack.c.bf16 %v9402, %v9402
  %v10279 = vpack.c.bf16 %v9405, %v9405
  %v10280 = vpack.c.bf16 %v9407, %v9407
  %v10281 = vpack.c.bf16 %v9410, %v9410
  %v10282 = vpack.c.bf16 %v9412, %v9412
  %v10283 = vpack.c.bf16 %v9415, %v9415
  %v10284 = vpack.c.bf16 %v9417, %v9417
  %v10285 = vpack.c.bf16 %v9420, %v9420
  %v10286 = vpack.c.bf16 %v9422, %v9422
  %v10287 = vpack.c.bf16 %v9425, %v9425
  %v10288 = vpack.c.bf16 %v9427, %v9427
  %v10289 = vpack.c.bf16 %v9430, %v9430
  %v10290 = vpack.c.bf16 %v9432, %v9432
  %v10291 = vpack.c.bf16 %v9435, %v9435
  %v10292 = vpack.c.bf16 %v9437, %v9437
  %v10293 = vpack.c.bf16 %v9440, %v9440
  %v10294 = vpack.c.bf16 %v9442, %v9442
  %v10295 = vpack.c.bf16 %v9445, %v9445
  %v10296 = vpack.c.bf16 %v9447, %v9447
  %v10297 = vpack.c.bf16 %v9450, %v9450
  %v10298 = vpack.c.bf16 %v9452, %v9452
  %v10299 = vpack.c.bf16 %v9455, %v9455
  %v10300 = vpack.c.bf16 %v9457, %v9457
  %v10301 = vpack.c.bf16 %v9460, %v9460
  %v10302 = vpack.c.bf16 %v9462, %v9462
  %v10303 = vpack.c.bf16 %v9465, %v9465
  %v10304 = vpack.c.bf16 %v9467, %v9467
  %v10305 = vpack.c.bf16 %v9470, %v9470
  %v10306 = vpack.c.bf16 %v9472, %v9472
  %v10307 = vpack.c.bf16 %v9475, %v9475
  %v10308 = vpack.c.bf16 %v9477, %v9477
  %v10309 = vpack.c.bf16 %v9480, %v9480
  %v10310 = vpack.c.bf16 %v9482, %v9482
  %v10311 = vpack.c.bf16 %v9485, %v9485
  %v10312 = vpack.c.bf16 %v9487, %v9487
  %v10313 = vpack.c.bf16 %v9490, %v9490
  %v10314 = vpack.c.bf16 %v9492, %v9492
  %v10315 = vpack.c.bf16 %v9495, %v9495
  %v10316 = vpack.c.bf16 %v9497, %v9497
  %v10317 = vpack.c.bf16 %v9500, %v9500
  %v10318 = vpack.c.bf16 %v9502, %v9502
  %v10319 = vpack.c.bf16 %v9505, %v9505
  %v10320 = vpack.c.bf16 %v9507, %v9507
  %v10321 = vpack.c.bf16 %v9510, %v9510
  %v10322 = vpack.c.bf16 %v9512, %v9512
  %v10323 = vpack.c.bf16 %v9515, %v9515
  %v10324 = vpack.c.bf16 %v9517, %v9517
  %v10325 = vpack.c.bf16 %v9520, %v9520
  %v10326 = vpack.c.bf16 %v9522, %v9522
  %v10327 = vpack.c.bf16 %v9525, %v9525
  %v10328 = vpack.c.bf16 %v9527, %v9527
  %v10329 = vpack.c.bf16 %v9530, %v9530
  %v10330 = vpack.c.bf16 %v9532, %v9532
  %v10331 = vpack.c.bf16 %v9535, %v9535
  %v10332 = vpack.c.bf16 %v9537, %v9537
  %v10333 = vpack.c.bf16 %v9540, %v9540
  %v10334 = vpack.c.bf16 %v9542, %v9542
  %v10335 = vpack.c.bf16 %v9545, %v9545
  %v10336 = vpack.c.bf16 %v9547, %v9547
  %v10337 = vpack.c.bf16 %v9550, %v9550
  %v10338 = vpack.c.bf16 %v9552, %v9552
  %v10339 = vpack.c.bf16 %v9555, %v9555
  %v10340 = vpack.c.bf16 %v9557, %v9557
  %v10341 = vpack.c.bf16 %v9560, %v9560
  %v10342 = vpack.c.bf16 %v9562, %v9562
  %v10343 = vpack.c.bf16 %v9565, %v9565
  %v10344 = vpack.c.bf16 %v9567, %v9567
  %v10345 = vpack.c.bf16 %v9570, %v9570
  %v10346 = vpack.c.bf16 %v9572, %v9572
  %v10347 = vpack.c.bf16 %v9575, %v9575
  %v10348 = vpack.c.bf16 %v9577, %v9577
  %v10349 = vpack.c.bf16 %v9580, %v9580
  %v10350 = vpack.c.bf16 %v9582, %v9582
  %v10351 = vpack.c.bf16 %v9585, %v9585
  %v10352 = vpack.c.bf16 %v9587, %v9587
  %v10353 = vpack.c.bf16 %v9590, %v9590
  %v10354 = vpack.c.bf16 %v9592, %v9592
  %v10355 = vpack.c.bf16 %v9595, %v9595
  %v10356 = vpack.c.bf16 %v9597, %v9597
  %v10357 = vpack.c.bf16 %v9600, %v9600
  %v10358 = vpack.c.bf16 %v9602, %v9602
  %v10359 = vpack.c.bf16 %v9605, %v9605
  %v10360 = vpack.c.bf16 %v9607, %v9607
  %v10361 = vpack.c.bf16 %v9610, %v9610
  %v10362 = vpack.c.bf16 %v9612, %v9612
  %v10363 = vpack.c.bf16 %v9615, %v9615
  %v10364 = vpack.c.bf16 %v9617, %v9617
  %v10365 = vpack.c.bf16 %v9620, %v9620
  %v10366 = vpack.c.bf16 %v9622, %v9622
  %v10367 = vpack.c.bf16 %v9625, %v9625
  %v10368 = vpack.c.bf16 %v9627, %v9627
  %v10369 = vpack.c.bf16 %v9630, %v9630
  %v10370 = vpack.c.bf16 %v9632, %v9632
  %v10371 = vpack.c.bf16 %v9635, %v9635
  %v10372 = vpack.c.bf16 %v9637, %v9637
  %v10373 = vpack.c.bf16 %v9640, %v9640
  %v10374 = vpack.c.bf16 %v9642, %v9642
  %v10375 = vpack.c.bf16 %v9645, %v9645
  %v10376 = vpack.c.bf16 %v9647, %v9647
  %v10377 = vpack.c.bf16 %v9650, %v9650
  %v10378 = vpack.c.bf16 %v9652, %v9652
  %v10379 = vpack.c.bf16 %v9655, %v9655
  %v10380 = vpack.c.bf16 %v9657, %v9657
  %v10381 = vpack.c.bf16 %v9660, %v9660
  %v10382 = vpack.c.bf16 %v9662, %v9662
  %v10383 = vpack.c.bf16 %v9665, %v9665
  %v10384 = vpack.c.bf16 %v9667, %v9667
  %v10385 = vpack.c.bf16 %v9670, %v9670
  %v10386 = vpack.c.bf16 %v9672, %v9672
  %v10387 = vpack.c.bf16 %v9675, %v9675
  %v10388 = vpack.c.bf16 %v9677, %v9677
  %v10389 = vpack.c.bf16 %v9680, %v9680
  %v10390 = vpack.c.bf16 %v9682, %v9682
  %v10391 = vpack.c.bf16 %v9685, %v9685
  %v10392 = vpack.c.bf16 %v9687, %v9687
  %v10393 = vpack.c.bf16 %v9690, %v9690
  %v10394 = vpack.c.bf16 %v9692, %v9692
  %v10395 = vpack.c.bf16 %v9695, %v9695
  %v10396 = vpack.c.bf16 %v9697, %v9697
  %v10397 = vpack.c.bf16 %v9700, %v9700
  %v10398 = vpack.c.bf16 %v9702, %v9702
  %v10399 = vpack.c.bf16 %v9705, %v9705
  %v10400 = vpack.c.bf16 %v9707, %v9707
  %v10401 = vpack.c.bf16 %v9710, %v9710
  %v10402 = vpack.c.bf16 %v9712, %v9712
  %v10403 = vpack.c.bf16 %v9715, %v9715
  %v10404 = vpack.c.bf16 %v9717, %v9717
  %v10405 = vpack.c.bf16 %v9720, %v9720
  %v10406 = vpack.c.bf16 %v9722, %v9722
  %v10407 = vpack.c.bf16 %v9725, %v9725
  %v10408 = vpack.c.bf16 %v9727, %v9727
  %v10409 = vpack.c.bf16 %v9730, %v9730
  %v10410 = vpack.c.bf16 %v9732, %v9732
  %v10411 = vpack.c.bf16 %v9735, %v9735
  %v10412 = vpack.c.bf16 %v9737, %v9737
  %v10413 = vpack.c.bf16 %v9740, %v9740
  %v10414 = vpack.c.bf16 %v9742, %v9742
  %v10415 = vpack.c.bf16 %v9745, %v9745
  %v10416 = vpack.c.bf16 %v9747, %v9747
  %v10417 = vpack.c.bf16 %v9750, %v9750
  %v10418 = vpack.c.bf16 %v9752, %v9752
  %v10419 = vpack.c.bf16 %v9755, %v9755
  %v10420 = vpack.c.bf16 %v9757, %v9757
  %v10421 = vpack.c.bf16 %v9760, %v9760
  %v10422 = vpack.c.bf16 %v9762, %v9762
  %v10423 = vpack.c.bf16 %v9765, %v9765
  %v10424 = vpack.c.bf16 %v9767, %v9767
  %v10425 = vpack.c.bf16 %v9770, %v9770
  %v10426 = vpack.c.bf16 %v9772, %v9772
  %v10427 = vpack.c.bf16 %v9775, %v9775
  %v10428 = vpack.c.bf16 %v9777, %v9777
  %v10429 = vpack.c.bf16 %v9780, %v9780
  %v10430 = vpack.c.bf16 %v9782, %v9782
  %v10431 = vpack.c.bf16 %v9785, %v9785
  %v10432 = vpack.c.bf16 %v9787, %v9787
  %v10433 = vpack.c.bf16 %v9790, %v9790
  %v10434 = vpack.c.bf16 %v9792, %v9792
  %v10435 = vpack.c.bf16 %v9795, %v9795
  %v10436 = vpack.c.bf16 %v9797, %v9797
  %v10437 = vpack.c.bf16 %v9800, %v9800
  %v10438 = vpack.c.bf16 %v9802, %v9802
  %v10439 = vpack.c.bf16 %v9805, %v9805
  %v10440 = vpack.c.bf16 %v9807, %v9807
  %v10441 = vpack.c.bf16 %v9810, %v9810
  %v10442 = vpack.c.bf16 %v9812, %v9812
  %v10443 = vpack.c.bf16 %v9815, %v9815
  %v10444 = vpack.c.bf16 %v9817, %v9817
  %v10445 = vpack.c.bf16 %v9820, %v9820
  %v10446 = vpack.c.bf16 %v9822, %v9822
  %v10447 = vpack.c.bf16 %v9825, %v9825
  %v10448 = vpack.c.bf16 %v9827, %v9827
  %v10449 = vpack.c.bf16 %v9830, %v9830
  %v10450 = vpack.c.bf16 %v9832, %v9832
  %v10451 = vpack.c.bf16 %v9835, %v9835
  %v10452 = vpack.c.bf16 %v9837, %v9837
  %v10453 = vpack.c.bf16 %v9840, %v9840
  %v10454 = vpack.c.bf16 %v9842, %v9842
  %v10455 = vpack.c.bf16 %v9845, %v9845
  %v10456 = vpack.c.bf16 %v9847, %v9847
  %v10457 = vpack.c.bf16 %v9850, %v9850
  %v10458 = vpack.c.bf16 %v9852, %v9852
  %v10459 = vpack.c.bf16 %v9855, %v9855
  %v10460 = vpack.c.bf16 %v9857, %v9857
  %v10461 = vpack.c.bf16 %v9860, %v9860
  %v10462 = vpack.c.bf16 %v9862, %v9862
  %v10463 = vpack.c.bf16 %v9865, %v9865
  %v10464 = vpack.c.bf16 %v9867, %v9867
  %v10465 = vpack.c.bf16 %v9870, %v9870
  %v10466 = vpack.c.bf16 %v9872, %v9872
  %v10467 = vpack.c.bf16 %v9875, %v9875
  %v10468 = vpack.c.bf16 %v9877, %v9877
  %v10469 = vpack.c.bf16 %v9880, %v9880
  %v10470 = vpack.c.bf16 %v9882, %v9882
  %v10471 = vpack.c.bf16 %v9885, %v9885
  %v10472 = vpack.c.bf16 %v9887, %v9887
  %v10473 = vpack.c.bf16 %v9890, %v9890
  %v10474 = vpack.c.bf16 %v9892, %v9892
  %v10475 = vpack.c.bf16 %v9895, %v9895
  %v10476 = vpack.c.bf16 %v9897, %v9897
  %v10477 = vpack.c.bf16 %v9900, %v9900
  %v10478 = vpack.c.bf16 %v9902, %v9902
  %v10479 = vpack.c.bf16 %v9905, %v9905
  %v10480 = vpack.c.bf16 %v9907, %v9907
  %v10481 = vpack.c.bf16 %v9910, %v9910
  %v10482 = vpack.c.bf16 %v9912, %v9912
  %v10483 = vpack.c.bf16 %v9915, %v9915
  %v10484 = vpack.c.bf16 %v9917, %v9917
  %v10485 = vpack.c.bf16 %v9920, %v9920
  %v10486 = vpack.c.bf16 %v9922, %v9922
  %v10487 = vpack.c.bf16 %v9925, %v9925
  %v10488 = vpack.c.bf16 %v9927, %v9927
  %v10489 = vpack.c.bf16 %v9930, %v9930
  %v10490 = vpack.c.bf16 %v9932, %v9932
  %v10491 = vpack.c.bf16 %v9935, %v9935
  %v10492 = vpack.c.bf16 %v9937, %v9937
  %v10493 = vpack.c.bf16 %v9940, %v9940
  %v10494 = vpack.c.bf16 %v9942, %v9942
  %v10495 = vpack.c.bf16 %v9945, %v9945
  %v10496 = vpack.c.bf16 %v9947, %v9947
  %v10497 = vpack.c.bf16 %v9950, %v9950
  %v10498 = vpack.c.bf16 %v9952, %v9952
  %v10499 = vpack.c.bf16 %v9955, %v9955
  %v10500 = vpack.c.bf16 %v9957, %v9957
  %v10501 = vpack.c.bf16 %v9960, %v9960
  %v10502 = vpack.c.bf16 %v9962, %v9962
  %v10503 = vpack.c.bf16 %v9965, %v9965
  %v10504 = vpack.c.bf16 %v9967, %v9967
  %v10505 = vpack.c.bf16 %v9970, %v9970
  %v10506 = vpack.c.bf16 %v9972, %v9972
  %v10507 = vpack.c.bf16 %v9975, %v9975
  %v10508 = vpack.c.bf16 %v9977, %v9977
  %v10509 = vpack.c.bf16 %v9980, %v9980
  %v10510 = vpack.c.bf16 %v9982, %v9982
  %v10511 = vpack.c.bf16 %v9985, %v9985
  %v10512 = vpack.c.bf16 %v9987, %v9987
  %v10513 = vpack.c.bf16 %v9990, %v9990
  %v10514 = vpack.c.bf16 %v9992, %v9992
  %v10515 = vpack.c.bf16 %v9995, %v9995
  %v10516 = vpack.c.bf16 %v9997, %v9997
  %v10517 = vpack.c.bf16 %v10000, %v10000
  %v10518 = vpack.c.bf16 %v10002, %v10002
  %v10519 = vpack.c.bf16 %v10005, %v10005
  %v10520 = vpack.c.bf16 %v10007, %v10007
  %vm10521 = vcmask 11264
  %10522 = vst.msk [vmem:[%s5] sm:$0xf] %vm10521, %v10009
  %10523 = vst.msk [vmem:[%s5 + $0x4] sm:$0xf] %vm10521, %v10010
  %10524 = vst.msk [vmem:[%s5 + $0x8] sm:$0xf] %vm10521, %v10011
  %10525 = vst.msk [vmem:[%s5 + $0xc] sm:$0xf] %vm10521, %v10012
  %10526 = vst.msk [vmem:[%s5 + $0x10] sm:$0xf] %vm10521, %v10013
  %10527 = vst.msk [vmem:[%s5 + $0x14] sm:$0xf] %vm10521, %v10014
  %10528 = vst.msk [vmem:[%s5 + $0x18] sm:$0xf] %vm10521, %v10015
  %10529 = vst.msk [vmem:[%s5 + $0x1c] sm:$0xf] %vm10521, %v10016
  %10530 = vst.msk [vmem:[%s5 + $0x20] sm:$0xf] %vm10521, %v10017
  %10531 = vst.msk [vmem:[%s5 + $0x24] sm:$0xf] %vm10521, %v10018
  %10532 = vst.msk [vmem:[%s5 + $0x28] sm:$0xf] %vm10521, %v10019
  %10533 = vst.msk [vmem:[%s5 + $0x2c] sm:$0xf] %vm10521, %v10020
  %10534 = vst.msk [vmem:[%s5 + $0x30] sm:$0xf] %vm10521, %v10021
  %10535 = vst.msk [vmem:[%s5 + $0x34] sm:$0xf] %vm10521, %v10022
  %10536 = vst.msk [vmem:[%s5 + $0x38] sm:$0xf] %vm10521, %v10023
  %10537 = vst.msk [vmem:[%s5 + $0x3c] sm:$0xf] %vm10521, %v10024
  %10538 = vst.msk [vmem:[%s5 + $0x40] sm:$0xf] %vm10521, %v10025
  %10539 = vst.msk [vmem:[%s5 + $0x44] sm:$0xf] %vm10521, %v10026
  %10540 = vst.msk [vmem:[%s5 + $0x48] sm:$0xf] %vm10521, %v10027
  %10541 = vst.msk [vmem:[%s5 + $0x4c] sm:$0xf] %vm10521, %v10028
  %10542 = vst.msk [vmem:[%s5 + $0x50] sm:$0xf] %vm10521, %v10029
  %10543 = vst.msk [vmem:[%s5 + $0x54] sm:$0xf] %vm10521, %v10030
  %10544 = vst.msk [vmem:[%s5 + $0x58] sm:$0xf] %vm10521, %v10031
  %10545 = vst.msk [vmem:[%s5 + $0x5c] sm:$0xf] %vm10521, %v10032
  %10546 = vst.msk [vmem:[%s5 + $0x60] sm:$0xf] %vm10521, %v10033
  %10547 = vst.msk [vmem:[%s5 + $0x64] sm:$0xf] %vm10521, %v10034
  %10548 = vst.msk [vmem:[%s5 + $0x68] sm:$0xf] %vm10521, %v10035
  %10549 = vst.msk [vmem:[%s5 + $0x6c] sm:$0xf] %vm10521, %v10036
  %10550 = vst.msk [vmem:[%s5 + $0x70] sm:$0xf] %vm10521, %v10037
  %10551 = vst.msk [vmem:[%s5 + $0x74] sm:$0xf] %vm10521, %v10038
  %10552 = vst.msk [vmem:[%s5 + $0x78] sm:$0xf] %vm10521, %v10039
  %10553 = vst.msk [vmem:[%s5 + $0x7c] sm:$0xf] %vm10521, %v10040
  %10554 = vst.msk [vmem:[%s5 + $0x80] sm:$0xf] %vm10521, %v10041
  %10555 = vst.msk [vmem:[%s5 + $0x84] sm:$0xf] %vm10521, %v10042
  %10556 = vst.msk [vmem:[%s5 + $0x88] sm:$0xf] %vm10521, %v10043
  %10557 = vst.msk [vmem:[%s5 + $0x8c] sm:$0xf] %vm10521, %v10044
  %10558 = vst.msk [vmem:[%s5 + $0x90] sm:$0xf] %vm10521, %v10045
  %10559 = vst.msk [vmem:[%s5 + $0x94] sm:$0xf] %vm10521, %v10046
  %10560 = vst.msk [vmem:[%s5 + $0x98] sm:$0xf] %vm10521, %v10047
  %10561 = vst.msk [vmem:[%s5 + $0x9c] sm:$0xf] %vm10521, %v10048
  %10562 = vst.msk [vmem:[%s5 + $0xa0] sm:$0xf] %vm10521, %v10049
  %10563 = vst.msk [vmem:[%s5 + $0xa4] sm:$0xf] %vm10521, %v10050
  %10564 = vst.msk [vmem:[%s5 + $0xa8] sm:$0xf] %vm10521, %v10051
  %10565 = vst.msk [vmem:[%s5 + $0xac] sm:$0xf] %vm10521, %v10052
  %10566 = vst.msk [vmem:[%s5 + $0xb0] sm:$0xf] %vm10521, %v10053
  %10567 = vst.msk [vmem:[%s5 + $0xb4] sm:$0xf] %vm10521, %v10054
  %10568 = vst.msk [vmem:[%s5 + $0xb8] sm:$0xf] %vm10521, %v10055
  %10569 = vst.msk [vmem:[%s5 + $0xbc] sm:$0xf] %vm10521, %v10056
  %10570 = vst.msk [vmem:[%s5 + $0xc0] sm:$0xf] %vm10521, %v10057
  %10571 = vst.msk [vmem:[%s5 + $0xc4] sm:$0xf] %vm10521, %v10058
  %10572 = vst.msk [vmem:[%s5 + $0xc8] sm:$0xf] %vm10521, %v10059
  %10573 = vst.msk [vmem:[%s5 + $0xcc] sm:$0xf] %vm10521, %v10060
  %10574 = vst.msk [vmem:[%s5 + $0xd0] sm:$0xf] %vm10521, %v10061
  %10575 = vst.msk [vmem:[%s5 + $0xd4] sm:$0xf] %vm10521, %v10062
  %10576 = vst.msk [vmem:[%s5 + $0xd8] sm:$0xf] %vm10521, %v10063
  %10577 = vst.msk [vmem:[%s5 + $0xdc] sm:$0xf] %vm10521, %v10064
  %10578 = vst.msk [vmem:[%s5 + $0xe0] sm:$0xf] %vm10521, %v10065
  %10579 = vst.msk [vmem:[%s5 + $0xe4] sm:$0xf] %vm10521, %v10066
  %10580 = vst.msk [vmem:[%s5 + $0xe8] sm:$0xf] %vm10521, %v10067
  %10581 = vst.msk [vmem:[%s5 + $0xec] sm:$0xf] %vm10521, %v10068
  %10582 = vst.msk [vmem:[%s5 + $0xf0] sm:$0xf] %vm10521, %v10069
  %10583 = vst.msk [vmem:[%s5 + $0xf4] sm:$0xf] %vm10521, %v10070
  %10584 = vst.msk [vmem:[%s5 + $0xf8] sm:$0xf] %vm10521, %v10071
  %10585 = vst.msk [vmem:[%s5 + $0xfc] sm:$0xf] %vm10521, %v10072
  %10586 = vst.msk [vmem:[%s5 + $0x100] sm:$0xf] %vm10521, %v10073
  %10587 = vst.msk [vmem:[%s5 + $0x104] sm:$0xf] %vm10521, %v10074
  %10588 = vst.msk [vmem:[%s5 + $0x108] sm:$0xf] %vm10521, %v10075
  %10589 = vst.msk [vmem:[%s5 + $0x10c] sm:$0xf] %vm10521, %v10076
  %10590 = vst.msk [vmem:[%s5 + $0x110] sm:$0xf] %vm10521, %v10077
  %10591 = vst.msk [vmem:[%s5 + $0x114] sm:$0xf] %vm10521, %v10078
  %10592 = vst.msk [vmem:[%s5 + $0x118] sm:$0xf] %vm10521, %v10079
  %10593 = vst.msk [vmem:[%s5 + $0x11c] sm:$0xf] %vm10521, %v10080
  %10594 = vst.msk [vmem:[%s5 + $0x120] sm:$0xf] %vm10521, %v10081
  %10595 = vst.msk [vmem:[%s5 + $0x124] sm:$0xf] %vm10521, %v10082
  %10596 = vst.msk [vmem:[%s5 + $0x128] sm:$0xf] %vm10521, %v10083
  %10597 = vst.msk [vmem:[%s5 + $0x12c] sm:$0xf] %vm10521, %v10084
  %10598 = vst.msk [vmem:[%s5 + $0x130] sm:$0xf] %vm10521, %v10085
  %10599 = vst.msk [vmem:[%s5 + $0x134] sm:$0xf] %vm10521, %v10086
  %10600 = vst.msk [vmem:[%s5 + $0x138] sm:$0xf] %vm10521, %v10087
  %10601 = vst.msk [vmem:[%s5 + $0x13c] sm:$0xf] %vm10521, %v10088
  %10602 = vst.msk [vmem:[%s5 + $0x140] sm:$0xf] %vm10521, %v10089
  %10603 = vst.msk [vmem:[%s5 + $0x144] sm:$0xf] %vm10521, %v10090
  %10604 = vst.msk [vmem:[%s5 + $0x148] sm:$0xf] %vm10521, %v10091
  %10605 = vst.msk [vmem:[%s5 + $0x14c] sm:$0xf] %vm10521, %v10092
  %10606 = vst.msk [vmem:[%s5 + $0x150] sm:$0xf] %vm10521, %v10093
  %10607 = vst.msk [vmem:[%s5 + $0x154] sm:$0xf] %vm10521, %v10094
  %10608 = vst.msk [vmem:[%s5 + $0x158] sm:$0xf] %vm10521, %v10095
  %10609 = vst.msk [vmem:[%s5 + $0x15c] sm:$0xf] %vm10521, %v10096
  %10610 = vst.msk [vmem:[%s5 + $0x160] sm:$0xf] %vm10521, %v10097
  %10611 = vst.msk [vmem:[%s5 + $0x164] sm:$0xf] %vm10521, %v10098
  %10612 = vst.msk [vmem:[%s5 + $0x168] sm:$0xf] %vm10521, %v10099
  %10613 = vst.msk [vmem:[%s5 + $0x16c] sm:$0xf] %vm10521, %v10100
  %10614 = vst.msk [vmem:[%s5 + $0x170] sm:$0xf] %vm10521, %v10101
  %10615 = vst.msk [vmem:[%s5 + $0x174] sm:$0xf] %vm10521, %v10102
  %10616 = vst.msk [vmem:[%s5 + $0x178] sm:$0xf] %vm10521, %v10103
  %10617 = vst.msk [vmem:[%s5 + $0x17c] sm:$0xf] %vm10521, %v10104
  %10618 = vst.msk [vmem:[%s5 + $0x180] sm:$0xf] %vm10521, %v10105
  %10619 = vst.msk [vmem:[%s5 + $0x184] sm:$0xf] %vm10521, %v10106
  %10620 = vst.msk [vmem:[%s5 + $0x188] sm:$0xf] %vm10521, %v10107
  %10621 = vst.msk [vmem:[%s5 + $0x18c] sm:$0xf] %vm10521, %v10108
  %10622 = vst.msk [vmem:[%s5 + $0x190] sm:$0xf] %vm10521, %v10109
  %10623 = vst.msk [vmem:[%s5 + $0x194] sm:$0xf] %vm10521, %v10110
  %10624 = vst.msk [vmem:[%s5 + $0x198] sm:$0xf] %vm10521, %v10111
  %10625 = vst.msk [vmem:[%s5 + $0x19c] sm:$0xf] %vm10521, %v10112
  %10626 = vst.msk [vmem:[%s5 + $0x1a0] sm:$0xf] %vm10521, %v10113
  %10627 = vst.msk [vmem:[%s5 + $0x1a4] sm:$0xf] %vm10521, %v10114
  %10628 = vst.msk [vmem:[%s5 + $0x1a8] sm:$0xf] %vm10521, %v10115
  %10629 = vst.msk [vmem:[%s5 + $0x1ac] sm:$0xf] %vm10521, %v10116
  %10630 = vst.msk [vmem:[%s5 + $0x1b0] sm:$0xf] %vm10521, %v10117
  %10631 = vst.msk [vmem:[%s5 + $0x1b4] sm:$0xf] %vm10521, %v10118
  %10632 = vst.msk [vmem:[%s5 + $0x1b8] sm:$0xf] %vm10521, %v10119
  %10633 = vst.msk [vmem:[%s5 + $0x1bc] sm:$0xf] %vm10521, %v10120
  %10634 = vst.msk [vmem:[%s5 + $0x1c0] sm:$0xf] %vm10521, %v10121
  %10635 = vst.msk [vmem:[%s5 + $0x1c4] sm:$0xf] %vm10521, %v10122
  %10636 = vst.msk [vmem:[%s5 + $0x1c8] sm:$0xf] %vm10521, %v10123
  %10637 = vst.msk [vmem:[%s5 + $0x1cc] sm:$0xf] %vm10521, %v10124
  %10638 = vst.msk [vmem:[%s5 + $0x1d0] sm:$0xf] %vm10521, %v10125
  %10639 = vst.msk [vmem:[%s5 + $0x1d4] sm:$0xf] %vm10521, %v10126
  %10640 = vst.msk [vmem:[%s5 + $0x1d8] sm:$0xf] %vm10521, %v10127
  %10641 = vst.msk [vmem:[%s5 + $0x1dc] sm:$0xf] %vm10521, %v10128
  %10642 = vst.msk [vmem:[%s5 + $0x1e0] sm:$0xf] %vm10521, %v10129
  %10643 = vst.msk [vmem:[%s5 + $0x1e4] sm:$0xf] %vm10521, %v10130
  %10644 = vst.msk [vmem:[%s5 + $0x1e8] sm:$0xf] %vm10521, %v10131
  %10645 = vst.msk [vmem:[%s5 + $0x1ec] sm:$0xf] %vm10521, %v10132
  %10646 = vst.msk [vmem:[%s5 + $0x1f0] sm:$0xf] %vm10521, %v10133
  %10647 = vst.msk [vmem:[%s5 + $0x1f4] sm:$0xf] %vm10521, %v10134
  %10648 = vst.msk [vmem:[%s5 + $0x1f8] sm:$0xf] %vm10521, %v10135
  %10649 = vst.msk [vmem:[%s5 + $0x1fc] sm:$0xf] %vm10521, %v10136
  %10650 = vst.msk [vmem:[%s5 + $0x200] sm:$0xf] %vm10521, %v10137
  %10651 = vst.msk [vmem:[%s5 + $0x204] sm:$0xf] %vm10521, %v10138
  %10652 = vst.msk [vmem:[%s5 + $0x208] sm:$0xf] %vm10521, %v10139
  %10653 = vst.msk [vmem:[%s5 + $0x20c] sm:$0xf] %vm10521, %v10140
  %10654 = vst.msk [vmem:[%s5 + $0x210] sm:$0xf] %vm10521, %v10141
  %10655 = vst.msk [vmem:[%s5 + $0x214] sm:$0xf] %vm10521, %v10142
  %10656 = vst.msk [vmem:[%s5 + $0x218] sm:$0xf] %vm10521, %v10143
  %10657 = vst.msk [vmem:[%s5 + $0x21c] sm:$0xf] %vm10521, %v10144
  %10658 = vst.msk [vmem:[%s5 + $0x220] sm:$0xf] %vm10521, %v10145
  %10659 = vst.msk [vmem:[%s5 + $0x224] sm:$0xf] %vm10521, %v10146
  %10660 = vst.msk [vmem:[%s5 + $0x228] sm:$0xf] %vm10521, %v10147
  %10661 = vst.msk [vmem:[%s5 + $0x22c] sm:$0xf] %vm10521, %v10148
  %10662 = vst.msk [vmem:[%s5 + $0x230] sm:$0xf] %vm10521, %v10149
  %10663 = vst.msk [vmem:[%s5 + $0x234] sm:$0xf] %vm10521, %v10150
  %10664 = vst.msk [vmem:[%s5 + $0x238] sm:$0xf] %vm10521, %v10151
  %10665 = vst.msk [vmem:[%s5 + $0x23c] sm:$0xf] %vm10521, %v10152
  %10666 = vst.msk [vmem:[%s5 + $0x240] sm:$0xf] %vm10521, %v10153
  %10667 = vst.msk [vmem:[%s5 + $0x244] sm:$0xf] %vm10521, %v10154
  %10668 = vst.msk [vmem:[%s5 + $0x248] sm:$0xf] %vm10521, %v10155
  %10669 = vst.msk [vmem:[%s5 + $0x24c] sm:$0xf] %vm10521, %v10156
  %10670 = vst.msk [vmem:[%s5 + $0x250] sm:$0xf] %vm10521, %v10157
  %10671 = vst.msk [vmem:[%s5 + $0x254] sm:$0xf] %vm10521, %v10158
  %10672 = vst.msk [vmem:[%s5 + $0x258] sm:$0xf] %vm10521, %v10159
  %10673 = vst.msk [vmem:[%s5 + $0x25c] sm:$0xf] %vm10521, %v10160
  %10674 = vst.msk [vmem:[%s5 + $0x260] sm:$0xf] %vm10521, %v10161
  %10675 = vst.msk [vmem:[%s5 + $0x264] sm:$0xf] %vm10521, %v10162
  %10676 = vst.msk [vmem:[%s5 + $0x268] sm:$0xf] %vm10521, %v10163
  %10677 = vst.msk [vmem:[%s5 + $0x26c] sm:$0xf] %vm10521, %v10164
  %10678 = vst.msk [vmem:[%s5 + $0x270] sm:$0xf] %vm10521, %v10165
  %10679 = vst.msk [vmem:[%s5 + $0x274] sm:$0xf] %vm10521, %v10166
  %10680 = vst.msk [vmem:[%s5 + $0x278] sm:$0xf] %vm10521, %v10167
  %10681 = vst.msk [vmem:[%s5 + $0x27c] sm:$0xf] %vm10521, %v10168
  %10682 = vst.msk [vmem:[%s5 + $0x280] sm:$0xf] %vm10521, %v10169
  %10683 = vst.msk [vmem:[%s5 + $0x284] sm:$0xf] %vm10521, %v10170
  %10684 = vst.msk [vmem:[%s5 + $0x288] sm:$0xf] %vm10521, %v10171
  %10685 = vst.msk [vmem:[%s5 + $0x28c] sm:$0xf] %vm10521, %v10172
  %10686 = vst.msk [vmem:[%s5 + $0x290] sm:$0xf] %vm10521, %v10173
  %10687 = vst.msk [vmem:[%s5 + $0x294] sm:$0xf] %vm10521, %v10174
  %10688 = vst.msk [vmem:[%s5 + $0x298] sm:$0xf] %vm10521, %v10175
  %10689 = vst.msk [vmem:[%s5 + $0x29c] sm:$0xf] %vm10521, %v10176
  %10690 = vst.msk [vmem:[%s5 + $0x2a0] sm:$0xf] %vm10521, %v10177
  %10691 = vst.msk [vmem:[%s5 + $0x2a4] sm:$0xf] %vm10521, %v10178
  %10692 = vst.msk [vmem:[%s5 + $0x2a8] sm:$0xf] %vm10521, %v10179
  %10693 = vst.msk [vmem:[%s5 + $0x2ac] sm:$0xf] %vm10521, %v10180
  %10694 = vst.msk [vmem:[%s5 + $0x2b0] sm:$0xf] %vm10521, %v10181
  %10695 = vst.msk [vmem:[%s5 + $0x2b4] sm:$0xf] %vm10521, %v10182
  %10696 = vst.msk [vmem:[%s5 + $0x2b8] sm:$0xf] %vm10521, %v10183
  %10697 = vst.msk [vmem:[%s5 + $0x2bc] sm:$0xf] %vm10521, %v10184
  %10698 = vst.msk [vmem:[%s5 + $0x2c0] sm:$0xf] %vm10521, %v10185
  %10699 = vst.msk [vmem:[%s5 + $0x2c4] sm:$0xf] %vm10521, %v10186
  %10700 = vst.msk [vmem:[%s5 + $0x2c8] sm:$0xf] %vm10521, %v10187
  %10701 = vst.msk [vmem:[%s5 + $0x2cc] sm:$0xf] %vm10521, %v10188
  %10702 = vst.msk [vmem:[%s5 + $0x2d0] sm:$0xf] %vm10521, %v10189
  %10703 = vst.msk [vmem:[%s5 + $0x2d4] sm:$0xf] %vm10521, %v10190
  %10704 = vst.msk [vmem:[%s5 + $0x2d8] sm:$0xf] %vm10521, %v10191
  %10705 = vst.msk [vmem:[%s5 + $0x2dc] sm:$0xf] %vm10521, %v10192
  %10706 = vst.msk [vmem:[%s5 + $0x2e0] sm:$0xf] %vm10521, %v10193
  %10707 = vst.msk [vmem:[%s5 + $0x2e4] sm:$0xf] %vm10521, %v10194
  %10708 = vst.msk [vmem:[%s5 + $0x2e8] sm:$0xf] %vm10521, %v10195
  %10709 = vst.msk [vmem:[%s5 + $0x2ec] sm:$0xf] %vm10521, %v10196
  %10710 = vst.msk [vmem:[%s5 + $0x2f0] sm:$0xf] %vm10521, %v10197
  %10711 = vst.msk [vmem:[%s5 + $0x2f4] sm:$0xf] %vm10521, %v10198
  %10712 = vst.msk [vmem:[%s5 + $0x2f8] sm:$0xf] %vm10521, %v10199
  %10713 = vst.msk [vmem:[%s5 + $0x2fc] sm:$0xf] %vm10521, %v10200
  %10714 = vst.msk [vmem:[%s5 + $0x300] sm:$0xf] %vm10521, %v10201
  %10715 = vst.msk [vmem:[%s5 + $0x304] sm:$0xf] %vm10521, %v10202
  %10716 = vst.msk [vmem:[%s5 + $0x308] sm:$0xf] %vm10521, %v10203
  %10717 = vst.msk [vmem:[%s5 + $0x30c] sm:$0xf] %vm10521, %v10204
  %10718 = vst.msk [vmem:[%s5 + $0x310] sm:$0xf] %vm10521, %v10205
  %10719 = vst.msk [vmem:[%s5 + $0x314] sm:$0xf] %vm10521, %v10206
  %10720 = vst.msk [vmem:[%s5 + $0x318] sm:$0xf] %vm10521, %v10207
  %10721 = vst.msk [vmem:[%s5 + $0x31c] sm:$0xf] %vm10521, %v10208
  %10722 = vst.msk [vmem:[%s5 + $0x320] sm:$0xf] %vm10521, %v10209
  %10723 = vst.msk [vmem:[%s5 + $0x324] sm:$0xf] %vm10521, %v10210
  %10724 = vst.msk [vmem:[%s5 + $0x328] sm:$0xf] %vm10521, %v10211
  %10725 = vst.msk [vmem:[%s5 + $0x32c] sm:$0xf] %vm10521, %v10212
  %10726 = vst.msk [vmem:[%s5 + $0x330] sm:$0xf] %vm10521, %v10213
  %10727 = vst.msk [vmem:[%s5 + $0x334] sm:$0xf] %vm10521, %v10214
  %10728 = vst.msk [vmem:[%s5 + $0x338] sm:$0xf] %vm10521, %v10215
  %10729 = vst.msk [vmem:[%s5 + $0x33c] sm:$0xf] %vm10521, %v10216
  %10730 = vst.msk [vmem:[%s5 + $0x340] sm:$0xf] %vm10521, %v10217
  %10731 = vst.msk [vmem:[%s5 + $0x344] sm:$0xf] %vm10521, %v10218
  %10732 = vst.msk [vmem:[%s5 + $0x348] sm:$0xf] %vm10521, %v10219
  %10733 = vst.msk [vmem:[%s5 + $0x34c] sm:$0xf] %vm10521, %v10220
  %10734 = vst.msk [vmem:[%s5 + $0x350] sm:$0xf] %vm10521, %v10221
  %10735 = vst.msk [vmem:[%s5 + $0x354] sm:$0xf] %vm10521, %v10222
  %10736 = vst.msk [vmem:[%s5 + $0x358] sm:$0xf] %vm10521, %v10223
  %10737 = vst.msk [vmem:[%s5 + $0x35c] sm:$0xf] %vm10521, %v10224
  %10738 = vst.msk [vmem:[%s5 + $0x360] sm:$0xf] %vm10521, %v10225
  %10739 = vst.msk [vmem:[%s5 + $0x364] sm:$0xf] %vm10521, %v10226
  %10740 = vst.msk [vmem:[%s5 + $0x368] sm:$0xf] %vm10521, %v10227
  %10741 = vst.msk [vmem:[%s5 + $0x36c] sm:$0xf] %vm10521, %v10228
  %10742 = vst.msk [vmem:[%s5 + $0x370] sm:$0xf] %vm10521, %v10229
  %10743 = vst.msk [vmem:[%s5 + $0x374] sm:$0xf] %vm10521, %v10230
  %10744 = vst.msk [vmem:[%s5 + $0x378] sm:$0xf] %vm10521, %v10231
  %10745 = vst.msk [vmem:[%s5 + $0x37c] sm:$0xf] %vm10521, %v10232
  %10746 = vst.msk [vmem:[%s5 + $0x380] sm:$0xf] %vm10521, %v10233
  %10747 = vst.msk [vmem:[%s5 + $0x384] sm:$0xf] %vm10521, %v10234
  %10748 = vst.msk [vmem:[%s5 + $0x388] sm:$0xf] %vm10521, %v10235
  %10749 = vst.msk [vmem:[%s5 + $0x38c] sm:$0xf] %vm10521, %v10236
  %10750 = vst.msk [vmem:[%s5 + $0x390] sm:$0xf] %vm10521, %v10237
  %10751 = vst.msk [vmem:[%s5 + $0x394] sm:$0xf] %vm10521, %v10238
  %10752 = vst.msk [vmem:[%s5 + $0x398] sm:$0xf] %vm10521, %v10239
  %10753 = vst.msk [vmem:[%s5 + $0x39c] sm:$0xf] %vm10521, %v10240
  %10754 = vst.msk [vmem:[%s5 + $0x3a0] sm:$0xf] %vm10521, %v10241
  %10755 = vst.msk [vmem:[%s5 + $0x3a4] sm:$0xf] %vm10521, %v10242
  %10756 = vst.msk [vmem:[%s5 + $0x3a8] sm:$0xf] %vm10521, %v10243
  %10757 = vst.msk [vmem:[%s5 + $0x3ac] sm:$0xf] %vm10521, %v10244
  %10758 = vst.msk [vmem:[%s5 + $0x3b0] sm:$0xf] %vm10521, %v10245
  %10759 = vst.msk [vmem:[%s5 + $0x3b4] sm:$0xf] %vm10521, %v10246
  %10760 = vst.msk [vmem:[%s5 + $0x3b8] sm:$0xf] %vm10521, %v10247
  %10761 = vst.msk [vmem:[%s5 + $0x3bc] sm:$0xf] %vm10521, %v10248
  %10762 = vst.msk [vmem:[%s5 + $0x3c0] sm:$0xf] %vm10521, %v10249
  %10763 = vst.msk [vmem:[%s5 + $0x3c4] sm:$0xf] %vm10521, %v10250
  %10764 = vst.msk [vmem:[%s5 + $0x3c8] sm:$0xf] %vm10521, %v10251
  %10765 = vst.msk [vmem:[%s5 + $0x3cc] sm:$0xf] %vm10521, %v10252
  %10766 = vst.msk [vmem:[%s5 + $0x3d0] sm:$0xf] %vm10521, %v10253
  %10767 = vst.msk [vmem:[%s5 + $0x3d4] sm:$0xf] %vm10521, %v10254
  %10768 = vst.msk [vmem:[%s5 + $0x3d8] sm:$0xf] %vm10521, %v10255
  %10769 = vst.msk [vmem:[%s5 + $0x3dc] sm:$0xf] %vm10521, %v10256
  %10770 = vst.msk [vmem:[%s5 + $0x3e0] sm:$0xf] %vm10521, %v10257
  %10771 = vst.msk [vmem:[%s5 + $0x3e4] sm:$0xf] %vm10521, %v10258
  %10772 = vst.msk [vmem:[%s5 + $0x3e8] sm:$0xf] %vm10521, %v10259
  %10773 = vst.msk [vmem:[%s5 + $0x3ec] sm:$0xf] %vm10521, %v10260
  %10774 = vst.msk [vmem:[%s5 + $0x3f0] sm:$0xf] %vm10521, %v10261
  %10775 = vst.msk [vmem:[%s5 + $0x3f4] sm:$0xf] %vm10521, %v10262
  %10776 = vst.msk [vmem:[%s5 + $0x3f8] sm:$0xf] %vm10521, %v10263
  %10777 = vst.msk [vmem:[%s5 + $0x3fc] sm:$0xf] %vm10521, %v10264
  %10778 = vst.msk [vmem:[%s5 + $0x400] sm:$0xf] %vm10521, %v10265
  %10779 = vst.msk [vmem:[%s5 + $0x404] sm:$0xf] %vm10521, %v10266
  %10780 = vst.msk [vmem:[%s5 + $0x408] sm:$0xf] %vm10521, %v10267
  %10781 = vst.msk [vmem:[%s5 + $0x40c] sm:$0xf] %vm10521, %v10268
  %10782 = vst.msk [vmem:[%s5 + $0x410] sm:$0xf] %vm10521, %v10269
  %10783 = vst.msk [vmem:[%s5 + $0x414] sm:$0xf] %vm10521, %v10270
  %10784 = vst.msk [vmem:[%s5 + $0x418] sm:$0xf] %vm10521, %v10271
  %10785 = vst.msk [vmem:[%s5 + $0x41c] sm:$0xf] %vm10521, %v10272
  %10786 = vst.msk [vmem:[%s5 + $0x420] sm:$0xf] %vm10521, %v10273
  %10787 = vst.msk [vmem:[%s5 + $0x424] sm:$0xf] %vm10521, %v10274
  %10788 = vst.msk [vmem:[%s5 + $0x428] sm:$0xf] %vm10521, %v10275
  %10789 = vst.msk [vmem:[%s5 + $0x42c] sm:$0xf] %vm10521, %v10276
  %10790 = vst.msk [vmem:[%s5 + $0x430] sm:$0xf] %vm10521, %v10277
  %10791 = vst.msk [vmem:[%s5 + $0x434] sm:$0xf] %vm10521, %v10278
  %10792 = vst.msk [vmem:[%s5 + $0x438] sm:$0xf] %vm10521, %v10279
  %10793 = vst.msk [vmem:[%s5 + $0x43c] sm:$0xf] %vm10521, %v10280
  %10794 = vst.msk [vmem:[%s5 + $0x440] sm:$0xf] %vm10521, %v10281
  %10795 = vst.msk [vmem:[%s5 + $0x444] sm:$0xf] %vm10521, %v10282
  %10796 = vst.msk [vmem:[%s5 + $0x448] sm:$0xf] %vm10521, %v10283
  %10797 = vst.msk [vmem:[%s5 + $0x44c] sm:$0xf] %vm10521, %v10284
  %10798 = vst.msk [vmem:[%s5 + $0x450] sm:$0xf] %vm10521, %v10285
  %10799 = vst.msk [vmem:[%s5 + $0x454] sm:$0xf] %vm10521, %v10286
  %10800 = vst.msk [vmem:[%s5 + $0x458] sm:$0xf] %vm10521, %v10287
  %10801 = vst.msk [vmem:[%s5 + $0x45c] sm:$0xf] %vm10521, %v10288
  %10802 = vst.msk [vmem:[%s5 + $0x460] sm:$0xf] %vm10521, %v10289
  %10803 = vst.msk [vmem:[%s5 + $0x464] sm:$0xf] %vm10521, %v10290
  %10804 = vst.msk [vmem:[%s5 + $0x468] sm:$0xf] %vm10521, %v10291
  %10805 = vst.msk [vmem:[%s5 + $0x46c] sm:$0xf] %vm10521, %v10292
  %10806 = vst.msk [vmem:[%s5 + $0x470] sm:$0xf] %vm10521, %v10293
  %10807 = vst.msk [vmem:[%s5 + $0x474] sm:$0xf] %vm10521, %v10294
  %10808 = vst.msk [vmem:[%s5 + $0x478] sm:$0xf] %vm10521, %v10295
  %10809 = vst.msk [vmem:[%s5 + $0x47c] sm:$0xf] %vm10521, %v10296
  %10810 = vst.msk [vmem:[%s5 + $0x480] sm:$0xf] %vm10521, %v10297
  %10811 = vst.msk [vmem:[%s5 + $0x484] sm:$0xf] %vm10521, %v10298
  %10812 = vst.msk [vmem:[%s5 + $0x488] sm:$0xf] %vm10521, %v10299
  %10813 = vst.msk [vmem:[%s5 + $0x48c] sm:$0xf] %vm10521, %v10300
  %10814 = vst.msk [vmem:[%s5 + $0x490] sm:$0xf] %vm10521, %v10301
  %10815 = vst.msk [vmem:[%s5 + $0x494] sm:$0xf] %vm10521, %v10302
  %10816 = vst.msk [vmem:[%s5 + $0x498] sm:$0xf] %vm10521, %v10303
  %10817 = vst.msk [vmem:[%s5 + $0x49c] sm:$0xf] %vm10521, %v10304
  %10818 = vst.msk [vmem:[%s5 + $0x4a0] sm:$0xf] %vm10521, %v10305
  %10819 = vst.msk [vmem:[%s5 + $0x4a4] sm:$0xf] %vm10521, %v10306
  %10820 = vst.msk [vmem:[%s5 + $0x4a8] sm:$0xf] %vm10521, %v10307
  %10821 = vst.msk [vmem:[%s5 + $0x4ac] sm:$0xf] %vm10521, %v10308
  %10822 = vst.msk [vmem:[%s5 + $0x4b0] sm:$0xf] %vm10521, %v10309
  %10823 = vst.msk [vmem:[%s5 + $0x4b4] sm:$0xf] %vm10521, %v10310
  %10824 = vst.msk [vmem:[%s5 + $0x4b8] sm:$0xf] %vm10521, %v10311
  %10825 = vst.msk [vmem:[%s5 + $0x4bc] sm:$0xf] %vm10521, %v10312
  %10826 = vst.msk [vmem:[%s5 + $0x4c0] sm:$0xf] %vm10521, %v10313
  %10827 = vst.msk [vmem:[%s5 + $0x4c4] sm:$0xf] %vm10521, %v10314
  %10828 = vst.msk [vmem:[%s5 + $0x4c8] sm:$0xf] %vm10521, %v10315
  %10829 = vst.msk [vmem:[%s5 + $0x4cc] sm:$0xf] %vm10521, %v10316
  %10830 = vst.msk [vmem:[%s5 + $0x4d0] sm:$0xf] %vm10521, %v10317
  %10831 = vst.msk [vmem:[%s5 + $0x4d4] sm:$0xf] %vm10521, %v10318
  %10832 = vst.msk [vmem:[%s5 + $0x4d8] sm:$0xf] %vm10521, %v10319
  %10833 = vst.msk [vmem:[%s5 + $0x4dc] sm:$0xf] %vm10521, %v10320
  %10834 = vst.msk [vmem:[%s5 + $0x4e0] sm:$0xf] %vm10521, %v10321
  %10835 = vst.msk [vmem:[%s5 + $0x4e4] sm:$0xf] %vm10521, %v10322
  %10836 = vst.msk [vmem:[%s5 + $0x4e8] sm:$0xf] %vm10521, %v10323
  %10837 = vst.msk [vmem:[%s5 + $0x4ec] sm:$0xf] %vm10521, %v10324
  %10838 = vst.msk [vmem:[%s5 + $0x4f0] sm:$0xf] %vm10521, %v10325
  %10839 = vst.msk [vmem:[%s5 + $0x4f4] sm:$0xf] %vm10521, %v10326
  %10840 = vst.msk [vmem:[%s5 + $0x4f8] sm:$0xf] %vm10521, %v10327
  %10841 = vst.msk [vmem:[%s5 + $0x4fc] sm:$0xf] %vm10521, %v10328
  %10842 = vst.msk [vmem:[%s5 + $0x500] sm:$0xf] %vm10521, %v10329
  %10843 = vst.msk [vmem:[%s5 + $0x504] sm:$0xf] %vm10521, %v10330
  %10844 = vst.msk [vmem:[%s5 + $0x508] sm:$0xf] %vm10521, %v10331
  %10845 = vst.msk [vmem:[%s5 + $0x50c] sm:$0xf] %vm10521, %v10332
  %10846 = vst.msk [vmem:[%s5 + $0x510] sm:$0xf] %vm10521, %v10333
  %10847 = vst.msk [vmem:[%s5 + $0x514] sm:$0xf] %vm10521, %v10334
  %10848 = vst.msk [vmem:[%s5 + $0x518] sm:$0xf] %vm10521, %v10335
  %10849 = vst.msk [vmem:[%s5 + $0x51c] sm:$0xf] %vm10521, %v10336
  %10850 = vst.msk [vmem:[%s5 + $0x520] sm:$0xf] %vm10521, %v10337
  %10851 = vst.msk [vmem:[%s5 + $0x524] sm:$0xf] %vm10521, %v10338
  %10852 = vst.msk [vmem:[%s5 + $0x528] sm:$0xf] %vm10521, %v10339
  %10853 = vst.msk [vmem:[%s5 + $0x52c] sm:$0xf] %vm10521, %v10340
  %10854 = vst.msk [vmem:[%s5 + $0x530] sm:$0xf] %vm10521, %v10341
  %10855 = vst.msk [vmem:[%s5 + $0x534] sm:$0xf] %vm10521, %v10342
  %10856 = vst.msk [vmem:[%s5 + $0x538] sm:$0xf] %vm10521, %v10343
  %10857 = vst.msk [vmem:[%s5 + $0x53c] sm:$0xf] %vm10521, %v10344
  %10858 = vst.msk [vmem:[%s5 + $0x540] sm:$0xf] %vm10521, %v10345
  %10859 = vst.msk [vmem:[%s5 + $0x544] sm:$0xf] %vm10521, %v10346
  %10860 = vst.msk [vmem:[%s5 + $0x548] sm:$0xf] %vm10521, %v10347
  %10861 = vst.msk [vmem:[%s5 + $0x54c] sm:$0xf] %vm10521, %v10348
  %10862 = vst.msk [vmem:[%s5 + $0x550] sm:$0xf] %vm10521, %v10349
  %10863 = vst.msk [vmem:[%s5 + $0x554] sm:$0xf] %vm10521, %v10350
  %10864 = vst.msk [vmem:[%s5 + $0x558] sm:$0xf] %vm10521, %v10351
  %10865 = vst.msk [vmem:[%s5 + $0x55c] sm:$0xf] %vm10521, %v10352
  %10866 = vst.msk [vmem:[%s5 + $0x560] sm:$0xf] %vm10521, %v10353
  %10867 = vst.msk [vmem:[%s5 + $0x564] sm:$0xf] %vm10521, %v10354
  %10868 = vst.msk [vmem:[%s5 + $0x568] sm:$0xf] %vm10521, %v10355
  %10869 = vst.msk [vmem:[%s5 + $0x56c] sm:$0xf] %vm10521, %v10356
  %10870 = vst.msk [vmem:[%s5 + $0x570] sm:$0xf] %vm10521, %v10357
  %10871 = vst.msk [vmem:[%s5 + $0x574] sm:$0xf] %vm10521, %v10358
  %10872 = vst.msk [vmem:[%s5 + $0x578] sm:$0xf] %vm10521, %v10359
  %10873 = vst.msk [vmem:[%s5 + $0x57c] sm:$0xf] %vm10521, %v10360
  %10874 = vst.msk [vmem:[%s5 + $0x580] sm:$0xf] %vm10521, %v10361
  %10875 = vst.msk [vmem:[%s5 + $0x584] sm:$0xf] %vm10521, %v10362
  %10876 = vst.msk [vmem:[%s5 + $0x588] sm:$0xf] %vm10521, %v10363
  %10877 = vst.msk [vmem:[%s5 + $0x58c] sm:$0xf] %vm10521, %v10364
  %10878 = vst.msk [vmem:[%s5 + $0x590] sm:$0xf] %vm10521, %v10365
  %10879 = vst.msk [vmem:[%s5 + $0x594] sm:$0xf] %vm10521, %v10366
  %10880 = vst.msk [vmem:[%s5 + $0x598] sm:$0xf] %vm10521, %v10367
  %10881 = vst.msk [vmem:[%s5 + $0x59c] sm:$0xf] %vm10521, %v10368
  %10882 = vst.msk [vmem:[%s5 + $0x5a0] sm:$0xf] %vm10521, %v10369
  %10883 = vst.msk [vmem:[%s5 + $0x5a4] sm:$0xf] %vm10521, %v10370
  %10884 = vst.msk [vmem:[%s5 + $0x5a8] sm:$0xf] %vm10521, %v10371
  %10885 = vst.msk [vmem:[%s5 + $0x5ac] sm:$0xf] %vm10521, %v10372
  %10886 = vst.msk [vmem:[%s5 + $0x5b0] sm:$0xf] %vm10521, %v10373
  %10887 = vst.msk [vmem:[%s5 + $0x5b4] sm:$0xf] %vm10521, %v10374
  %10888 = vst.msk [vmem:[%s5 + $0x5b8] sm:$0xf] %vm10521, %v10375
  %10889 = vst.msk [vmem:[%s5 + $0x5bc] sm:$0xf] %vm10521, %v10376
  %10890 = vst.msk [vmem:[%s5 + $0x5c0] sm:$0xf] %vm10521, %v10377
  %10891 = vst.msk [vmem:[%s5 + $0x5c4] sm:$0xf] %vm10521, %v10378
  %10892 = vst.msk [vmem:[%s5 + $0x5c8] sm:$0xf] %vm10521, %v10379
  %10893 = vst.msk [vmem:[%s5 + $0x5cc] sm:$0xf] %vm10521, %v10380
  %10894 = vst.msk [vmem:[%s5 + $0x5d0] sm:$0xf] %vm10521, %v10381
  %10895 = vst.msk [vmem:[%s5 + $0x5d4] sm:$0xf] %vm10521, %v10382
  %10896 = vst.msk [vmem:[%s5 + $0x5d8] sm:$0xf] %vm10521, %v10383
  %10897 = vst.msk [vmem:[%s5 + $0x5dc] sm:$0xf] %vm10521, %v10384
  %10898 = vst.msk [vmem:[%s5 + $0x5e0] sm:$0xf] %vm10521, %v10385
  %10899 = vst.msk [vmem:[%s5 + $0x5e4] sm:$0xf] %vm10521, %v10386
  %10900 = vst.msk [vmem:[%s5 + $0x5e8] sm:$0xf] %vm10521, %v10387
  %10901 = vst.msk [vmem:[%s5 + $0x5ec] sm:$0xf] %vm10521, %v10388
  %10902 = vst.msk [vmem:[%s5 + $0x5f0] sm:$0xf] %vm10521, %v10389
  %10903 = vst.msk [vmem:[%s5 + $0x5f4] sm:$0xf] %vm10521, %v10390
  %10904 = vst.msk [vmem:[%s5 + $0x5f8] sm:$0xf] %vm10521, %v10391
  %10905 = vst.msk [vmem:[%s5 + $0x5fc] sm:$0xf] %vm10521, %v10392
  %10906 = vst.msk [vmem:[%s5 + $0x600] sm:$0xf] %vm10521, %v10393
  %10907 = vst.msk [vmem:[%s5 + $0x604] sm:$0xf] %vm10521, %v10394
  %10908 = vst.msk [vmem:[%s5 + $0x608] sm:$0xf] %vm10521, %v10395
  %10909 = vst.msk [vmem:[%s5 + $0x60c] sm:$0xf] %vm10521, %v10396
  %10910 = vst.msk [vmem:[%s5 + $0x610] sm:$0xf] %vm10521, %v10397
  %10911 = vst.msk [vmem:[%s5 + $0x614] sm:$0xf] %vm10521, %v10398
  %10912 = vst.msk [vmem:[%s5 + $0x618] sm:$0xf] %vm10521, %v10399
  %10913 = vst.msk [vmem:[%s5 + $0x61c] sm:$0xf] %vm10521, %v10400
  %10914 = vst.msk [vmem:[%s5 + $0x620] sm:$0xf] %vm10521, %v10401
  %10915 = vst.msk [vmem:[%s5 + $0x624] sm:$0xf] %vm10521, %v10402
  %10916 = vst.msk [vmem:[%s5 + $0x628] sm:$0xf] %vm10521, %v10403
  %10917 = vst.msk [vmem:[%s5 + $0x62c] sm:$0xf] %vm10521, %v10404
  %10918 = vst.msk [vmem:[%s5 + $0x630] sm:$0xf] %vm10521, %v10405
  %10919 = vst.msk [vmem:[%s5 + $0x634] sm:$0xf] %vm10521, %v10406
  %10920 = vst.msk [vmem:[%s5 + $0x638] sm:$0xf] %vm10521, %v10407
  %10921 = vst.msk [vmem:[%s5 + $0x63c] sm:$0xf] %vm10521, %v10408
  %10922 = vst.msk [vmem:[%s5 + $0x640] sm:$0xf] %vm10521, %v10409
  %10923 = vst.msk [vmem:[%s5 + $0x644] sm:$0xf] %vm10521, %v10410
  %10924 = vst.msk [vmem:[%s5 + $0x648] sm:$0xf] %vm10521, %v10411
  %10925 = vst.msk [vmem:[%s5 + $0x64c] sm:$0xf] %vm10521, %v10412
  %10926 = vst.msk [vmem:[%s5 + $0x650] sm:$0xf] %vm10521, %v10413
  %10927 = vst.msk [vmem:[%s5 + $0x654] sm:$0xf] %vm10521, %v10414
  %10928 = vst.msk [vmem:[%s5 + $0x658] sm:$0xf] %vm10521, %v10415
  %10929 = vst.msk [vmem:[%s5 + $0x65c] sm:$0xf] %vm10521, %v10416
  %10930 = vst.msk [vmem:[%s5 + $0x660] sm:$0xf] %vm10521, %v10417
  %10931 = vst.msk [vmem:[%s5 + $0x664] sm:$0xf] %vm10521, %v10418
  %10932 = vst.msk [vmem:[%s5 + $0x668] sm:$0xf] %vm10521, %v10419
  %10933 = vst.msk [vmem:[%s5 + $0x66c] sm:$0xf] %vm10521, %v10420
  %10934 = vst.msk [vmem:[%s5 + $0x670] sm:$0xf] %vm10521, %v10421
  %10935 = vst.msk [vmem:[%s5 + $0x674] sm:$0xf] %vm10521, %v10422
  %10936 = vst.msk [vmem:[%s5 + $0x678] sm:$0xf] %vm10521, %v10423
  %10937 = vst.msk [vmem:[%s5 + $0x67c] sm:$0xf] %vm10521, %v10424
  %10938 = vst.msk [vmem:[%s5 + $0x680] sm:$0xf] %vm10521, %v10425
  %10939 = vst.msk [vmem:[%s5 + $0x684] sm:$0xf] %vm10521, %v10426
  %10940 = vst.msk [vmem:[%s5 + $0x688] sm:$0xf] %vm10521, %v10427
  %10941 = vst.msk [vmem:[%s5 + $0x68c] sm:$0xf] %vm10521, %v10428
  %10942 = vst.msk [vmem:[%s5 + $0x690] sm:$0xf] %vm10521, %v10429
  %10943 = vst.msk [vmem:[%s5 + $0x694] sm:$0xf] %vm10521, %v10430
  %10944 = vst.msk [vmem:[%s5 + $0x698] sm:$0xf] %vm10521, %v10431
  %10945 = vst.msk [vmem:[%s5 + $0x69c] sm:$0xf] %vm10521, %v10432
  %10946 = vst.msk [vmem:[%s5 + $0x6a0] sm:$0xf] %vm10521, %v10433
  %10947 = vst.msk [vmem:[%s5 + $0x6a4] sm:$0xf] %vm10521, %v10434
  %10948 = vst.msk [vmem:[%s5 + $0x6a8] sm:$0xf] %vm10521, %v10435
  %10949 = vst.msk [vmem:[%s5 + $0x6ac] sm:$0xf] %vm10521, %v10436
  %10950 = vst.msk [vmem:[%s5 + $0x6b0] sm:$0xf] %vm10521, %v10437
  %10951 = vst.msk [vmem:[%s5 + $0x6b4] sm:$0xf] %vm10521, %v10438
  %10952 = vst.msk [vmem:[%s5 + $0x6b8] sm:$0xf] %vm10521, %v10439
  %10953 = vst.msk [vmem:[%s5 + $0x6bc] sm:$0xf] %vm10521, %v10440
  %10954 = vst.msk [vmem:[%s5 + $0x6c0] sm:$0xf] %vm10521, %v10441
  %10955 = vst.msk [vmem:[%s5 + $0x6c4] sm:$0xf] %vm10521, %v10442
  %10956 = vst.msk [vmem:[%s5 + $0x6c8] sm:$0xf] %vm10521, %v10443
  %10957 = vst.msk [vmem:[%s5 + $0x6cc] sm:$0xf] %vm10521, %v10444
  %10958 = vst.msk [vmem:[%s5 + $0x6d0] sm:$0xf] %vm10521, %v10445
  %10959 = vst.msk [vmem:[%s5 + $0x6d4] sm:$0xf] %vm10521, %v10446
  %10960 = vst.msk [vmem:[%s5 + $0x6d8] sm:$0xf] %vm10521, %v10447
  %10961 = vst.msk [vmem:[%s5 + $0x6dc] sm:$0xf] %vm10521, %v10448
  %10962 = vst.msk [vmem:[%s5 + $0x6e0] sm:$0xf] %vm10521, %v10449
  %10963 = vst.msk [vmem:[%s5 + $0x6e4] sm:$0xf] %vm10521, %v10450
  %10964 = vst.msk [vmem:[%s5 + $0x6e8] sm:$0xf] %vm10521, %v10451
  %10965 = vst.msk [vmem:[%s5 + $0x6ec] sm:$0xf] %vm10521, %v10452
  %10966 = vst.msk [vmem:[%s5 + $0x6f0] sm:$0xf] %vm10521, %v10453
  %10967 = vst.msk [vmem:[%s5 + $0x6f4] sm:$0xf] %vm10521, %v10454
  %10968 = vst.msk [vmem:[%s5 + $0x6f8] sm:$0xf] %vm10521, %v10455
  %10969 = vst.msk [vmem:[%s5 + $0x6fc] sm:$0xf] %vm10521, %v10456
  %10970 = vst.msk [vmem:[%s5 + $0x700] sm:$0xf] %vm10521, %v10457
  %10971 = vst.msk [vmem:[%s5 + $0x704] sm:$0xf] %vm10521, %v10458
  %10972 = vst.msk [vmem:[%s5 + $0x708] sm:$0xf] %vm10521, %v10459
  %10973 = vst.msk [vmem:[%s5 + $0x70c] sm:$0xf] %vm10521, %v10460
  %10974 = vst.msk [vmem:[%s5 + $0x710] sm:$0xf] %vm10521, %v10461
  %10975 = vst.msk [vmem:[%s5 + $0x714] sm:$0xf] %vm10521, %v10462
  %10976 = vst.msk [vmem:[%s5 + $0x718] sm:$0xf] %vm10521, %v10463
  %10977 = vst.msk [vmem:[%s5 + $0x71c] sm:$0xf] %vm10521, %v10464
  %10978 = vst.msk [vmem:[%s5 + $0x720] sm:$0xf] %vm10521, %v10465
  %10979 = vst.msk [vmem:[%s5 + $0x724] sm:$0xf] %vm10521, %v10466
  %10980 = vst.msk [vmem:[%s5 + $0x728] sm:$0xf] %vm10521, %v10467
  %10981 = vst.msk [vmem:[%s5 + $0x72c] sm:$0xf] %vm10521, %v10468
  %10982 = vst.msk [vmem:[%s5 + $0x730] sm:$0xf] %vm10521, %v10469
  %10983 = vst.msk [vmem:[%s5 + $0x734] sm:$0xf] %vm10521, %v10470
  %10984 = vst.msk [vmem:[%s5 + $0x738] sm:$0xf] %vm10521, %v10471
  %10985 = vst.msk [vmem:[%s5 + $0x73c] sm:$0xf] %vm10521, %v10472
  %10986 = vst.msk [vmem:[%s5 + $0x740] sm:$0xf] %vm10521, %v10473
  %10987 = vst.msk [vmem:[%s5 + $0x744] sm:$0xf] %vm10521, %v10474
  %10988 = vst.msk [vmem:[%s5 + $0x748] sm:$0xf] %vm10521, %v10475
  %10989 = vst.msk [vmem:[%s5 + $0x74c] sm:$0xf] %vm10521, %v10476
  %10990 = vst.msk [vmem:[%s5 + $0x750] sm:$0xf] %vm10521, %v10477
  %10991 = vst.msk [vmem:[%s5 + $0x754] sm:$0xf] %vm10521, %v10478
  %10992 = vst.msk [vmem:[%s5 + $0x758] sm:$0xf] %vm10521, %v10479
  %10993 = vst.msk [vmem:[%s5 + $0x75c] sm:$0xf] %vm10521, %v10480
  %10994 = vst.msk [vmem:[%s5 + $0x760] sm:$0xf] %vm10521, %v10481
  %10995 = vst.msk [vmem:[%s5 + $0x764] sm:$0xf] %vm10521, %v10482
  %10996 = vst.msk [vmem:[%s5 + $0x768] sm:$0xf] %vm10521, %v10483
  %10997 = vst.msk [vmem:[%s5 + $0x76c] sm:$0xf] %vm10521, %v10484
  %10998 = vst.msk [vmem:[%s5 + $0x770] sm:$0xf] %vm10521, %v10485
  %10999 = vst.msk [vmem:[%s5 + $0x774] sm:$0xf] %vm10521, %v10486
  %11000 = vst.msk [vmem:[%s5 + $0x778] sm:$0xf] %vm10521, %v10487
  %11001 = vst.msk [vmem:[%s5 + $0x77c] sm:$0xf] %vm10521, %v10488
  %11002 = vst.msk [vmem:[%s5 + $0x780] sm:$0xf] %vm10521, %v10489
  %11003 = vst.msk [vmem:[%s5 + $0x784] sm:$0xf] %vm10521, %v10490
  %11004 = vst.msk [vmem:[%s5 + $0x788] sm:$0xf] %vm10521, %v10491
  %11005 = vst.msk [vmem:[%s5 + $0x78c] sm:$0xf] %vm10521, %v10492
  %11006 = vst.msk [vmem:[%s5 + $0x790] sm:$0xf] %vm10521, %v10493
  %11007 = vst.msk [vmem:[%s5 + $0x794] sm:$0xf] %vm10521, %v10494
  %11008 = vst.msk [vmem:[%s5 + $0x798] sm:$0xf] %vm10521, %v10495
  %11009 = vst.msk [vmem:[%s5 + $0x79c] sm:$0xf] %vm10521, %v10496
  %11010 = vst.msk [vmem:[%s5 + $0x7a0] sm:$0xf] %vm10521, %v10497
  %11011 = vst.msk [vmem:[%s5 + $0x7a4] sm:$0xf] %vm10521, %v10498
  %11012 = vst.msk [vmem:[%s5 + $0x7a8] sm:$0xf] %vm10521, %v10499
  %11013 = vst.msk [vmem:[%s5 + $0x7ac] sm:$0xf] %vm10521, %v10500
  %11014 = vst.msk [vmem:[%s5 + $0x7b0] sm:$0xf] %vm10521, %v10501
  %11015 = vst.msk [vmem:[%s5 + $0x7b4] sm:$0xf] %vm10521, %v10502
  %11016 = vst.msk [vmem:[%s5 + $0x7b8] sm:$0xf] %vm10521, %v10503
  %11017 = vst.msk [vmem:[%s5 + $0x7bc] sm:$0xf] %vm10521, %v10504
  %11018 = vst.msk [vmem:[%s5 + $0x7c0] sm:$0xf] %vm10521, %v10505
  %11019 = vst.msk [vmem:[%s5 + $0x7c4] sm:$0xf] %vm10521, %v10506
  %11020 = vst.msk [vmem:[%s5 + $0x7c8] sm:$0xf] %vm10521, %v10507
  %11021 = vst.msk [vmem:[%s5 + $0x7cc] sm:$0xf] %vm10521, %v10508
  %11022 = vst.msk [vmem:[%s5 + $0x7d0] sm:$0xf] %vm10521, %v10509
  %11023 = vst.msk [vmem:[%s5 + $0x7d4] sm:$0xf] %vm10521, %v10510
  %11024 = vst.msk [vmem:[%s5 + $0x7d8] sm:$0xf] %vm10521, %v10511
  %11025 = vst.msk [vmem:[%s5 + $0x7dc] sm:$0xf] %vm10521, %v10512
  %11026 = vst.msk [vmem:[%s5 + $0x7e0] sm:$0xf] %vm10521, %v10513
  %11027 = vst.msk [vmem:[%s5 + $0x7e4] sm:$0xf] %vm10521, %v10514
  %11028 = vst.msk [vmem:[%s5 + $0x7e8] sm:$0xf] %vm10521, %v10515
  %11029 = vst.msk [vmem:[%s5 + $0x7ec] sm:$0xf] %vm10521, %v10516
  %11030 = vst.msk [vmem:[%s5 + $0x7f0] sm:$0xf] %vm10521, %v10517
  %11031 = vst.msk [vmem:[%s5 + $0x7f4] sm:$0xf] %vm10521, %v10518
  %11032 = vst.msk [vmem:[%s5 + $0x7f8] sm:$0xf] %vm10521, %v10519
  %11033 = vst.msk [vmem:[%s5 + $0x7fc] sm:$0xf] %vm10521, %v10520
  // Predicated region
  $region22: #{pre_d_forward.4} parent=0 // pred_check
    _
  $region23: #{pre_d_forward.4} parent=0 // pred_check_branch
    %11035 = sbr.rel (0) target = $region25
  $region24: #{pre_d_forward.4} parent=0 // pred_region
    _
  $region25: #{pre_d_forward.4} parent=0 // pred_fallthru
    _
  // Predicated region
  $region26: #{pre_d_forward.4} parent=0 // pred_check
    _
  $region27: #{pre_d_forward.4} parent=0 // pred_check_branch
    %11037 = sbr.rel (0) target = $region29
  $region28: #{pre_d_forward.4} parent=0 // pred_region
    _
  $region29: #{pre_d_forward.4} parent=0 // pred_fallthru
    _

// kernel: pre_d_forward.5
$region0: #{pre_d_forward.5}
  #allocation0 [shape = 'u32[]', space=smem, size = 0x4, offset = 0x4, fixed_abs, tag = 'smem constant byte address 0x4 - core index']
  #allocation1 [shape = 'u32[72,128]{1,0:T(1,128)}', space=vmem, size = 0x9000, scoped, tag = 'internal scratch']
  %s0 = inlined_call_operand.vmem [shape: bf16[576,128], index: 0, kind: input, shape index: {}]
  %s1 = inlined_call_operand.vmem [shape: bf16[4,576], index: 1, kind: input, shape index: {}]
  %s2 = inlined_call_operand.vmem [shape: f32[4,1], index: 2, kind: input, shape index: {}]
  %s3 = inlined_call_operand.vmem [shape: f32[4,128], index: 3, kind: output, shape index: {}]
  %s4 = sld [smem:[#allocation0]]
  $region22: #{pre_d_forward.5} parent=0
    _
  %s6 = ssub.s32 1, %s4
  %s7 = scalar_select 0, %s6, %s4
  // Predicated region
  $region2: #{pre_d_forward.5} parent=0 // pred_check
    _
  $region3: #{pre_d_forward.5} parent=0 // pred_check_branch
    %9 = sbr.rel (0) target = $region5
  $region4: #{pre_d_forward.5} parent=0 // pred_region
    _
  $region5: #{pre_d_forward.5} parent=0 // pred_fallthru
    _
  // Predicated region
  $region6: #{pre_d_forward.5} parent=0 // pred_check
    _
  $region7: #{pre_d_forward.5} parent=0 // pred_check_branch
    %11 = sbr.rel (0) target = $region9
  $region8: #{pre_d_forward.5} parent=0 // pred_region
    _
  $region9: #{pre_d_forward.5} parent=0 // pred_fallthru
    _
  // Predicated region
  $region10: #{pre_d_forward.5} parent=0 // pred_check
    _
  $region11: #{pre_d_forward.5} parent=0 // pred_check_branch
    %13 = sbr.rel (0) target = $region13
  $region12: #{pre_d_forward.5} parent=0 // pred_region
    _
  $region13: #{pre_d_forward.5} parent=0 // pred_fallthru
    _
  %v15 = vld [vmem:[%s1] sm:$0xff]
  %v16 = vld [vmem:[%s1 + $0x8] sm:$0x3]
  %v17 = vld [vmem:[%s0] sm:$0xf]
  %v18 = vld [vmem:[%s0 + $0x4] sm:$0xf]
  %v19 = vld [vmem:[%s0 + $0x8] sm:$0xf]
  %v20 = vld [vmem:[%s0 + $0xc] sm:$0xf]
  %v21 = vld [vmem:[%s0 + $0x10] sm:$0xf]
  %v22 = vld [vmem:[%s0 + $0x14] sm:$0xf]
  %v23 = vld [vmem:[%s0 + $0x18] sm:$0xf]
  %v24 = vld [vmem:[%s0 + $0x1c] sm:$0xf]
  %v25 = vld [vmem:[%s0 + $0x20] sm:$0xf]
  %v26 = vld [vmem:[%s0 + $0x24] sm:$0xf]
  %v27 = vld [vmem:[%s0 + $0x28] sm:$0xf]
  %v28 = vld [vmem:[%s0 + $0x2c] sm:$0xf]
  %v29 = vld [vmem:[%s0 + $0x30] sm:$0xf]
  %v30 = vld [vmem:[%s0 + $0x34] sm:$0xf]
  %v31 = vld [vmem:[%s0 + $0x38] sm:$0xf]
  %v32 = vld [vmem:[%s0 + $0x3c] sm:$0xf]
  %v33 = vld [vmem:[%s0 + $0x40] sm:$0xf]
  %v34 = vld [vmem:[%s0 + $0x44] sm:$0xf]
  %v35 = vld [vmem:[%s0 + $0x48] sm:$0xf]
  %v36 = vld [vmem:[%s0 + $0x4c] sm:$0xf]
  %v37 = vld [vmem:[%s0 + $0x50] sm:$0xf]
  %v38 = vld [vmem:[%s0 + $0x54] sm:$0xf]
  %v39 = vld [vmem:[%s0 + $0x58] sm:$0xf]
  %v40 = vld [vmem:[%s0 + $0x5c] sm:$0xf]
  %v41 = vld [vmem:[%s0 + $0x60] sm:$0xf]
  %v42 = vld [vmem:[%s0 + $0x64] sm:$0xf]
  %v43 = vld [vmem:[%s0 + $0x68] sm:$0xf]
  %v44 = vld [vmem:[%s0 + $0x6c] sm:$0xf]
  %v45 = vld [vmem:[%s0 + $0x70] sm:$0xf]
  %v46 = vld [vmem:[%s0 + $0x74] sm:$0xf]
  %v47 = vld [vmem:[%s0 + $0x78] sm:$0xf]
  %v48 = vld [vmem:[%s0 + $0x7c] sm:$0xf]
  %v49 = vld [vmem:[%s0 + $0x80] sm:$0xf]
  %v50 = vld [vmem:[%s0 + $0x84] sm:$0xf]
  %v51 = vld [vmem:[%s0 + $0x88] sm:$0xf]
  %v52 = vld [vmem:[%s0 + $0x8c] sm:$0xf]
  %v53 = vld [vmem:[%s0 + $0x90] sm:$0xf]
  %v54 = vld [vmem:[%s0 + $0x94] sm:$0xf]
  %v55 = vld [vmem:[%s0 + $0x98] sm:$0xf]
  %v56 = vld [vmem:[%s0 + $0x9c] sm:$0xf]
  %v57 = vld [vmem:[%s0 + $0xa0] sm:$0xf]
  %v58 = vld [vmem:[%s0 + $0xa4] sm:$0xf]
  %v59 = vld [vmem:[%s0 + $0xa8] sm:$0xf]
  %v60 = vld [vmem:[%s0 + $0xac] sm:$0xf]
  %v61 = vld [vmem:[%s0 + $0xb0] sm:$0xf]
  %v62 = vld [vmem:[%s0 + $0xb4] sm:$0xf]
  %v63 = vld [vmem:[%s0 + $0xb8] sm:$0xf]
  %v64 = vld [vmem:[%s0 + $0xbc] sm:$0xf]
  %v65 = vld [vmem:[%s0 + $0xc0] sm:$0xf]
  %v66 = vld [vmem:[%s0 + $0xc4] sm:$0xf]
  %v67 = vld [vmem:[%s0 + $0xc8] sm:$0xf]
  %v68 = vld [vmem:[%s0 + $0xcc] sm:$0xf]
  %v69 = vld [vmem:[%s0 + $0xd0] sm:$0xf]
  %v70 = vld [vmem:[%s0 + $0xd4] sm:$0xf]
  %v71 = vld [vmem:[%s0 + $0xd8] sm:$0xf]
  %v72 = vld [vmem:[%s0 + $0xdc] sm:$0xf]
  %v73 = vld [vmem:[%s0 + $0xe0] sm:$0xf]
  %v74 = vld [vmem:[%s0 + $0xe4] sm:$0xf]
  %v75 = vld [vmem:[%s0 + $0xe8] sm:$0xf]
  %v76 = vld [vmem:[%s0 + $0xec] sm:$0xf]
  %v77 = vld [vmem:[%s0 + $0xf0] sm:$0xf]
  %v78 = vld [vmem:[%s0 + $0xf4] sm:$0xf]
  %v79 = vld [vmem:[%s0 + $0xf8] sm:$0xf]
  %v80 = vld [vmem:[%s0 + $0xfc] sm:$0xf]
  %v81 = vld [vmem:[%s0 + $0x100] sm:$0xf]
  %v82 = vld [vmem:[%s0 + $0x104] sm:$0xf]
  %v83 = vld [vmem:[%s0 + $0x108] sm:$0xf]
  %v84 = vld [vmem:[%s0 + $0x10c] sm:$0xf]
  %v85 = vld [vmem:[%s0 + $0x110] sm:$0xf]
  %v86 = vld [vmem:[%s0 + $0x114] sm:$0xf]
  %v87 = vld [vmem:[%s0 + $0x118] sm:$0xf]
  %v88 = vld [vmem:[%s0 + $0x11c] sm:$0xf]
  %v89 = vld [vmem:[%s2] sm:$0xf]
  %91 = vset.pattern.permute.xlu0 0
  %92 = vperm.xlu0 %91, %v89
  %v93 = vpop.permute.xlu0 %92
  %96 = vst [vmem:[#allocation1] ss:$4 sm:$0xff] %v15
  %s98 = scalar_lea.vmem [#allocation1], 32
  %99 = vst [vmem:[%s98] ss:$4 sm:$0xff] %v16
  %v100 = vld.sshfl [vmem:[#allocation1] sm:$0xff pattern:$0x73625140]
  %v101 = vld.sshfl [vmem:[#allocation1 + $0x8] sm:$0xff pattern:$0x73625140]
  %v102 = vld.sshfl [vmem:[#allocation1 + $0x10] sm:$0xff pattern:$0x73625140]
  %v103 = vld.sshfl [vmem:[#allocation1 + $0x18] sm:$0xff pattern:$0x73625140]
  %v104 = vld.sshfl [vmem:[#allocation1 + $0x20] sm:$0xff pattern:$0x73625140]
  %v181 = vunpack.c.l.b16 %v17
  %v182 = vunpack.c.l.b16 %v18
  %v183 = vunpack.c.l.b16 %v19
  %v184 = vunpack.c.l.b16 %v20
  %v185 = vunpack.c.l.b16 %v21
  %v186 = vunpack.c.l.b16 %v22
  %v187 = vunpack.c.l.b16 %v23
  %v188 = vunpack.c.l.b16 %v24
  %v189 = vunpack.c.l.b16 %v25
  %v190 = vunpack.c.l.b16 %v26
  %v191 = vunpack.c.l.b16 %v27
  %v192 = vunpack.c.l.b16 %v28
  %v193 = vunpack.c.l.b16 %v29
  %v194 = vunpack.c.l.b16 %v30
  %v195 = vunpack.c.l.b16 %v31
  %v196 = vunpack.c.l.b16 %v32
  %v197 = vunpack.c.l.b16 %v33
  %v198 = vunpack.c.l.b16 %v34
  %v199 = vunpack.c.l.b16 %v35
  %v200 = vunpack.c.l.b16 %v36
  %v201 = vunpack.c.l.b16 %v37
  %v202 = vunpack.c.l.b16 %v38
  %v203 = vunpack.c.l.b16 %v39
  %v204 = vunpack.c.l.b16 %v40
  %v205 = vunpack.c.l.b16 %v41
  %v206 = vunpack.c.l.b16 %v42
  %v207 = vunpack.c.l.b16 %v43
  %v208 = vunpack.c.l.b16 %v44
  %v209 = vunpack.c.l.b16 %v45
  %v210 = vunpack.c.l.b16 %v46
  %v211 = vunpack.c.l.b16 %v47
  %v212 = vunpack.c.l.b16 %v48
  %v213 = vunpack.c.l.b16 %v49
  %v214 = vunpack.c.l.b16 %v50
  %v215 = vunpack.c.l.b16 %v51
  %v216 = vunpack.c.l.b16 %v52
  %v217 = vunpack.c.l.b16 %v53
  %v218 = vunpack.c.l.b16 %v54
  %v219 = vunpack.c.l.b16 %v55
  %v220 = vunpack.c.l.b16 %v56
  %v221 = vunpack.c.l.b16 %v57
  %v222 = vunpack.c.l.b16 %v58
  %v223 = vunpack.c.l.b16 %v59
  %v224 = vunpack.c.l.b16 %v60
  %v225 = vunpack.c.l.b16 %v61
  %v226 = vunpack.c.l.b16 %v62
  %v227 = vunpack.c.l.b16 %v63
  %v228 = vunpack.c.l.b16 %v64
  %v229 = vunpack.c.l.b16 %v65
  %v230 = vunpack.c.l.b16 %v66
  %v231 = vunpack.c.l.b16 %v67
  %v232 = vunpack.c.l.b16 %v68
  %v233 = vunpack.c.l.b16 %v69
  %v234 = vunpack.c.l.b16 %v70
  %v235 = vunpack.c.l.b16 %v71
  %v236 = vunpack.c.l.b16 %v72
  %v237 = vunpack.c.l.b16 %v73
  %v238 = vunpack.c.l.b16 %v74
  %v239 = vunpack.c.l.b16 %v75
  %v240 = vunpack.c.l.b16 %v76
  %v241 = vunpack.c.l.b16 %v77
  %v242 = vunpack.c.l.b16 %v78
  %v243 = vunpack.c.l.b16 %v79
  %v244 = vunpack.c.l.b16 %v80
  %v245 = vunpack.c.l.b16 %v81
  %v246 = vunpack.c.l.b16 %v82
  %v247 = vunpack.c.l.b16 %v83
  %v248 = vunpack.c.l.b16 %v84
  %v249 = vunpack.c.l.b16 %v85
  %v250 = vunpack.c.l.b16 %v86
  %v251 = vunpack.c.l.b16 %v87
  %v252 = vunpack.c.l.b16 %v88
  %v253 = vpack.c.b16 %v182, %v181
  %v254 = vpack.c.b16 %v184, %v183
  %v255 = vpack.c.b16 %v186, %v185
  %v256 = vpack.c.b16 %v188, %v187
  %v257 = vpack.c.b16 %v190, %v189
  %v258 = vpack.c.b16 %v192, %v191
  %v259 = vpack.c.b16 %v194, %v193
  %v260 = vpack.c.b16 %v196, %v195
  %v261 = vpack.c.b16 %v198, %v197
  %v262 = vpack.c.b16 %v200, %v199
  %v263 = vpack.c.b16 %v202, %v201
  %v264 = vpack.c.b16 %v204, %v203
  %v265 = vpack.c.b16 %v206, %v205
  %v266 = vpack.c.b16 %v208, %v207
  %v267 = vpack.c.b16 %v210, %v209
  %v268 = vpack.c.b16 %v212, %v211
  %v269 = vpack.c.b16 %v214, %v213
  %v270 = vpack.c.b16 %v216, %v215
  %v271 = vpack.c.b16 %v218, %v217
  %v272 = vpack.c.b16 %v220, %v219
  %v273 = vpack.c.b16 %v222, %v221
  %v274 = vpack.c.b16 %v224, %v223
  %v275 = vpack.c.b16 %v226, %v225
  %v276 = vpack.c.b16 %v228, %v227
  %v277 = vpack.c.b16 %v230, %v229
  %v278 = vpack.c.b16 %v232, %v231
  %v279 = vpack.c.b16 %v234, %v233
  %v280 = vpack.c.b16 %v236, %v235
  %v281 = vpack.c.b16 %v238, %v237
  %v282 = vpack.c.b16 %v240, %v239
  %v283 = vpack.c.b16 %v242, %v241
  %v284 = vpack.c.b16 %v244, %v243
  %v285 = vpack.c.b16 %v246, %v245
  %v286 = vpack.c.b16 %v248, %v247
  %v287 = vpack.c.b16 %v250, %v249
  %v288 = vpack.c.b16 %v252, %v251
  %vm325 = vcmask 523264
  %v326 = vsel %vm325, %v104, 0
  %328 = vmatpush.bf16.msra.mxu0 %v260
  %329 = vmatpush.bf16.msra.mxu0 %v259
  %330 = vmatpush.bf16.msra.mxu0 %v258
  %331 = vmatpush.bf16.msra.mxu0 %v257
  %332 = vmatpush.bf16.msra.mxu0 %v256
  %333 = vmatpush.bf16.msra.mxu0 %v255
  %334 = vmatpush.bf16.msra.mxu0 %v254
  %335 = vmatpush.bf16.msra.mxu0 %v253
  %336 = vmatmul.bf16.gmra.mxu0 %v100
  %v337 = vpop.f32.mrf.mxu0
  %v338 = vadd.f32 %v93, %v337
  %v339 = vpop.f32.mrf.mxu0
  %340 = vdwg.mxu0
  %341 = vmatpush.bf16.msra.mxu0 %v268
  %342 = vmatpush.bf16.msra.mxu0 %v267
  %343 = vmatpush.bf16.msra.mxu0 %v266
  %344 = vmatpush.bf16.msra.mxu0 %v265
  %345 = vmatpush.bf16.msra.mxu0 %v264
  %346 = vmatpush.bf16.msra.mxu0 %v263
  %347 = vmatpush.bf16.msra.mxu0 %v262
  %348 = vmatpush.bf16.msra.mxu0 %v261
  %349 = vmatmul.bf16.gmra.mxu0 %v101
  %v350 = vpop.f32.mrf.mxu0
  %v351 = vadd.f32 %v338, %v350
  %v352 = vpop.f32.mrf.mxu0
  %353 = vdwg.mxu0
  %354 = vmatpush.bf16.msra.mxu0 %v276
  %355 = vmatpush.bf16.msra.mxu0 %v275
  %356 = vmatpush.bf16.msra.mxu0 %v274
  %357 = vmatpush.bf16.msra.mxu0 %v273
  %358 = vmatpush.bf16.msra.mxu0 %v272
  %359 = vmatpush.bf16.msra.mxu0 %v271
  %360 = vmatpush.bf16.msra.mxu0 %v270
  %361 = vmatpush.bf16.msra.mxu0 %v269
  %362 = vmatmul.bf16.gmra.mxu0 %v102
  %v363 = vpop.f32.mrf.mxu0
  %v364 = vadd.f32 %v351, %v363
  %v365 = vpop.f32.mrf.mxu0
  %366 = vdwg.mxu0
  %367 = vmatpush.bf16.msra.mxu0 %v284
  %368 = vmatpush.bf16.msra.mxu0 %v283
  %369 = vmatpush.bf16.msra.mxu0 %v282
  %370 = vmatpush.bf16.msra.mxu0 %v281
  %371 = vmatpush.bf16.msra.mxu0 %v280
  %372 = vmatpush.bf16.msra.mxu0 %v279
  %373 = vmatpush.bf16.msra.mxu0 %v278
  %374 = vmatpush.bf16.msra.mxu0 %v277
  %375 = vmatmul.bf16.gmra.mxu0 %v103
  %v376 = vpop.f32.mrf.mxu0
  %v377 = vadd.f32 %v364, %v376
  %v378 = vpop.f32.mrf.mxu0
  %379 = vdwg.mxu0
  %380 = vmatpush.bf16.msra.mxu0 0
  %381 = vmatpush.bf16.msra.mxu0 0
  %382 = vmatpush.bf16.msra.mxu0 0
  %383 = vmatpush.bf16.msra.mxu0 0
  %384 = vmatpush.bf16.msra.mxu0 %v288
  %385 = vmatpush.bf16.msra.mxu0 %v287
  %386 = vmatpush.bf16.msra.mxu0 %v286
  %387 = vmatpush.bf16.msra.mxu0 %v285
  %388 = vmatmul.bf16.gmra.mxu0 %v326
  %v389 = vpop.f32.mrf.mxu0
  %v390 = vadd.f32 %v377, %v389
  %v391 = vpop.f32.mrf.mxu0
  %392 = vdwg.mxu0
  %393 = vst [vmem:[%s3] sm:$0xf] %v390
  // Predicated region
  $region14: #{pre_d_forward.5} parent=0 // pred_check
    _
  $region15: #{pre_d_forward.5} parent=0 // pred_check_branch
    %395 = sbr.rel (0) target = $region17
  $region16: #{pre_d_forward.5} parent=0 // pred_region
    _
  $region17: #{pre_d_forward.5} parent=0 // pred_fallthru
    _
  // Predicated region
  $region18: #{pre_d_forward.5} parent=0 // pred_check
    _
  $region19: #{pre_d_forward.5} parent=0 // pred_check_branch
    %397 = sbr.rel (0) target = $region21
  $region20: #{pre_d_forward.5} parent=0 // pred_region
    _
  $region21: #{pre_d_forward.5} parent=0 // pred_fallthru
    _

</llo_original>
